<compile_context>
chip_gen: v7x
topology: tpu7x:2x2x1
jax: 0.10.0
libtpu: 0.0.40
codegen_flags: <defaults>
</compile_context>

<pallas_src>
import functools
import math

import jax
import jax.numpy as jnp
from jax.experimental import pallas as pl
from jax.experimental.pallas import tpu as pltpu


# ----------------------------------------------------------------------------
# In-kernel helpers
# ----------------------------------------------------------------------------

def _mm(a, b):
    # bf16 operands, f32 accumulation (MXU fast path); biases added in f32.
    return jnp.dot(a.astype(jnp.bfloat16), b.astype(jnp.bfloat16),
                   preferred_element_type=jnp.float32)


def _layer_norm(y, g, b):
    # PyTorch LayerNorm: biased variance, eps=1e-5
    mu = jnp.mean(y, axis=-1, keepdims=True)
    var = jnp.mean((y - mu) ** 2, axis=-1, keepdims=True)
    return (y - mu) * jax.lax.rsqrt(var + 1e-5) * g + b


def _attend(q, k, v, bias, num_heads, scale):
    # q: [Lq, D], k/v: [Lk, D], bias: [1, Lk] (0 or -1e30).
    # Per-head attention via lane masks on k/v: per-head scores are
    # q @ (k * mask_h)^T and the head outputs land directly in their own
    # column range of the accumulator (no lane slicing / concat needed).
    Lq, D = q.shape
    Dh = D // num_heads
    col = jax.lax.broadcasted_iota(jnp.int32, (1, D), 1)
    qs = (q * scale).astype(jnp.bfloat16)
    acc = jnp.zeros((Lq, D), jnp.float32)
    for h in range(num_heads):
        mh = ((col >= h * Dh) & (col < (h + 1) * Dh)).astype(jnp.float32)
        kh = (k * mh).astype(jnp.bfloat16)
        vh = (v * mh).astype(jnp.bfloat16)
        s = jax.lax.dot_general(qs, kh, (((1,), (1,)), ((), ())),
                                preferred_element_type=jnp.float32)
        s = s + bias
        m = jnp.max(s, axis=-1, keepdims=True)
        p = jnp.exp(s - m)
        p = p * pl.reciprocal(jnp.sum(p, axis=-1, keepdims=True), approx=True)
        acc = acc + jnp.dot(p.astype(jnp.bfloat16), vh,
                            preferred_element_type=jnp.float32)
    return acc


# ----------------------------------------------------------------------------
# Fused encoder kernel: grid = (batch, n_layers); all layers in one call.
# The running activation is carried in the VMEM-resident output block.
# ----------------------------------------------------------------------------

def _encoder_kernel(x_ref, pos_ref, bias_ref,
                    wqk_ref, bqk_ref, wv_ref, bv_ref, wo_ref, bo_ref,
                    ln1g_ref, ln1b_ref,
                    w1_ref, b1_ref, w2_ref, b2_ref,
                    ln2g_ref, ln2b_ref,
                    o_ref, *, num_heads, scale):
    layer = pl.program_id(1)

    @pl.when(layer == 0)
    def _():
        o_ref[0] = x_ref[0]

    x = o_ref[0]                      # [Lt, D] running activation (VMEM)
    xp = x + pos_ref[0]
    bias = bias_ref[0]                # [1, Lt]
    D = x.shape[-1]

    # self-attention: q = k = x + pos (packed QK projection), v = x
    qk = _mm(xp, wqk_ref[0]) + bqk_ref[0]
    q = qk[:, :D]
    k = qk[:, D:]
    v = _mm(x, wv_ref[0]) + bv_ref[0]
    a = _attend(q, k, v, bias, num_heads, scale)
    attn = _mm(a, wo_ref[0]) + bo_ref[0]
    y = _layer_norm(x + attn, ln1g_ref[0], ln1b_ref[0])

    # FFN
    h = jnp.maximum(_mm(y, w1_ref[0]) + b1_ref[0], 0.0)
    ffn = _mm(h, w2_ref[0]) + b2_ref[0]
    o_ref[0] = _layer_norm(y + ffn, ln2g_ref[0], ln2b_ref[0])


_ENC_NAMES = ["wqk", "bqk", "wv", "bv", "wo", "bo", "ln1g", "ln1b",
              "w1", "b1", "w2", "b2", "ln2g", "ln2b"]


def encoder_call(x, pos, bias, enc, num_heads):
    B, L, D = x.shape
    n_layers = enc["wqk"].shape[0]
    scale = 1.0 / math.sqrt(D // num_heads)
    kern = functools.partial(_encoder_kernel, num_heads=num_heads, scale=scale)

    act_spec = pl.BlockSpec((1, L, D), lambda b, l: (b, 0, 0))
    bias_spec = pl.BlockSpec((1, 1, L), lambda b, l: (b, 0, 0))

    def w_spec(arr):
        n = arr.ndim
        return pl.BlockSpec((1,) + arr.shape[1:],
                            lambda b, l, _n=n: (l,) + (0,) * (_n - 1))

    weights = [enc[n] for n in _ENC_NAMES]

    return pl.pallas_call(
        kern,
        out_shape=jax.ShapeDtypeStruct((B, L, D), jnp.float32),
        grid=(B, n_layers),
        in_specs=[act_spec, act_spec, bias_spec] + [w_spec(w) for w in weights],
        out_specs=act_spec,
        compiler_params=pltpu.CompilerParams(
            dimension_semantics=("parallel", "arbitrary")),
    )(x, pos, bias, *weights)


# ----------------------------------------------------------------------------
# Fused decoder kernel: grid = (2 decoders, batch, n_layers); both decoders'
# full layer stacks run inside one call.  The running tgt is carried in the
# VMEM-resident `tgt_out` block; per-layer normalized intermediates are the
# second output.
# ----------------------------------------------------------------------------

def _decoder_kernel(
        tgt_ref, mem_ref, pos_s_ref, pos_t_ref, bias_s_ref, bias_t_ref,
        swqk_ref, sbqk_ref, swv_ref, sbv_ref, swo_ref, sbo_ref,
        ln1g_ref, ln1b_ref,
        cwq_ref, cbq_ref, cwk_ref, cbk_ref, cwv_ref, cbv_ref, cwo_ref, cbo_ref,
        ln2g_ref, ln2b_ref,
        w1_ref, b1_ref, w2_ref, b2_ref, ln3g_ref, ln3b_ref,
        ng_ref, nb_ref,
        tgt_out_ref, inter_ref, *, num_heads, scale):
    layer = pl.program_id(2)

    @pl.when(layer == 0)
    def _():
        tgt_out_ref[0, 0] = tgt_ref[0]

    tgt = tgt_out_ref[0, 0]           # [Ls, D] running activation (VMEM)
    mem = mem_ref[0]                  # [Lt, D]
    ps = pos_s_ref[0]
    pt = pos_t_ref[0]
    bias_s = bias_s_ref[0]            # [1, Ls]
    bias_t = bias_t_ref[0]            # [1, Lt]
    D = tgt.shape[-1]

    # --- self-attention: q = k = tgt + pos_search, v = tgt
    tp = tgt + ps
    qk = _mm(tp, swqk_ref[0, 0]) + sbqk_ref[0, 0]
    q = qk[:, :D]
    k = qk[:, D:]
    v = _mm(tgt, swv_ref[0, 0]) + sbv_ref[0, 0]
    a = _attend(q, k, v, bias_s, num_heads, scale)
    attn = _mm(a, swo_ref[0, 0]) + sbo_ref[0, 0]
    x = _layer_norm(tgt + attn, ln1g_ref[0, 0], ln1b_ref[0, 0])

    # --- cross-attention: q = x + pos_search, k = memory + pos_template, v = memory
    qc = _mm(x + ps, cwq_ref[0, 0]) + cbq_ref[0, 0]
    kc = _mm(mem + pt, cwk_ref[0, 0]) + cbk_ref[0, 0]
    vc = _mm(mem, cwv_ref[0, 0]) + cbv_ref[0, 0]
    ac = _attend(qc, kc, vc, bias_t, num_heads, scale)
    cattn = _mm(ac, cwo_ref[0, 0]) + cbo_ref[0, 0]
    x = _layer_norm(x + cattn, ln2g_ref[0, 0], ln2b_ref[0, 0])

    # --- FFN
    h = jnp.maximum(_mm(x, w1_ref[0, 0]) + b1_ref[0, 0], 0.0)
    ffn = _mm(h, w2_ref[0, 0]) + b2_ref[0, 0]
    x = _layer_norm(x + ffn, ln3g_ref[0, 0], ln3b_ref[0, 0])

    tgt_out_ref[0, 0] = x
    # return_intermediate: per-layer output normalized with the decoder norm
    inter_ref[0, 0, 0] = _layer_norm(x, ng_ref[0], nb_ref[0])


_DEC_NAMES = ["swqk", "sbqk", "swv", "sbv", "swo", "sbo", "ln1g", "ln1b",
              "cwq", "cbq", "cwk", "cbk", "cwv", "cbv", "cwo", "cbo",
              "ln2g", "ln2b", "w1", "b1", "w2", "b2", "ln3g", "ln3b"]


def decoder_call(search_tok, memory, pos_s, pos_t, bias_s, bias_t,
                 dec, num_heads):
    B, Ls, D = search_tok.shape
    Lt = memory.shape[1]
    ndec, n_layers = dec["swqk"].shape[:2]
    scale = 1.0 / math.sqrt(D // num_heads)
    kern = functools.partial(_decoder_kernel, num_heads=num_heads, scale=scale)

    def act_spec(L):
        return pl.BlockSpec((1, L, D), lambda d, b, l: (b, 0, 0))

    def bias_spec(L):
        return pl.BlockSpec((1, 1, L), lambda d, b, l: (b, 0, 0))

    def w_spec(arr):        # (ndec, n_layers, ...)
        n = arr.ndim
        return pl.BlockSpec((1, 1) + arr.shape[2:],
                            lambda d, b, l, _n=n: (d, l) + (0,) * (_n - 2))

    def norm_spec(arr):     # (ndec, 1, D)
        return pl.BlockSpec((1,) + arr.shape[1:], lambda d, b, l: (d, 0, 0))

    weights = [dec[n] for n in _DEC_NAMES]

    out_shape = (
        jax.ShapeDtypeStruct((ndec, B, Ls, D), jnp.float32),           # final tgt
        jax.ShapeDtypeStruct((n_layers, ndec, B, Ls, D), jnp.float32),  # intermediates
    )
    out_specs = (
        pl.BlockSpec((1, 1, Ls, D), lambda d, b, l: (d, b, 0, 0)),
        pl.BlockSpec((1, 1, 1, Ls, D), lambda d, b, l: (l, d, b, 0, 0)),
    )

    _, inter = pl.pallas_call(
        kern,
        out_shape=out_shape,
        grid=(ndec, B, n_layers),
        in_specs=[act_spec(Ls), act_spec(Lt), act_spec(Ls), act_spec(Lt),
                  bias_spec(Ls), bias_spec(Lt)]
                 + [w_spec(w) for w in weights]
                 + [norm_spec(dec["ng"]), norm_spec(dec["nb"])],
        out_specs=out_specs,
        compiler_params=pltpu.CompilerParams(
            dimension_semantics=("parallel", "parallel", "arbitrary")),
    )(search_tok, memory, pos_s, pos_t, bias_s, bias_t,
      *weights, dec["ng"], dec["nb"])
    return inter


# ----------------------------------------------------------------------------
# Full forward pass
# ----------------------------------------------------------------------------

def transformer_forward(params, template, mask_template, pos_template,
                        search, mask_search, pos_search, *, num_heads):
    B, C, Ht, Wt = template.shape
    _, _, Hs, Ws = search.shape
    Lt, Ls = Ht * Wt, Hs * Ws

    # flatten(2).permute(2,0,1) in PyTorch gives [L, B, C]; all layer math is
    # per-batch independent, so we keep the batch-major [B, L, C] layout that
    # the fused per-batch kernels consume directly.
    t = template.reshape(B, C, Lt).transpose(0, 2, 1)
    s = search.reshape(B, C, Ls).transpose(0, 2, 1)
    pt = pos_template.reshape(B, C, Lt).transpose(0, 2, 1)
    ps = pos_search.reshape(B, C, Ls).transpose(0, 2, 1)
    mt_bias = jnp.where(mask_template.reshape(B, Lt), -1e30, 0.0
                        ).astype(jnp.float32)[:, None, :]
    ms_bias = jnp.where(mask_search.reshape(B, Ls), -1e30, 0.0
                        ).astype(jnp.float32)[:, None, :]

    # encoder over template tokens (all layers fused in one call)
    memory = encoder_call(t, pt, mt_bias, params["enc"], num_heads)

    # decoder & decoder2 (all layers of both decoders fused in one call)
    inter = decoder_call(s, memory, ps, pt, ms_bias, mt_bias,
                         params["dec"], num_heads)    # [n_layers, 2, B, Ls, D]

    # stack-of-intermediates [n_layers, Ls, B, D].transpose(1, 2) in the
    # reference == [n_layers, B, Ls, D] here.
    out = inter[:, 0]
    out2 = inter[:, 1]
    return out, out2


# ----------------------------------------------------------------------------
# Deterministic parameter init (xavier-uniform matrices, zero biases),
# already laid out in the packed / stacked form the kernels consume.
# Projection / FFN matrices are stored in bf16 (halves weight DMA bytes);
# biases / LayerNorm params stay f32.
# ----------------------------------------------------------------------------

def _xavier(key, shape):
    a = math.sqrt(6.0 / (shape[0] + shape[1]))
    return jax.random.uniform(key, shape, jnp.float32, -a, a)


def _init_enc_layer(key, D, F):
    ks = jax.random.split(key, 6)
    wq = _xavier(ks[0], (D, D))
    wk = _xavier(ks[1], (D, D))
    return dict(
        wqk=jnp.concatenate([wq, wk], axis=1).astype(jnp.bfloat16),
        bqk=jnp.zeros((1, 2 * D)),
        wv=_xavier(ks[2], (D, D)).astype(jnp.bfloat16), bv=jnp.zeros((1, D)),
        wo=_xavier(ks[3], (D, D)).astype(jnp.bfloat16), bo=jnp.zeros((1, D)),
        ln1g=jnp.ones((1, D)), ln1b=jnp.zeros((1, D)),
        w1=_xavier(ks[4], (D, F)).astype(jnp.bfloat16), b1=jnp.zeros((1, F)),
        w2=_xavier(ks[5], (F, D)).astype(jnp.bfloat16), b2=jnp.zeros((1, D)),
        ln2g=jnp.ones((1, D)), ln2b=jnp.zeros((1, D)),
    )


def _init_dec_layer(key, D, F):
    ks = jax.random.split(key, 10)
    swq = _xavier(ks[0], (D, D))
    swk = _xavier(ks[1], (D, D))
    return dict(
        swqk=jnp.concatenate([swq, swk], axis=1).astype(jnp.bfloat16),
        sbqk=jnp.zeros((1, 2 * D)),
        swv=_xavier(ks[2], (D, D)).astype(jnp.bfloat16), sbv=jnp.zeros((1, D)),
        swo=_xavier(ks[3], (D, D)).astype(jnp.bfloat16), sbo=jnp.zeros((1, D)),
        ln1g=jnp.ones((1, D)), ln1b=jnp.zeros((1, D)),
        cwq=_xavier(ks[4], (D, D)).astype(jnp.bfloat16), cbq=jnp.zeros((1, D)),
        cwk=_xavier(ks[5], (D, D)).astype(jnp.bfloat16), cbk=jnp.zeros((1, D)),
        cwv=_xavier(ks[6], (D, D)).astype(jnp.bfloat16), cbv=jnp.zeros((1, D)),
        cwo=_xavier(ks[7], (D, D)).astype(jnp.bfloat16), cbo=jnp.zeros((1, D)),
        ln2g=jnp.ones((1, D)), ln2b=jnp.zeros((1, D)),
        w1=_xavier(ks[8], (D, F)).astype(jnp.bfloat16), b1=jnp.zeros((1, F)),
        w2=_xavier(ks[9], (F, D)).astype(jnp.bfloat16), b2=jnp.zeros((1, D)),
        ln3g=jnp.ones((1, D)), ln3b=jnp.zeros((1, D)),
    )


def _stack_trees(trees):
    return jax.tree_util.tree_map(lambda *xs: jnp.stack(xs), *trees)


def init_params(key, D, F, n_enc, n_dec):
    k_enc, k_d1, k_d2 = jax.random.split(key, 3)
    enc = _stack_trees([_init_enc_layer(k, D, F)
                        for k in jax.random.split(k_enc, n_enc)])
    d1 = _stack_trees([_init_dec_layer(k, D, F)
                       for k in jax.random.split(k_d1, n_dec)])
    d2 = _stack_trees([_init_dec_layer(k, D, F)
                       for k in jax.random.split(k_d2, n_dec)])
    dec = _stack_trees([d1, d2])              # leading axis: 2 decoders
    dec["ng"] = jnp.ones((2, 1, D))
    dec["nb"] = jnp.zeros((2, 1, D))
    return dict(enc=enc, dec=dec)


# ----------------------------------------------------------------------------
# Demo
# ----------------------------------------------------------------------------

if __name__ == "__main__":
    D, NUM_HEADS, FF = 32, 4, 64
    N_ENC, N_DEC = 2, 2
    B = 2
    Ht = Wt = 4      # template spatial -> 16 tokens
    Hs = Ws = 8      # search spatial   -> 64 tokens

    root = jax.random.PRNGKey(0)
    kp, kt, ksr, kpt, kps = jax.random.split(root, 5)
    params = init_params(kp, D, FF, N_ENC, N_DEC)

    template = jax.random.normal(kt, (B, D, Ht, Wt), jnp.float32)
    search = jax.random.normal(ksr, (B, D, Hs, Ws), jnp.float32)
    pos_template = jax.random.normal(kpt, (B, D, Ht, Wt), jnp.float32)
    pos_search = jax.random.normal(kps, (B, D, Hs, Ws), jnp.float32)
    # key padding masks (True = padded); mask last template column, search unmasked
    mask_template = jnp.zeros((B, Ht, Wt), jnp.bool_).at[:, :, -1].set(True)
    mask_search = jnp.zeros((B, Hs, Ws), jnp.bool_)

    fwd = jax.jit(transformer_forward, static_argnames=("num_heads",))
    out, out2 = fwd(params, template, mask_template, pos_template,
                    search, mask_search, pos_search, num_heads=NUM_HEADS)
    jax.block_until_ready((out, out2))

    assert out.shape == (N_DEC, B, Hs * Ws, D), out.shape
    assert out2.shape == (N_DEC, B, Hs * Ws, D), out2.shape
    assert bool(jnp.all(jnp.isfinite(out))) and bool(jnp.all(jnp.isfinite(out2)))
    print("KERNEL_OK")
</pallas_src>

<mosaic_0001>
module attributes {stable_mosaic.version = 11 : i64} {
  func.func @_encoder_kernel(%arg0: i32, %arg1: i32, %arg2: memref<1x16x32xf32, #tpu.memory_space<vmem>>, %arg3: memref<1x16x32xf32, #tpu.memory_space<vmem>>, %arg4: memref<1x1x16xf32, #tpu.memory_space<vmem>>, %arg5: memref<1x32x64xbf16, #tpu.memory_space<vmem>>, %arg6: memref<1x1x64xf32, #tpu.memory_space<vmem>>, %arg7: memref<1x32x32xbf16, #tpu.memory_space<vmem>>, %arg8: memref<1x1x32xf32, #tpu.memory_space<vmem>>, %arg9: memref<1x32x32xbf16, #tpu.memory_space<vmem>>, %arg10: memref<1x1x32xf32, #tpu.memory_space<vmem>>, %arg11: memref<1x1x32xf32, #tpu.memory_space<vmem>>, %arg12: memref<1x1x32xf32, #tpu.memory_space<vmem>>, %arg13: memref<1x32x64xbf16, #tpu.memory_space<vmem>>, %arg14: memref<1x1x64xf32, #tpu.memory_space<vmem>>, %arg15: memref<1x64x32xbf16, #tpu.memory_space<vmem>>, %arg16: memref<1x1x32xf32, #tpu.memory_space<vmem>>, %arg17: memref<1x1x32xf32, #tpu.memory_space<vmem>>, %arg18: memref<1x1x32xf32, #tpu.memory_space<vmem>>, %arg19: memref<1x16x32xf32, #tpu.memory_space<vmem>>) attributes {dimension_semantics = [#tpu.dimension_semantics<parallel>, #tpu.dimension_semantics<arbitrary>], iteration_bounds = array<i64: 2, 2>, scalar_prefetch = 0 : i64, scratch_operands = 0 : i64, tpu.core_type = #tpu.core_type<tc>, window_params = [{transform_indices = @transform_0, window_bounds = array<i64: 1, 16, 32>}, {transform_indices = @transform_1, window_bounds = array<i64: 1, 16, 32>}, {transform_indices = @transform_2, window_bounds = array<i64: 1, 1, 16>}, {transform_indices = @transform_3, window_bounds = array<i64: 1, 32, 64>}, {transform_indices = @transform_4, window_bounds = array<i64: 1, 1, 64>}, {transform_indices = @transform_5, window_bounds = array<i64: 1, 32, 32>}, {transform_indices = @transform_6, window_bounds = array<i64: 1, 1, 32>}, {transform_indices = @transform_7, window_bounds = array<i64: 1, 32, 32>}, {transform_indices = @transform_8, window_bounds = array<i64: 1, 1, 32>}, {transform_indices = @transform_9, window_bounds = array<i64: 1, 1, 32>}, {transform_indices = @transform_10, window_bounds = array<i64: 1, 1, 32>}, {transform_indices = @transform_11, window_bounds = array<i64: 1, 32, 64>}, {transform_indices = @transform_12, window_bounds = array<i64: 1, 1, 64>}, {transform_indices = @transform_13, window_bounds = array<i64: 1, 64, 32>}, {transform_indices = @transform_14, window_bounds = array<i64: 1, 1, 32>}, {transform_indices = @transform_15, window_bounds = array<i64: 1, 1, 32>}, {transform_indices = @transform_16, window_bounds = array<i64: 1, 1, 32>}, {transform_indices = @transform_17, window_bounds = array<i64: 1, 16, 32>}]} {
    %c0_i32 = arith.constant 0 : i32
    %0 = arith.cmpi eq, %arg1, %c0_i32 : i32
    %1 = arith.extui %0 : i1 to i32
    %c0_i32_0 = arith.constant 0 : i32
    %2 = arith.cmpi ne, %1, %c0_i32_0 : i32
    scf.if %2 {
      %c0_91 = arith.constant 0 : index
      %c0_92 = arith.constant 0 : index
      %c0_93 = arith.constant 0 : index
      %232 = vector.load %arg2[%c0_91, %c0_92, %c0_93] : memref<1x16x32xf32, #tpu.memory_space<vmem>>, vector<1x16x32xf32>
      %233 = vector.shape_cast %232 : vector<1x16x32xf32> to vector<16x32xf32>
      %c0_94 = arith.constant 0 : index
      %c0_95 = arith.constant 0 : index
      %c0_96 = arith.constant 0 : index
      %234 = vector.load %arg19[%c0_94, %c0_95, %c0_96] : memref<1x16x32xf32, #tpu.memory_space<vmem>>, vector<1x16x32xf32>
      %235 = vector.shape_cast %234 : vector<1x16x32xf32> to vector<16x32xf32>
      %236 = vector.shape_cast %233 : vector<16x32xf32> to vector<1x16x32xf32>
      tpu.vector_store %arg19[%c0_94, %c0_95, %c0_96], %236 {strides = array<i32>} : memref<1x16x32xf32, #tpu.memory_space<vmem>>, vector<1x16x32xf32>,
    } else {
    }
    %c0 = arith.constant 0 : index
    %c0_1 = arith.constant 0 : index
    %c0_2 = arith.constant 0 : index
    %3 = vector.load %arg19[%c0, %c0_1, %c0_2] : memref<1x16x32xf32, #tpu.memory_space<vmem>>, vector<1x16x32xf32>
    %4 = vector.shape_cast %3 : vector<1x16x32xf32> to vector<16x32xf32>
    %c0_3 = arith.constant 0 : index
    %c0_4 = arith.constant 0 : index
    %c0_5 = arith.constant 0 : index
    %5 = vector.load %arg3[%c0_3, %c0_4, %c0_5] : memref<1x16x32xf32, #tpu.memory_space<vmem>>, vector<1x16x32xf32>
    %6 = vector.shape_cast %5 : vector<1x16x32xf32> to vector<16x32xf32>
    %7 = arith.addf %4, %6 : vector<16x32xf32>
    %c0_6 = arith.constant 0 : index
    %c0_7 = arith.constant 0 : index
    %c0_8 = arith.constant 0 : index
    %8 = vector.load %arg4[%c0_6, %c0_7, %c0_8] : memref<1x1x16xf32, #tpu.memory_space<vmem>>, vector<1x1x16xf32>
    %9 = vector.shape_cast %8 : vector<1x1x16xf32> to vector<1x16xf32>
    %c0_9 = arith.constant 0 : index
    %c0_10 = arith.constant 0 : index
    %c0_11 = arith.constant 0 : index
    %10 = vector.load %arg5[%c0_9, %c0_10, %c0_11] : memref<1x32x64xbf16, #tpu.memory_space<vmem>>, vector<1x32x64xbf16>
    %11 = vector.shape_cast %10 : vector<1x32x64xbf16> to vector<32x64xbf16>
    %12 = arith.truncf %7 : vector<16x32xf32> to vector<16x32xbf16>
    %cst = arith.constant dense<0.000000e+00> : vector<16x64xf32>
    %13 = tpu.matmul %12, %11, %cst {dimension_numbers = #tpu.dot_dimension_numbers<[1], [0], [0], [1], [0, 0, 1, 1], [], []>} : vector<16x32xbf16>, vector<32x64xbf16>, vector<16x64xf32> -> vector<16x64xf32>
    %c0_12 = arith.constant 0 : index
    %c0_13 = arith.constant 0 : index
    %c0_14 = arith.constant 0 : index
    %14 = vector.load %arg6[%c0_12, %c0_13, %c0_14] : memref<1x1x64xf32, #tpu.memory_space<vmem>>, vector<1x1x64xf32>
    %15 = vector.shape_cast %14 : vector<1x1x64xf32> to vector<1x64xf32>
    %16 = vector.broadcast %15 : vector<1x64xf32> to vector<16x64xf32>
    %17 = arith.addf %13, %16 : vector<16x64xf32>
    %18 = vector.extract_strided_slice %17 {offsets = [0, 0], sizes = [16, 32], strides = [1, 1]} : vector<16x64xf32> to vector<16x32xf32>
    %19 = vector.extract_strided_slice %17 {offsets = [0, 32], sizes = [16, 32], strides = [1, 1]} : vector<16x64xf32> to vector<16x32xf32>
    %c0_15 = arith.constant 0 : index
    %c0_16 = arith.constant 0 : index
    %c0_17 = arith.constant 0 : index
    %20 = vector.load %arg7[%c0_15, %c0_16, %c0_17] : memref<1x32x32xbf16, #tpu.memory_space<vmem>>, vector<1x32x32xbf16>
    %21 = vector.shape_cast %20 : vector<1x32x32xbf16> to vector<32x32xbf16>
    %22 = arith.truncf %4 : vector<16x32xf32> to vector<16x32xbf16>
    %cst_18 = arith.constant dense<0.000000e+00> : vector<16x32xf32>
    %23 = tpu.matmul %22, %21, %cst_18 {dimension_numbers = #tpu.dot_dimension_numbers<[1], [0], [0], [1], [0, 0, 1, 1], [], []>} : vector<16x32xbf16>, vector<32x32xbf16>, vector<16x32xf32> -> vector<16x32xf32>
    %c0_19 = arith.constant 0 : index
    %c0_20 = arith.constant 0 : index
    %c0_21 = arith.constant 0 : index
    %24 = vector.load %arg8[%c0_19, %c0_20, %c0_21] : memref<1x1x32xf32, #tpu.memory_space<vmem>>, vector<1x1x32xf32>
    %25 = vector.shape_cast %24 : vector<1x1x32xf32> to vector<1x32xf32>
    %26 = vector.broadcast %25 : vector<1x32xf32> to vector<16x32xf32>
    %27 = arith.addf %23, %26 : vector<16x32xf32>
    %28 = tpu.iota {dimensions = array<i32: 1>} : vector<1x32xi32>
    %cst_22 = arith.constant 0.353553385 : f32
    %29 = vector.broadcast %cst_22 : f32 to vector<16x32xf32>
    %30 = arith.mulf %18, %29 : vector<16x32xf32>
    %31 = arith.truncf %30 : vector<16x32xf32> to vector<16x32xbf16>
    %cst_23 = arith.constant 0.000000e+00 : f32
    %32 = vector.broadcast %cst_23 : f32 to vector<16x32xf32>
    %c0_i32_24 = arith.constant 0 : i32
    %33 = vector.broadcast %c0_i32_24 : i32 to vector<1x32xi32>
    %34 = arith.cmpi sge, %28, %33 : vector<1x32xi32>
    %c8_i32 = arith.constant 8 : i32
    %35 = vector.broadcast %c8_i32 : i32 to vector<1x32xi32>
    %36 = arith.cmpi slt, %28, %35 : vector<1x32xi32>
    %37 = arith.andi %34, %36 : vector<1x32xi1>
    %38 = arith.extui %37 : vector<1x32xi1> to vector<1x32xi32>
    %39 = arith.sitofp %38 : vector<1x32xi32> to vector<1x32xf32>
    %40 = vector.broadcast %39 : vector<1x32xf32> to vector<16x32xf32>
    %41 = arith.mulf %19, %40 : vector<16x32xf32>
    %42 = arith.truncf %41 : vector<16x32xf32> to vector<16x32xbf16>
    %43 = vector.broadcast %39 : vector<1x32xf32> to vector<16x32xf32>
    %44 = arith.mulf %27, %43 : vector<16x32xf32>
    %45 = arith.truncf %44 : vector<16x32xf32> to vector<16x32xbf16>
    %cst_25 = arith.constant dense<0.000000e+00> : vector<16x16xf32>
    %46 = tpu.matmul %31, %42, %cst_25 {dimension_numbers = #tpu.dot_dimension_numbers<[1], [1], [0], [0], [0, 0, 1, 0], [], []>} : vector<16x32xbf16>, vector<16x32xbf16>, vector<16x16xf32> -> vector<16x16xf32>
    %47 = vector.broadcast %9 : vector<1x16xf32> to vector<16x16xf32>
    %48 = arith.addf %46, %47 : vector<16x16xf32>
    %cst_26 = arith.constant dense<0xFF800000> : vector<16xf32>
    %49 = vector.multi_reduction <maximumf>, %48, %cst_26 [1] : vector<16x16xf32> to vector<16xf32>
    %50 = vector.shape_cast %49 : vector<16xf32> to vector<16x1xf32>
    %51 = vector.broadcast %50 : vector<16x1xf32> to vector<16x16xf32>
    %52 = arith.subf %48, %51 : vector<16x16xf32>
    %53 = math.exp %52 : vector<16x16xf32>
    %cst_27 = arith.constant dense<0.000000e+00> : vector<16xf32>
    %54 = vector.multi_reduction <add>, %53, %cst_27 [1] : vector<16x16xf32> to vector<16xf32>
    %55 = vector.shape_cast %54 : vector<16xf32> to vector<16x1xf32>
    %56 = tpu.reciprocal %55 {approx = true} : vector<16x1xf32> -> vector<16x1xf32>
    %57 = vector.broadcast %56 : vector<16x1xf32> to vector<16x16xf32>
    %58 = arith.mulf %53, %57 : vector<16x16xf32>
    %59 = arith.truncf %58 : vector<16x16xf32> to vector<16x16xbf16>
    %cst_28 = arith.constant dense<0.000000e+00> : vector<16x32xf32>
    %60 = tpu.matmul %59, %45, %cst_28 {dimension_numbers = #tpu.dot_dimension_numbers<[1], [0], [0], [1], [0, 0, 1, 1], [], []>} : vector<16x16xbf16>, vector<16x32xbf16>, vector<16x32xf32> -> vector<16x32xf32>
    %61 = arith.addf %32, %60 : vector<16x32xf32>
    %c8_i32_29 = arith.constant 8 : i32
    %62 = vector.broadcast %c8_i32_29 : i32 to vector<1x32xi32>
    %63 = arith.cmpi sge, %28, %62 : vector<1x32xi32>
    %c16_i32 = arith.constant 16 : i32
    %64 = vector.broadcast %c16_i32 : i32 to vector<1x32xi32>
    %65 = arith.cmpi slt, %28, %64 : vector<1x32xi32>
    %66 = arith.andi %63, %65 : vector<1x32xi1>
    %67 = arith.extui %66 : vector<1x32xi1> to vector<1x32xi32>
    %68 = arith.sitofp %67 : vector<1x32xi32> to vector<1x32xf32>
    %69 = vector.broadcast %68 : vector<1x32xf32> to vector<16x32xf32>
    %70 = arith.mulf %19, %69 : vector<16x32xf32>
    %71 = arith.truncf %70 : vector<16x32xf32> to vector<16x32xbf16>
    %72 = vector.broadcast %68 : vector<1x32xf32> to vector<16x32xf32>
    %73 = arith.mulf %27, %72 : vector<16x32xf32>
    %74 = arith.truncf %73 : vector<16x32xf32> to vector<16x32xbf16>
    %cst_30 = arith.constant dense<0.000000e+00> : vector<16x16xf32>
    %75 = tpu.matmul %31, %71, %cst_30 {dimension_numbers = #tpu.dot_dimension_numbers<[1], [1], [0], [0], [0, 0, 1, 0], [], []>} : vector<16x32xbf16>, vector<16x32xbf16>, vector<16x16xf32> -> vector<16x16xf32>
    %76 = vector.broadcast %9 : vector<1x16xf32> to vector<16x16xf32>
    %77 = arith.addf %75, %76 : vector<16x16xf32>
    %cst_31 = arith.constant dense<0xFF800000> : vector<16xf32>
    %78 = vector.multi_reduction <maximumf>, %77, %cst_31 [1] : vector<16x16xf32> to vector<16xf32>
    %79 = vector.shape_cast %78 : vector<16xf32> to vector<16x1xf32>
    %80 = vector.broadcast %79 : vector<16x1xf32> to vector<16x16xf32>
    %81 = arith.subf %77, %80 : vector<16x16xf32>
    %82 = math.exp %81 : vector<16x16xf32>
    %cst_32 = arith.constant dense<0.000000e+00> : vector<16xf32>
    %83 = vector.multi_reduction <add>, %82, %cst_32 [1] : vector<16x16xf32> to vector<16xf32>
    %84 = vector.shape_cast %83 : vector<16xf32> to vector<16x1xf32>
    %85 = tpu.reciprocal %84 {approx = true} : vector<16x1xf32> -> vector<16x1xf32>
    %86 = vector.broadcast %85 : vector<16x1xf32> to vector<16x16xf32>
    %87 = arith.mulf %82, %86 : vector<16x16xf32>
    %88 = arith.truncf %87 : vector<16x16xf32> to vector<16x16xbf16>
    %cst_33 = arith.constant dense<0.000000e+00> : vector<16x32xf32>
    %89 = tpu.matmul %88, %74, %cst_33 {dimension_numbers = #tpu.dot_dimension_numbers<[1], [0], [0], [1], [0, 0, 1, 1], [], []>} : vector<16x16xbf16>, vector<16x32xbf16>, vector<16x32xf32> -> vector<16x32xf32>
    %90 = arith.addf %61, %89 : vector<16x32xf32>
    %c16_i32_34 = arith.constant 16 : i32
    %91 = vector.broadcast %c16_i32_34 : i32 to vector<1x32xi32>
    %92 = arith.cmpi sge, %28, %91 : vector<1x32xi32>
    %c24_i32 = arith.constant 24 : i32
    %93 = vector.broadcast %c24_i32 : i32 to vector<1x32xi32>
    %94 = arith.cmpi slt, %28, %93 : vector<1x32xi32>
    %95 = arith.andi %92, %94 : vector<1x32xi1>
    %96 = arith.extui %95 : vector<1x32xi1> to vector<1x32xi32>
    %97 = arith.sitofp %96 : vector<1x32xi32> to vector<1x32xf32>
    %98 = vector.broadcast %97 : vector<1x32xf32> to vector<16x32xf32>
    %99 = arith.mulf %19, %98 : vector<16x32xf32>
    %100 = arith.truncf %99 : vector<16x32xf32> to vector<16x32xbf16>
    %101 = vector.broadcast %97 : vector<1x32xf32> to vector<16x32xf32>
    %102 = arith.mulf %27, %101 : vector<16x32xf32>
    %103 = arith.truncf %102 : vector<16x32xf32> to vector<16x32xbf16>
    %cst_35 = arith.constant dense<0.000000e+00> : vector<16x16xf32>
    %104 = tpu.matmul %31, %100, %cst_35 {dimension_numbers = #tpu.dot_dimension_numbers<[1], [1], [0], [0], [0, 0, 1, 0], [], []>} : vector<16x32xbf16>, vector<16x32xbf16>, vector<16x16xf32> -> vector<16x16xf32>
    %105 = vector.broadcast %9 : vector<1x16xf32> to vector<16x16xf32>
    %106 = arith.addf %104, %105 : vector<16x16xf32>
    %cst_36 = arith.constant dense<0xFF800000> : vector<16xf32>
    %107 = vector.multi_reduction <maximumf>, %106, %cst_36 [1] : vector<16x16xf32> to vector<16xf32>
    %108 = vector.shape_cast %107 : vector<16xf32> to vector<16x1xf32>
    %109 = vector.broadcast %108 : vector<16x1xf32> to vector<16x16xf32>
    %110 = arith.subf %106, %109 : vector<16x16xf32>
    %111 = math.exp %110 : vector<16x16xf32>
    %cst_37 = arith.constant dense<0.000000e+00> : vector<16xf32>
    %112 = vector.multi_reduction <add>, %111, %cst_37 [1] : vector<16x16xf32> to vector<16xf32>
    %113 = vector.shape_cast %112 : vector<16xf32> to vector<16x1xf32>
    %114 = tpu.reciprocal %113 {approx = true} : vector<16x1xf32> -> vector<16x1xf32>
    %115 = vector.broadcast %114 : vector<16x1xf32> to vector<16x16xf32>
    %116 = arith.mulf %111, %115 : vector<16x16xf32>
    %117 = arith.truncf %116 : vector<16x16xf32> to vector<16x16xbf16>
    %cst_38 = arith.constant dense<0.000000e+00> : vector<16x32xf32>
    %118 = tpu.matmul %117, %103, %cst_38 {dimension_numbers = #tpu.dot_dimension_numbers<[1], [0], [0], [1], [0, 0, 1, 1], [], []>} : vector<16x16xbf16>, vector<16x32xbf16>, vector<16x32xf32> -> vector<16x32xf32>
    %119 = arith.addf %90, %118 : vector<16x32xf32>
    %c24_i32_39 = arith.constant 24 : i32
    %120 = vector.broadcast %c24_i32_39 : i32 to vector<1x32xi32>
    %121 = arith.cmpi sge, %28, %120 : vector<1x32xi32>
    %c32_i32 = arith.constant 32 : i32
    %122 = vector.broadcast %c32_i32 : i32 to vector<1x32xi32>
    %123 = arith.cmpi slt, %28, %122 : vector<1x32xi32>
    %124 = arith.andi %121, %123 : vector<1x32xi1>
    %125 = arith.extui %124 : vector<1x32xi1> to vector<1x32xi32>
    %126 = arith.sitofp %125 : vector<1x32xi32> to vector<1x32xf32>
    %127 = vector.broadcast %126 : vector<1x32xf32> to vector<16x32xf32>
    %128 = arith.mulf %19, %127 : vector<16x32xf32>
    %129 = arith.truncf %128 : vector<16x32xf32> to vector<16x32xbf16>
    %130 = vector.broadcast %126 : vector<1x32xf32> to vector<16x32xf32>
    %131 = arith.mulf %27, %130 : vector<16x32xf32>
    %132 = arith.truncf %131 : vector<16x32xf32> to vector<16x32xbf16>
    %cst_40 = arith.constant dense<0.000000e+00> : vector<16x16xf32>
    %133 = tpu.matmul %31, %129, %cst_40 {dimension_numbers = #tpu.dot_dimension_numbers<[1], [1], [0], [0], [0, 0, 1, 0], [], []>} : vector<16x32xbf16>, vector<16x32xbf16>, vector<16x16xf32> -> vector<16x16xf32>
    %134 = vector.broadcast %9 : vector<1x16xf32> to vector<16x16xf32>
    %135 = arith.addf %133, %134 : vector<16x16xf32>
    %cst_41 = arith.constant dense<0xFF800000> : vector<16xf32>
    %136 = vector.multi_reduction <maximumf>, %135, %cst_41 [1] : vector<16x16xf32> to vector<16xf32>
    %137 = vector.shape_cast %136 : vector<16xf32> to vector<16x1xf32>
    %138 = vector.broadcast %137 : vector<16x1xf32> to vector<16x16xf32>
    %139 = arith.subf %135, %138 : vector<16x16xf32>
    %140 = math.exp %139 : vector<16x16xf32>
    %cst_42 = arith.constant dense<0.000000e+00> : vector<16xf32>
    %141 = vector.multi_reduction <add>, %140, %cst_42 [1] : vector<16x16xf32> to vector<16xf32>
    %142 = vector.shape_cast %141 : vector<16xf32> to vector<16x1xf32>
    %143 = tpu.reciprocal %142 {approx = true} : vector<16x1xf32> -> vector<16x1xf32>
    %144 = vector.broadcast %143 : vector<16x1xf32> to vector<16x16xf32>
    %145 = arith.mulf %140, %144 : vector<16x16xf32>
    %146 = arith.truncf %145 : vector<16x16xf32> to vector<16x16xbf16>
    %cst_43 = arith.constant dense<0.000000e+00> : vector<16x32xf32>
    %147 = tpu.matmul %146, %132, %cst_43 {dimension_numbers = #tpu.dot_dimension_numbers<[1], [0], [0], [1], [0, 0, 1, 1], [], []>} : vector<16x16xbf16>, vector<16x32xbf16>, vector<16x32xf32> -> vector<16x32xf32>
    %148 = arith.addf %119, %147 : vector<16x32xf32>
    %c0_44 = arith.constant 0 : index
    %c0_45 = arith.constant 0 : index
    %c0_46 = arith.constant 0 : index
    %149 = vector.load %arg9[%c0_44, %c0_45, %c0_46] : memref<1x32x32xbf16, #tpu.memory_space<vmem>>, vector<1x32x32xbf16>
    %150 = vector.shape_cast %149 : vector<1x32x32xbf16> to vector<32x32xbf16>
    %151 = arith.truncf %148 : vector<16x32xf32> to vector<16x32xbf16>
    %cst_47 = arith.constant dense<0.000000e+00> : vector<16x32xf32>
    %152 = tpu.matmul %151, %150, %cst_47 {dimension_numbers = #tpu.dot_dimension_numbers<[1], [0], [0], [1], [0, 0, 1, 1], [], []>} : vector<16x32xbf16>, vector<32x32xbf16>, vector<16x32xf32> -> vector<16x32xf32>
    %c0_48 = arith.constant 0 : index
    %c0_49 = arith.constant 0 : index
    %c0_50 = arith.constant 0 : index
    %153 = vector.load %arg10[%c0_48, %c0_49, %c0_50] : memref<1x1x32xf32, #tpu.memory_space<vmem>>, vector<1x1x32xf32>
    %154 = vector.shape_cast %153 : vector<1x1x32xf32> to vector<1x32xf32>
    %155 = vector.broadcast %154 : vector<1x32xf32> to vector<16x32xf32>
    %156 = arith.addf %152, %155 : vector<16x32xf32>
    %157 = arith.addf %4, %156 : vector<16x32xf32>
    %c0_51 = arith.constant 0 : index
    %c0_52 = arith.constant 0 : index
    %c0_53 = arith.constant 0 : index
    %158 = vector.load %arg11[%c0_51, %c0_52, %c0_53] : memref<1x1x32xf32, #tpu.memory_space<vmem>>, vector<1x1x32xf32>
    %159 = vector.shape_cast %158 : vector<1x1x32xf32> to vector<1x32xf32>
    %c0_54 = arith.constant 0 : index
    %c0_55 = arith.constant 0 : index
    %c0_56 = arith.constant 0 : index
    %160 = vector.load %arg12[%c0_54, %c0_55, %c0_56] : memref<1x1x32xf32, #tpu.memory_space<vmem>>, vector<1x1x32xf32>
    %161 = vector.shape_cast %160 : vector<1x1x32xf32> to vector<1x32xf32>
    %cst_57 = arith.constant dense<0.000000e+00> : vector<16xf32>
    %162 = vector.multi_reduction <add>, %157, %cst_57 [1] : vector<16x32xf32> to vector<16xf32>
    %163 = vector.shape_cast %162 : vector<16xf32> to vector<16x1xf32>
    %cst_58 = arith.constant 3.200000e+01 : f32
    %164 = vector.broadcast %cst_58 : f32 to vector<16x1xf32>
    %165 = arith.divf %163, %164 : vector<16x1xf32>
    %166 = vector.broadcast %165 : vector<16x1xf32> to vector<16x32xf32>
    %167 = arith.subf %157, %166 : vector<16x32xf32>
    %168 = arith.mulf %167, %167 : vector<16x32xf32>
    %cst_59 = arith.constant dense<0.000000e+00> : vector<16xf32>
    %169 = vector.multi_reduction <add>, %168, %cst_59 [1] : vector<16x32xf32> to vector<16xf32>
    %170 = vector.shape_cast %169 : vector<16xf32> to vector<16x1xf32>
    %cst_60 = arith.constant 3.200000e+01 : f32
    %171 = vector.broadcast %cst_60 : f32 to vector<16x1xf32>
    %172 = arith.divf %170, %171 : vector<16x1xf32>
    %173 = vector.broadcast %165 : vector<16x1xf32> to vector<16x32xf32>
    %174 = arith.subf %157, %173 : vector<16x32xf32>
    %cst_61 = arith.constant 9.99999974E-6 : f32
    %175 = vector.broadcast %cst_61 : f32 to vector<16x1xf32>
    %176 = arith.addf %172, %175 : vector<16x1xf32>
    %177 = math.rsqrt %176 : vector<16x1xf32>
    %178 = vector.broadcast %177 : vector<16x1xf32> to vector<16x32xf32>
    %179 = arith.mulf %174, %178 : vector<16x32xf32>
    %180 = vector.broadcast %159 : vector<1x32xf32> to vector<16x32xf32>
    %181 = arith.mulf %179, %180 : vector<16x32xf32>
    %182 = vector.broadcast %161 : vector<1x32xf32> to vector<16x32xf32>
    %183 = arith.addf %181, %182 : vector<16x32xf32>
    %c0_62 = arith.constant 0 : index
    %c0_63 = arith.constant 0 : index
    %c0_64 = arith.constant 0 : index
    %184 = vector.load %arg13[%c0_62, %c0_63, %c0_64] : memref<1x32x64xbf16, #tpu.memory_space<vmem>>, vector<1x32x64xbf16>
    %185 = vector.shape_cast %184 : vector<1x32x64xbf16> to vector<32x64xbf16>
    %186 = arith.truncf %183 : vector<16x32xf32> to vector<16x32xbf16>
    %cst_65 = arith.constant dense<0.000000e+00> : vector<16x64xf32>
    %187 = tpu.matmul %186, %185, %cst_65 {dimension_numbers = #tpu.dot_dimension_numbers<[1], [0], [0], [1], [0, 0, 1, 1], [], []>} : vector<16x32xbf16>, vector<32x64xbf16>, vector<16x64xf32> -> vector<16x64xf32>
    %c0_66 = arith.constant 0 : index
    %c0_67 = arith.constant 0 : index
    %c0_68 = arith.constant 0 : index
    %188 = vector.load %arg14[%c0_66, %c0_67, %c0_68] : memref<1x1x64xf32, #tpu.memory_space<vmem>>, vector<1x1x64xf32>
    %189 = vector.shape_cast %188 : vector<1x1x64xf32> to vector<1x64xf32>
    %190 = vector.broadcast %189 : vector<1x64xf32> to vector<16x64xf32>
    %191 = arith.addf %187, %190 : vector<16x64xf32>
    %cst_69 = arith.constant 0.000000e+00 : f32
    %192 = vector.broadcast %cst_69 : f32 to vector<16x64xf32>
    %193 = arith.maximumf %191, %192 : vector<16x64xf32>
    %c0_70 = arith.constant 0 : index
    %c0_71 = arith.constant 0 : index
    %c0_72 = arith.constant 0 : index
    %194 = vector.load %arg15[%c0_70, %c0_71, %c0_72] : memref<1x64x32xbf16, #tpu.memory_space<vmem>>, vector<1x64x32xbf16>
    %195 = vector.shape_cast %194 : vector<1x64x32xbf16> to vector<64x32xbf16>
    %196 = arith.truncf %193 : vector<16x64xf32> to vector<16x64xbf16>
    %cst_73 = arith.constant dense<0.000000e+00> : vector<16x32xf32>
    %197 = tpu.matmul %196, %195, %cst_73 {dimension_numbers = #tpu.dot_dimension_numbers<[1], [0], [0], [1], [0, 0, 1, 1], [], []>} : vector<16x64xbf16>, vector<64x32xbf16>, vector<16x32xf32> -> vector<16x32xf32>
    %c0_74 = arith.constant 0 : index
    %c0_75 = arith.constant 0 : index
    %c0_76 = arith.constant 0 : index
    %198 = vector.load %arg16[%c0_74, %c0_75, %c0_76] : memref<1x1x32xf32, #tpu.memory_space<vmem>>, vector<1x1x32xf32>
    %199 = vector.shape_cast %198 : vector<1x1x32xf32> to vector<1x32xf32>
    %200 = vector.broadcast %199 : vector<1x32xf32> to vector<16x32xf32>
    %201 = arith.addf %197, %200 : vector<16x32xf32>
    %202 = arith.addf %183, %201 : vector<16x32xf32>
    %c0_77 = arith.constant 0 : index
    %c0_78 = arith.constant 0 : index
    %c0_79 = arith.constant 0 : index
    %203 = vector.load %arg17[%c0_77, %c0_78, %c0_79] : memref<1x1x32xf32, #tpu.memory_space<vmem>>, vector<1x1x32xf32>
    %204 = vector.shape_cast %203 : vector<1x1x32xf32> to vector<1x32xf32>
    %c0_80 = arith.constant 0 : index
    %c0_81 = arith.constant 0 : index
    %c0_82 = arith.constant 0 : index
    %205 = vector.load %arg18[%c0_80, %c0_81, %c0_82] : memref<1x1x32xf32, #tpu.memory_space<vmem>>, vector<1x1x32xf32>
    %206 = vector.shape_cast %205 : vector<1x1x32xf32> to vector<1x32xf32>
    %cst_83 = arith.constant dense<0.000000e+00> : vector<16xf32>
    %207 = vector.multi_reduction <add>, %202, %cst_83 [1] : vector<16x32xf32> to vector<16xf32>
    %208 = vector.shape_cast %207 : vector<16xf32> to vector<16x1xf32>
    %cst_84 = arith.constant 3.200000e+01 : f32
    %209 = vector.broadcast %cst_84 : f32 to vector<16x1xf32>
    %210 = arith.divf %208, %209 : vector<16x1xf32>
    %211 = vector.broadcast %210 : vector<16x1xf32> to vector<16x32xf32>
    %212 = arith.subf %202, %211 : vector<16x32xf32>
    %213 = arith.mulf %212, %212 : vector<16x32xf32>
    %cst_85 = arith.constant dense<0.000000e+00> : vector<16xf32>
    %214 = vector.multi_reduction <add>, %213, %cst_85 [1] : vector<16x32xf32> to vector<16xf32>
    %215 = vector.shape_cast %214 : vector<16xf32> to vector<16x1xf32>
    %cst_86 = arith.constant 3.200000e+01 : f32
    %216 = vector.broadcast %cst_86 : f32 to vector<16x1xf32>
    %217 = arith.divf %215, %216 : vector<16x1xf32>
    %218 = vector.broadcast %210 : vector<16x1xf32> to vector<16x32xf32>
    %219 = arith.subf %202, %218 : vector<16x32xf32>
    %cst_87 = arith.constant 9.99999974E-6 : f32
    %220 = vector.broadcast %cst_87 : f32 to vector<16x1xf32>
    %221 = arith.addf %217, %220 : vector<16x1xf32>
    %222 = math.rsqrt %221 : vector<16x1xf32>
    %223 = vector.broadcast %222 : vector<16x1xf32> to vector<16x32xf32>
    %224 = arith.mulf %219, %223 : vector<16x32xf32>
    %225 = vector.broadcast %204 : vector<1x32xf32> to vector<16x32xf32>
    %226 = arith.mulf %224, %225 : vector<16x32xf32>
    %227 = vector.broadcast %206 : vector<1x32xf32> to vector<16x32xf32>
    %228 = arith.addf %226, %227 : vector<16x32xf32>
    %c0_88 = arith.constant 0 : index
    %c0_89 = arith.constant 0 : index
    %c0_90 = arith.constant 0 : index
    %229 = vector.load %arg19[%c0_88, %c0_89, %c0_90] : memref<1x16x32xf32, #tpu.memory_space<vmem>>, vector<1x16x32xf32>
    %230 = vector.shape_cast %229 : vector<1x16x32xf32> to vector<16x32xf32>
    %231 = vector.shape_cast %228 : vector<16x32xf32> to vector<1x16x32xf32>
    tpu.vector_store %arg19[%c0_88, %c0_89, %c0_90], %231 {strides = array<i32>} : memref<1x16x32xf32, #tpu.memory_space<vmem>>, vector<1x16x32xf32>,
    return
  }
  func.func @transform_0(%arg0: i32, %arg1: i32) -> (i32, i32, i32) {
    %c0_i32 = arith.constant 0 : i32
    %c0_i32_0 = arith.constant 0 : i32
    %c0_i32_1 = arith.constant 0 : i32
    return %arg0, %c0_i32, %c0_i32_0 : i32, i32, i32
  }
  func.func @transform_1(%arg0: i32, %arg1: i32) -> (i32, i32, i32) {
    %c0_i32 = arith.constant 0 : i32
    %c0_i32_0 = arith.constant 0 : i32
    %c0_i32_1 = arith.constant 0 : i32
    return %arg0, %c0_i32, %c0_i32_0 : i32, i32, i32
  }
  func.func @transform_2(%arg0: i32, %arg1: i32) -> (i32, i32, i32) {
    %c0_i32 = arith.constant 0 : i32
    %c0_i32_0 = arith.constant 0 : i32
    %c0_i32_1 = arith.constant 0 : i32
    return %arg0, %c0_i32, %c0_i32_0 : i32, i32, i32
  }
  func.func @transform_3(%arg0: i32, %arg1: i32) -> (i32, i32, i32) {
    %c0_i32 = arith.constant 0 : i32
    %c0_i32_0 = arith.constant 0 : i32
    %c0_i32_1 = arith.constant 0 : i32
    return %arg1, %c0_i32, %c0_i32_0 : i32, i32, i32
  }
  func.func @transform_4(%arg0: i32, %arg1: i32) -> (i32, i32, i32) {
    %c0_i32 = arith.constant 0 : i32
    %c0_i32_0 = arith.constant 0 : i32
    %c0_i32_1 = arith.constant 0 : i32
    return %arg1, %c0_i32, %c0_i32_0 : i32, i32, i32
  }
  func.func @transform_5(%arg0: i32, %arg1: i32) -> (i32, i32, i32) {
    %c0_i32 = arith.constant 0 : i32
    %c0_i32_0 = arith.constant 0 : i32
    %c0_i32_1 = arith.constant 0 : i32
    return %arg1, %c0_i32, %c0_i32_0 : i32, i32, i32
  }
  func.func @transform_6(%arg0: i32, %arg1: i32) -> (i32, i32, i32) {
    %c0_i32 = arith.constant 0 : i32
    %c0_i32_0 = arith.constant 0 : i32
    %c0_i32_1 = arith.constant 0 : i32
    return %arg1, %c0_i32, %c0_i32_0 : i32, i32, i32
  }
  func.func @transform_7(%arg0: i32, %arg1: i32) -> (i32, i32, i32) {
    %c0_i32 = arith.constant 0 : i32
    %c0_i32_0 = arith.constant 0 : i32
    %c0_i32_1 = arith.constant 0 : i32
    return %arg1, %c0_i32, %c0_i32_0 : i32, i32, i32
  }
  func.func @transform_8(%arg0: i32, %arg1: i32) -> (i32, i32, i32) {
    %c0_i32 = arith.constant 0 : i32
    %c0_i32_0 = arith.constant 0 : i32
    %c0_i32_1 = arith.constant 0 : i32
    return %arg1, %c0_i32, %c0_i32_0 : i32, i32, i32
  }
  func.func @transform_9(%arg0: i32, %arg1: i32) -> (i32, i32, i32) {
    %c0_i32 = arith.constant 0 : i32
    %c0_i32_0 = arith.constant 0 : i32
    %c0_i32_1 = arith.constant 0 : i32
    return %arg1, %c0_i32, %c0_i32_0 : i32, i32, i32
  }
  func.func @transform_10(%arg0: i32, %arg1: i32) -> (i32, i32, i32) {
    %c0_i32 = arith.constant 0 : i32
    %c0_i32_0 = arith.constant 0 : i32
    %c0_i32_1 = arith.constant 0 : i32
    return %arg1, %c0_i32, %c0_i32_0 : i32, i32, i32
  }
  func.func @transform_11(%arg0: i32, %arg1: i32) -> (i32, i32, i32) {
    %c0_i32 = arith.constant 0 : i32
    %c0_i32_0 = arith.constant 0 : i32
    %c0_i32_1 = arith.constant 0 : i32
    return %arg1, %c0_i32, %c0_i32_0 : i32, i32, i32
  }
  func.func @transform_12(%arg0: i32, %arg1: i32) -> (i32, i32, i32) {
    %c0_i32 = arith.constant 0 : i32
    %c0_i32_0 = arith.constant 0 : i32
    %c0_i32_1 = arith.constant 0 : i32
    return %arg1, %c0_i32, %c0_i32_0 : i32, i32, i32
  }
  func.func @transform_13(%arg0: i32, %arg1: i32) -> (i32, i32, i32) {
    %c0_i32 = arith.constant 0 : i32
    %c0_i32_0 = arith.constant 0 : i32
    %c0_i32_1 = arith.constant 0 : i32
    return %arg1, %c0_i32, %c0_i32_0 : i32, i32, i32
  }
  func.func @transform_14(%arg0: i32, %arg1: i32) -> (i32, i32, i32) {
    %c0_i32 = arith.constant 0 : i32
    %c0_i32_0 = arith.constant 0 : i32
    %c0_i32_1 = arith.constant 0 : i32
    return %arg1, %c0_i32, %c0_i32_0 : i32, i32, i32
  }
  func.func @transform_15(%arg0: i32, %arg1: i32) -> (i32, i32, i32) {
    %c0_i32 = arith.constant 0 : i32
    %c0_i32_0 = arith.constant 0 : i32
    %c0_i32_1 = arith.constant 0 : i32
    return %arg1, %c0_i32, %c0_i32_0 : i32, i32, i32
  }
  func.func @transform_16(%arg0: i32, %arg1: i32) -> (i32, i32, i32) {
    %c0_i32 = arith.constant 0 : i32
    %c0_i32_0 = arith.constant 0 : i32
    %c0_i32_1 = arith.constant 0 : i32
    return %arg1, %c0_i32, %c0_i32_0 : i32, i32, i32
  }
  func.func @transform_17(%arg0: i32, %arg1: i32) -> (i32, i32, i32) {
    %c0_i32 = arith.constant 0 : i32
    %c0_i32_0 = arith.constant 0 : i32
    %c0_i32_1 = arith.constant 0 : i32
    return %arg0, %c0_i32, %c0_i32_0 : i32, i32, i32
  }
}

module attributes {stable_mosaic.version = 11 : i64} {
  func.func @_decoder_kernel(%arg0: i32, %arg1: i32, %arg2: i32, %arg3: memref<1x64x32xf32, #tpu.memory_space<vmem>>, %arg4: memref<1x16x32xf32, #tpu.memory_space<vmem>>, %arg5: memref<1x64x32xf32, #tpu.memory_space<vmem>>, %arg6: memref<1x16x32xf32, #tpu.memory_space<vmem>>, %arg7: memref<1x1x64xf32, #tpu.memory_space<vmem>>, %arg8: memref<1x1x16xf32, #tpu.memory_space<vmem>>, %arg9: memref<1x1x32x64xbf16, #tpu.memory_space<vmem>>, %arg10: memref<1x1x1x64xf32, #tpu.memory_space<vmem>>, %arg11: memref<1x1x32x32xbf16, #tpu.memory_space<vmem>>, %arg12: memref<1x1x1x32xf32, #tpu.memory_space<vmem>>, %arg13: memref<1x1x32x32xbf16, #tpu.memory_space<vmem>>, %arg14: memref<1x1x1x32xf32, #tpu.memory_space<vmem>>, %arg15: memref<1x1x1x32xf32, #tpu.memory_space<vmem>>, %arg16: memref<1x1x1x32xf32, #tpu.memory_space<vmem>>, %arg17: memref<1x1x32x32xbf16, #tpu.memory_space<vmem>>, %arg18: memref<1x1x1x32xf32, #tpu.memory_space<vmem>>, %arg19: memref<1x1x32x32xbf16, #tpu.memory_space<vmem>>, %arg20: memref<1x1x1x32xf32, #tpu.memory_space<vmem>>, %arg21: memref<1x1x32x32xbf16, #tpu.memory_space<vmem>>, %arg22: memref<1x1x1x32xf32, #tpu.memory_space<vmem>>, %arg23: memref<1x1x32x32xbf16, #tpu.memory_space<vmem>>, %arg24: memref<1x1x1x32xf32, #tpu.memory_space<vmem>>, %arg25: memref<1x1x1x32xf32, #tpu.memory_space<vmem>>, %arg26: memref<1x1x1x32xf32, #tpu.memory_space<vmem>>, %arg27: memref<1x1x32x64xbf16, #tpu.memory_space<vmem>>, %arg28: memref<1x1x1x64xf32, #tpu.memory_space<vmem>>, %arg29: memref<1x1x64x32xbf16, #tpu.memory_space<vmem>>, %arg30: memref<1x1x1x32xf32, #tpu.memory_space<vmem>>, %arg31: memref<1x1x1x32xf32, #tpu.memory_space<vmem>>, %arg32: memref<1x1x1x32xf32, #tpu.memory_space<vmem>>, %arg33: memref<1x1x32xf32, #tpu.memory_space<vmem>>, %arg34: memref<1x1x32xf32, #tpu.memory_space<vmem>>, %arg35: memref<1x1x64x32xf32, #tpu.memory_space<vmem>>, %arg36: memref<1x1x1x64x32xf32, #tpu.memory_space<vmem>>) attributes {dimension_semantics = [#tpu.dimension_semantics<parallel>, #tpu.dimension_semantics<parallel>, #tpu.dimension_semantics<arbitrary>], iteration_bounds = array<i64: 2, 2, 2>, scalar_prefetch = 0 : i64, scratch_operands = 0 : i64, tpu.core_type = #tpu.core_type<tc>, window_params = [{transform_indices = @transform_0, window_bounds = array<i64: 1, 64, 32>}, {transform_indices = @transform_1, window_bounds = array<i64: 1, 16, 32>}, {transform_indices = @transform_2, window_bounds = array<i64: 1, 64, 32>}, {transform_indices = @transform_3, window_bounds = array<i64: 1, 16, 32>}, {transform_indices = @transform_4, window_bounds = array<i64: 1, 1, 64>}, {transform_indices = @transform_5, window_bounds = array<i64: 1, 1, 16>}, {transform_indices = @transform_6, window_bounds = array<i64: 1, 1, 32, 64>}, {transform_indices = @transform_7, window_bounds = array<i64: 1, 1, 1, 64>}, {transform_indices = @transform_8, window_bounds = array<i64: 1, 1, 32, 32>}, {transform_indices = @transform_9, window_bounds = array<i64: 1, 1, 1, 32>}, {transform_indices = @transform_10, window_bounds = array<i64: 1, 1, 32, 32>}, {transform_indices = @transform_11, window_bounds = array<i64: 1, 1, 1, 32>}, {transform_indices = @transform_12, window_bounds = array<i64: 1, 1, 1, 32>}, {transform_indices = @transform_13, window_bounds = array<i64: 1, 1, 1, 32>}, {transform_indices = @transform_14, window_bounds = array<i64: 1, 1, 32, 32>}, {transform_indices = @transform_15, window_bounds = array<i64: 1, 1, 1, 32>}, {transform_indices = @transform_16, window_bounds = array<i64: 1, 1, 32, 32>}, {transform_indices = @transform_17, window_bounds = array<i64: 1, 1, 1, 32>}, {transform_indices = @transform_18, window_bounds = array<i64: 1, 1, 32, 32>}, {transform_indices = @transform_19, window_bounds = array<i64: 1, 1, 1, 32>}, {transform_indices = @transform_20, window_bounds = array<i64: 1, 1, 32, 32>}, {transform_indices = @transform_21, window_bounds = array<i64: 1, 1, 1, 32>}, {transform_indices = @transform_22, window_bounds = array<i64: 1, 1, 1, 32>}, {transform_indices = @transform_23, window_bounds = array<i64: 1, 1, 1, 32>}, {transform_indices = @transform_24, window_bounds = array<i64: 1, 1, 32, 64>}, {transform_indices = @transform_25, window_bounds = array<i64: 1, 1, 1, 64>}, {transform_indices = @transform_26, window_bounds = array<i64: 1, 1, 64, 32>}, {transform_indices = @transform_27, window_bounds = array<i64: 1, 1, 1, 32>}, {transform_indices = @transform_28, window_bounds = array<i64: 1, 1, 1, 32>}, {transform_indices = @transform_29, window_bounds = array<i64: 1, 1, 1, 32>}, {transform_indices = @transform_30, window_bounds = array<i64: 1, 1, 32>}, {transform_indices = @transform_31, window_bounds = array<i64: 1, 1, 32>}, {transform_indices = @transform_32, window_bounds = array<i64: 1, 1, 64, 32>}, {transform_indices = @transform_33, window_bounds = array<i64: 1, 1, 1, 64, 32>}]} {
    %c0_i32 = arith.constant 0 : i32
    %0 = arith.cmpi eq, %arg2, %c0_i32 : i32
    %1 = arith.extui %0 : i1 to i32
    %c0_i32_0 = arith.constant 0 : i32
    %2 = arith.cmpi ne, %1, %c0_i32_0 : i32
    scf.if %2 {
      %c0_207 = arith.constant 0 : index
      %c0_208 = arith.constant 0 : index
      %c0_209 = arith.constant 0 : index
      %449 = vector.load %arg3[%c0_207, %c0_208, %c0_209] : memref<1x64x32xf32, #tpu.memory_space<vmem>>, vector<1x64x32xf32>
      %450 = vector.shape_cast %449 : vector<1x64x32xf32> to vector<64x32xf32>
      %c0_210 = arith.constant 0 : index
      %c0_211 = arith.constant 0 : index
      %c0_212 = arith.constant 0 : index
      %c0_213 = arith.constant 0 : index
      %451 = vector.load %arg35[%c0_210, %c0_211, %c0_212, %c0_213] : memref<1x1x64x32xf32, #tpu.memory_space<vmem>>, vector<1x1x64x32xf32>
      %452 = vector.shape_cast %451 : vector<1x1x64x32xf32> to vector<64x32xf32>
      %453 = vector.shape_cast %450 : vector<64x32xf32> to vector<1x1x64x32xf32>
      tpu.vector_store %arg35[%c0_210, %c0_211, %c0_212, %c0_213], %453 {strides = array<i32>} : memref<1x1x64x32xf32, #tpu.memory_space<vmem>>, vector<1x1x64x32xf32>,
    } else {
    }
    %c0 = arith.constant 0 : index
    %c0_1 = arith.constant 0 : index
    %c0_2 = arith.constant 0 : index
    %c0_3 = arith.constant 0 : index
    %3 = vector.load %arg35[%c0, %c0_1, %c0_2, %c0_3] : memref<1x1x64x32xf32, #tpu.memory_space<vmem>>, vector<1x1x64x32xf32>
    %4 = vector.shape_cast %3 : vector<1x1x64x32xf32> to vector<64x32xf32>
    %c0_4 = arith.constant 0 : index
    %c0_5 = arith.constant 0 : index
    %c0_6 = arith.constant 0 : index
    %5 = vector.load %arg4[%c0_4, %c0_5, %c0_6] : memref<1x16x32xf32, #tpu.memory_space<vmem>>, vector<1x16x32xf32>
    %6 = vector.shape_cast %5 : vector<1x16x32xf32> to vector<16x32xf32>
    %c0_7 = arith.constant 0 : index
    %c0_8 = arith.constant 0 : index
    %c0_9 = arith.constant 0 : index
    %7 = vector.load %arg5[%c0_7, %c0_8, %c0_9] : memref<1x64x32xf32, #tpu.memory_space<vmem>>, vector<1x64x32xf32>
    %8 = vector.shape_cast %7 : vector<1x64x32xf32> to vector<64x32xf32>
    %c0_10 = arith.constant 0 : index
    %c0_11 = arith.constant 0 : index
    %c0_12 = arith.constant 0 : index
    %9 = vector.load %arg6[%c0_10, %c0_11, %c0_12] : memref<1x16x32xf32, #tpu.memory_space<vmem>>, vector<1x16x32xf32>
    %10 = vector.shape_cast %9 : vector<1x16x32xf32> to vector<16x32xf32>
    %c0_13 = arith.constant 0 : index
    %c0_14 = arith.constant 0 : index
    %c0_15 = arith.constant 0 : index
    %11 = vector.load %arg7[%c0_13, %c0_14, %c0_15] : memref<1x1x64xf32, #tpu.memory_space<vmem>>, vector<1x1x64xf32>
    %12 = vector.shape_cast %11 : vector<1x1x64xf32> to vector<1x64xf32>
    %c0_16 = arith.constant 0 : index
    %c0_17 = arith.constant 0 : index
    %c0_18 = arith.constant 0 : index
    %13 = vector.load %arg8[%c0_16, %c0_17, %c0_18] : memref<1x1x16xf32, #tpu.memory_space<vmem>>, vector<1x1x16xf32>
    %14 = vector.shape_cast %13 : vector<1x1x16xf32> to vector<1x16xf32>
    %15 = arith.addf %4, %8 : vector<64x32xf32>
    %c0_19 = arith.constant 0 : index
    %c0_20 = arith.constant 0 : index
    %c0_21 = arith.constant 0 : index
    %c0_22 = arith.constant 0 : index
    %16 = vector.load %arg9[%c0_19, %c0_20, %c0_21, %c0_22] : memref<1x1x32x64xbf16, #tpu.memory_space<vmem>>, vector<1x1x32x64xbf16>
    %17 = vector.shape_cast %16 : vector<1x1x32x64xbf16> to vector<32x64xbf16>
    %18 = arith.truncf %15 : vector<64x32xf32> to vector<64x32xbf16>
    %cst = arith.constant dense<0.000000e+00> : vector<64x64xf32>
    %19 = tpu.matmul %18, %17, %cst {dimension_numbers = #tpu.dot_dimension_numbers<[1], [0], [0], [1], [0, 0, 1, 1], [], []>} : vector<64x32xbf16>, vector<32x64xbf16>, vector<64x64xf32> -> vector<64x64xf32>
    %c0_23 = arith.constant 0 : index
    %c0_24 = arith.constant 0 : index
    %c0_25 = arith.constant 0 : index
    %c0_26 = arith.constant 0 : index
    %20 = vector.load %arg10[%c0_23, %c0_24, %c0_25, %c0_26] : memref<1x1x1x64xf32, #tpu.memory_space<vmem>>, vector<1x1x1x64xf32>
    %21 = vector.shape_cast %20 : vector<1x1x1x64xf32> to vector<1x64xf32>
    %22 = vector.broadcast %21 : vector<1x64xf32> to vector<64x64xf32>
    %23 = arith.addf %19, %22 : vector<64x64xf32>
    %24 = vector.extract_strided_slice %23 {offsets = [0, 0], sizes = [64, 32], strides = [1, 1]} : vector<64x64xf32> to vector<64x32xf32>
    %25 = vector.extract_strided_slice %23 {offsets = [0, 32], sizes = [64, 32], strides = [1, 1]} : vector<64x64xf32> to vector<64x32xf32>
    %c0_27 = arith.constant 0 : index
    %c0_28 = arith.constant 0 : index
    %c0_29 = arith.constant 0 : index
    %c0_30 = arith.constant 0 : index
    %26 = vector.load %arg11[%c0_27, %c0_28, %c0_29, %c0_30] : memref<1x1x32x32xbf16, #tpu.memory_space<vmem>>, vector<1x1x32x32xbf16>
    %27 = vector.shape_cast %26 : vector<1x1x32x32xbf16> to vector<32x32xbf16>
    %28 = arith.truncf %4 : vector<64x32xf32> to vector<64x32xbf16>
    %cst_31 = arith.constant dense<0.000000e+00> : vector<64x32xf32>
    %29 = tpu.matmul %28, %27, %cst_31 {dimension_numbers = #tpu.dot_dimension_numbers<[1], [0], [0], [1], [0, 0, 1, 1], [], []>} : vector<64x32xbf16>, vector<32x32xbf16>, vector<64x32xf32> -> vector<64x32xf32>
    %c0_32 = arith.constant 0 : index
    %c0_33 = arith.constant 0 : index
    %c0_34 = arith.constant 0 : index
    %c0_35 = arith.constant 0 : index
    %30 = vector.load %arg12[%c0_32, %c0_33, %c0_34, %c0_35] : memref<1x1x1x32xf32, #tpu.memory_space<vmem>>, vector<1x1x1x32xf32>
    %31 = vector.shape_cast %30 : vector<1x1x1x32xf32> to vector<1x32xf32>
    %32 = vector.broadcast %31 : vector<1x32xf32> to vector<64x32xf32>
    %33 = arith.addf %29, %32 : vector<64x32xf32>
    %34 = tpu.iota {dimensions = array<i32: 1>} : vector<1x32xi32>
    %cst_36 = arith.constant 0.353553385 : f32
    %35 = vector.broadcast %cst_36 : f32 to vector<64x32xf32>
    %36 = arith.mulf %24, %35 : vector<64x32xf32>
    %37 = arith.truncf %36 : vector<64x32xf32> to vector<64x32xbf16>
    %cst_37 = arith.constant 0.000000e+00 : f32
    %38 = vector.broadcast %cst_37 : f32 to vector<64x32xf32>
    %c0_i32_38 = arith.constant 0 : i32
    %39 = vector.broadcast %c0_i32_38 : i32 to vector<1x32xi32>
    %40 = arith.cmpi sge, %34, %39 : vector<1x32xi32>
    %c8_i32 = arith.constant 8 : i32
    %41 = vector.broadcast %c8_i32 : i32 to vector<1x32xi32>
    %42 = arith.cmpi slt, %34, %41 : vector<1x32xi32>
    %43 = arith.andi %40, %42 : vector<1x32xi1>
    %44 = arith.extui %43 : vector<1x32xi1> to vector<1x32xi32>
    %45 = arith.sitofp %44 : vector<1x32xi32> to vector<1x32xf32>
    %46 = vector.broadcast %45 : vector<1x32xf32> to vector<64x32xf32>
    %47 = arith.mulf %25, %46 : vector<64x32xf32>
    %48 = arith.truncf %47 : vector<64x32xf32> to vector<64x32xbf16>
    %49 = vector.broadcast %45 : vector<1x32xf32> to vector<64x32xf32>
    %50 = arith.mulf %33, %49 : vector<64x32xf32>
    %51 = arith.truncf %50 : vector<64x32xf32> to vector<64x32xbf16>
    %cst_39 = arith.constant dense<0.000000e+00> : vector<64x64xf32>
    %52 = tpu.matmul %37, %48, %cst_39 {dimension_numbers = #tpu.dot_dimension_numbers<[1], [1], [0], [0], [0, 0, 1, 0], [], []>} : vector<64x32xbf16>, vector<64x32xbf16>, vector<64x64xf32> -> vector<64x64xf32>
    %53 = vector.broadcast %12 : vector<1x64xf32> to vector<64x64xf32>
    %54 = arith.addf %52, %53 : vector<64x64xf32>
    %cst_40 = arith.constant dense<0xFF800000> : vector<64xf32>
    %55 = vector.multi_reduction <maximumf>, %54, %cst_40 [1] : vector<64x64xf32> to vector<64xf32>
    %56 = vector.shape_cast %55 : vector<64xf32> to vector<64x1xf32>
    %57 = vector.broadcast %56 : vector<64x1xf32> to vector<64x64xf32>
    %58 = arith.subf %54, %57 : vector<64x64xf32>
    %59 = math.exp %58 : vector<64x64xf32>
    %cst_41 = arith.constant dense<0.000000e+00> : vector<64xf32>
    %60 = vector.multi_reduction <add>, %59, %cst_41 [1] : vector<64x64xf32> to vector<64xf32>
    %61 = vector.shape_cast %60 : vector<64xf32> to vector<64x1xf32>
    %62 = tpu.reciprocal %61 {approx = true} : vector<64x1xf32> -> vector<64x1xf32>
    %63 = vector.broadcast %62 : vector<64x1xf32> to vector<64x64xf32>
    %64 = arith.mulf %59, %63 : vector<64x64xf32>
    %65 = arith.truncf %64 : vector<64x64xf32> to vector<64x64xbf16>
    %cst_42 = arith.constant dense<0.000000e+00> : vector<64x32xf32>
    %66 = tpu.matmul %65, %51, %cst_42 {dimension_numbers = #tpu.dot_dimension_numbers<[1], [0], [0], [1], [0, 0, 1, 1], [], []>} : vector<64x64xbf16>, vector<64x32xbf16>, vector<64x32xf32> -> vector<64x32xf32>
    %67 = arith.addf %38, %66 : vector<64x32xf32>
    %c8_i32_43 = arith.constant 8 : i32
    %68 = vector.broadcast %c8_i32_43 : i32 to vector<1x32xi32>
    %69 = arith.cmpi sge, %34, %68 : vector<1x32xi32>
    %c16_i32 = arith.constant 16 : i32
    %70 = vector.broadcast %c16_i32 : i32 to vector<1x32xi32>
    %71 = arith.cmpi slt, %34, %70 : vector<1x32xi32>
    %72 = arith.andi %69, %71 : vector<1x32xi1>
    %73 = arith.extui %72 : vector<1x32xi1> to vector<1x32xi32>
    %74 = arith.sitofp %73 : vector<1x32xi32> to vector<1x32xf32>
    %75 = vector.broadcast %74 : vector<1x32xf32> to vector<64x32xf32>
    %76 = arith.mulf %25, %75 : vector<64x32xf32>
    %77 = arith.truncf %76 : vector<64x32xf32> to vector<64x32xbf16>
    %78 = vector.broadcast %74 : vector<1x32xf32> to vector<64x32xf32>
    %79 = arith.mulf %33, %78 : vector<64x32xf32>
    %80 = arith.truncf %79 : vector<64x32xf32> to vector<64x32xbf16>
    %cst_44 = arith.constant dense<0.000000e+00> : vector<64x64xf32>
    %81 = tpu.matmul %37, %77, %cst_44 {dimension_numbers = #tpu.dot_dimension_numbers<[1], [1], [0], [0], [0, 0, 1, 0], [], []>} : vector<64x32xbf16>, vector<64x32xbf16>, vector<64x64xf32> -> vector<64x64xf32>
    %82 = vector.broadcast %12 : vector<1x64xf32> to vector<64x64xf32>
    %83 = arith.addf %81, %82 : vector<64x64xf32>
    %cst_45 = arith.constant dense<0xFF800000> : vector<64xf32>
    %84 = vector.multi_reduction <maximumf>, %83, %cst_45 [1] : vector<64x64xf32> to vector<64xf32>
    %85 = vector.shape_cast %84 : vector<64xf32> to vector<64x1xf32>
    %86 = vector.broadcast %85 : vector<64x1xf32> to vector<64x64xf32>
    %87 = arith.subf %83, %86 : vector<64x64xf32>
    %88 = math.exp %87 : vector<64x64xf32>
    %cst_46 = arith.constant dense<0.000000e+00> : vector<64xf32>
    %89 = vector.multi_reduction <add>, %88, %cst_46 [1] : vector<64x64xf32> to vector<64xf32>
    %90 = vector.shape_cast %89 : vector<64xf32> to vector<64x1xf32>
    %91 = tpu.reciprocal %90 {approx = true} : vector<64x1xf32> -> vector<64x1xf32>
    %92 = vector.broadcast %91 : vector<64x1xf32> to vector<64x64xf32>
    %93 = arith.mulf %88, %92 : vector<64x64xf32>
    %94 = arith.truncf %93 : vector<64x64xf32> to vector<64x64xbf16>
    %cst_47 = arith.constant dense<0.000000e+00> : vector<64x32xf32>
    %95 = tpu.matmul %94, %80, %cst_47 {dimension_numbers = #tpu.dot_dimension_numbers<[1], [0], [0], [1], [0, 0, 1, 1], [], []>} : vector<64x64xbf16>, vector<64x32xbf16>, vector<64x32xf32> -> vector<64x32xf32>
    %96 = arith.addf %67, %95 : vector<64x32xf32>
    %c16_i32_48 = arith.constant 16 : i32
    %97 = vector.broadcast %c16_i32_48 : i32 to vector<1x32xi32>
    %98 = arith.cmpi sge, %34, %97 : vector<1x32xi32>
    %c24_i32 = arith.constant 24 : i32
    %99 = vector.broadcast %c24_i32 : i32 to vector<1x32xi32>
    %100 = arith.cmpi slt, %34, %99 : vector<1x32xi32>
    %101 = arith.andi %98, %100 : vector<1x32xi1>
    %102 = arith.extui %101 : vector<1x32xi1> to vector<1x32xi32>
    %103 = arith.sitofp %102 : vector<1x32xi32> to vector<1x32xf32>
    %104 = vector.broadcast %103 : vector<1x32xf32> to vector<64x32xf32>
    %105 = arith.mulf %25, %104 : vector<64x32xf32>
    %106 = arith.truncf %105 : vector<64x32xf32> to vector<64x32xbf16>
    %107 = vector.broadcast %103 : vector<1x32xf32> to vector<64x32xf32>
    %108 = arith.mulf %33, %107 : vector<64x32xf32>
    %109 = arith.truncf %108 : vector<64x32xf32> to vector<64x32xbf16>
    %cst_49 = arith.constant dense<0.000000e+00> : vector<64x64xf32>
    %110 = tpu.matmul %37, %106, %cst_49 {dimension_numbers = #tpu.dot_dimension_numbers<[1], [1], [0], [0], [0, 0, 1, 0], [], []>} : vector<64x32xbf16>, vector<64x32xbf16>, vector<64x64xf32> -> vector<64x64xf32>
    %111 = vector.broadcast %12 : vector<1x64xf32> to vector<64x64xf32>
    %112 = arith.addf %110, %111 : vector<64x64xf32>
    %cst_50 = arith.constant dense<0xFF800000> : vector<64xf32>
    %113 = vector.multi_reduction <maximumf>, %112, %cst_50 [1] : vector<64x64xf32> to vector<64xf32>
    %114 = vector.shape_cast %113 : vector<64xf32> to vector<64x1xf32>
    %115 = vector.broadcast %114 : vector<64x1xf32> to vector<64x64xf32>
    %116 = arith.subf %112, %115 : vector<64x64xf32>
    %117 = math.exp %116 : vector<64x64xf32>
    %cst_51 = arith.constant dense<0.000000e+00> : vector<64xf32>
    %118 = vector.multi_reduction <add>, %117, %cst_51 [1] : vector<64x64xf32> to vector<64xf32>
    %119 = vector.shape_cast %118 : vector<64xf32> to vector<64x1xf32>
    %120 = tpu.reciprocal %119 {approx = true} : vector<64x1xf32> -> vector<64x1xf32>
    %121 = vector.broadcast %120 : vector<64x1xf32> to vector<64x64xf32>
    %122 = arith.mulf %117, %121 : vector<64x64xf32>
    %123 = arith.truncf %122 : vector<64x64xf32> to vector<64x64xbf16>
    %cst_52 = arith.constant dense<0.000000e+00> : vector<64x32xf32>
    %124 = tpu.matmul %123, %109, %cst_52 {dimension_numbers = #tpu.dot_dimension_numbers<[1], [0], [0], [1], [0, 0, 1, 1], [], []>} : vector<64x64xbf16>, vector<64x32xbf16>, vector<64x32xf32> -> vector<64x32xf32>
    %125 = arith.addf %96, %124 : vector<64x32xf32>
    %c24_i32_53 = arith.constant 24 : i32
    %126 = vector.broadcast %c24_i32_53 : i32 to vector<1x32xi32>
    %127 = arith.cmpi sge, %34, %126 : vector<1x32xi32>
    %c32_i32 = arith.constant 32 : i32
    %128 = vector.broadcast %c32_i32 : i32 to vector<1x32xi32>
    %129 = arith.cmpi slt, %34, %128 : vector<1x32xi32>
    %130 = arith.andi %127, %129 : vector<1x32xi1>
    %131 = arith.extui %130 : vector<1x32xi1> to vector<1x32xi32>
    %132 = arith.sitofp %131 : vector<1x32xi32> to vector<1x32xf32>
    %133 = vector.broadcast %132 : vector<1x32xf32> to vector<64x32xf32>
    %134 = arith.mulf %25, %133 : vector<64x32xf32>
    %135 = arith.truncf %134 : vector<64x32xf32> to vector<64x32xbf16>
    %136 = vector.broadcast %132 : vector<1x32xf32> to vector<64x32xf32>
    %137 = arith.mulf %33, %136 : vector<64x32xf32>
    %138 = arith.truncf %137 : vector<64x32xf32> to vector<64x32xbf16>
    %cst_54 = arith.constant dense<0.000000e+00> : vector<64x64xf32>
    %139 = tpu.matmul %37, %135, %cst_54 {dimension_numbers = #tpu.dot_dimension_numbers<[1], [1], [0], [0], [0, 0, 1, 0], [], []>} : vector<64x32xbf16>, vector<64x32xbf16>, vector<64x64xf32> -> vector<64x64xf32>
    %140 = vector.broadcast %12 : vector<1x64xf32> to vector<64x64xf32>
    %141 = arith.addf %139, %140 : vector<64x64xf32>
    %cst_55 = arith.constant dense<0xFF800000> : vector<64xf32>
    %142 = vector.multi_reduction <maximumf>, %141, %cst_55 [1] : vector<64x64xf32> to vector<64xf32>
    %143 = vector.shape_cast %142 : vector<64xf32> to vector<64x1xf32>
    %144 = vector.broadcast %143 : vector<64x1xf32> to vector<64x64xf32>
    %145 = arith.subf %141, %144 : vector<64x64xf32>
    %146 = math.exp %145 : vector<64x64xf32>
    %cst_56 = arith.constant dense<0.000000e+00> : vector<64xf32>
    %147 = vector.multi_reduction <add>, %146, %cst_56 [1] : vector<64x64xf32> to vector<64xf32>
    %148 = vector.shape_cast %147 : vector<64xf32> to vector<64x1xf32>
    %149 = tpu.reciprocal %148 {approx = true} : vector<64x1xf32> -> vector<64x1xf32>
    %150 = vector.broadcast %149 : vector<64x1xf32> to vector<64x64xf32>
    %151 = arith.mulf %146, %150 : vector<64x64xf32>
    %152 = arith.truncf %151 : vector<64x64xf32> to vector<64x64xbf16>
    %cst_57 = arith.constant dense<0.000000e+00> : vector<64x32xf32>
    %153 = tpu.matmul %152, %138, %cst_57 {dimension_numbers = #tpu.dot_dimension_numbers<[1], [0], [0], [1], [0, 0, 1, 1], [], []>} : vector<64x64xbf16>, vector<64x32xbf16>, vector<64x32xf32> -> vector<64x32xf32>
    %154 = arith.addf %125, %153 : vector<64x32xf32>
    %c0_58 = arith.constant 0 : index
    %c0_59 = arith.constant 0 : index
    %c0_60 = arith.constant 0 : index
    %c0_61 = arith.constant 0 : index
    %155 = vector.load %arg13[%c0_58, %c0_59, %c0_60, %c0_61] : memref<1x1x32x32xbf16, #tpu.memory_space<vmem>>, vector<1x1x32x32xbf16>
    %156 = vector.shape_cast %155 : vector<1x1x32x32xbf16> to vector<32x32xbf16>
    %157 = arith.truncf %154 : vector<64x32xf32> to vector<64x32xbf16>
    %cst_62 = arith.constant dense<0.000000e+00> : vector<64x32xf32>
    %158 = tpu.matmul %157, %156, %cst_62 {dimension_numbers = #tpu.dot_dimension_numbers<[1], [0], [0], [1], [0, 0, 1, 1], [], []>} : vector<64x32xbf16>, vector<32x32xbf16>, vector<64x32xf32> -> vector<64x32xf32>
    %c0_63 = arith.constant 0 : index
    %c0_64 = arith.constant 0 : index
    %c0_65 = arith.constant 0 : index
    %c0_66 = arith.constant 0 : index
    %159 = vector.load %arg14[%c0_63, %c0_64, %c0_65, %c0_66] : memref<1x1x1x32xf32, #tpu.memory_space<vmem>>, vector<1x1x1x32xf32>
    %160 = vector.shape_cast %159 : vector<1x1x1x32xf32> to vector<1x32xf32>
    %161 = vector.broadcast %160 : vector<1x32xf32> to vector<64x32xf32>
    %162 = arith.addf %158, %161 : vector<64x32xf32>
    %163 = arith.addf %4, %162 : vector<64x32xf32>
    %c0_67 = arith.constant 0 : index
    %c0_68 = arith.constant 0 : index
    %c0_69 = arith.constant 0 : index
    %c0_70 = arith.constant 0 : index
    %164 = vector.load %arg15[%c0_67, %c0_68, %c0_69, %c0_70] : memref<1x1x1x32xf32, #tpu.memory_space<vmem>>, vector<1x1x1x32xf32>
    %165 = vector.shape_cast %164 : vector<1x1x1x32xf32> to vector<1x32xf32>
    %c0_71 = arith.constant 0 : index
    %c0_72 = arith.constant 0 : index
    %c0_73 = arith.constant 0 : index
    %c0_74 = arith.constant 0 : index
    %166 = vector.load %arg16[%c0_71, %c0_72, %c0_73, %c0_74] : memref<1x1x1x32xf32, #tpu.memory_space<vmem>>, vector<1x1x1x32xf32>
    %167 = vector.shape_cast %166 : vector<1x1x1x32xf32> to vector<1x32xf32>
    %cst_75 = arith.constant dense<0.000000e+00> : vector<64xf32>
    %168 = vector.multi_reduction <add>, %163, %cst_75 [1] : vector<64x32xf32> to vector<64xf32>
    %169 = vector.shape_cast %168 : vector<64xf32> to vector<64x1xf32>
    %cst_76 = arith.constant 3.200000e+01 : f32
    %170 = vector.broadcast %cst_76 : f32 to vector<64x1xf32>
    %171 = arith.divf %169, %170 : vector<64x1xf32>
    %172 = vector.broadcast %171 : vector<64x1xf32> to vector<64x32xf32>
    %173 = arith.subf %163, %172 : vector<64x32xf32>
    %174 = arith.mulf %173, %173 : vector<64x32xf32>
    %cst_77 = arith.constant dense<0.000000e+00> : vector<64xf32>
    %175 = vector.multi_reduction <add>, %174, %cst_77 [1] : vector<64x32xf32> to vector<64xf32>
    %176 = vector.shape_cast %175 : vector<64xf32> to vector<64x1xf32>
    %cst_78 = arith.constant 3.200000e+01 : f32
    %177 = vector.broadcast %cst_78 : f32 to vector<64x1xf32>
    %178 = arith.divf %176, %177 : vector<64x1xf32>
    %179 = vector.broadcast %171 : vector<64x1xf32> to vector<64x32xf32>
    %180 = arith.subf %163, %179 : vector<64x32xf32>
    %cst_79 = arith.constant 9.99999974E-6 : f32
    %181 = vector.broadcast %cst_79 : f32 to vector<64x1xf32>
    %182 = arith.addf %178, %181 : vector<64x1xf32>
    %183 = math.rsqrt %182 : vector<64x1xf32>
    %184 = vector.broadcast %183 : vector<64x1xf32> to vector<64x32xf32>
    %185 = arith.mulf %180, %184 : vector<64x32xf32>
    %186 = vector.broadcast %165 : vector<1x32xf32> to vector<64x32xf32>
    %187 = arith.mulf %185, %186 : vector<64x32xf32>
    %188 = vector.broadcast %167 : vector<1x32xf32> to vector<64x32xf32>
    %189 = arith.addf %187, %188 : vector<64x32xf32>
    %190 = arith.addf %189, %8 : vector<64x32xf32>
    %c0_80 = arith.constant 0 : index
    %c0_81 = arith.constant 0 : index
    %c0_82 = arith.constant 0 : index
    %c0_83 = arith.constant 0 : index
    %191 = vector.load %arg17[%c0_80, %c0_81, %c0_82, %c0_83] : memref<1x1x32x32xbf16, #tpu.memory_space<vmem>>, vector<1x1x32x32xbf16>
    %192 = vector.shape_cast %191 : vector<1x1x32x32xbf16> to vector<32x32xbf16>
    %193 = arith.truncf %190 : vector<64x32xf32> to vector<64x32xbf16>
    %cst_84 = arith.constant dense<0.000000e+00> : vector<64x32xf32>
    %194 = tpu.matmul %193, %192, %cst_84 {dimension_numbers = #tpu.dot_dimension_numbers<[1], [0], [0], [1], [0, 0, 1, 1], [], []>} : vector<64x32xbf16>, vector<32x32xbf16>, vector<64x32xf32> -> vector<64x32xf32>
    %c0_85 = arith.constant 0 : index
    %c0_86 = arith.constant 0 : index
    %c0_87 = arith.constant 0 : index
    %c0_88 = arith.constant 0 : index
    %195 = vector.load %arg18[%c0_85, %c0_86, %c0_87, %c0_88] : memref<1x1x1x32xf32, #tpu.memory_space<vmem>>, vector<1x1x1x32xf32>
    %196 = vector.shape_cast %195 : vector<1x1x1x32xf32> to vector<1x32xf32>
    %197 = vector.broadcast %196 : vector<1x32xf32> to vector<64x32xf32>
    %198 = arith.addf %194, %197 : vector<64x32xf32>
    %199 = arith.addf %6, %10 : vector<16x32xf32>
    %c0_89 = arith.constant 0 : index
    %c0_90 = arith.constant 0 : index
    %c0_91 = arith.constant 0 : index
    %c0_92 = arith.constant 0 : index
    %200 = vector.load %arg19[%c0_89, %c0_90, %c0_91, %c0_92] : memref<1x1x32x32xbf16, #tpu.memory_space<vmem>>, vector<1x1x32x32xbf16>
    %201 = vector.shape_cast %200 : vector<1x1x32x32xbf16> to vector<32x32xbf16>
    %202 = arith.truncf %199 : vector<16x32xf32> to vector<16x32xbf16>
    %cst_93 = arith.constant dense<0.000000e+00> : vector<16x32xf32>
    %203 = tpu.matmul %202, %201, %cst_93 {dimension_numbers = #tpu.dot_dimension_numbers<[1], [0], [0], [1], [0, 0, 1, 1], [], []>} : vector<16x32xbf16>, vector<32x32xbf16>, vector<16x32xf32> -> vector<16x32xf32>
    %c0_94 = arith.constant 0 : index
    %c0_95 = arith.constant 0 : index
    %c0_96 = arith.constant 0 : index
    %c0_97 = arith.constant 0 : index
    %204 = vector.load %arg20[%c0_94, %c0_95, %c0_96, %c0_97] : memref<1x1x1x32xf32, #tpu.memory_space<vmem>>, vector<1x1x1x32xf32>
    %205 = vector.shape_cast %204 : vector<1x1x1x32xf32> to vector<1x32xf32>
    %206 = vector.broadcast %205 : vector<1x32xf32> to vector<16x32xf32>
    %207 = arith.addf %203, %206 : vector<16x32xf32>
    %c0_98 = arith.constant 0 : index
    %c0_99 = arith.constant 0 : index
    %c0_100 = arith.constant 0 : index
    %c0_101 = arith.constant 0 : index
    %208 = vector.load %arg21[%c0_98, %c0_99, %c0_100, %c0_101] : memref<1x1x32x32xbf16, #tpu.memory_space<vmem>>, vector<1x1x32x32xbf16>
    %209 = vector.shape_cast %208 : vector<1x1x32x32xbf16> to vector<32x32xbf16>
    %210 = arith.truncf %6 : vector<16x32xf32> to vector<16x32xbf16>
    %cst_102 = arith.constant dense<0.000000e+00> : vector<16x32xf32>
    %211 = tpu.matmul %210, %209, %cst_102 {dimension_numbers = #tpu.dot_dimension_numbers<[1], [0], [0], [1], [0, 0, 1, 1], [], []>} : vector<16x32xbf16>, vector<32x32xbf16>, vector<16x32xf32> -> vector<16x32xf32>
    %c0_103 = arith.constant 0 : index
    %c0_104 = arith.constant 0 : index
    %c0_105 = arith.constant 0 : index
    %c0_106 = arith.constant 0 : index
    %212 = vector.load %arg22[%c0_103, %c0_104, %c0_105, %c0_106] : memref<1x1x1x32xf32, #tpu.memory_space<vmem>>, vector<1x1x1x32xf32>
    %213 = vector.shape_cast %212 : vector<1x1x1x32xf32> to vector<1x32xf32>
    %214 = vector.broadcast %213 : vector<1x32xf32> to vector<16x32xf32>
    %215 = arith.addf %211, %214 : vector<16x32xf32>
    %216 = tpu.iota {dimensions = array<i32: 1>} : vector<1x32xi32>
    %cst_107 = arith.constant 0.353553385 : f32
    %217 = vector.broadcast %cst_107 : f32 to vector<64x32xf32>
    %218 = arith.mulf %198, %217 : vector<64x32xf32>
    %219 = arith.truncf %218 : vector<64x32xf32> to vector<64x32xbf16>
    %cst_108 = arith.constant 0.000000e+00 : f32
    %220 = vector.broadcast %cst_108 : f32 to vector<64x32xf32>
    %c0_i32_109 = arith.constant 0 : i32
    %221 = vector.broadcast %c0_i32_109 : i32 to vector<1x32xi32>
    %222 = arith.cmpi sge, %216, %221 : vector<1x32xi32>
    %c8_i32_110 = arith.constant 8 : i32
    %223 = vector.broadcast %c8_i32_110 : i32 to vector<1x32xi32>
    %224 = arith.cmpi slt, %216, %223 : vector<1x32xi32>
    %225 = arith.andi %222, %224 : vector<1x32xi1>
    %226 = arith.extui %225 : vector<1x32xi1> to vector<1x32xi32>
    %227 = arith.sitofp %226 : vector<1x32xi32> to vector<1x32xf32>
    %228 = vector.broadcast %227 : vector<1x32xf32> to vector<16x32xf32>
    %229 = arith.mulf %207, %228 : vector<16x32xf32>
    %230 = arith.truncf %229 : vector<16x32xf32> to vector<16x32xbf16>
    %231 = vector.broadcast %227 : vector<1x32xf32> to vector<16x32xf32>
    %232 = arith.mulf %215, %231 : vector<16x32xf32>
    %233 = arith.truncf %232 : vector<16x32xf32> to vector<16x32xbf16>
    %cst_111 = arith.constant dense<0.000000e+00> : vector<64x16xf32>
    %234 = tpu.matmul %219, %230, %cst_111 {dimension_numbers = #tpu.dot_dimension_numbers<[1], [1], [0], [0], [0, 0, 1, 0], [], []>} : vector<64x32xbf16>, vector<16x32xbf16>, vector<64x16xf32> -> vector<64x16xf32>
    %235 = vector.broadcast %14 : vector<1x16xf32> to vector<64x16xf32>
    %236 = arith.addf %234, %235 : vector<64x16xf32>
    %cst_112 = arith.constant dense<0xFF800000> : vector<64xf32>
    %237 = vector.multi_reduction <maximumf>, %236, %cst_112 [1] : vector<64x16xf32> to vector<64xf32>
    %238 = vector.shape_cast %237 : vector<64xf32> to vector<64x1xf32>
    %239 = vector.broadcast %238 : vector<64x1xf32> to vector<64x16xf32>
    %240 = arith.subf %236, %239 : vector<64x16xf32>
    %241 = math.exp %240 : vector<64x16xf32>
    %cst_113 = arith.constant dense<0.000000e+00> : vector<64xf32>
    %242 = vector.multi_reduction <add>, %241, %cst_113 [1] : vector<64x16xf32> to vector<64xf32>
    %243 = vector.shape_cast %242 : vector<64xf32> to vector<64x1xf32>
    %244 = tpu.reciprocal %243 {approx = true} : vector<64x1xf32> -> vector<64x1xf32>
    %245 = vector.broadcast %244 : vector<64x1xf32> to vector<64x16xf32>
    %246 = arith.mulf %241, %245 : vector<64x16xf32>
    %247 = arith.truncf %246 : vector<64x16xf32> to vector<64x16xbf16>
    %cst_114 = arith.constant dense<0.000000e+00> : vector<64x32xf32>
    %248 = tpu.matmul %247, %233, %cst_114 {dimension_numbers = #tpu.dot_dimension_numbers<[1], [0], [0], [1], [0, 0, 1, 1], [], []>} : vector<64x16xbf16>, vector<16x32xbf16>, vector<64x32xf32> -> vector<64x32xf32>
    %249 = arith.addf %220, %248 : vector<64x32xf32>
    %c8_i32_115 = arith.constant 8 : i32
    %250 = vector.broadcast %c8_i32_115 : i32 to vector<1x32xi32>
    %251 = arith.cmpi sge, %216, %250 : vector<1x32xi32>
    %c16_i32_116 = arith.constant 16 : i32
    %252 = vector.broadcast %c16_i32_116 : i32 to vector<1x32xi32>
    %253 = arith.cmpi slt, %216, %252 : vector<1x32xi32>
    %254 = arith.andi %251, %253 : vector<1x32xi1>
    %255 = arith.extui %254 : vector<1x32xi1> to vector<1x32xi32>
    %256 = arith.sitofp %255 : vector<1x32xi32> to vector<1x32xf32>
    %257 = vector.broadcast %256 : vector<1x32xf32> to vector<16x32xf32>
    %258 = arith.mulf %207, %257 : vector<16x32xf32>
    %259 = arith.truncf %258 : vector<16x32xf32> to vector<16x32xbf16>
    %260 = vector.broadcast %256 : vector<1x32xf32> to vector<16x32xf32>
    %261 = arith.mulf %215, %260 : vector<16x32xf32>
    %262 = arith.truncf %261 : vector<16x32xf32> to vector<16x32xbf16>
    %cst_117 = arith.constant dense<0.000000e+00> : vector<64x16xf32>
    %263 = tpu.matmul %219, %259, %cst_117 {dimension_numbers = #tpu.dot_dimension_numbers<[1], [1], [0], [0], [0, 0, 1, 0], [], []>} : vector<64x32xbf16>, vector<16x32xbf16>, vector<64x16xf32> -> vector<64x16xf32>
    %264 = vector.broadcast %14 : vector<1x16xf32> to vector<64x16xf32>
    %265 = arith.addf %263, %264 : vector<64x16xf32>
    %cst_118 = arith.constant dense<0xFF800000> : vector<64xf32>
    %266 = vector.multi_reduction <maximumf>, %265, %cst_118 [1] : vector<64x16xf32> to vector<64xf32>
    %267 = vector.shape_cast %266 : vector<64xf32> to vector<64x1xf32>
    %268 = vector.broadcast %267 : vector<64x1xf32> to vector<64x16xf32>
    %269 = arith.subf %265, %268 : vector<64x16xf32>
    %270 = math.exp %269 : vector<64x16xf32>
    %cst_119 = arith.constant dense<0.000000e+00> : vector<64xf32>
    %271 = vector.multi_reduction <add>, %270, %cst_119 [1] : vector<64x16xf32> to vector<64xf32>
    %272 = vector.shape_cast %271 : vector<64xf32> to vector<64x1xf32>
    %273 = tpu.reciprocal %272 {approx = true} : vector<64x1xf32> -> vector<64x1xf32>
    %274 = vector.broadcast %273 : vector<64x1xf32> to vector<64x16xf32>
    %275 = arith.mulf %270, %274 : vector<64x16xf32>
    %276 = arith.truncf %275 : vector<64x16xf32> to vector<64x16xbf16>
    %cst_120 = arith.constant dense<0.000000e+00> : vector<64x32xf32>
    %277 = tpu.matmul %276, %262, %cst_120 {dimension_numbers = #tpu.dot_dimension_numbers<[1], [0], [0], [1], [0, 0, 1, 1], [], []>} : vector<64x16xbf16>, vector<16x32xbf16>, vector<64x32xf32> -> vector<64x32xf32>
    %278 = arith.addf %249, %277 : vector<64x32xf32>
    %c16_i32_121 = arith.constant 16 : i32
    %279 = vector.broadcast %c16_i32_121 : i32 to vector<1x32xi32>
    %280 = arith.cmpi sge, %216, %279 : vector<1x32xi32>
    %c24_i32_122 = arith.constant 24 : i32
    %281 = vector.broadcast %c24_i32_122 : i32 to vector<1x32xi32>
    %282 = arith.cmpi slt, %216, %281 : vector<1x32xi32>
    %283 = arith.andi %280, %282 : vector<1x32xi1>
    %284 = arith.extui %283 : vector<1x32xi1> to vector<1x32xi32>
    %285 = arith.sitofp %284 : vector<1x32xi32> to vector<1x32xf32>
    %286 = vector.broadcast %285 : vector<1x32xf32> to vector<16x32xf32>
    %287 = arith.mulf %207, %286 : vector<16x32xf32>
    %288 = arith.truncf %287 : vector<16x32xf32> to vector<16x32xbf16>
    %289 = vector.broadcast %285 : vector<1x32xf32> to vector<16x32xf32>
    %290 = arith.mulf %215, %289 : vector<16x32xf32>
    %291 = arith.truncf %290 : vector<16x32xf32> to vector<16x32xbf16>
    %cst_123 = arith.constant dense<0.000000e+00> : vector<64x16xf32>
    %292 = tpu.matmul %219, %288, %cst_123 {dimension_numbers = #tpu.dot_dimension_numbers<[1], [1], [0], [0], [0, 0, 1, 0], [], []>} : vector<64x32xbf16>, vector<16x32xbf16>, vector<64x16xf32> -> vector<64x16xf32>
    %293 = vector.broadcast %14 : vector<1x16xf32> to vector<64x16xf32>
    %294 = arith.addf %292, %293 : vector<64x16xf32>
    %cst_124 = arith.constant dense<0xFF800000> : vector<64xf32>
    %295 = vector.multi_reduction <maximumf>, %294, %cst_124 [1] : vector<64x16xf32> to vector<64xf32>
    %296 = vector.shape_cast %295 : vector<64xf32> to vector<64x1xf32>
    %297 = vector.broadcast %296 : vector<64x1xf32> to vector<64x16xf32>
    %298 = arith.subf %294, %297 : vector<64x16xf32>
    %299 = math.exp %298 : vector<64x16xf32>
    %cst_125 = arith.constant dense<0.000000e+00> : vector<64xf32>
    %300 = vector.multi_reduction <add>, %299, %cst_125 [1] : vector<64x16xf32> to vector<64xf32>
    %301 = vector.shape_cast %300 : vector<64xf32> to vector<64x1xf32>
    %302 = tpu.reciprocal %301 {approx = true} : vector<64x1xf32> -> vector<64x1xf32>
    %303 = vector.broadcast %302 : vector<64x1xf32> to vector<64x16xf32>
    %304 = arith.mulf %299, %303 : vector<64x16xf32>
    %305 = arith.truncf %304 : vector<64x16xf32> to vector<64x16xbf16>
    %cst_126 = arith.constant dense<0.000000e+00> : vector<64x32xf32>
    %306 = tpu.matmul %305, %291, %cst_126 {dimension_numbers = #tpu.dot_dimension_numbers<[1], [0], [0], [1], [0, 0, 1, 1], [], []>} : vector<64x16xbf16>, vector<16x32xbf16>, vector<64x32xf32> -> vector<64x32xf32>
    %307 = arith.addf %278, %306 : vector<64x32xf32>
    %c24_i32_127 = arith.constant 24 : i32
    %308 = vector.broadcast %c24_i32_127 : i32 to vector<1x32xi32>
    %309 = arith.cmpi sge, %216, %308 : vector<1x32xi32>
    %c32_i32_128 = arith.constant 32 : i32
    %310 = vector.broadcast %c32_i32_128 : i32 to vector<1x32xi32>
    %311 = arith.cmpi slt, %216, %310 : vector<1x32xi32>
    %312 = arith.andi %309, %311 : vector<1x32xi1>
    %313 = arith.extui %312 : vector<1x32xi1> to vector<1x32xi32>
    %314 = arith.sitofp %313 : vector<1x32xi32> to vector<1x32xf32>
    %315 = vector.broadcast %314 : vector<1x32xf32> to vector<16x32xf32>
    %316 = arith.mulf %207, %315 : vector<16x32xf32>
    %317 = arith.truncf %316 : vector<16x32xf32> to vector<16x32xbf16>
    %318 = vector.broadcast %314 : vector<1x32xf32> to vector<16x32xf32>
    %319 = arith.mulf %215, %318 : vector<16x32xf32>
    %320 = arith.truncf %319 : vector<16x32xf32> to vector<16x32xbf16>
    %cst_129 = arith.constant dense<0.000000e+00> : vector<64x16xf32>
    %321 = tpu.matmul %219, %317, %cst_129 {dimension_numbers = #tpu.dot_dimension_numbers<[1], [1], [0], [0], [0, 0, 1, 0], [], []>} : vector<64x32xbf16>, vector<16x32xbf16>, vector<64x16xf32> -> vector<64x16xf32>
    %322 = vector.broadcast %14 : vector<1x16xf32> to vector<64x16xf32>
    %323 = arith.addf %321, %322 : vector<64x16xf32>
    %cst_130 = arith.constant dense<0xFF800000> : vector<64xf32>
    %324 = vector.multi_reduction <maximumf>, %323, %cst_130 [1] : vector<64x16xf32> to vector<64xf32>
    %325 = vector.shape_cast %324 : vector<64xf32> to vector<64x1xf32>
    %326 = vector.broadcast %325 : vector<64x1xf32> to vector<64x16xf32>
    %327 = arith.subf %323, %326 : vector<64x16xf32>
    %328 = math.exp %327 : vector<64x16xf32>
    %cst_131 = arith.constant dense<0.000000e+00> : vector<64xf32>
    %329 = vector.multi_reduction <add>, %328, %cst_131 [1] : vector<64x16xf32> to vector<64xf32>
    %330 = vector.shape_cast %329 : vector<64xf32> to vector<64x1xf32>
    %331 = tpu.reciprocal %330 {approx = true} : vector<64x1xf32> -> vector<64x1xf32>
    %332 = vector.broadcast %331 : vector<64x1xf32> to vector<64x16xf32>
    %333 = arith.mulf %328, %332 : vector<64x16xf32>
    %334 = arith.truncf %333 : vector<64x16xf32> to vector<64x16xbf16>
    %cst_132 = arith.constant dense<0.000000e+00> : vector<64x32xf32>
    %335 = tpu.matmul %334, %320, %cst_132 {dimension_numbers = #tpu.dot_dimension_numbers<[1], [0], [0], [1], [0, 0, 1, 1], [], []>} : vector<64x16xbf16>, vector<16x32xbf16>, vector<64x32xf32> -> vector<64x32xf32>
    %336 = arith.addf %307, %335 : vector<64x32xf32>
    %c0_133 = arith.constant 0 : index
    %c0_134 = arith.constant 0 : index
    %c0_135 = arith.constant 0 : index
    %c0_136 = arith.constant 0 : index
    %337 = vector.load %arg23[%c0_133, %c0_134, %c0_135, %c0_136] : memref<1x1x32x32xbf16, #tpu.memory_space<vmem>>, vector<1x1x32x32xbf16>
    %338 = vector.shape_cast %337 : vector<1x1x32x32xbf16> to vector<32x32xbf16>
    %339 = arith.truncf %336 : vector<64x32xf32> to vector<64x32xbf16>
    %cst_137 = arith.constant dense<0.000000e+00> : vector<64x32xf32>
    %340 = tpu.matmul %339, %338, %cst_137 {dimension_numbers = #tpu.dot_dimension_numbers<[1], [0], [0], [1], [0, 0, 1, 1], [], []>} : vector<64x32xbf16>, vector<32x32xbf16>, vector<64x32xf32> -> vector<64x32xf32>
    %c0_138 = arith.constant 0 : index
    %c0_139 = arith.constant 0 : index
    %c0_140 = arith.constant 0 : index
    %c0_141 = arith.constant 0 : index
    %341 = vector.load %arg24[%c0_138, %c0_139, %c0_140, %c0_141] : memref<1x1x1x32xf32, #tpu.memory_space<vmem>>, vector<1x1x1x32xf32>
    %342 = vector.shape_cast %341 : vector<1x1x1x32xf32> to vector<1x32xf32>
    %343 = vector.broadcast %342 : vector<1x32xf32> to vector<64x32xf32>
    %344 = arith.addf %340, %343 : vector<64x32xf32>
    %345 = arith.addf %189, %344 : vector<64x32xf32>
    %c0_142 = arith.constant 0 : index
    %c0_143 = arith.constant 0 : index
    %c0_144 = arith.constant 0 : index
    %c0_145 = arith.constant 0 : index
    %346 = vector.load %arg25[%c0_142, %c0_143, %c0_144, %c0_145] : memref<1x1x1x32xf32, #tpu.memory_space<vmem>>, vector<1x1x1x32xf32>
    %347 = vector.shape_cast %346 : vector<1x1x1x32xf32> to vector<1x32xf32>
    %c0_146 = arith.constant 0 : index
    %c0_147 = arith.constant 0 : index
    %c0_148 = arith.constant 0 : index
    %c0_149 = arith.constant 0 : index
    %348 = vector.load %arg26[%c0_146, %c0_147, %c0_148, %c0_149] : memref<1x1x1x32xf32, #tpu.memory_space<vmem>>, vector<1x1x1x32xf32>
    %349 = vector.shape_cast %348 : vector<1x1x1x32xf32> to vector<1x32xf32>
    %cst_150 = arith.constant dense<0.000000e+00> : vector<64xf32>
    %350 = vector.multi_reduction <add>, %345, %cst_150 [1] : vector<64x32xf32> to vector<64xf32>
    %351 = vector.shape_cast %350 : vector<64xf32> to vector<64x1xf32>
    %cst_151 = arith.constant 3.200000e+01 : f32
    %352 = vector.broadcast %cst_151 : f32 to vector<64x1xf32>
    %353 = arith.divf %351, %352 : vector<64x1xf32>
    %354 = vector.broadcast %353 : vector<64x1xf32> to vector<64x32xf32>
    %355 = arith.subf %345, %354 : vector<64x32xf32>
    %356 = arith.mulf %355, %355 : vector<64x32xf32>
    %cst_152 = arith.constant dense<0.000000e+00> : vector<64xf32>
    %357 = vector.multi_reduction <add>, %356, %cst_152 [1] : vector<64x32xf32> to vector<64xf32>
    %358 = vector.shape_cast %357 : vector<64xf32> to vector<64x1xf32>
    %cst_153 = arith.constant 3.200000e+01 : f32
    %359 = vector.broadcast %cst_153 : f32 to vector<64x1xf32>
    %360 = arith.divf %358, %359 : vector<64x1xf32>
    %361 = vector.broadcast %353 : vector<64x1xf32> to vector<64x32xf32>
    %362 = arith.subf %345, %361 : vector<64x32xf32>
    %cst_154 = arith.constant 9.99999974E-6 : f32
    %363 = vector.broadcast %cst_154 : f32 to vector<64x1xf32>
    %364 = arith.addf %360, %363 : vector<64x1xf32>
    %365 = math.rsqrt %364 : vector<64x1xf32>
    %366 = vector.broadcast %365 : vector<64x1xf32> to vector<64x32xf32>
    %367 = arith.mulf %362, %366 : vector<64x32xf32>
    %368 = vector.broadcast %347 : vector<1x32xf32> to vector<64x32xf32>
    %369 = arith.mulf %367, %368 : vector<64x32xf32>
    %370 = vector.broadcast %349 : vector<1x32xf32> to vector<64x32xf32>
    %371 = arith.addf %369, %370 : vector<64x32xf32>
    %c0_155 = arith.constant 0 : index
    %c0_156 = arith.constant 0 : index
    %c0_157 = arith.constant 0 : index
    %c0_158 = arith.constant 0 : index
    %372 = vector.load %arg27[%c0_155, %c0_156, %c0_157, %c0_158] : memref<1x1x32x64xbf16, #tpu.memory_space<vmem>>, vector<1x1x32x64xbf16>
    %373 = vector.shape_cast %372 : vector<1x1x32x64xbf16> to vector<32x64xbf16>
    %374 = arith.truncf %371 : vector<64x32xf32> to vector<64x32xbf16>
    %cst_159 = arith.constant dense<0.000000e+00> : vector<64x64xf32>
    %375 = tpu.matmul %374, %373, %cst_159 {dimension_numbers = #tpu.dot_dimension_numbers<[1], [0], [0], [1], [0, 0, 1, 1], [], []>} : vector<64x32xbf16>, vector<32x64xbf16>, vector<64x64xf32> -> vector<64x64xf32>
    %c0_160 = arith.constant 0 : index
    %c0_161 = arith.constant 0 : index
    %c0_162 = arith.constant 0 : index
    %c0_163 = arith.constant 0 : index
    %376 = vector.load %arg28[%c0_160, %c0_161, %c0_162, %c0_163] : memref<1x1x1x64xf32, #tpu.memory_space<vmem>>, vector<1x1x1x64xf32>
    %377 = vector.shape_cast %376 : vector<1x1x1x64xf32> to vector<1x64xf32>
    %378 = vector.broadcast %377 : vector<1x64xf32> to vector<64x64xf32>
    %379 = arith.addf %375, %378 : vector<64x64xf32>
    %cst_164 = arith.constant 0.000000e+00 : f32
    %380 = vector.broadcast %cst_164 : f32 to vector<64x64xf32>
    %381 = arith.maximumf %379, %380 : vector<64x64xf32>
    %c0_165 = arith.constant 0 : index
    %c0_166 = arith.constant 0 : index
    %c0_167 = arith.constant 0 : index
    %c0_168 = arith.constant 0 : index
    %382 = vector.load %arg29[%c0_165, %c0_166, %c0_167, %c0_168] : memref<1x1x64x32xbf16, #tpu.memory_space<vmem>>, vector<1x1x64x32xbf16>
    %383 = vector.shape_cast %382 : vector<1x1x64x32xbf16> to vector<64x32xbf16>
    %384 = arith.truncf %381 : vector<64x64xf32> to vector<64x64xbf16>
    %cst_169 = arith.constant dense<0.000000e+00> : vector<64x32xf32>
    %385 = tpu.matmul %384, %383, %cst_169 {dimension_numbers = #tpu.dot_dimension_numbers<[1], [0], [0], [1], [0, 0, 1, 1], [], []>} : vector<64x64xbf16>, vector<64x32xbf16>, vector<64x32xf32> -> vector<64x32xf32>
    %c0_170 = arith.constant 0 : index
    %c0_171 = arith.constant 0 : index
    %c0_172 = arith.constant 0 : index
    %c0_173 = arith.constant 0 : index
    %386 = vector.load %arg30[%c0_170, %c0_171, %c0_172, %c0_173] : memref<1x1x1x32xf32, #tpu.memory_space<vmem>>, vector<1x1x1x32xf32>
    %387 = vector.shape_cast %386 : vector<1x1x1x32xf32> to vector<1x32xf32>
    %388 = vector.broadcast %387 : vector<1x32xf32> to vector<64x32xf32>
    %389 = arith.addf %385, %388 : vector<64x32xf32>
    %390 = arith.addf %371, %389 : vector<64x32xf32>
    %c0_174 = arith.constant 0 : index
    %c0_175 = arith.constant 0 : index
    %c0_176 = arith.constant 0 : index
    %c0_177 = arith.constant 0 : index
    %391 = vector.load %arg31[%c0_174, %c0_175, %c0_176, %c0_177] : memref<1x1x1x32xf32, #tpu.memory_space<vmem>>, vector<1x1x1x32xf32>
    %392 = vector.shape_cast %391 : vector<1x1x1x32xf32> to vector<1x32xf32>
    %c0_178 = arith.constant 0 : index
    %c0_179 = arith.constant 0 : index
    %c0_180 = arith.constant 0 : index
    %c0_181 = arith.constant 0 : index
    %393 = vector.load %arg32[%c0_178, %c0_179, %c0_180, %c0_181] : memref<1x1x1x32xf32, #tpu.memory_space<vmem>>, vector<1x1x1x32xf32>
    %394 = vector.shape_cast %393 : vector<1x1x1x32xf32> to vector<1x32xf32>
    %cst_182 = arith.constant dense<0.000000e+00> : vector<64xf32>
    %395 = vector.multi_reduction <add>, %390, %cst_182 [1] : vector<64x32xf32> to vector<64xf32>
    %396 = vector.shape_cast %395 : vector<64xf32> to vector<64x1xf32>
    %cst_183 = arith.constant 3.200000e+01 : f32
    %397 = vector.broadcast %cst_183 : f32 to vector<64x1xf32>
    %398 = arith.divf %396, %397 : vector<64x1xf32>
    %399 = vector.broadcast %398 : vector<64x1xf32> to vector<64x32xf32>
    %400 = arith.subf %390, %399 : vector<64x32xf32>
    %401 = arith.mulf %400, %400 : vector<64x32xf32>
    %cst_184 = arith.constant dense<0.000000e+00> : vector<64xf32>
    %402 = vector.multi_reduction <add>, %401, %cst_184 [1] : vector<64x32xf32> to vector<64xf32>
    %403 = vector.shape_cast %402 : vector<64xf32> to vector<64x1xf32>
    %cst_185 = arith.constant 3.200000e+01 : f32
    %404 = vector.broadcast %cst_185 : f32 to vector<64x1xf32>
    %405 = arith.divf %403, %404 : vector<64x1xf32>
    %406 = vector.broadcast %398 : vector<64x1xf32> to vector<64x32xf32>
    %407 = arith.subf %390, %406 : vector<64x32xf32>
    %cst_186 = arith.constant 9.99999974E-6 : f32
    %408 = vector.broadcast %cst_186 : f32 to vector<64x1xf32>
    %409 = arith.addf %405, %408 : vector<64x1xf32>
    %410 = math.rsqrt %409 : vector<64x1xf32>
    %411 = vector.broadcast %410 : vector<64x1xf32> to vector<64x32xf32>
    %412 = arith.mulf %407, %411 : vector<64x32xf32>
    %413 = vector.broadcast %392 : vector<1x32xf32> to vector<64x32xf32>
    %414 = arith.mulf %412, %413 : vector<64x32xf32>
    %415 = vector.broadcast %394 : vector<1x32xf32> to vector<64x32xf32>
    %416 = arith.addf %414, %415 : vector<64x32xf32>
    %c0_187 = arith.constant 0 : index
    %c0_188 = arith.constant 0 : index
    %c0_189 = arith.constant 0 : index
    %c0_190 = arith.constant 0 : index
    %417 = vector.load %arg35[%c0_187, %c0_188, %c0_189, %c0_190] : memref<1x1x64x32xf32, #tpu.memory_space<vmem>>, vector<1x1x64x32xf32>
    %418 = vector.shape_cast %417 : vector<1x1x64x32xf32> to vector<64x32xf32>
    %419 = vector.shape_cast %416 : vector<64x32xf32> to vector<1x1x64x32xf32>
    tpu.vector_store %arg35[%c0_187, %c0_188, %c0_189, %c0_190], %419 {strides = array<i32>} : memref<1x1x64x32xf32, #tpu.memory_space<vmem>>, vector<1x1x64x32xf32>,
    %c0_191 = arith.constant 0 : index
    %c0_192 = arith.constant 0 : index
    %c0_193 = arith.constant 0 : index
    %420 = vector.load %arg33[%c0_191, %c0_192, %c0_193] : memref<1x1x32xf32, #tpu.memory_space<vmem>>, vector<1x1x32xf32>
    %421 = vector.shape_cast %420 : vector<1x1x32xf32> to vector<1x32xf32>
    %c0_194 = arith.constant 0 : index
    %c0_195 = arith.constant 0 : index
    %c0_196 = arith.constant 0 : index
    %422 = vector.load %arg34[%c0_194, %c0_195, %c0_196] : memref<1x1x32xf32, #tpu.memory_space<vmem>>, vector<1x1x32xf32>
    %423 = vector.shape_cast %422 : vector<1x1x32xf32> to vector<1x32xf32>
    %cst_197 = arith.constant dense<0.000000e+00> : vector<64xf32>
    %424 = vector.multi_reduction <add>, %416, %cst_197 [1] : vector<64x32xf32> to vector<64xf32>
    %425 = vector.shape_cast %424 : vector<64xf32> to vector<64x1xf32>
    %cst_198 = arith.constant 3.200000e+01 : f32
    %426 = vector.broadcast %cst_198 : f32 to vector<64x1xf32>
    %427 = arith.divf %425, %426 : vector<64x1xf32>
    %428 = vector.broadcast %427 : vector<64x1xf32> to vector<64x32xf32>
    %429 = arith.subf %416, %428 : vector<64x32xf32>
    %430 = arith.mulf %429, %429 : vector<64x32xf32>
    %cst_199 = arith.constant dense<0.000000e+00> : vector<64xf32>
    %431 = vector.multi_reduction <add>, %430, %cst_199 [1] : vector<64x32xf32> to vector<64xf32>
    %432 = vector.shape_cast %431 : vector<64xf32> to vector<64x1xf32>
    %cst_200 = arith.constant 3.200000e+01 : f32
    %433 = vector.broadcast %cst_200 : f32 to vector<64x1xf32>
    %434 = arith.divf %432, %433 : vector<64x1xf32>
    %435 = vector.broadcast %427 : vector<64x1xf32> to vector<64x32xf32>
    %436 = arith.subf %416, %435 : vector<64x32xf32>
    %cst_201 = arith.constant 9.99999974E-6 : f32
    %437 = vector.broadcast %cst_201 : f32 to vector<64x1xf32>
    %438 = arith.addf %434, %437 : vector<64x1xf32>
    %439 = math.rsqrt %438 : vector<64x1xf32>
    %440 = vector.broadcast %439 : vector<64x1xf32> to vector<64x32xf32>
    %441 = arith.mulf %436, %440 : vector<64x32xf32>
    %442 = vector.broadcast %421 : vector<1x32xf32> to vector<64x32xf32>
    %443 = arith.mulf %441, %442 : vector<64x32xf32>
    %444 = vector.broadcast %423 : vector<1x32xf32> to vector<64x32xf32>
    %445 = arith.addf %443, %444 : vector<64x32xf32>
    %c0_202 = arith.constant 0 : index
    %c0_203 = arith.constant 0 : index
    %c0_204 = arith.constant 0 : index
    %c0_205 = arith.constant 0 : index
    %c0_206 = arith.constant 0 : index
    %446 = vector.load %arg36[%c0_202, %c0_203, %c0_204, %c0_205, %c0_206] : memref<1x1x1x64x32xf32, #tpu.memory_space<vmem>>, vector<1x1x1x64x32xf32>
    %447 = vector.shape_cast %446 : vector<1x1x1x64x32xf32> to vector<64x32xf32>
    %448 = vector.shape_cast %445 : vector<64x32xf32> to vector<1x1x1x64x32xf32>
    tpu.vector_store %arg36[%c0_202, %c0_203, %c0_204, %c0_205, %c0_206], %448 {strides = array<i32>} : memref<1x1x1x64x32xf32, #tpu.memory_space<vmem>>, vector<1x1x1x64x32xf32>,
    return
  }
  func.func @transform_0(%arg0: i32, %arg1: i32, %arg2: i32) -> (i32, i32, i32) {
    %c0_i32 = arith.constant 0 : i32
    %c0_i32_0 = arith.constant 0 : i32
    %c0_i32_1 = arith.constant 0 : i32
    return %arg1, %c0_i32, %c0_i32_0 : i32, i32, i32
  }
  func.func @transform_1(%arg0: i32, %arg1: i32, %arg2: i32) -> (i32, i32, i32) {
    %c0_i32 = arith.constant 0 : i32
    %c0_i32_0 = arith.constant 0 : i32
    %c0_i32_1 = arith.constant 0 : i32
    return %arg1, %c0_i32, %c0_i32_0 : i32, i32, i32
  }
  func.func @transform_2(%arg0: i32, %arg1: i32, %arg2: i32) -> (i32, i32, i32) {
    %c0_i32 = arith.constant 0 : i32
    %c0_i32_0 = arith.constant 0 : i32
    %c0_i32_1 = arith.constant 0 : i32
    return %arg1, %c0_i32, %c0_i32_0 : i32, i32, i32
  }
  func.func @transform_3(%arg0: i32, %arg1: i32, %arg2: i32) -> (i32, i32, i32) {
    %c0_i32 = arith.constant 0 : i32
    %c0_i32_0 = arith.constant 0 : i32
    %c0_i32_1 = arith.constant 0 : i32
    return %arg1, %c0_i32, %c0_i32_0 : i32, i32, i32
  }
  func.func @transform_4(%arg0: i32, %arg1: i32, %arg2: i32) -> (i32, i32, i32) {
    %c0_i32 = arith.constant 0 : i32
    %c0_i32_0 = arith.constant 0 : i32
    %c0_i32_1 = arith.constant 0 : i32
    return %arg1, %c0_i32, %c0_i32_0 : i32, i32, i32
  }
  func.func @transform_5(%arg0: i32, %arg1: i32, %arg2: i32) -> (i32, i32, i32) {
    %c0_i32 = arith.constant 0 : i32
    %c0_i32_0 = arith.constant 0 : i32
    %c0_i32_1 = arith.constant 0 : i32
    return %arg1, %c0_i32, %c0_i32_0 : i32, i32, i32
  }
  func.func @transform_6(%arg0: i32, %arg1: i32, %arg2: i32) -> (i32, i32, i32, i32) {
    %c0_i32 = arith.constant 0 : i32
    %c0_i32_0 = arith.constant 0 : i32
    %c0_i32_1 = arith.constant 0 : i32
    return %arg0, %arg2, %c0_i32, %c0_i32_0 : i32, i32, i32, i32
  }
  func.func @transform_7(%arg0: i32, %arg1: i32, %arg2: i32) -> (i32, i32, i32, i32) {
    %c0_i32 = arith.constant 0 : i32
    %c0_i32_0 = arith.constant 0 : i32
    %c0_i32_1 = arith.constant 0 : i32
    return %arg0, %arg2, %c0_i32, %c0_i32_0 : i32, i32, i32, i32
  }
  func.func @transform_8(%arg0: i32, %arg1: i32, %arg2: i32) -> (i32, i32, i32, i32) {
    %c0_i32 = arith.constant 0 : i32
    %c0_i32_0 = arith.constant 0 : i32
    %c0_i32_1 = arith.constant 0 : i32
    return %arg0, %arg2, %c0_i32, %c0_i32_0 : i32, i32, i32, i32
  }
  func.func @transform_9(%arg0: i32, %arg1: i32, %arg2: i32) -> (i32, i32, i32, i32) {
    %c0_i32 = arith.constant 0 : i32
    %c0_i32_0 = arith.constant 0 : i32
    %c0_i32_1 = arith.constant 0 : i32
    return %arg0, %arg2, %c0_i32, %c0_i32_0 : i32, i32, i32, i32
  }
  func.func @transform_10(%arg0: i32, %arg1: i32, %arg2: i32) -> (i32, i32, i32, i32) {
    %c0_i32 = arith.constant 0 : i32
    %c0_i32_0 = arith.constant 0 : i32
    %c0_i32_1 = arith.constant 0 : i32
    return %arg0, %arg2, %c0_i32, %c0_i32_0 : i32, i32, i32, i32
  }
  func.func @transform_11(%arg0: i32, %arg1: i32, %arg2: i32) -> (i32, i32, i32, i32) {
    %c0_i32 = arith.constant 0 : i32
    %c0_i32_0 = arith.constant 0 : i32
    %c0_i32_1 = arith.constant 0 : i32
    return %arg0, %arg2, %c0_i32, %c0_i32_0 : i32, i32, i32, i32
  }
  func.func @transform_12(%arg0: i32, %arg1: i32, %arg2: i32) -> (i32, i32, i32, i32) {
    %c0_i32 = arith.constant 0 : i32
    %c0_i32_0 = arith.constant 0 : i32
    %c0_i32_1 = arith.constant 0 : i32
    return %arg0, %arg2, %c0_i32, %c0_i32_0 : i32, i32, i32, i32
  }
  func.func @transform_13(%arg0: i32, %arg1: i32, %arg2: i32) -> (i32, i32, i32, i32) {
    %c0_i32 = arith.constant 0 : i32
    %c0_i32_0 = arith.constant 0 : i32
    %c0_i32_1 = arith.constant 0 : i32
    return %arg0, %arg2, %c0_i32, %c0_i32_0 : i32, i32, i32, i32
  }
  func.func @transform_14(%arg0: i32, %arg1: i32, %arg2: i32) -> (i32, i32, i32, i32) {
    %c0_i32 = arith.constant 0 : i32
    %c0_i32_0 = arith.constant 0 : i32
    %c0_i32_1 = arith.constant 0 : i32
    return %arg0, %arg2, %c0_i32, %c0_i32_0 : i32, i32, i32, i32
  }
  func.func @transform_15(%arg0: i32, %arg1: i32, %arg2: i32) -> (i32, i32, i32, i32) {
    %c0_i32 = arith.constant 0 : i32
    %c0_i32_0 = arith.constant 0 : i32
    %c0_i32_1 = arith.constant 0 : i32
    return %arg0, %arg2, %c0_i32, %c0_i32_0 : i32, i32, i32, i32
  }
  func.func @transform_16(%arg0: i32, %arg1: i32, %arg2: i32) -> (i32, i32, i32, i32) {
    %c0_i32 = arith.constant 0 : i32
    %c0_i32_0 = arith.constant 0 : i32
    %c0_i32_1 = arith.constant 0 : i32
    return %arg0, %arg2, %c0_i32, %c0_i32_0 : i32, i32, i32, i32
  }
  func.func @transform_17(%arg0: i32, %arg1: i32, %arg2: i32) -> (i32, i32, i32, i32) {
    %c0_i32 = arith.constant 0 : i32
    %c0_i32_0 = arith.constant 0 : i32
    %c0_i32_1 = arith.constant 0 : i32
    return %arg0, %arg2, %c0_i32, %c0_i32_0 : i32, i32, i32, i32
  }
  func.func @transform_18(%arg0: i32, %arg1: i32, %arg2: i32) -> (i32, i32, i32, i32) {
    %c0_i32 = arith.constant 0 : i32
    %c0_i32_0 = arith.constant 0 : i32
    %c0_i32_1 = arith.constant 0 : i32
    return %arg0, %arg2, %c0_i32, %c0_i32_0 : i32, i32, i32, i32
  }
  func.func @transform_19(%arg0: i32, %arg1: i32, %arg2: i32) -> (i32, i32, i32, i32) {
    %c0_i32 = arith.constant 0 : i32
    %c0_i32_0 = arith.constant 0 : i32
    %c0_i32_1 = arith.constant 0 : i32
    return %arg0, %arg2, %c0_i32, %c0_i32_0 : i32, i32, i32, i32
  }
  func.func @transform_20(%arg0: i32, %arg1: i32, %arg2: i32) -> (i32, i32, i32, i32) {
    %c0_i32 = arith.constant 0 : i32
    %c0_i32_0 = arith.constant 0 : i32
    %c0_i32_1 = arith.constant 0 : i32
    return %arg0, %arg2, %c0_i32, %c0_i32_0 : i32, i32, i32, i32
  }
  func.func @transform_21(%arg0: i32, %arg1: i32, %arg2: i32) -> (i32, i32, i32, i32) {
    %c0_i32 = arith.constant 0 : i32
    %c0_i32_0 = arith.constant 0 : i32
    %c0_i32_1 = arith.constant 0 : i32
    return %arg0, %arg2, %c0_i32, %c0_i32_0 : i32, i32, i32, i32
  }
  func.func @transform_22(%arg0: i32, %arg1: i32, %arg2: i32) -> (i32, i32, i32, i32) {
    %c0_i32 = arith.constant 0 : i32
    %c0_i32_0 = arith.constant 0 : i32
    %c0_i32_1 = arith.constant 0 : i32
    return %arg0, %arg2, %c0_i32, %c0_i32_0 : i32, i32, i32, i32
  }
  func.func @transform_23(%arg0: i32, %arg1: i32, %arg2: i32) -> (i32, i32, i32, i32) {
    %c0_i32 = arith.constant 0 : i32
    %c0_i32_0 = arith.constant 0 : i32
    %c0_i32_1 = arith.constant 0 : i32
    return %arg0, %arg2, %c0_i32, %c0_i32_0 : i32, i32, i32, i32
  }
  func.func @transform_24(%arg0: i32, %arg1: i32, %arg2: i32) -> (i32, i32, i32, i32) {
    %c0_i32 = arith.constant 0 : i32
    %c0_i32_0 = arith.constant 0 : i32
    %c0_i32_1 = arith.constant 0 : i32
    return %arg0, %arg2, %c0_i32, %c0_i32_0 : i32, i32, i32, i32
  }
  func.func @transform_25(%arg0: i32, %arg1: i32, %arg2: i32) -> (i32, i32, i32, i32) {
    %c0_i32 = arith.constant 0 : i32
    %c0_i32_0 = arith.constant 0 : i32
    %c0_i32_1 = arith.constant 0 : i32
    return %arg0, %arg2, %c0_i32, %c0_i32_0 : i32, i32, i32, i32
  }
  func.func @transform_26(%arg0: i32, %arg1: i32, %arg2: i32) -> (i32, i32, i32, i32) {
    %c0_i32 = arith.constant 0 : i32
    %c0_i32_0 = arith.constant 0 : i32
    %c0_i32_1 = arith.constant 0 : i32
    return %arg0, %arg2, %c0_i32, %c0_i32_0 : i32, i32, i32, i32
  }
  func.func @transform_27(%arg0: i32, %arg1: i32, %arg2: i32) -> (i32, i32, i32, i32) {
    %c0_i32 = arith.constant 0 : i32
    %c0_i32_0 = arith.constant 0 : i32
    %c0_i32_1 = arith.constant 0 : i32
    return %arg0, %arg2, %c0_i32, %c0_i32_0 : i32, i32, i32, i32
  }
  func.func @transform_28(%arg0: i32, %arg1: i32, %arg2: i32) -> (i32, i32, i32, i32) {
    %c0_i32 = arith.constant 0 : i32
    %c0_i32_0 = arith.constant 0 : i32
    %c0_i32_1 = arith.constant 0 : i32
    return %arg0, %arg2, %c0_i32, %c0_i32_0 : i32, i32, i32, i32
  }
  func.func @transform_29(%arg0: i32, %arg1: i32, %arg2: i32) -> (i32, i32, i32, i32) {
    %c0_i32 = arith.constant 0 : i32
    %c0_i32_0 = arith.constant 0 : i32
    %c0_i32_1 = arith.constant 0 : i32
    return %arg0, %arg2, %c0_i32, %c0_i32_0 : i32, i32, i32, i32
  }
  func.func @transform_30(%arg0: i32, %arg1: i32, %arg2: i32) -> (i32, i32, i32) {
    %c0_i32 = arith.constant 0 : i32
    %c0_i32_0 = arith.constant 0 : i32
    %c0_i32_1 = arith.constant 0 : i32
    return %arg0, %c0_i32, %c0_i32_0 : i32, i32, i32
  }
  func.func @transform_31(%arg0: i32, %arg1: i32, %arg2: i32) -> (i32, i32, i32) {
    %c0_i32 = arith.constant 0 : i32
    %c0_i32_0 = arith.constant 0 : i32
    %c0_i32_1 = arith.constant 0 : i32
    return %arg0, %c0_i32, %c0_i32_0 : i32, i32, i32
  }
  func.func @transform_32(%arg0: i32, %arg1: i32, %arg2: i32) -> (i32, i32, i32, i32) {
    %c0_i32 = arith.constant 0 : i32
    %c0_i32_0 = arith.constant 0 : i32
    %c0_i32_1 = arith.constant 0 : i32
    return %arg0, %arg1, %c0_i32, %c0_i32_0 : i32, i32, i32, i32
  }
  func.func @transform_33(%arg0: i32, %arg1: i32, %arg2: i32) -> (i32, i32, i32, i32, i32) {
    %c0_i32 = arith.constant 0 : i32
    %c0_i32_0 = arith.constant 0 : i32
    %c0_i32_1 = arith.constant 0 : i32
    return %arg2, %arg0, %arg1, %c0_i32, %c0_i32_0 : i32, i32, i32, i32, i32
  }
}

</mosaic_0001>

<llo_original>
// kernel: transformer_forward.2
$region0: #{transformer_forward.2}
  #allocation0 [shape = 'u32[]', space=smem, size = 0x4, offset = 0x4, fixed_abs, tag = 'smem constant byte address 0x4 - core index']
  #allocation1 [shape = 'u32[144,128]{1,0:T(1,128)}', space=vmem, size = 0x12000, scoped, tag = 'internal scratch']
  %s0 = inlined_call_operand.vmem [shape: f32[2,16,32], index: 0, kind: input, shape index: {}]
  %s1 = inlined_call_operand.vmem [shape: f32[2,16,32], index: 1, kind: input, shape index: {}]
  %s2 = inlined_call_operand.vmem [shape: f32[2,1,16], index: 2, kind: input, shape index: {}]
  %s3 = inlined_call_operand.hbm [shape: bf16[2,32,64], index: 3, kind: input, shape index: {}]
  %s4 = inlined_call_operand.hbm [shape: f32[2,1,64], index: 4, kind: input, shape index: {}]
  %s5 = inlined_call_operand.hbm [shape: bf16[2,32,32], index: 5, kind: input, shape index: {}]
  %s6 = inlined_call_operand.hbm [shape: f32[2,1,32], index: 6, kind: input, shape index: {}]
  %s7 = inlined_call_operand.hbm [shape: bf16[2,32,32], index: 7, kind: input, shape index: {}]
  %s8 = inlined_call_operand.hbm [shape: f32[2,1,32], index: 8, kind: input, shape index: {}]
  %s9 = inlined_call_operand.hbm [shape: f32[2,1,32], index: 9, kind: input, shape index: {}]
  %s10 = inlined_call_operand.hbm [shape: f32[2,1,32], index: 10, kind: input, shape index: {}]
  %s11 = inlined_call_operand.hbm [shape: bf16[2,32,64], index: 11, kind: input, shape index: {}]
  %s12 = inlined_call_operand.hbm [shape: f32[2,1,64], index: 12, kind: input, shape index: {}]
  %s13 = inlined_call_operand.vmem [shape: bf16[2,64,32], index: 13, kind: input, shape index: {}]
  %s14 = inlined_call_operand.hbm [shape: f32[2,1,32], index: 14, kind: input, shape index: {}]
  %s15 = inlined_call_operand.hbm [shape: f32[2,1,32], index: 15, kind: input, shape index: {}]
  %s16 = inlined_call_operand.hbm [shape: f32[2,1,32], index: 16, kind: input, shape index: {}]
  %s17 = inlined_call_operand.vmem [shape: f32[2,16,32], index: 17, kind: output, shape index: {}]
  %s18 = sld [smem:[#allocation0]]
  $region157: #{transformer_forward.2} parent=0
    _
  %s20 = ssub.s32 1, %s18
  %s21 = scalar_select 0, %s20, %s18
  $region1: #{transformer_forward.2} parent=0
    #allocation2 [shape = 'u8[16384]{0}', space=vmem, size = 0x4000, scoped, tag = 'input window, operand 3']
    #allocation3 [shape = 's32[2]{0}', space=sflag, size = 0x8, scoped, tag = 'scoped memory for transformer_forward.2']
    #allocation4 [shape = 'u8[1024]{0}', space=vmem, size = 0x400, scoped, tag = 'input window, operand 4']
    #allocation5 [shape = 's32[2]{0}', space=sflag, size = 0x8, scoped, tag = 'scoped memory for transformer_forward.2']
    #allocation6 [shape = 'u8[16384]{0}', space=vmem, size = 0x4000, scoped, tag = 'input window, operand 5']
    #allocation7 [shape = 'u8[1024]{0}', space=vmem, size = 0x400, scoped, tag = 'input window, operand 6']
    #allocation8 [shape = 's32[2]{0}', space=sflag, size = 0x8, scoped, tag = 'scoped memory for transformer_forward.2']
    #allocation9 [shape = 'u8[16384]{0}', space=vmem, size = 0x4000, scoped, tag = 'input window, operand 7']
    #allocation10 [shape = 'u8[1024]{0}', space=vmem, size = 0x400, scoped, tag = 'input window, operand 8']
    #allocation11 [shape = 's32[2]{0}', space=sflag, size = 0x8, scoped, tag = 'scoped memory for transformer_forward.2']
    #allocation12 [shape = 'u8[1024]{0}', space=vmem, size = 0x400, scoped, tag = 'input window, operand 9']
    #allocation13 [shape = 'u8[1024]{0}', space=vmem, size = 0x400, scoped, tag = 'input window, operand 10']
    #allocation14 [shape = 's32[2]{0}', space=sflag, size = 0x8, scoped, tag = 'scoped memory for transformer_forward.2']
    #allocation15 [shape = 'u8[16384]{0}', space=vmem, size = 0x4000, scoped, tag = 'input window, operand 11']
    #allocation16 [shape = 'u8[1024]{0}', space=vmem, size = 0x400, scoped, tag = 'input window, operand 12']
    #allocation17 [shape = 's32[2]{0}', space=sflag, size = 0x8, scoped, tag = 'scoped memory for transformer_forward.2']
    #allocation18 [shape = 'u8[1024]{0}', space=vmem, size = 0x400, scoped, tag = 'input window, operand 14']
    #allocation19 [shape = 'u8[1024]{0}', space=vmem, size = 0x400, scoped, tag = 'input window, operand 15']
    #allocation20 [shape = 's32[2]{0}', space=sflag, size = 0x8, scoped, tag = 'scoped memory for transformer_forward.2']
    #allocation21 [shape = 'u8[1024]{0}', space=vmem, size = 0x400, scoped, tag = 'input window, operand 16']
    %22 = vsyncpa [#allocation3], 0
    %s23 = scalar_lea.sflag [#allocation3], 1
    %24 = vsyncpa %s23, 0
    %25 = vsyncpa [#allocation5], 0
    %s26 = scalar_lea.sflag [#allocation5], 1
    %27 = vsyncpa %s26, 0
    %28 = vsyncpa [#allocation8], 0
    %s29 = scalar_lea.sflag [#allocation8], 1
    %30 = vsyncpa %s29, 0
    %31 = vsyncpa [#allocation11], 0
    %s32 = scalar_lea.sflag [#allocation11], 1
    %33 = vsyncpa %s32, 0
    %34 = vsyncpa [#allocation14], 0
    %s35 = scalar_lea.sflag [#allocation14], 1
    %36 = vsyncpa %s35, 0
    %37 = vsyncpa [#allocation17], 0
    %s38 = scalar_lea.sflag [#allocation17], 1
    %39 = vsyncpa %s38, 0
    %40 = vsyncpa [#allocation20], 0
    %s41 = scalar_lea.sflag [#allocation20], 1
    %42 = vsyncpa %s41, 0
    loop: start=0, step=1, limit=6
    $region2: #{transformer_forward.2} parent=1 // loop_pre_header
      _
    $region3: #{transformer_forward.2} parent=1 // loop_header
      %s44 = sphi 0, %s48
      %p45 = scmp.ge.s32.totalorder %s44, 6
      %s51 = sphi 0, %s63
      %s52 = sphi 0, %s59
      %s53 = sphi 0, %s51
      %s54 = sphi 0, %s52
      %s55 = sphi 0, %s53
      %s56 = sphi 0, %s54
      %s66 = sphi 0, %s68
      %s69 = sphi 0, %s66
      %s70 = sphi 0, %s69
      %s86 = sphi 0, %s70
      %s92 = sphi 0, %s94
      %s95 = sphi 0, %s92
      %s96 = sphi 0, %s95
      %s112 = sphi 0, %s96
      %s118 = sphi 0, %s120
      %s121 = sphi 0, %s118
      %s122 = sphi 0, %s121
      %s138 = sphi 0, %s122
      %s144 = sphi 0, %s146
      %s147 = sphi 0, %s144
      %s148 = sphi 0, %s147
      %s164 = sphi 0, %s148
      %s170 = sphi 0, %s172
      %s173 = sphi 0, %s170
      %s174 = sphi 0, %s173
      %s190 = sphi 0, %s174
      %s196 = sphi 0, %s198
      %s199 = sphi 0, %s196
      %s200 = sphi 0, %s199
      %s216 = sphi 0, %s200
      %s222 = sphi 0, %s224
      %s225 = sphi 0, %s222
      %s226 = sphi 0, %s225
      %s242 = sphi 0, %s226
      %s248 = sphi 0, %s250
      %s251 = sphi 0, %s248
      %s252 = sphi 0, %s251
      %s268 = sphi 0, %s252
      %s274 = sphi 0, %s276
      %s277 = sphi 0, %s274
      %s278 = sphi 0, %s277
      %s294 = sphi 0, %s278
      %s300 = sphi 0, %s302
      %s303 = sphi 0, %s300
      %s304 = sphi 0, %s303
      %s320 = sphi 0, %s304
      %s326 = sphi 0, %s328
      %s329 = sphi 0, %s326
      %s330 = sphi 0, %s329
      %s346 = sphi 0, %s330
      %s352 = sphi 0, %s354
      %s355 = sphi 0, %s352
      %s356 = sphi 0, %s355
      %s372 = sphi 0, %s356
      %s378 = sphi 0, %s380
      %s381 = sphi 0, %s378
      %s382 = sphi 0, %s381
      %s398 = sphi 0, %s382
      %s404 = sphi 0, %s406
      %s407 = sphi 0, %s404
      %s408 = sphi 0, %s407
      %s424 = sphi 0, %s408
      %s430 = sphi 0, %s432
      %s433 = sphi 0, %s430
      %s434 = sphi 0, %s433
      %s450 = sphi 0, %s434
      %s456 = sphi 0, %s458
      %s459 = sphi 0, %s456
      %s460 = sphi 0, %s459
      %s476 = sphi 0, %s460
      %s482 = sphi 0, %s484
      %s485 = sphi 0, %s482
      %s486 = sphi 0, %s485
      %s502 = sphi 0, %s486
      %s508 = sphi 0, %s510
      %s511 = sphi 0, %s508
      %s512 = sphi 0, %s511
      %s528 = sphi 0, %s512
    $region4: #{transformer_forward.2} parent=1 // loop_header_branch
      %47 = sbr.rel (%p45) target = $region8
    $region5: #{transformer_forward.2} parent=1 // loop_body
      %s49 = ssub.s32 %s44, 1
      %s50 = ssub.s32 %s44, 2
      %s57 = sadd.s32 1, %s52
      %p58 = scmp.ge.s32.totalorder %s57, 2
      %s59 = scalar_select %p58, 0, %s57
      %s60 = sadd.s32 1, %s51
      %s61 = scalar_select %p58, %s60, %s51
      %p62 = scmp.ge.s32.totalorder %s61, 2
      %s63 = scalar_select %p62, 0, %s61
      %s64 = ssub.s32 %s51, %s63
      %p65 = scmp.eq.s32.totalorder %s64, 0
      %s67 = sadd.s32 %s66, 1
      %s68 = scalar_select %p65, %s66, %s67
      %p71 = pneg %p65
      %p72 = scmp.eq.s32.totalorder %s44, 3
      %p73 = por %p71, %p72
      %p74 = scmp.ne.s32.totalorder %s66, %s69
      %p75 = scmp.eq.s32.totalorder %s44, 0
      %p76 = por %p74, %p75
      %p77 = scmp.ne.s32.totalorder %s66, %s69
      %p78 = scmp.eq.s32.totalorder %s49, 3
      %p79 = por %p77, %p78
      %p80 = scmp.ne.s32.totalorder %s69, %s70
      %p81 = scmp.eq.s32.totalorder %s49, 0
      %p82 = por %p80, %p81
      %p83 = scmp.ne.s32.totalorder %s69, %s70
      %p84 = scmp.eq.s32.totalorder %s50, 3
      %p85 = por %p83, %p84
      %p87 = scmp.ne.s32.totalorder %s70, %s86
      %p88 = scmp.eq.s32.totalorder %s50, 0
      %p89 = por %p87, %p88
      %s90 = ssub.s32 %s51, %s63
      %p91 = scmp.eq.s32.totalorder %s90, 0
      %s93 = sadd.s32 %s92, 1
      %s94 = scalar_select %p91, %s92, %s93
      %p97 = pneg %p91
      %p98 = scmp.eq.s32.totalorder %s44, 3
      %p99 = por %p97, %p98
      %p100 = scmp.ne.s32.totalorder %s92, %s95
      %p101 = scmp.eq.s32.totalorder %s44, 0
      %p102 = por %p100, %p101
      %p103 = scmp.ne.s32.totalorder %s92, %s95
      %p104 = scmp.eq.s32.totalorder %s49, 3
      %p105 = por %p103, %p104
      %p106 = scmp.ne.s32.totalorder %s95, %s96
      %p107 = scmp.eq.s32.totalorder %s49, 0
      %p108 = por %p106, %p107
      %p109 = scmp.ne.s32.totalorder %s95, %s96
      %p110 = scmp.eq.s32.totalorder %s50, 3
      %p111 = por %p109, %p110
      %p113 = scmp.ne.s32.totalorder %s96, %s112
      %p114 = scmp.eq.s32.totalorder %s50, 0
      %p115 = por %p113, %p114
      %s116 = ssub.s32 %s51, %s63
      %p117 = scmp.eq.s32.totalorder %s116, 0
      %s119 = sadd.s32 %s118, 1
      %s120 = scalar_select %p117, %s118, %s119
      %p123 = pneg %p117
      %p124 = scmp.eq.s32.totalorder %s44, 3
      %p125 = por %p123, %p124
      %p126 = scmp.ne.s32.totalorder %s118, %s121
      %p127 = scmp.eq.s32.totalorder %s44, 0
      %p128 = por %p126, %p127
      %p129 = scmp.ne.s32.totalorder %s118, %s121
      %p130 = scmp.eq.s32.totalorder %s49, 3
      %p131 = por %p129, %p130
      %p132 = scmp.ne.s32.totalorder %s121, %s122
      %p133 = scmp.eq.s32.totalorder %s49, 0
      %p134 = por %p132, %p133
      %p135 = scmp.ne.s32.totalorder %s121, %s122
      %p136 = scmp.eq.s32.totalorder %s50, 3
      %p137 = por %p135, %p136
      %p139 = scmp.ne.s32.totalorder %s122, %s138
      %p140 = scmp.eq.s32.totalorder %s50, 0
      %p141 = por %p139, %p140
      %s142 = ssub.s32 %s52, %s59
      %p143 = scmp.eq.s32.totalorder %s142, 0
      %s145 = sadd.s32 %s144, 1
      %s146 = scalar_select %p143, %s144, %s145
      %p149 = pneg %p143
      %p150 = scmp.eq.s32.totalorder %s44, 3
      %p151 = por %p149, %p150
      %p152 = scmp.ne.s32.totalorder %s144, %s147
      %p153 = scmp.eq.s32.totalorder %s44, 0
      %p154 = por %p152, %p153
      %p155 = scmp.ne.s32.totalorder %s144, %s147
      %p156 = scmp.eq.s32.totalorder %s49, 3
      %p157 = por %p155, %p156
      %p158 = scmp.ne.s32.totalorder %s147, %s148
      %p159 = scmp.eq.s32.totalorder %s49, 0
      %p160 = por %p158, %p159
      %p161 = scmp.ne.s32.totalorder %s147, %s148
      %p162 = scmp.eq.s32.totalorder %s50, 3
      %p163 = por %p161, %p162
      %p165 = scmp.ne.s32.totalorder %s148, %s164
      %p166 = scmp.eq.s32.totalorder %s50, 0
      %p167 = por %p165, %p166
      %s168 = ssub.s32 %s52, %s59
      %p169 = scmp.eq.s32.totalorder %s168, 0
      %s171 = sadd.s32 %s170, 1
      %s172 = scalar_select %p169, %s170, %s171
      %p175 = pneg %p169
      %p176 = scmp.eq.s32.totalorder %s44, 3
      %p177 = por %p175, %p176
      %p178 = scmp.ne.s32.totalorder %s170, %s173
      %p179 = scmp.eq.s32.totalorder %s44, 0
      %p180 = por %p178, %p179
      %p181 = scmp.ne.s32.totalorder %s170, %s173
      %p182 = scmp.eq.s32.totalorder %s49, 3
      %p183 = por %p181, %p182
      %p184 = scmp.ne.s32.totalorder %s173, %s174
      %p185 = scmp.eq.s32.totalorder %s49, 0
      %p186 = por %p184, %p185
      %p187 = scmp.ne.s32.totalorder %s173, %s174
      %p188 = scmp.eq.s32.totalorder %s50, 3
      %p189 = por %p187, %p188
      %p191 = scmp.ne.s32.totalorder %s174, %s190
      %p192 = scmp.eq.s32.totalorder %s50, 0
      %p193 = por %p191, %p192
      %s194 = ssub.s32 %s52, %s59
      %p195 = scmp.eq.s32.totalorder %s194, 0
      %s197 = sadd.s32 %s196, 1
      %s198 = scalar_select %p195, %s196, %s197
      %p201 = pneg %p195
      %p202 = scmp.eq.s32.totalorder %s44, 3
      %p203 = por %p201, %p202
      %p204 = scmp.ne.s32.totalorder %s196, %s199
      %p205 = scmp.eq.s32.totalorder %s44, 0
      %p206 = por %p204, %p205
      %p207 = scmp.ne.s32.totalorder %s196, %s199
      %p208 = scmp.eq.s32.totalorder %s49, 3
      %p209 = por %p207, %p208
      %p210 = scmp.ne.s32.totalorder %s199, %s200
      %p211 = scmp.eq.s32.totalorder %s49, 0
      %p212 = por %p210, %p211
      %p213 = scmp.ne.s32.totalorder %s199, %s200
      %p214 = scmp.eq.s32.totalorder %s50, 3
      %p215 = por %p213, %p214
      %p217 = scmp.ne.s32.totalorder %s200, %s216
      %p218 = scmp.eq.s32.totalorder %s50, 0
      %p219 = por %p217, %p218
      %s220 = ssub.s32 %s52, %s59
      %p221 = scmp.eq.s32.totalorder %s220, 0
      %s223 = sadd.s32 %s222, 1
      %s224 = scalar_select %p221, %s222, %s223
      %p227 = pneg %p221
      %p228 = scmp.eq.s32.totalorder %s44, 3
      %p229 = por %p227, %p228
      %p230 = scmp.ne.s32.totalorder %s222, %s225
      %p231 = scmp.eq.s32.totalorder %s44, 0
      %p232 = por %p230, %p231
      %p233 = scmp.ne.s32.totalorder %s222, %s225
      %p234 = scmp.eq.s32.totalorder %s49, 3
      %p235 = por %p233, %p234
      %p236 = scmp.ne.s32.totalorder %s225, %s226
      %p237 = scmp.eq.s32.totalorder %s49, 0
      %p238 = por %p236, %p237
      %p239 = scmp.ne.s32.totalorder %s225, %s226
      %p240 = scmp.eq.s32.totalorder %s50, 3
      %p241 = por %p239, %p240
      %p243 = scmp.ne.s32.totalorder %s226, %s242
      %p244 = scmp.eq.s32.totalorder %s50, 0
      %p245 = por %p243, %p244
      %s246 = ssub.s32 %s52, %s59
      %p247 = scmp.eq.s32.totalorder %s246, 0
      %s249 = sadd.s32 %s248, 1
      %s250 = scalar_select %p247, %s248, %s249
      %p253 = pneg %p247
      %p254 = scmp.eq.s32.totalorder %s44, 3
      %p255 = por %p253, %p254
      %p256 = scmp.ne.s32.totalorder %s248, %s251
      %p257 = scmp.eq.s32.totalorder %s44, 0
      %p258 = por %p256, %p257
      %p259 = scmp.ne.s32.totalorder %s248, %s251
      %p260 = scmp.eq.s32.totalorder %s49, 3
      %p261 = por %p259, %p260
      %p262 = scmp.ne.s32.totalorder %s251, %s252
      %p263 = scmp.eq.s32.totalorder %s49, 0
      %p264 = por %p262, %p263
      %p265 = scmp.ne.s32.totalorder %s251, %s252
      %p266 = scmp.eq.s32.totalorder %s50, 3
      %p267 = por %p265, %p266
      %p269 = scmp.ne.s32.totalorder %s252, %s268
      %p270 = scmp.eq.s32.totalorder %s50, 0
      %p271 = por %p269, %p270
      %s272 = ssub.s32 %s52, %s59
      %p273 = scmp.eq.s32.totalorder %s272, 0
      %s275 = sadd.s32 %s274, 1
      %s276 = scalar_select %p273, %s274, %s275
      %p279 = pneg %p273
      %p280 = scmp.eq.s32.totalorder %s44, 3
      %p281 = por %p279, %p280
      %p282 = scmp.ne.s32.totalorder %s274, %s277
      %p283 = scmp.eq.s32.totalorder %s44, 0
      %p284 = por %p282, %p283
      %p285 = scmp.ne.s32.totalorder %s274, %s277
      %p286 = scmp.eq.s32.totalorder %s49, 3
      %p287 = por %p285, %p286
      %p288 = scmp.ne.s32.totalorder %s277, %s278
      %p289 = scmp.eq.s32.totalorder %s49, 0
      %p290 = por %p288, %p289
      %p291 = scmp.ne.s32.totalorder %s277, %s278
      %p292 = scmp.eq.s32.totalorder %s50, 3
      %p293 = por %p291, %p292
      %p295 = scmp.ne.s32.totalorder %s278, %s294
      %p296 = scmp.eq.s32.totalorder %s50, 0
      %p297 = por %p295, %p296
      %s298 = ssub.s32 %s52, %s59
      %p299 = scmp.eq.s32.totalorder %s298, 0
      %s301 = sadd.s32 %s300, 1
      %s302 = scalar_select %p299, %s300, %s301
      %p305 = pneg %p299
      %p306 = scmp.eq.s32.totalorder %s44, 3
      %p307 = por %p305, %p306
      %p308 = scmp.ne.s32.totalorder %s300, %s303
      %p309 = scmp.eq.s32.totalorder %s44, 0
      %p310 = por %p308, %p309
      %p311 = scmp.ne.s32.totalorder %s300, %s303
      %p312 = scmp.eq.s32.totalorder %s49, 3
      %p313 = por %p311, %p312
      %p314 = scmp.ne.s32.totalorder %s303, %s304
      %p315 = scmp.eq.s32.totalorder %s49, 0
      %p316 = por %p314, %p315
      %p317 = scmp.ne.s32.totalorder %s303, %s304
      %p318 = scmp.eq.s32.totalorder %s50, 3
      %p319 = por %p317, %p318
      %p321 = scmp.ne.s32.totalorder %s304, %s320
      %p322 = scmp.eq.s32.totalorder %s50, 0
      %p323 = por %p321, %p322
      %s324 = ssub.s32 %s52, %s59
      %p325 = scmp.eq.s32.totalorder %s324, 0
      %s327 = sadd.s32 %s326, 1
      %s328 = scalar_select %p325, %s326, %s327
      %p331 = pneg %p325
      %p332 = scmp.eq.s32.totalorder %s44, 3
      %p333 = por %p331, %p332
      %p334 = scmp.ne.s32.totalorder %s326, %s329
      %p335 = scmp.eq.s32.totalorder %s44, 0
      %p336 = por %p334, %p335
      %p337 = scmp.ne.s32.totalorder %s326, %s329
      %p338 = scmp.eq.s32.totalorder %s49, 3
      %p339 = por %p337, %p338
      %p340 = scmp.ne.s32.totalorder %s329, %s330
      %p341 = scmp.eq.s32.totalorder %s49, 0
      %p342 = por %p340, %p341
      %p343 = scmp.ne.s32.totalorder %s329, %s330
      %p344 = scmp.eq.s32.totalorder %s50, 3
      %p345 = por %p343, %p344
      %p347 = scmp.ne.s32.totalorder %s330, %s346
      %p348 = scmp.eq.s32.totalorder %s50, 0
      %p349 = por %p347, %p348
      %s350 = ssub.s32 %s52, %s59
      %p351 = scmp.eq.s32.totalorder %s350, 0
      %s353 = sadd.s32 %s352, 1
      %s354 = scalar_select %p351, %s352, %s353
      %p357 = pneg %p351
      %p358 = scmp.eq.s32.totalorder %s44, 3
      %p359 = por %p357, %p358
      %p360 = scmp.ne.s32.totalorder %s352, %s355
      %p361 = scmp.eq.s32.totalorder %s44, 0
      %p362 = por %p360, %p361
      %p363 = scmp.ne.s32.totalorder %s352, %s355
      %p364 = scmp.eq.s32.totalorder %s49, 3
      %p365 = por %p363, %p364
      %p366 = scmp.ne.s32.totalorder %s355, %s356
      %p367 = scmp.eq.s32.totalorder %s49, 0
      %p368 = por %p366, %p367
      %p369 = scmp.ne.s32.totalorder %s355, %s356
      %p370 = scmp.eq.s32.totalorder %s50, 3
      %p371 = por %p369, %p370
      %p373 = scmp.ne.s32.totalorder %s356, %s372
      %p374 = scmp.eq.s32.totalorder %s50, 0
      %p375 = por %p373, %p374
      %s376 = ssub.s32 %s52, %s59
      %p377 = scmp.eq.s32.totalorder %s376, 0
      %s379 = sadd.s32 %s378, 1
      %s380 = scalar_select %p377, %s378, %s379
      %p383 = pneg %p377
      %p384 = scmp.eq.s32.totalorder %s44, 3
      %p385 = por %p383, %p384
      %p386 = scmp.ne.s32.totalorder %s378, %s381
      %p387 = scmp.eq.s32.totalorder %s44, 0
      %p388 = por %p386, %p387
      %p389 = scmp.ne.s32.totalorder %s378, %s381
      %p390 = scmp.eq.s32.totalorder %s49, 3
      %p391 = por %p389, %p390
      %p392 = scmp.ne.s32.totalorder %s381, %s382
      %p393 = scmp.eq.s32.totalorder %s49, 0
      %p394 = por %p392, %p393
      %p395 = scmp.ne.s32.totalorder %s381, %s382
      %p396 = scmp.eq.s32.totalorder %s50, 3
      %p397 = por %p395, %p396
      %p399 = scmp.ne.s32.totalorder %s382, %s398
      %p400 = scmp.eq.s32.totalorder %s50, 0
      %p401 = por %p399, %p400
      %s402 = ssub.s32 %s52, %s59
      %p403 = scmp.eq.s32.totalorder %s402, 0
      %s405 = sadd.s32 %s404, 1
      %s406 = scalar_select %p403, %s404, %s405
      %p409 = pneg %p403
      %p410 = scmp.eq.s32.totalorder %s44, 3
      %p411 = por %p409, %p410
      %p412 = scmp.ne.s32.totalorder %s404, %s407
      %p413 = scmp.eq.s32.totalorder %s44, 0
      %p414 = por %p412, %p413
      %p415 = scmp.ne.s32.totalorder %s404, %s407
      %p416 = scmp.eq.s32.totalorder %s49, 3
      %p417 = por %p415, %p416
      %p418 = scmp.ne.s32.totalorder %s407, %s408
      %p419 = scmp.eq.s32.totalorder %s49, 0
      %p420 = por %p418, %p419
      %p421 = scmp.ne.s32.totalorder %s407, %s408
      %p422 = scmp.eq.s32.totalorder %s50, 3
      %p423 = por %p421, %p422
      %p425 = scmp.ne.s32.totalorder %s408, %s424
      %p426 = scmp.eq.s32.totalorder %s50, 0
      %p427 = por %p425, %p426
      %s428 = ssub.s32 %s52, %s59
      %p429 = scmp.eq.s32.totalorder %s428, 0
      %s431 = sadd.s32 %s430, 1
      %s432 = scalar_select %p429, %s430, %s431
      %p435 = pneg %p429
      %p436 = scmp.eq.s32.totalorder %s44, 3
      %p437 = por %p435, %p436
      %p438 = scmp.ne.s32.totalorder %s430, %s433
      %p439 = scmp.eq.s32.totalorder %s44, 0
      %p440 = por %p438, %p439
      %p441 = scmp.ne.s32.totalorder %s430, %s433
      %p442 = scmp.eq.s32.totalorder %s49, 3
      %p443 = por %p441, %p442
      %p444 = scmp.ne.s32.totalorder %s433, %s434
      %p445 = scmp.eq.s32.totalorder %s49, 0
      %p446 = por %p444, %p445
      %p447 = scmp.ne.s32.totalorder %s433, %s434
      %p448 = scmp.eq.s32.totalorder %s50, 3
      %p449 = por %p447, %p448
      %p451 = scmp.ne.s32.totalorder %s434, %s450
      %p452 = scmp.eq.s32.totalorder %s50, 0
      %p453 = por %p451, %p452
      %s454 = ssub.s32 %s52, %s59
      %p455 = scmp.eq.s32.totalorder %s454, 0
      %s457 = sadd.s32 %s456, 1
      %s458 = scalar_select %p455, %s456, %s457
      %p461 = pneg %p455
      %p462 = scmp.eq.s32.totalorder %s44, 3
      %p463 = por %p461, %p462
      %p464 = scmp.ne.s32.totalorder %s456, %s459
      %p465 = scmp.eq.s32.totalorder %s44, 0
      %p466 = por %p464, %p465
      %p467 = scmp.ne.s32.totalorder %s456, %s459
      %p468 = scmp.eq.s32.totalorder %s49, 3
      %p469 = por %p467, %p468
      %p470 = scmp.ne.s32.totalorder %s459, %s460
      %p471 = scmp.eq.s32.totalorder %s49, 0
      %p472 = por %p470, %p471
      %p473 = scmp.ne.s32.totalorder %s459, %s460
      %p474 = scmp.eq.s32.totalorder %s50, 3
      %p475 = por %p473, %p474
      %p477 = scmp.ne.s32.totalorder %s460, %s476
      %p478 = scmp.eq.s32.totalorder %s50, 0
      %p479 = por %p477, %p478
      %s480 = ssub.s32 %s52, %s59
      %p481 = scmp.eq.s32.totalorder %s480, 0
      %s483 = sadd.s32 %s482, 1
      %s484 = scalar_select %p481, %s482, %s483
      %p487 = pneg %p481
      %p488 = scmp.eq.s32.totalorder %s44, 3
      %p489 = por %p487, %p488
      %p490 = scmp.ne.s32.totalorder %s482, %s485
      %p491 = scmp.eq.s32.totalorder %s44, 0
      %p492 = por %p490, %p491
      %p493 = scmp.ne.s32.totalorder %s482, %s485
      %p494 = scmp.eq.s32.totalorder %s49, 3
      %p495 = por %p493, %p494
      %p496 = scmp.ne.s32.totalorder %s485, %s486
      %p497 = scmp.eq.s32.totalorder %s49, 0
      %p498 = por %p496, %p497
      %p499 = scmp.ne.s32.totalorder %s485, %s486
      %p500 = scmp.eq.s32.totalorder %s50, 3
      %p501 = por %p499, %p500
      %p503 = scmp.ne.s32.totalorder %s486, %s502
      %p504 = scmp.eq.s32.totalorder %s50, 0
      %p505 = por %p503, %p504
      %s506 = ssub.s32 %s51, %s63
      %p507 = scmp.eq.s32.totalorder %s506, 0
      %s509 = sadd.s32 %s508, 1
      %s510 = scalar_select %p507, %s508, %s509
      %p513 = pneg %p507
      %p514 = scmp.eq.s32.totalorder %s44, 3
      %p515 = por %p513, %p514
      %p516 = scmp.ne.s32.totalorder %s508, %s511
      %p517 = scmp.eq.s32.totalorder %s44, 0
      %p518 = por %p516, %p517
      %p519 = scmp.ne.s32.totalorder %s508, %s511
      %p520 = scmp.eq.s32.totalorder %s49, 3
      %p521 = por %p519, %p520
      %p522 = scmp.ne.s32.totalorder %s511, %s512
      %p523 = scmp.eq.s32.totalorder %s49, 0
      %p524 = por %p522, %p523
      %p525 = scmp.ne.s32.totalorder %s511, %s512
      %p526 = scmp.eq.s32.totalorder %s50, 3
      %p527 = por %p525, %p526
      %p529 = scmp.ne.s32.totalorder %s512, %s528
      %p530 = scmp.eq.s32.totalorder %s50, 0
      %p531 = por %p529, %p530
      %p532 = scmp.le.s32.totalorder 1, %s44
      %p533 = scmp.lt.s32.totalorder %s44, 5
      %p534 = pnand %p532, %p533
      %p535 = pneg %p534
      // Predicated region
      $region9: #{transformer_forward.2} parent=5 // pred_check
        _
      $region10: #{transformer_forward.2} parent=5 // pred_check_branch
        %537 = sbr.rel (%p534) target = $region12
      $region11: #{transformer_forward.2} parent=5 // pred_region
        %s538 = ssub.s32 %s44, 1
      $region12: #{transformer_forward.2} parent=5 // pred_fallthru
        _
      %p539 = scmp.lt.s32.totalorder %s44, 4
      // Predicated region
      $region13: #{transformer_forward.2} parent=5 // pred_check
        %p540 = pneg %p539
      $region14: #{transformer_forward.2} parent=5 // pred_check_branch
        %542 = sbr.rel (%p540) target = $region16
      $region15: #{transformer_forward.2} parent=5 // pred_region
        // Predicated region
        $region17: #{transformer_forward.2} parent=15 // pred_check
          %p543 = pneg %p76
        $region18: #{transformer_forward.2} parent=15 // pred_check_branch
          %545 = sbr.rel (%p543) target = $region20
        $region19: #{transformer_forward.2} parent=15 // pred_region
          %p546 = scmp.lt.s32.totalorder %s51, 1
          %s547 = scalar_select %p546, %s51, 1
          %s548 = smul.addr %s547, 2
          %s549 = smul.addr %s548, 8
          %s550 = scalar_lea.vmem %s0, %s549
        $region20: #{transformer_forward.2} parent=15 // pred_fallthru
          _
        // Predicated region
        $region21: #{transformer_forward.2} parent=15 // pred_check
          %p551 = pneg %p102
        $region22: #{transformer_forward.2} parent=15 // pred_check_branch
          %553 = sbr.rel (%p551) target = $region24
        $region23: #{transformer_forward.2} parent=15 // pred_region
          %p554 = scmp.lt.s32.totalorder %s51, 1
          %s555 = scalar_select %p554, %s51, 1
          %s556 = smul.addr %s555, 2
          %s557 = smul.addr %s556, 8
          %s558 = scalar_lea.vmem %s1, %s557
        $region24: #{transformer_forward.2} parent=15 // pred_fallthru
          _
        // Predicated region
        $region25: #{transformer_forward.2} parent=15 // pred_check
          %p559 = pneg %p128
        $region26: #{transformer_forward.2} parent=15 // pred_check_branch
          %561 = sbr.rel (%p559) target = $region28
        $region27: #{transformer_forward.2} parent=15 // pred_region
          %p562 = scmp.lt.s32.totalorder %s51, 1
          %s563 = scalar_select %p562, %s51, 1
          %s564 = scalar_lea.vmem %s2, %s563
        $region28: #{transformer_forward.2} parent=15 // pred_fallthru
          _
        // Predicated region
        $region29: #{transformer_forward.2} parent=15 // pred_check
          %p565 = pneg %p154
        $region30: #{transformer_forward.2} parent=15 // pred_check_branch
          %567 = sbr.rel (%p565) target = $region32
        $region31: #{transformer_forward.2} parent=15 // pred_region
          %s568 = sand.u32 %s144, 1
          %s569 = scalar_lea.sflag [#allocation3], %s568
          %s570 = sand.u32 %s144, 1
          %s571 = smul.addr %s570, 16
          %s572 = scalar_lea.vmem [#allocation2], %s571
          %s574 = ssub.s32 256, 256
          %575 = vsyncadd %s569, %s574
          %s576 = smul.addr %s52, 4
          %s577 = smul.addr %s576, 64
          %s578 = scalar_lea.hbm %s3, %s577
          %s579 = sshll.u32 %s572, 4
          %s580 = int_to_ptr.vmem [resolvable:$true] %s579
          %585 = dma.hbm_to_vmem [thread:$0]  %s578, 256, %s580, %s569, 64, 64, 4
        $region32: #{transformer_forward.2} parent=15 // pred_fallthru
          _
        // Predicated region
        $region33: #{transformer_forward.2} parent=15 // pred_check
          %p586 = pneg %p180
        $region34: #{transformer_forward.2} parent=15 // pred_check_branch
          %588 = sbr.rel (%p586) target = $region36
        $region35: #{transformer_forward.2} parent=15 // pred_region
          %s589 = sand.u32 %s44, 1
          %s590 = scalar_lea.sflag [#allocation5], %s589
          %s591 = sand.u32 %s170, 1
          %s592 = scalar_lea.vmem [#allocation4], %s591
          %s594 = ssub.s32 16, 16
          %595 = vsyncadd %s590, %s594
          %s596 = smul.addr %s52, 16
          %s597 = scalar_lea.hbm %s4, %s596
          %s599 = sshll.u32 %s592, 4
          %s600 = int_to_ptr.vmem [resolvable:$true] %s599
          %602 = dma.hbm_to_vmem [thread:$0]  %s597, 16, %s600, %s590
        $region36: #{transformer_forward.2} parent=15 // pred_fallthru
          _
        // Predicated region
        $region37: #{transformer_forward.2} parent=15 // pred_check
          %p603 = pneg %p206
        $region38: #{transformer_forward.2} parent=15 // pred_check_branch
          %605 = sbr.rel (%p603) target = $region40
        $region39: #{transformer_forward.2} parent=15 // pred_region
          %s606 = sand.u32 %s44, 1
          %s607 = scalar_lea.sflag [#allocation5], %s606
          %s608 = sand.u32 %s196, 1
          %s609 = smul.addr %s608, 16
          %s610 = scalar_lea.vmem [#allocation6], %s609
          %s612 = ssub.s32 256, 256
          %613 = vsyncadd %s607, %s612
          %s614 = smul.addr %s52, 4
          %s615 = smul.addr %s614, 64
          %s616 = scalar_lea.hbm %s5, %s615
          %s617 = sshll.u32 %s610, 4
          %s618 = int_to_ptr.vmem [resolvable:$true] %s617
          %623 = dma.hbm_to_vmem [thread:$0]  %s616, 256, %s618, %s607, 64, 64, 4
        $region40: #{transformer_forward.2} parent=15 // pred_fallthru
          _
        // Predicated region
        $region41: #{transformer_forward.2} parent=15 // pred_check
          %p624 = pneg %p232
        $region42: #{transformer_forward.2} parent=15 // pred_check_branch
          %626 = sbr.rel (%p624) target = $region44
        $region43: #{transformer_forward.2} parent=15 // pred_region
          %s627 = sand.u32 %s44, 1
          %s628 = scalar_lea.sflag [#allocation8], %s627
          %s629 = sand.u32 %s222, 1
          %s630 = scalar_lea.vmem [#allocation7], %s629
          %s632 = ssub.s32 16, 16
          %633 = vsyncadd %s628, %s632
          %s634 = smul.addr %s52, 16
          %s635 = scalar_lea.hbm %s6, %s634
          %s637 = sshll.u32 %s630, 4
          %s638 = int_to_ptr.vmem [resolvable:$true] %s637
          %640 = dma.hbm_to_vmem [thread:$0]  %s635, 16, %s638, %s628
        $region44: #{transformer_forward.2} parent=15 // pred_fallthru
          _
        // Predicated region
        $region45: #{transformer_forward.2} parent=15 // pred_check
          %p641 = pneg %p258
        $region46: #{transformer_forward.2} parent=15 // pred_check_branch
          %643 = sbr.rel (%p641) target = $region48
        $region47: #{transformer_forward.2} parent=15 // pred_region
          %s644 = sand.u32 %s44, 1
          %s645 = scalar_lea.sflag [#allocation8], %s644
          %s646 = sand.u32 %s248, 1
          %s647 = smul.addr %s646, 16
          %s648 = scalar_lea.vmem [#allocation9], %s647
          %s650 = ssub.s32 256, 256
          %651 = vsyncadd %s645, %s650
          %s652 = smul.addr %s52, 4
          %s653 = smul.addr %s652, 64
          %s654 = scalar_lea.hbm %s7, %s653
          %s655 = sshll.u32 %s648, 4
          %s656 = int_to_ptr.vmem [resolvable:$true] %s655
          %661 = dma.hbm_to_vmem [thread:$0]  %s654, 256, %s656, %s645, 64, 64, 4
        $region48: #{transformer_forward.2} parent=15 // pred_fallthru
          _
        // Predicated region
        $region49: #{transformer_forward.2} parent=15 // pred_check
          %p662 = pneg %p284
        $region50: #{transformer_forward.2} parent=15 // pred_check_branch
          %664 = sbr.rel (%p662) target = $region52
        $region51: #{transformer_forward.2} parent=15 // pred_region
          %s665 = sand.u32 %s44, 1
          %s666 = scalar_lea.sflag [#allocation11], %s665
          %s667 = sand.u32 %s274, 1
          %s668 = scalar_lea.vmem [#allocation10], %s667
          %s670 = ssub.s32 16, 16
          %671 = vsyncadd %s666, %s670
          %s672 = smul.addr %s52, 16
          %s673 = scalar_lea.hbm %s8, %s672
          %s675 = sshll.u32 %s668, 4
          %s676 = int_to_ptr.vmem [resolvable:$true] %s675
          %678 = dma.hbm_to_vmem [thread:$0]  %s673, 16, %s676, %s666
        $region52: #{transformer_forward.2} parent=15 // pred_fallthru
          _
        // Predicated region
        $region53: #{transformer_forward.2} parent=15 // pred_check
          %p679 = pneg %p310
        $region54: #{transformer_forward.2} parent=15 // pred_check_branch
          %681 = sbr.rel (%p679) target = $region56
        $region55: #{transformer_forward.2} parent=15 // pred_region
          %s682 = sand.u32 %s44, 1
          %s683 = scalar_lea.sflag [#allocation11], %s682
          %s684 = sand.u32 %s300, 1
          %s685 = scalar_lea.vmem [#allocation12], %s684
          %s687 = ssub.s32 16, 16
          %688 = vsyncadd %s683, %s687
          %s689 = smul.addr %s52, 16
          %s690 = scalar_lea.hbm %s9, %s689
          %s692 = sshll.u32 %s685, 4
          %s693 = int_to_ptr.vmem [resolvable:$true] %s692
          %695 = dma.hbm_to_vmem [thread:$0]  %s690, 16, %s693, %s683
        $region56: #{transformer_forward.2} parent=15 // pred_fallthru
          _
        // Predicated region
        $region57: #{transformer_forward.2} parent=15 // pred_check
          %p696 = pneg %p336
        $region58: #{transformer_forward.2} parent=15 // pred_check_branch
          %698 = sbr.rel (%p696) target = $region60
        $region59: #{transformer_forward.2} parent=15 // pred_region
          %s699 = sand.u32 %s44, 1
          %s700 = scalar_lea.sflag [#allocation14], %s699
          %s701 = sand.u32 %s326, 1
          %s702 = scalar_lea.vmem [#allocation13], %s701
          %s704 = ssub.s32 16, 16
          %705 = vsyncadd %s700, %s704
          %s706 = smul.addr %s52, 16
          %s707 = scalar_lea.hbm %s10, %s706
          %s709 = sshll.u32 %s702, 4
          %s710 = int_to_ptr.vmem [resolvable:$true] %s709
          %712 = dma.hbm_to_vmem [thread:$0]  %s707, 16, %s710, %s700
        $region60: #{transformer_forward.2} parent=15 // pred_fallthru
          _
        // Predicated region
        $region61: #{transformer_forward.2} parent=15 // pred_check
          %p713 = pneg %p362
        $region62: #{transformer_forward.2} parent=15 // pred_check_branch
          %715 = sbr.rel (%p713) target = $region64
        $region63: #{transformer_forward.2} parent=15 // pred_region
          %s716 = sand.u32 %s44, 1
          %s717 = scalar_lea.sflag [#allocation14], %s716
          %s718 = sand.u32 %s352, 1
          %s719 = smul.addr %s718, 16
          %s720 = scalar_lea.vmem [#allocation15], %s719
          %s722 = ssub.s32 256, 256
          %723 = vsyncadd %s717, %s722
          %s724 = smul.addr %s52, 4
          %s725 = smul.addr %s724, 64
          %s726 = scalar_lea.hbm %s11, %s725
          %s727 = sshll.u32 %s720, 4
          %s728 = int_to_ptr.vmem [resolvable:$true] %s727
          %733 = dma.hbm_to_vmem [thread:$0]  %s726, 256, %s728, %s717, 64, 64, 4
        $region64: #{transformer_forward.2} parent=15 // pred_fallthru
          _
        // Predicated region
        $region65: #{transformer_forward.2} parent=15 // pred_check
          %p734 = pneg %p388
        $region66: #{transformer_forward.2} parent=15 // pred_check_branch
          %736 = sbr.rel (%p734) target = $region68
        $region67: #{transformer_forward.2} parent=15 // pred_region
          %s737 = sand.u32 %s44, 1
          %s738 = scalar_lea.sflag [#allocation17], %s737
          %s739 = sand.u32 %s378, 1
          %s740 = scalar_lea.vmem [#allocation16], %s739
          %s742 = ssub.s32 16, 16
          %743 = vsyncadd %s738, %s742
          %s744 = smul.addr %s52, 16
          %s745 = scalar_lea.hbm %s12, %s744
          %s747 = sshll.u32 %s740, 4
          %s748 = int_to_ptr.vmem [resolvable:$true] %s747
          %750 = dma.hbm_to_vmem [thread:$0]  %s745, 16, %s748, %s738
        $region68: #{transformer_forward.2} parent=15 // pred_fallthru
          _
        // Predicated region
        $region69: #{transformer_forward.2} parent=15 // pred_check
          %p751 = pneg %p414
        $region70: #{transformer_forward.2} parent=15 // pred_check_branch
          %753 = sbr.rel (%p751) target = $region72
        $region71: #{transformer_forward.2} parent=15 // pred_region
          %p754 = scmp.lt.s32.totalorder %s52, 1
          %s755 = scalar_select %p754, %s52, 1
          %s756 = smul.addr %s755, 8
          %s757 = smul.addr %s756, 4
          %s758 = scalar_lea.vmem %s13, %s757
        $region72: #{transformer_forward.2} parent=15 // pred_fallthru
          _
        // Predicated region
        $region73: #{transformer_forward.2} parent=15 // pred_check
          %p759 = pneg %p440
        $region74: #{transformer_forward.2} parent=15 // pred_check_branch
          %761 = sbr.rel (%p759) target = $region76
        $region75: #{transformer_forward.2} parent=15 // pred_region
          %s762 = sand.u32 %s44, 1
          %s763 = scalar_lea.sflag [#allocation17], %s762
          %s764 = sand.u32 %s430, 1
          %s765 = scalar_lea.vmem [#allocation18], %s764
          %s767 = ssub.s32 16, 16
          %768 = vsyncadd %s763, %s767
          %s769 = smul.addr %s52, 16
          %s770 = scalar_lea.hbm %s14, %s769
          %s772 = sshll.u32 %s765, 4
          %s773 = int_to_ptr.vmem [resolvable:$true] %s772
          %775 = dma.hbm_to_vmem [thread:$0]  %s770, 16, %s773, %s763
        $region76: #{transformer_forward.2} parent=15 // pred_fallthru
          _
        // Predicated region
        $region77: #{transformer_forward.2} parent=15 // pred_check
          %p776 = pneg %p466
        $region78: #{transformer_forward.2} parent=15 // pred_check_branch
          %778 = sbr.rel (%p776) target = $region80
        $region79: #{transformer_forward.2} parent=15 // pred_region
          %s779 = sand.u32 %s44, 1
          %s780 = scalar_lea.sflag [#allocation20], %s779
          %s781 = sand.u32 %s456, 1
          %s782 = scalar_lea.vmem [#allocation19], %s781
          %s784 = ssub.s32 16, 16
          %785 = vsyncadd %s780, %s784
          %s786 = smul.addr %s52, 16
          %s787 = scalar_lea.hbm %s15, %s786
          %s789 = sshll.u32 %s782, 4
          %s790 = int_to_ptr.vmem [resolvable:$true] %s789
          %792 = dma.hbm_to_vmem [thread:$0]  %s787, 16, %s790, %s780
        $region80: #{transformer_forward.2} parent=15 // pred_fallthru
          _
        // Predicated region
        $region81: #{transformer_forward.2} parent=15 // pred_check
          %p793 = pneg %p492
        $region82: #{transformer_forward.2} parent=15 // pred_check_branch
          %795 = sbr.rel (%p793) target = $region84
        $region83: #{transformer_forward.2} parent=15 // pred_region
          %s796 = sand.u32 %s44, 1
          %s797 = scalar_lea.sflag [#allocation20], %s796
          %s798 = sand.u32 %s482, 1
          %s799 = scalar_lea.vmem [#allocation21], %s798
          %s801 = ssub.s32 16, 16
          %802 = vsyncadd %s797, %s801
          %s803 = smul.addr %s52, 16
          %s804 = scalar_lea.hbm %s16, %s803
          %s806 = sshll.u32 %s799, 4
          %s807 = int_to_ptr.vmem [resolvable:$true] %s806
          %809 = dma.hbm_to_vmem [thread:$0]  %s804, 16, %s807, %s797
        $region84: #{transformer_forward.2} parent=15 // pred_fallthru
          _
      $region16: #{transformer_forward.2} parent=5 // pred_fallthru
        _
      %p810 = scmp.le.s32.totalorder 1, %s44
      %p811 = scmp.lt.s32.totalorder %s44, 5
      %p812 = pnand %p810, %p811
      %p813 = pneg %p812
      // Predicated region
      $region85: #{transformer_forward.2} parent=5 // pred_check
        _
      $region86: #{transformer_forward.2} parent=5 // pred_check_branch
        %815 = sbr.rel (%p812) target = $region88
      $region87: #{transformer_forward.2} parent=5 // pred_region
        %s816 = ssub.s32 %s44, 1
        %s817 = sand.u32 %s147, 1
        %s818 = scalar_lea.sflag [#allocation3], %s817
        %s819 = sand.u32 %s147, 1
        %s820 = smul.addr %s819, 16
        %s821 = scalar_lea.vmem [#allocation2], %s820
        // Predicated region
        $region89: #{transformer_forward.2} parent=87 // pred_check
          %p822 = pneg %p160
        $region90: #{transformer_forward.2} parent=87 // pred_check_branch
          %824 = sbr.rel (%p822) target = $region92
        $region91: #{transformer_forward.2} parent=87 // pred_region
          %825 = dma.done %s818, 256
        $region92: #{transformer_forward.2} parent=87 // pred_fallthru
          _
        %s826 = sand.u32 %s49, 1
        %s827 = scalar_lea.sflag [#allocation5], %s826
        %s828 = sand.u32 %s173, 1
        %s829 = scalar_lea.vmem [#allocation4], %s828
        // Predicated region
        $region93: #{transformer_forward.2} parent=87 // pred_check
          %p830 = pneg %p186
        $region94: #{transformer_forward.2} parent=87 // pred_check_branch
          %832 = sbr.rel (%p830) target = $region96
        $region95: #{transformer_forward.2} parent=87 // pred_region
          %833 = dma.done %s827, 16
        $region96: #{transformer_forward.2} parent=87 // pred_fallthru
          _
        %s834 = sand.u32 %s49, 1
        %s835 = scalar_lea.sflag [#allocation5], %s834
        %s836 = sand.u32 %s199, 1
        %s837 = smul.addr %s836, 16
        %s838 = scalar_lea.vmem [#allocation6], %s837
        // Predicated region
        $region97: #{transformer_forward.2} parent=87 // pred_check
          %p839 = pneg %p212
        $region98: #{transformer_forward.2} parent=87 // pred_check_branch
          %841 = sbr.rel (%p839) target = $region100
        $region99: #{transformer_forward.2} parent=87 // pred_region
          %842 = dma.done %s835, 256
        $region100: #{transformer_forward.2} parent=87 // pred_fallthru
          _
        %s843 = sand.u32 %s49, 1
        %s844 = scalar_lea.sflag [#allocation8], %s843
        %s845 = sand.u32 %s225, 1
        %s846 = scalar_lea.vmem [#allocation7], %s845
        // Predicated region
        $region101: #{transformer_forward.2} parent=87 // pred_check
          %p847 = pneg %p238
        $region102: #{transformer_forward.2} parent=87 // pred_check_branch
          %849 = sbr.rel (%p847) target = $region104
        $region103: #{transformer_forward.2} parent=87 // pred_region
          %850 = dma.done %s844, 16
        $region104: #{transformer_forward.2} parent=87 // pred_fallthru
          _
        %s851 = sand.u32 %s49, 1
        %s852 = scalar_lea.sflag [#allocation8], %s851
        %s853 = sand.u32 %s251, 1
        %s854 = smul.addr %s853, 16
        %s855 = scalar_lea.vmem [#allocation9], %s854
        // Predicated region
        $region105: #{transformer_forward.2} parent=87 // pred_check
          %p856 = pneg %p264
        $region106: #{transformer_forward.2} parent=87 // pred_check_branch
          %858 = sbr.rel (%p856) target = $region108
        $region107: #{transformer_forward.2} parent=87 // pred_region
          %859 = dma.done %s852, 256
        $region108: #{transformer_forward.2} parent=87 // pred_fallthru
          _
        %s860 = sand.u32 %s49, 1
        %s861 = scalar_lea.sflag [#allocation11], %s860
        %s862 = sand.u32 %s277, 1
        %s863 = scalar_lea.vmem [#allocation10], %s862
        // Predicated region
        $region109: #{transformer_forward.2} parent=87 // pred_check
          %p864 = pneg %p290
        $region110: #{transformer_forward.2} parent=87 // pred_check_branch
          %866 = sbr.rel (%p864) target = $region112
        $region111: #{transformer_forward.2} parent=87 // pred_region
          %867 = dma.done %s861, 16
        $region112: #{transformer_forward.2} parent=87 // pred_fallthru
          _
        %s868 = sand.u32 %s49, 1
        %s869 = scalar_lea.sflag [#allocation11], %s868
        %s870 = sand.u32 %s303, 1
        %s871 = scalar_lea.vmem [#allocation12], %s870
        // Predicated region
        $region113: #{transformer_forward.2} parent=87 // pred_check
          %p872 = pneg %p316
        $region114: #{transformer_forward.2} parent=87 // pred_check_branch
          %874 = sbr.rel (%p872) target = $region116
        $region115: #{transformer_forward.2} parent=87 // pred_region
          %875 = dma.done %s869, 16
        $region116: #{transformer_forward.2} parent=87 // pred_fallthru
          _
        %s876 = sand.u32 %s49, 1
        %s877 = scalar_lea.sflag [#allocation14], %s876
        %s878 = sand.u32 %s329, 1
        %s879 = scalar_lea.vmem [#allocation13], %s878
        // Predicated region
        $region117: #{transformer_forward.2} parent=87 // pred_check
          %p880 = pneg %p342
        $region118: #{transformer_forward.2} parent=87 // pred_check_branch
          %882 = sbr.rel (%p880) target = $region120
        $region119: #{transformer_forward.2} parent=87 // pred_region
          %883 = dma.done %s877, 16
        $region120: #{transformer_forward.2} parent=87 // pred_fallthru
          _
        %s884 = sand.u32 %s49, 1
        %s885 = scalar_lea.sflag [#allocation14], %s884
        %s886 = sand.u32 %s355, 1
        %s887 = smul.addr %s886, 16
        %s888 = scalar_lea.vmem [#allocation15], %s887
        // Predicated region
        $region121: #{transformer_forward.2} parent=87 // pred_check
          %p889 = pneg %p368
        $region122: #{transformer_forward.2} parent=87 // pred_check_branch
          %891 = sbr.rel (%p889) target = $region124
        $region123: #{transformer_forward.2} parent=87 // pred_region
          %892 = dma.done %s885, 256
        $region124: #{transformer_forward.2} parent=87 // pred_fallthru
          _
        %s893 = sand.u32 %s49, 1
        %s894 = scalar_lea.sflag [#allocation17], %s893
        %s895 = sand.u32 %s381, 1
        %s896 = scalar_lea.vmem [#allocation16], %s895
        // Predicated region
        $region125: #{transformer_forward.2} parent=87 // pred_check
          %p897 = pneg %p394
        $region126: #{transformer_forward.2} parent=87 // pred_check_branch
          %899 = sbr.rel (%p897) target = $region128
        $region127: #{transformer_forward.2} parent=87 // pred_region
          %900 = dma.done %s894, 16
        $region128: #{transformer_forward.2} parent=87 // pred_fallthru
          _
        %s901 = sand.u32 %s49, 1
        %s902 = scalar_lea.sflag [#allocation17], %s901
        %s903 = sand.u32 %s433, 1
        %s904 = scalar_lea.vmem [#allocation18], %s903
        // Predicated region
        $region129: #{transformer_forward.2} parent=87 // pred_check
          %p905 = pneg %p446
        $region130: #{transformer_forward.2} parent=87 // pred_check_branch
          %907 = sbr.rel (%p905) target = $region132
        $region131: #{transformer_forward.2} parent=87 // pred_region
          %908 = dma.done %s902, 16
        $region132: #{transformer_forward.2} parent=87 // pred_fallthru
          _
        %s909 = sand.u32 %s49, 1
        %s910 = scalar_lea.sflag [#allocation20], %s909
        %s911 = sand.u32 %s459, 1
        %s912 = scalar_lea.vmem [#allocation19], %s911
        // Predicated region
        $region133: #{transformer_forward.2} parent=87 // pred_check
          %p913 = pneg %p472
        $region134: #{transformer_forward.2} parent=87 // pred_check_branch
          %915 = sbr.rel (%p913) target = $region136
        $region135: #{transformer_forward.2} parent=87 // pred_region
          %916 = dma.done %s910, 16
        $region136: #{transformer_forward.2} parent=87 // pred_fallthru
          _
        %s917 = sand.u32 %s49, 1
        %s918 = scalar_lea.sflag [#allocation20], %s917
        %s919 = sand.u32 %s485, 1
        %s920 = scalar_lea.vmem [#allocation21], %s919
        // Predicated region
        $region137: #{transformer_forward.2} parent=87 // pred_check
          %p921 = pneg %p498
        $region138: #{transformer_forward.2} parent=87 // pred_check_branch
          %923 = sbr.rel (%p921) target = $region140
        $region139: #{transformer_forward.2} parent=87 // pred_region
          %924 = dma.done %s918, 16
        $region140: #{transformer_forward.2} parent=87 // pred_fallthru
          _
        %p925 = scmp.lt.s32.totalorder %s53, 1
        %s926 = scalar_select %p925, %s53, 1
        %s927 = smul.addr %s926, 2
        %s928 = smul.addr %s927, 8
        %s929 = scalar_lea.vmem %s0, %s928
        %p930 = pneg %p82
        %p931 = pneg %p79
        %p932 = scmp.lt.s32.totalorder %s53, 1
        %s933 = scalar_select %p932, %s53, 1
        %s934 = smul.addr %s933, 2
        %s935 = smul.addr %s934, 8
        %s936 = scalar_lea.vmem %s1, %s935
        %p937 = pneg %p108
        %p938 = pneg %p105
        %p939 = scmp.lt.s32.totalorder %s53, 1
        %s940 = scalar_select %p939, %s53, 1
        %s941 = scalar_lea.vmem %s2, %s940
        %p942 = pneg %p134
        %p943 = pneg %p131
        %s944 = sand.u32 %s147, 1
        %s945 = scalar_lea.sflag [#allocation3], %s944
        %s946 = sand.u32 %s147, 1
        %s947 = smul.addr %s946, 16
        %s948 = scalar_lea.vmem [#allocation2], %s947
        %p949 = pneg %p160
        %p950 = pneg %p157
        %s951 = sand.u32 %s49, 1
        %s952 = scalar_lea.sflag [#allocation5], %s951
        %s953 = sand.u32 %s173, 1
        %s954 = scalar_lea.vmem [#allocation4], %s953
        %p955 = pneg %p186
        %p956 = pneg %p183
        %s957 = sand.u32 %s49, 1
        %s958 = scalar_lea.sflag [#allocation5], %s957
        %s959 = sand.u32 %s199, 1
        %s960 = smul.addr %s959, 16
        %s961 = scalar_lea.vmem [#allocation6], %s960
        %p962 = pneg %p212
        %p963 = pneg %p209
        %s964 = sand.u32 %s49, 1
        %s965 = scalar_lea.sflag [#allocation8], %s964
        %s966 = sand.u32 %s225, 1
        %s967 = scalar_lea.vmem [#allocation7], %s966
        %p968 = pneg %p238
        %p969 = pneg %p235
        %s970 = sand.u32 %s49, 1
        %s971 = scalar_lea.sflag [#allocation8], %s970
        %s972 = sand.u32 %s251, 1
        %s973 = smul.addr %s972, 16
        %s974 = scalar_lea.vmem [#allocation9], %s973
        %p975 = pneg %p264
        %p976 = pneg %p261
        %s977 = sand.u32 %s49, 1
        %s978 = scalar_lea.sflag [#allocation11], %s977
        %s979 = sand.u32 %s277, 1
        %s980 = scalar_lea.vmem [#allocation10], %s979
        %p981 = pneg %p290
        %p982 = pneg %p287
        %s983 = sand.u32 %s49, 1
        %s984 = scalar_lea.sflag [#allocation11], %s983
        %s985 = sand.u32 %s303, 1
        %s986 = scalar_lea.vmem [#allocation12], %s985
        %p987 = pneg %p316
        %p988 = pneg %p313
        %s989 = sand.u32 %s49, 1
        %s990 = scalar_lea.sflag [#allocation14], %s989
        %s991 = sand.u32 %s329, 1
        %s992 = scalar_lea.vmem [#allocation13], %s991
        %p993 = pneg %p342
        %p994 = pneg %p339
        %s995 = sand.u32 %s49, 1
        %s996 = scalar_lea.sflag [#allocation14], %s995
        %s997 = sand.u32 %s355, 1
        %s998 = smul.addr %s997, 16
        %s999 = scalar_lea.vmem [#allocation15], %s998
        %p1000 = pneg %p368
        %p1001 = pneg %p365
        %s1002 = sand.u32 %s49, 1
        %s1003 = scalar_lea.sflag [#allocation17], %s1002
        %s1004 = sand.u32 %s381, 1
        %s1005 = scalar_lea.vmem [#allocation16], %s1004
        %p1006 = pneg %p394
        %p1007 = pneg %p391
        %p1008 = scmp.lt.s32.totalorder %s54, 1
        %s1009 = scalar_select %p1008, %s54, 1
        %s1010 = smul.addr %s1009, 8
        %s1011 = smul.addr %s1010, 4
        %s1012 = scalar_lea.vmem %s13, %s1011
        %p1013 = pneg %p420
        %p1014 = pneg %p417
        %s1015 = sand.u32 %s49, 1
        %s1016 = scalar_lea.sflag [#allocation17], %s1015
        %s1017 = sand.u32 %s433, 1
        %s1018 = scalar_lea.vmem [#allocation18], %s1017
        %p1019 = pneg %p446
        %p1020 = pneg %p443
        %s1021 = sand.u32 %s49, 1
        %s1022 = scalar_lea.sflag [#allocation20], %s1021
        %s1023 = sand.u32 %s459, 1
        %s1024 = scalar_lea.vmem [#allocation19], %s1023
        %p1025 = pneg %p472
        %p1026 = pneg %p469
        %s1027 = sand.u32 %s49, 1
        %s1028 = scalar_lea.sflag [#allocation20], %s1027
        %s1029 = sand.u32 %s485, 1
        %s1030 = scalar_lea.vmem [#allocation21], %s1029
        %p1031 = pneg %p498
        %p1032 = pneg %p495
        %p1033 = pneg %p524
        %p1034 = pneg %p521
        %p1035 = scmp.lt.s32.totalorder %s53, 1
        %s1036 = scalar_select %p1035, %s53, 1
        %s1037 = smul.addr %s1036, 2
        %s1038 = smul.addr %s1037, 8
        %s1039 = scalar_lea.vmem %s17, %s1038
        %p1040 = scmp.lt.s32.totalorder %s53, 1
        %s1041 = scalar_select %p1040, %s53, 1
        %s1042 = smul.addr %s1041, 2
        %s1043 = smul.addr %s1042, 8
        %s1044 = scalar_lea.vmem %s0, %s1043
        %p1045 = scmp.lt.s32.totalorder %s53, 1
        %s1046 = scalar_select %p1045, %s53, 1
        %s1047 = smul.addr %s1046, 2
        %s1048 = smul.addr %s1047, 8
        %s1049 = scalar_lea.vmem %s1, %s1048
        %p1050 = scmp.lt.s32.totalorder %s53, 1
        %s1051 = scalar_select %p1050, %s53, 1
        %s1052 = scalar_lea.vmem %s2, %s1051
        %p1053 = scmp.lt.s32.totalorder %s54, 1
        %s1054 = scalar_select %p1053, %s54, 1
        %s1055 = smul.addr %s1054, 8
        %s1056 = smul.addr %s1055, 4
        %s1057 = scalar_lea.vmem %s13, %s1056
        %p1058 = scmp.lt.s32.totalorder %s53, 1
        %s1059 = scalar_select %p1058, %s53, 1
        %s1060 = smul.addr %s1059, 2
        %s1061 = smul.addr %s1060, 8
        %s1062 = scalar_lea.vmem %s17, %s1061
        %p1064 = scmp.eq.s32.totalorder %s54, 0
        // Predicated region
        $region141: #{transformer_forward.2} parent=87 // pred_check
          %p1065 = pneg %p1064
        $region142: #{transformer_forward.2} parent=87 // pred_check_branch
          %1067 = sbr.rel (%p1065) target = $region144
        $region143: #{transformer_forward.2} parent=87 // pred_region
          %v1068 = vld [vmem:[%s1044] sm:$0xff]
          %v1069 = vld [vmem:[%s1044 + $0x8] sm:$0xff]
          %vm1070 = vcmask 261120
          %1071 = vst.msk [vmem:[%s1062] sm:$0xff] %vm1070, %v1068
          %1072 = vst.msk [vmem:[%s1062 + $0x8] sm:$0xff] %vm1070, %v1069
        $region144: #{transformer_forward.2} parent=87 // pred_fallthru
          _
        %v1073 = vld [vmem:[%s1062] sm:$0xff]
        %v1074 = vld [vmem:[%s1062 + $0x8] sm:$0xff]
        %v1075 = vld [vmem:[%s1049] sm:$0xff]
        %v1076 = vld [vmem:[%s1049 + $0x8] sm:$0xff]
        %v1077 = vadd.f32 %v1073, %v1075
        %v1078 = vadd.f32 %v1074, %v1076
        %v1079 = vld [vmem:[%s1052] sm:$0x1]
        %v1080 = vld [vmem:[%s821] sm:$0xf]
        %v1081 = vld [vmem:[%s821 + $0x4] sm:$0xf]
        %v1082 = vld [vmem:[%s821 + $0x8] sm:$0xf]
        %v1083 = vld [vmem:[%s821 + $0xc] sm:$0xf]
        %v1084 = vpack.c.bf16 %v1078, %v1077
        %v1085 = vld [vmem:[%s829] sm:$0x1]
        %v1087 = vlaneseq
        %v1088 = vshrl.u32 %v1087, 7
        %v1089 = vsub.s32 0, %v1088
        %v1090 = vrot.slane %v1085, %v1089
        %v1096 = vunpack.c.l.b16 %v1080
        %v1097 = vunpack.c.l.b16 %v1081
        %v1098 = vunpack.c.l.b16 %v1082
        %v1099 = vunpack.c.l.b16 %v1083
        %v1100 = vpack.c.b16 %v1097, %v1096
        %v1101 = vpack.c.b16 %v1099, %v1098
        %vm1104 = vcmask 261120
        %v1106 = vsel %vm1104, %v1084, 0
        %1108 = vmatprep.subr.bf16.mxu0 0
        %1109 = vmatpush1.bf16.msra.mxu0 %v1100
        %1110 = vmatprep.subr.bf16.mxu0 0
        %1111 = vmatpush1.bf16.msra.mxu0 %v1101
        %1112 = vmatprep.subr.bf16.mxu0 0
        %1113 = vmatpush1.bf16.msra.mxu0 0
        %1114 = vmatprep.subr.bf16.mxu0 0
        %1115 = vmatpush1.bf16.msra.mxu0 0
        %1116 = vmatprep.subr.bf16.mxu0 0
        %1117 = vmatpush1.bf16.msra.mxu0 0
        %1118 = vmatprep.subr.bf16.mxu0 0
        %1119 = vmatpush1.bf16.msra.mxu0 0
        %1120 = vmatprep.subr.bf16.mxu0 0
        %1121 = vmatpush1.bf16.msra.mxu0 0
        %1122 = vmatprep.subr.bf16.mxu0 0
        %1123 = vmatpush1.bf16.msra.mxu0 0
        %1124 = vmatprep.subr.bf16.mxu0 0
        %1125 = vmatpush1.bf16.msra.mxu0 0
        %1126 = vmatprep.subr.bf16.mxu0 0
        %1127 = vmatpush1.bf16.msra.mxu0 0
        %1128 = vmatprep.subr.bf16.mxu0 0
        %1129 = vmatpush1.bf16.msra.mxu0 0
        %1130 = vmatprep.subr.bf16.mxu0 0
        %1131 = vmatpush1.bf16.msra.mxu0 0
        %1132 = vmatprep.subr.bf16.mxu0 0
        %1133 = vmatpush1.bf16.msra.mxu0 0
        %1134 = vmatprep.subr.bf16.mxu0 0
        %1135 = vmatpush1.bf16.msra.mxu0 0
        %1136 = vmatprep.subr.bf16.mxu0 0
        %1137 = vmatpush1.bf16.msra.mxu0 0
        %1138 = vmatprep.subr.bf16.mxu0 0
        %1139 = vmatpush1.bf16.msra.mxu0 0
        %1140 = vmatprep.mubr.bf16.mxu0 0
        %1141 = vmatmul.mubr.bf16.gmra.mrb[0].mxu0 %v1106
        %v1142 = vpop.f32.mrb[0].mxu0
        %v1143 = vadd.f32 %v1090, %v1142
        %v1144 = vpop.f32.mrb[0].mxu0
        %v1145 = vpop.f32.mrb[0].mxu0
        %v1146 = vadd.f32 %v1090, %v1145
        %v1147 = vpop.f32.mrb[0].mxu0
        %1148 = vdwg.mxu0
        %v1149 = vld [vmem:[%s838] sm:$0xf]
        %v1150 = vld [vmem:[%s838 + $0x4] sm:$0xf]
        %v1151 = vld [vmem:[%s838 + $0x8] sm:$0xf]
        %v1152 = vld [vmem:[%s838 + $0xc] sm:$0xf]
        %v1153 = vpack.c.bf16 %v1074, %v1073
        %v1154 = vld [vmem:[%s846] sm:$0x1]
        %v1156 = vlaneseq
        %v1157 = vshrl.u32 %v1156, 7
        %v1158 = vsub.s32 0, %v1157
        %v1159 = vrot.slane %v1154, %v1158
        %v1165 = vunpack.c.l.b16 %v1149
        %v1166 = vunpack.c.l.b16 %v1150
        %v1167 = vunpack.c.l.b16 %v1151
        %v1168 = vunpack.c.l.b16 %v1152
        %v1169 = vpack.c.b16 %v1166, %v1165
        %v1170 = vpack.c.b16 %v1168, %v1167
        %v1174 = vsel %vm1104, %v1153, 0
        %1176 = vmatprep.subr.bf16.mxu0 0
        %1177 = vmatpush1.bf16.msra.mxu0 %v1169
        %1178 = vmatprep.subr.bf16.mxu0 0
        %1179 = vmatpush1.bf16.msra.mxu0 %v1170
        %1180 = vmatprep.subr.bf16.mxu0 0
        %1181 = vmatpush1.bf16.msra.mxu0 0
        %1182 = vmatprep.subr.bf16.mxu0 0
        %1183 = vmatpush1.bf16.msra.mxu0 0
        %1184 = vmatprep.subr.bf16.mxu0 0
        %1185 = vmatpush1.bf16.msra.mxu0 0
        %1186 = vmatprep.subr.bf16.mxu0 0
        %1187 = vmatpush1.bf16.msra.mxu0 0
        %1188 = vmatprep.subr.bf16.mxu0 0
        %1189 = vmatpush1.bf16.msra.mxu0 0
        %1190 = vmatprep.subr.bf16.mxu0 0
        %1191 = vmatpush1.bf16.msra.mxu0 0
        %1192 = vmatprep.subr.bf16.mxu0 0
        %1193 = vmatpush1.bf16.msra.mxu0 0
        %1194 = vmatprep.subr.bf16.mxu0 0
        %1195 = vmatpush1.bf16.msra.mxu0 0
        %1196 = vmatprep.subr.bf16.mxu0 0
        %1197 = vmatpush1.bf16.msra.mxu0 0
        %1198 = vmatprep.subr.bf16.mxu0 0
        %1199 = vmatpush1.bf16.msra.mxu0 0
        %1200 = vmatprep.subr.bf16.mxu0 0
        %1201 = vmatpush1.bf16.msra.mxu0 0
        %1202 = vmatprep.subr.bf16.mxu0 0
        %1203 = vmatpush1.bf16.msra.mxu0 0
        %1204 = vmatprep.subr.bf16.mxu0 0
        %1205 = vmatpush1.bf16.msra.mxu0 0
        %1206 = vmatprep.subr.bf16.mxu0 0
        %1207 = vmatpush1.bf16.msra.mxu0 0
        %1208 = vmatprep.mubr.bf16.mxu0 0
        %1209 = vmatmul.mubr.bf16.gmra.mrb[0].mxu0 %v1174
        %v1210 = vpop.f32.mrb[0].mxu0
        %v1211 = vadd.f32 %v1159, %v1210
        %v1212 = vpop.f32.mrb[0].mxu0
        %v1213 = vpop.f32.mrb[0].mxu0
        %v1214 = vadd.f32 %v1159, %v1213
        %v1215 = vpop.f32.mrb[0].mxu0
        %1216 = vdwg.mxu0
        %v1217 = vlaneseq
        %v1218 = vand.u32 %v1217, 127
        %v1219 = vmul.f32 %v1143, 0.35355338
        %v1220 = vmul.f32 %v1146, 0.35355338
        %v1221 = vpack.c.bf16 %v1220, %v1219
        %vm1222 = vcmp.ge.s32.totalorder %v1218, 0
        %vm1223 = vcmp.lt.s32.totalorder %v1218, 8
        %vm1224 = vmand %vm1222, %vm1223
        %v1225 = vsel %vm1224, 1, 0
        %v1226 = vcvt.s32.f32 %v1225
        %1228 = vrot.lane.b32.xlu0 %v1226, 32
        %v1229 = vpop.permute.xlu0 %1228
        %v1231 = vmul.f32 %v1143, %v1229
        %v1232 = vmul.f32 %v1146, %v1229
        %v1233 = vpack.c.bf16 %v1232, %v1231
        %v1234 = vmul.f32 %v1211, %v1226
        %v1235 = vmul.f32 %v1214, %v1226
        %v1236 = vpack.c.bf16 %v1235, %v1234
        %v1238 = vlaneseq
        %v1239 = vshrl.u32 %v1238, 7
        %v1240 = vsub.s32 0, %v1239
        %v1241 = vrot.slane %v1079, %v1240
        %1244 = vrot.lane.b32.xlu0 %v1233, 96
        %v1245 = vpop.permute.xlu0 %1244
        %v1247 = vsel %vm1104, %v1221, 0
        %v1250 = vsel %vm1104, %v1245, 0
        %1252 = vmatprep.subr.bf16.mxu0 0
        %1253 = vmatpush1.bf16.xpose.msra.mxu0 %v1250
        %1254 = vmatprep.subr.bf16.mxu0 0
        %1255 = vmatpush1.bf16.xpose.msra.mxu0 0
        %1256 = vmatprep.subr.bf16.mxu0 0
        %1257 = vmatpush1.bf16.xpose.msra.mxu0 0
        %1258 = vmatprep.subr.bf16.mxu0 0
        %1259 = vmatpush1.bf16.xpose.msra.mxu0 0
        %1260 = vmatprep.subr.bf16.mxu0 0
        %1261 = vmatpush1.bf16.xpose.msra.mxu0 0
        %1262 = vmatprep.subr.bf16.mxu0 0
        %1263 = vmatpush1.bf16.xpose.msra.mxu0 0
        %1264 = vmatprep.subr.bf16.mxu0 0
        %1265 = vmatpush1.bf16.xpose.msra.mxu0 0
        %1266 = vmatprep.subr.bf16.mxu0 0
        %1267 = vmatpush1.bf16.xpose.msra.mxu0 0
        %1268 = vmatprep.subr.bf16.mxu0 0
        %1269 = vmatpush1.bf16.xpose.msra.mxu0 0
        %1270 = vmatprep.subr.bf16.mxu0 0
        %1271 = vmatpush1.bf16.xpose.msra.mxu0 0
        %1272 = vmatprep.subr.bf16.mxu0 0
        %1273 = vmatpush1.bf16.xpose.msra.mxu0 0
        %1274 = vmatprep.subr.bf16.mxu0 0
        %1275 = vmatpush1.bf16.xpose.msra.mxu0 0
        %1276 = vmatprep.subr.bf16.mxu0 0
        %1277 = vmatpush1.bf16.xpose.msra.mxu0 0
        %1278 = vmatprep.subr.bf16.mxu0 0
        %1279 = vmatpush1.bf16.xpose.msra.mxu0 0
        %1280 = vmatprep.subr.bf16.mxu0 0
        %1281 = vmatpush1.bf16.xpose.msra.mxu0 0
        %1282 = vmatprep.subr.bf16.mxu0 0
        %1283 = vmatpush1.bf16.xpose.msra.mxu0 0
        %1284 = vmatprep.mubr.bf16.mxu0 0
        %1285 = vmatmul.mubr.bf16.gmra.mrb[0].mxu0 %v1247
        %v1286 = vpop.f32.mrb[0].mxu0
        %v1287 = vadd.f32 %v1241, %v1286
        %v1288 = vpop.f32.mrb[0].mxu0
        %v1289 = vpop.f32.mrb[0].mxu0
        %v1290 = vadd.f32 %v1241, %v1289
        %v1291 = vpop.f32.mrb[0].mxu0
        %1292 = vdwg.mxu0
        %vm1293 = vcmask 130048
        %v1294 = vsel %vm1293, %v1287, -inf
        %1295 = vmax.xlane.f32.xlu0 %v1294
        %v1296 = vpop.xlane.xlu0 %1295
        %v1297 = vsel %vm1293, %v1290, -inf
        %1298 = vmax.xlane.f32.xlu0 %v1297
        %v1299 = vpop.xlane.xlu0 %1298
        %v1300 = vsub.f32 %v1287, %v1296
        %v1301 = vsub.f32 %v1290, %v1299
        %v1302 = vmul.f32 %v1300, 1.442695
        %v1303 = vpow.pop %v1302
        %v1304 = vmul.f32 %v1301, 1.442695
        %v1305 = vpow.pop %v1304
        %v1306 = vsel %vm1293, %v1303, 0.0
        %1307 = vadd.xlane.f32.xlu0 %v1306
        %v1308 = vpop.xlane.xlu0 %1307
        %v1309 = vsel %vm1293, %v1305, 0.0
        %1310 = vadd.xlane.f32.xlu0 %v1309
        %v1311 = vpop.xlane.xlu0 %1310
        %v1312 = vrcp.pop %v1308
        %v1313 = vrcp.pop %v1311
        %v1314 = vmul.f32 %v1303, %v1312
        %v1315 = vmul.f32 %v1305, %v1313
        %v1316 = vpack.c.bf16 %v1315, %v1314
        %vm1317 = vcmp.ge.s32.totalorder %v1218, 8
        %vm1318 = vcmp.lt.s32.totalorder %v1218, 16
        %vm1319 = vmand %vm1317, %vm1318
        %v1320 = vsel %vm1319, 1, 0
        %v1321 = vcvt.s32.f32 %v1320
        %1323 = vrot.lane.b32.xlu0 %v1321, 32
        %v1324 = vpop.permute.xlu0 %1323
        %v1326 = vmul.f32 %v1143, %v1324
        %v1327 = vmul.f32 %v1146, %v1324
        %v1328 = vpack.c.bf16 %v1327, %v1326
        %v1329 = vmul.f32 %v1211, %v1321
        %v1330 = vmul.f32 %v1214, %v1321
        %v1331 = vpack.c.bf16 %v1330, %v1329
        %1333 = vrot.lane.b32.xlu0 %v1328, 96
        %v1334 = vpop.permute.xlu0 %1333
        %v1336 = vsel %vm1104, %v1334, 0
        %1338 = vmatprep.subr.bf16.mxu0 0
        %1339 = vmatpush1.bf16.xpose.msra.mxu0 %v1336
        %1340 = vmatprep.subr.bf16.mxu0 0
        %1341 = vmatpush1.bf16.xpose.msra.mxu0 0
        %1342 = vmatprep.subr.bf16.mxu0 0
        %1343 = vmatpush1.bf16.xpose.msra.mxu0 0
        %1344 = vmatprep.subr.bf16.mxu0 0
        %1345 = vmatpush1.bf16.xpose.msra.mxu0 0
        %1346 = vmatprep.subr.bf16.mxu0 0
        %1347 = vmatpush1.bf16.xpose.msra.mxu0 0
        %1348 = vmatprep.subr.bf16.mxu0 0
        %1349 = vmatpush1.bf16.xpose.msra.mxu0 0
        %1350 = vmatprep.subr.bf16.mxu0 0
        %1351 = vmatpush1.bf16.xpose.msra.mxu0 0
        %1352 = vmatprep.subr.bf16.mxu0 0
        %1353 = vmatpush1.bf16.xpose.msra.mxu0 0
        %1354 = vmatprep.subr.bf16.mxu0 0
        %1355 = vmatpush1.bf16.xpose.msra.mxu0 0
        %1356 = vmatprep.subr.bf16.mxu0 0
        %1357 = vmatpush1.bf16.xpose.msra.mxu0 0
        %1358 = vmatprep.subr.bf16.mxu0 0
        %1359 = vmatpush1.bf16.xpose.msra.mxu0 0
        %1360 = vmatprep.subr.bf16.mxu0 0
        %1361 = vmatpush1.bf16.xpose.msra.mxu0 0
        %1362 = vmatprep.subr.bf16.mxu0 0
        %1363 = vmatpush1.bf16.xpose.msra.mxu0 0
        %1364 = vmatprep.subr.bf16.mxu0 0
        %1365 = vmatpush1.bf16.xpose.msra.mxu0 0
        %1366 = vmatprep.subr.bf16.mxu0 0
        %1367 = vmatpush1.bf16.xpose.msra.mxu0 0
        %1368 = vmatprep.subr.bf16.mxu0 0
        %1369 = vmatpush1.bf16.xpose.msra.mxu0 0
        %1370 = vmatprep.mubr.bf16.mxu0 0
        %1371 = vmatmul.mubr.bf16.gmra.mrb[0].mxu0 %v1247
        %v1372 = vpop.f32.mrb[0].mxu0
        %v1373 = vadd.f32 %v1241, %v1372
        %v1374 = vpop.f32.mrb[0].mxu0
        %v1375 = vpop.f32.mrb[0].mxu0
        %v1376 = vadd.f32 %v1241, %v1375
        %v1377 = vpop.f32.mrb[0].mxu0
        %1378 = vdwg.mxu0
        %v1379 = vsel %vm1293, %v1373, -inf
        %1380 = vmax.xlane.f32.xlu0 %v1379
        %v1381 = vpop.xlane.xlu0 %1380
        %v1382 = vsel %vm1293, %v1376, -inf
        %1383 = vmax.xlane.f32.xlu0 %v1382
        %v1384 = vpop.xlane.xlu0 %1383
        %v1385 = vsub.f32 %v1373, %v1381
        %v1386 = vsub.f32 %v1376, %v1384
        %v1387 = vmul.f32 %v1385, 1.442695
        %v1388 = vpow.pop %v1387
        %v1389 = vmul.f32 %v1386, 1.442695
        %v1390 = vpow.pop %v1389
        %v1391 = vsel %vm1293, %v1388, 0.0
        %1392 = vadd.xlane.f32.xlu0 %v1391
        %v1393 = vpop.xlane.xlu0 %1392
        %v1394 = vsel %vm1293, %v1390, 0.0
        %1395 = vadd.xlane.f32.xlu0 %v1394
        %v1396 = vpop.xlane.xlu0 %1395
        %v1397 = vrcp.pop %v1393
        %v1398 = vrcp.pop %v1396
        %v1399 = vmul.f32 %v1388, %v1397
        %v1400 = vmul.f32 %v1390, %v1398
        %v1401 = vpack.c.bf16 %v1400, %v1399
        %v1403 = vsel %vm1293, %v1401, 0
        %1405 = vmatprep.subr.bf16.mxu0 0
        %1406 = vmatpush1.bf16.msra.mxu0 %v1331
        %1407 = vmatprep.subr.bf16.mxu0 0
        %1408 = vmatpush1.bf16.msra.mxu0 0
        %1409 = vmatprep.subr.bf16.mxu0 0
        %1410 = vmatpush1.bf16.msra.mxu0 0
        %1411 = vmatprep.subr.bf16.mxu0 0
        %1412 = vmatpush1.bf16.msra.mxu0 0
        %1413 = vmatprep.subr.bf16.mxu0 0
        %1414 = vmatpush1.bf16.msra.mxu0 0
        %1415 = vmatprep.subr.bf16.mxu0 0
        %1416 = vmatpush1.bf16.msra.mxu0 0
        %1417 = vmatprep.subr.bf16.mxu0 0
        %1418 = vmatpush1.bf16.msra.mxu0 0
        %1419 = vmatprep.subr.bf16.mxu0 0
        %1420 = vmatpush1.bf16.msra.mxu0 0
        %1421 = vmatprep.subr.bf16.mxu0 0
        %1422 = vmatpush1.bf16.msra.mxu0 0
        %1423 = vmatprep.subr.bf16.mxu0 0
        %1424 = vmatpush1.bf16.msra.mxu0 0
        %1425 = vmatprep.subr.bf16.mxu0 0
        %1426 = vmatpush1.bf16.msra.mxu0 0
        %1427 = vmatprep.subr.bf16.mxu0 0
        %1428 = vmatpush1.bf16.msra.mxu0 0
        %1429 = vmatprep.subr.bf16.mxu0 0
        %1430 = vmatpush1.bf16.msra.mxu0 0
        %1431 = vmatprep.subr.bf16.mxu0 0
        %1432 = vmatpush1.bf16.msra.mxu0 0
        %1433 = vmatprep.subr.bf16.mxu0 0
        %1434 = vmatpush1.bf16.msra.mxu0 0
        %1435 = vmatprep.subr.bf16.mxu0 0
        %1436 = vmatpush1.bf16.msra.mxu0 0
        %1437 = vmatprep.mubr.bf16.mxu0 0
        %1438 = vmatmul.mubr.bf16.gmra.mrb[0].mxu0 %v1403
        %v1439 = vpop.f32.mrb[0].mxu0
        %v1440 = vadd.f32 0.0, %v1439
        %v1441 = vpop.f32.mrb[0].mxu0
        %v1442 = vpop.f32.mrb[0].mxu0
        %v1443 = vadd.f32 0.0, %v1442
        %v1444 = vpop.f32.mrb[0].mxu0
        %1445 = vdwg.mxu0
        %v1447 = vsel %vm1293, %v1316, 0
        %1449 = vmatprep.subr.bf16.mxu0 0
        %1450 = vmatpush1.bf16.msra.mxu0 %v1236
        %1451 = vmatprep.subr.bf16.mxu0 0
        %1452 = vmatpush1.bf16.msra.mxu0 0
        %1453 = vmatprep.subr.bf16.mxu0 0
        %1454 = vmatpush1.bf16.msra.mxu0 0
        %1455 = vmatprep.subr.bf16.mxu0 0
        %1456 = vmatpush1.bf16.msra.mxu0 0
        %1457 = vmatprep.subr.bf16.mxu0 0
        %1458 = vmatpush1.bf16.msra.mxu0 0
        %1459 = vmatprep.subr.bf16.mxu0 0
        %1460 = vmatpush1.bf16.msra.mxu0 0
        %1461 = vmatprep.subr.bf16.mxu0 0
        %1462 = vmatpush1.bf16.msra.mxu0 0
        %1463 = vmatprep.subr.bf16.mxu0 0
        %1464 = vmatpush1.bf16.msra.mxu0 0
        %1465 = vmatprep.subr.bf16.mxu0 0
        %1466 = vmatpush1.bf16.msra.mxu0 0
        %1467 = vmatprep.subr.bf16.mxu0 0
        %1468 = vmatpush1.bf16.msra.mxu0 0
        %1469 = vmatprep.subr.bf16.mxu0 0
        %1470 = vmatpush1.bf16.msra.mxu0 0
        %1471 = vmatprep.subr.bf16.mxu0 0
        %1472 = vmatpush1.bf16.msra.mxu0 0
        %1473 = vmatprep.subr.bf16.mxu0 0
        %1474 = vmatpush1.bf16.msra.mxu0 0
        %1475 = vmatprep.subr.bf16.mxu0 0
        %1476 = vmatpush1.bf16.msra.mxu0 0
        %1477 = vmatprep.subr.bf16.mxu0 0
        %1478 = vmatpush1.bf16.msra.mxu0 0
        %1479 = vmatprep.subr.bf16.mxu0 0
        %1480 = vmatpush1.bf16.msra.mxu0 0
        %1481 = vmatprep.mubr.bf16.mxu0 0
        %1482 = vmatmul.mubr.bf16.gmra.mrb[0].mxu0 %v1447
        %v1483 = vpop.f32.mrb[0].mxu0
        %v1484 = vadd.f32 %v1440, %v1483
        %v1485 = vpop.f32.mrb[0].mxu0
        %v1486 = vpop.f32.mrb[0].mxu0
        %v1487 = vadd.f32 %v1443, %v1486
        %v1488 = vpop.f32.mrb[0].mxu0
        %1489 = vdwg.mxu0
        %vm1490 = vcmp.ge.s32.totalorder %v1218, 16
        %vm1491 = vcmp.lt.s32.totalorder %v1218, 24
        %vm1492 = vmand %vm1490, %vm1491
        %v1493 = vsel %vm1492, 1, 0
        %v1494 = vcvt.s32.f32 %v1493
        %1496 = vrot.lane.b32.xlu0 %v1494, 32
        %v1497 = vpop.permute.xlu0 %1496
        %v1499 = vmul.f32 %v1143, %v1497
        %v1500 = vmul.f32 %v1146, %v1497
        %v1501 = vpack.c.bf16 %v1500, %v1499
        %v1502 = vmul.f32 %v1211, %v1494
        %v1503 = vmul.f32 %v1214, %v1494
        %v1504 = vpack.c.bf16 %v1503, %v1502
        %1506 = vrot.lane.b32.xlu0 %v1501, 96
        %v1507 = vpop.permute.xlu0 %1506
        %v1509 = vsel %vm1104, %v1507, 0
        %1511 = vmatprep.subr.bf16.mxu0 0
        %1512 = vmatpush1.bf16.xpose.msra.mxu0 %v1509
        %1513 = vmatprep.subr.bf16.mxu0 0
        %1514 = vmatpush1.bf16.xpose.msra.mxu0 0
        %1515 = vmatprep.subr.bf16.mxu0 0
        %1516 = vmatpush1.bf16.xpose.msra.mxu0 0
        %1517 = vmatprep.subr.bf16.mxu0 0
        %1518 = vmatpush1.bf16.xpose.msra.mxu0 0
        %1519 = vmatprep.subr.bf16.mxu0 0
        %1520 = vmatpush1.bf16.xpose.msra.mxu0 0
        %1521 = vmatprep.subr.bf16.mxu0 0
        %1522 = vmatpush1.bf16.xpose.msra.mxu0 0
        %1523 = vmatprep.subr.bf16.mxu0 0
        %1524 = vmatpush1.bf16.xpose.msra.mxu0 0
        %1525 = vmatprep.subr.bf16.mxu0 0
        %1526 = vmatpush1.bf16.xpose.msra.mxu0 0
        %1527 = vmatprep.subr.bf16.mxu0 0
        %1528 = vmatpush1.bf16.xpose.msra.mxu0 0
        %1529 = vmatprep.subr.bf16.mxu0 0
        %1530 = vmatpush1.bf16.xpose.msra.mxu0 0
        %1531 = vmatprep.subr.bf16.mxu0 0
        %1532 = vmatpush1.bf16.xpose.msra.mxu0 0
        %1533 = vmatprep.subr.bf16.mxu0 0
        %1534 = vmatpush1.bf16.xpose.msra.mxu0 0
        %1535 = vmatprep.subr.bf16.mxu0 0
        %1536 = vmatpush1.bf16.xpose.msra.mxu0 0
        %1537 = vmatprep.subr.bf16.mxu0 0
        %1538 = vmatpush1.bf16.xpose.msra.mxu0 0
        %1539 = vmatprep.subr.bf16.mxu0 0
        %1540 = vmatpush1.bf16.xpose.msra.mxu0 0
        %1541 = vmatprep.subr.bf16.mxu0 0
        %1542 = vmatpush1.bf16.xpose.msra.mxu0 0
        %1543 = vmatprep.mubr.bf16.mxu0 0
        %1544 = vmatmul.mubr.bf16.gmra.mrb[0].mxu0 %v1247
        %v1545 = vpop.f32.mrb[0].mxu0
        %v1546 = vadd.f32 %v1241, %v1545
        %v1547 = vpop.f32.mrb[0].mxu0
        %v1548 = vpop.f32.mrb[0].mxu0
        %v1549 = vadd.f32 %v1241, %v1548
        %v1550 = vpop.f32.mrb[0].mxu0
        %1551 = vdwg.mxu0
        %v1552 = vsel %vm1293, %v1546, -inf
        %1553 = vmax.xlane.f32.xlu0 %v1552
        %v1554 = vpop.xlane.xlu0 %1553
        %v1555 = vsel %vm1293, %v1549, -inf
        %1556 = vmax.xlane.f32.xlu0 %v1555
        %v1557 = vpop.xlane.xlu0 %1556
        %v1558 = vsub.f32 %v1546, %v1554
        %v1559 = vsub.f32 %v1549, %v1557
        %v1560 = vmul.f32 %v1558, 1.442695
        %v1561 = vpow.pop %v1560
        %v1562 = vmul.f32 %v1559, 1.442695
        %v1563 = vpow.pop %v1562
        %v1564 = vsel %vm1293, %v1561, 0.0
        %1565 = vadd.xlane.f32.xlu0 %v1564
        %v1566 = vpop.xlane.xlu0 %1565
        %v1567 = vsel %vm1293, %v1563, 0.0
        %1568 = vadd.xlane.f32.xlu0 %v1567
        %v1569 = vpop.xlane.xlu0 %1568
        %v1570 = vrcp.pop %v1566
        %v1571 = vrcp.pop %v1569
        %v1572 = vmul.f32 %v1561, %v1570
        %v1573 = vmul.f32 %v1563, %v1571
        %v1574 = vpack.c.bf16 %v1573, %v1572
        %v1576 = vsel %vm1293, %v1574, 0
        %1578 = vmatprep.subr.bf16.mxu0 0
        %1579 = vmatpush1.bf16.msra.mxu0 %v1504
        %1580 = vmatprep.subr.bf16.mxu0 0
        %1581 = vmatpush1.bf16.msra.mxu0 0
        %1582 = vmatprep.subr.bf16.mxu0 0
        %1583 = vmatpush1.bf16.msra.mxu0 0
        %1584 = vmatprep.subr.bf16.mxu0 0
        %1585 = vmatpush1.bf16.msra.mxu0 0
        %1586 = vmatprep.subr.bf16.mxu0 0
        %1587 = vmatpush1.bf16.msra.mxu0 0
        %1588 = vmatprep.subr.bf16.mxu0 0
        %1589 = vmatpush1.bf16.msra.mxu0 0
        %1590 = vmatprep.subr.bf16.mxu0 0
        %1591 = vmatpush1.bf16.msra.mxu0 0
        %1592 = vmatprep.subr.bf16.mxu0 0
        %1593 = vmatpush1.bf16.msra.mxu0 0
        %1594 = vmatprep.subr.bf16.mxu0 0
        %1595 = vmatpush1.bf16.msra.mxu0 0
        %1596 = vmatprep.subr.bf16.mxu0 0
        %1597 = vmatpush1.bf16.msra.mxu0 0
        %1598 = vmatprep.subr.bf16.mxu0 0
        %1599 = vmatpush1.bf16.msra.mxu0 0
        %1600 = vmatprep.subr.bf16.mxu0 0
        %1601 = vmatpush1.bf16.msra.mxu0 0
        %1602 = vmatprep.subr.bf16.mxu0 0
        %1603 = vmatpush1.bf16.msra.mxu0 0
        %1604 = vmatprep.subr.bf16.mxu0 0
        %1605 = vmatpush1.bf16.msra.mxu0 0
        %1606 = vmatprep.subr.bf16.mxu0 0
        %1607 = vmatpush1.bf16.msra.mxu0 0
        %1608 = vmatprep.subr.bf16.mxu0 0
        %1609 = vmatpush1.bf16.msra.mxu0 0
        %1610 = vmatprep.mubr.bf16.mxu0 0
        %1611 = vmatmul.mubr.bf16.gmra.mrb[0].mxu0 %v1576
        %v1612 = vpop.f32.mrb[0].mxu0
        %v1613 = vadd.f32 0.0, %v1612
        %v1614 = vpop.f32.mrb[0].mxu0
        %v1615 = vpop.f32.mrb[0].mxu0
        %v1616 = vadd.f32 0.0, %v1615
        %v1617 = vpop.f32.mrb[0].mxu0
        %1618 = vdwg.mxu0
        %v1619 = vadd.f32 %v1484, %v1613
        %v1620 = vadd.f32 %v1487, %v1616
        %vm1621 = vcmp.ge.s32.totalorder %v1218, 24
        %vm1622 = vcmp.lt.s32.totalorder %v1218, 32
        %vm1623 = vmand %vm1621, %vm1622
        %v1624 = vsel %vm1623, 1, 0
        %v1625 = vcvt.s32.f32 %v1624
        %1627 = vrot.lane.b32.xlu0 %v1625, 32
        %v1628 = vpop.permute.xlu0 %1627
        %v1630 = vmul.f32 %v1143, %v1628
        %v1631 = vmul.f32 %v1146, %v1628
        %v1632 = vpack.c.bf16 %v1631, %v1630
        %v1633 = vmul.f32 %v1211, %v1625
        %v1634 = vmul.f32 %v1214, %v1625
        %v1635 = vpack.c.bf16 %v1634, %v1633
        %1637 = vrot.lane.b32.xlu0 %v1632, 96
        %v1638 = vpop.permute.xlu0 %1637
        %v1640 = vsel %vm1104, %v1638, 0
        %1642 = vmatprep.subr.bf16.mxu0 0
        %1643 = vmatpush1.bf16.xpose.msra.mxu0 %v1640
        %1644 = vmatprep.subr.bf16.mxu0 0
        %1645 = vmatpush1.bf16.xpose.msra.mxu0 0
        %1646 = vmatprep.subr.bf16.mxu0 0
        %1647 = vmatpush1.bf16.xpose.msra.mxu0 0
        %1648 = vmatprep.subr.bf16.mxu0 0
        %1649 = vmatpush1.bf16.xpose.msra.mxu0 0
        %1650 = vmatprep.subr.bf16.mxu0 0
        %1651 = vmatpush1.bf16.xpose.msra.mxu0 0
        %1652 = vmatprep.subr.bf16.mxu0 0
        %1653 = vmatpush1.bf16.xpose.msra.mxu0 0
        %1654 = vmatprep.subr.bf16.mxu0 0
        %1655 = vmatpush1.bf16.xpose.msra.mxu0 0
        %1656 = vmatprep.subr.bf16.mxu0 0
        %1657 = vmatpush1.bf16.xpose.msra.mxu0 0
        %1658 = vmatprep.subr.bf16.mxu0 0
        %1659 = vmatpush1.bf16.xpose.msra.mxu0 0
        %1660 = vmatprep.subr.bf16.mxu0 0
        %1661 = vmatpush1.bf16.xpose.msra.mxu0 0
        %1662 = vmatprep.subr.bf16.mxu0 0
        %1663 = vmatpush1.bf16.xpose.msra.mxu0 0
        %1664 = vmatprep.subr.bf16.mxu0 0
        %1665 = vmatpush1.bf16.xpose.msra.mxu0 0
        %1666 = vmatprep.subr.bf16.mxu0 0
        %1667 = vmatpush1.bf16.xpose.msra.mxu0 0
        %1668 = vmatprep.subr.bf16.mxu0 0
        %1669 = vmatpush1.bf16.xpose.msra.mxu0 0
        %1670 = vmatprep.subr.bf16.mxu0 0
        %1671 = vmatpush1.bf16.xpose.msra.mxu0 0
        %1672 = vmatprep.subr.bf16.mxu0 0
        %1673 = vmatpush1.bf16.xpose.msra.mxu0 0
        %1674 = vmatprep.mubr.bf16.mxu0 0
        %1675 = vmatmul.mubr.bf16.gmra.mrb[0].mxu0 %v1247
        %v1676 = vpop.f32.mrb[0].mxu0
        %v1677 = vadd.f32 %v1241, %v1676
        %v1678 = vpop.f32.mrb[0].mxu0
        %v1679 = vpop.f32.mrb[0].mxu0
        %v1680 = vadd.f32 %v1241, %v1679
        %v1681 = vpop.f32.mrb[0].mxu0
        %1682 = vdwg.mxu0
        %v1683 = vsel %vm1293, %v1677, -inf
        %1684 = vmax.xlane.f32.xlu0 %v1683
        %v1685 = vpop.xlane.xlu0 %1684
        %v1686 = vsel %vm1293, %v1680, -inf
        %1687 = vmax.xlane.f32.xlu0 %v1686
        %v1688 = vpop.xlane.xlu0 %1687
        %v1689 = vsub.f32 %v1677, %v1685
        %v1690 = vsub.f32 %v1680, %v1688
        %v1691 = vmul.f32 %v1689, 1.442695
        %v1692 = vpow.pop %v1691
        %v1693 = vmul.f32 %v1690, 1.442695
        %v1694 = vpow.pop %v1693
        %v1695 = vsel %vm1293, %v1692, 0.0
        %1696 = vadd.xlane.f32.xlu0 %v1695
        %v1697 = vpop.xlane.xlu0 %1696
        %v1698 = vsel %vm1293, %v1694, 0.0
        %1699 = vadd.xlane.f32.xlu0 %v1698
        %v1700 = vpop.xlane.xlu0 %1699
        %v1701 = vrcp.pop %v1697
        %v1702 = vrcp.pop %v1700
        %v1703 = vmul.f32 %v1692, %v1701
        %v1704 = vmul.f32 %v1694, %v1702
        %v1705 = vpack.c.bf16 %v1704, %v1703
        %v1707 = vsel %vm1293, %v1705, 0
        %1709 = vmatprep.subr.bf16.mxu0 0
        %1710 = vmatpush1.bf16.msra.mxu0 %v1635
        %1711 = vmatprep.subr.bf16.mxu0 0
        %1712 = vmatpush1.bf16.msra.mxu0 0
        %1713 = vmatprep.subr.bf16.mxu0 0
        %1714 = vmatpush1.bf16.msra.mxu0 0
        %1715 = vmatprep.subr.bf16.mxu0 0
        %1716 = vmatpush1.bf16.msra.mxu0 0
        %1717 = vmatprep.subr.bf16.mxu0 0
        %1718 = vmatpush1.bf16.msra.mxu0 0
        %1719 = vmatprep.subr.bf16.mxu0 0
        %1720 = vmatpush1.bf16.msra.mxu0 0
        %1721 = vmatprep.subr.bf16.mxu0 0
        %1722 = vmatpush1.bf16.msra.mxu0 0
        %1723 = vmatprep.subr.bf16.mxu0 0
        %1724 = vmatpush1.bf16.msra.mxu0 0
        %1725 = vmatprep.subr.bf16.mxu0 0
        %1726 = vmatpush1.bf16.msra.mxu0 0
        %1727 = vmatprep.subr.bf16.mxu0 0
        %1728 = vmatpush1.bf16.msra.mxu0 0
        %1729 = vmatprep.subr.bf16.mxu0 0
        %1730 = vmatpush1.bf16.msra.mxu0 0
        %1731 = vmatprep.subr.bf16.mxu0 0
        %1732 = vmatpush1.bf16.msra.mxu0 0
        %1733 = vmatprep.subr.bf16.mxu0 0
        %1734 = vmatpush1.bf16.msra.mxu0 0
        %1735 = vmatprep.subr.bf16.mxu0 0
        %1736 = vmatpush1.bf16.msra.mxu0 0
        %1737 = vmatprep.subr.bf16.mxu0 0
        %1738 = vmatpush1.bf16.msra.mxu0 0
        %1739 = vmatprep.subr.bf16.mxu0 0
        %1740 = vmatpush1.bf16.msra.mxu0 0
        %1741 = vmatprep.mubr.bf16.mxu0 0
        %1742 = vmatmul.mubr.bf16.gmra.mrb[0].mxu0 %v1707
        %v1743 = vpop.f32.mrb[0].mxu0
        %v1744 = vadd.f32 0.0, %v1743
        %v1745 = vpop.f32.mrb[0].mxu0
        %v1746 = vpop.f32.mrb[0].mxu0
        %v1747 = vadd.f32 0.0, %v1746
        %v1748 = vpop.f32.mrb[0].mxu0
        %1749 = vdwg.mxu0
        %v1750 = vadd.f32 %v1619, %v1744
        %v1751 = vadd.f32 %v1620, %v1747
        %v1752 = vld [vmem:[%s855] sm:$0xf]
        %v1753 = vld [vmem:[%s855 + $0x4] sm:$0xf]
        %v1754 = vld [vmem:[%s855 + $0x8] sm:$0xf]
        %v1755 = vld [vmem:[%s855 + $0xc] sm:$0xf]
        %v1756 = vpack.c.bf16 %v1751, %v1750
        %v1757 = vld [vmem:[%s863] sm:$0x1]
        %v1759 = vlaneseq
        %v1760 = vshrl.u32 %v1759, 7
        %v1761 = vsub.s32 0, %v1760
        %v1762 = vrot.slane %v1757, %v1761
        %v1768 = vunpack.c.l.b16 %v1752
        %v1769 = vunpack.c.l.b16 %v1753
        %v1770 = vunpack.c.l.b16 %v1754
        %v1771 = vunpack.c.l.b16 %v1755
        %v1772 = vpack.c.b16 %v1769, %v1768
        %v1773 = vpack.c.b16 %v1771, %v1770
        %v1777 = vsel %vm1104, %v1756, 0
        %1779 = vmatprep.subr.bf16.mxu0 0
        %1780 = vmatpush1.bf16.msra.mxu0 %v1772
        %1781 = vmatprep.subr.bf16.mxu0 0
        %1782 = vmatpush1.bf16.msra.mxu0 %v1773
        %1783 = vmatprep.subr.bf16.mxu0 0
        %1784 = vmatpush1.bf16.msra.mxu0 0
        %1785 = vmatprep.subr.bf16.mxu0 0
        %1786 = vmatpush1.bf16.msra.mxu0 0
        %1787 = vmatprep.subr.bf16.mxu0 0
        %1788 = vmatpush1.bf16.msra.mxu0 0
        %1789 = vmatprep.subr.bf16.mxu0 0
        %1790 = vmatpush1.bf16.msra.mxu0 0
        %1791 = vmatprep.subr.bf16.mxu0 0
        %1792 = vmatpush1.bf16.msra.mxu0 0
        %1793 = vmatprep.subr.bf16.mxu0 0
        %1794 = vmatpush1.bf16.msra.mxu0 0
        %1795 = vmatprep.subr.bf16.mxu0 0
        %1796 = vmatpush1.bf16.msra.mxu0 0
        %1797 = vmatprep.subr.bf16.mxu0 0
        %1798 = vmatpush1.bf16.msra.mxu0 0
        %1799 = vmatprep.subr.bf16.mxu0 0
        %1800 = vmatpush1.bf16.msra.mxu0 0
        %1801 = vmatprep.subr.bf16.mxu0 0
        %1802 = vmatpush1.bf16.msra.mxu0 0
        %1803 = vmatprep.subr.bf16.mxu0 0
        %1804 = vmatpush1.bf16.msra.mxu0 0
        %1805 = vmatprep.subr.bf16.mxu0 0
        %1806 = vmatpush1.bf16.msra.mxu0 0
        %1807 = vmatprep.subr.bf16.mxu0 0
        %1808 = vmatpush1.bf16.msra.mxu0 0
        %1809 = vmatprep.subr.bf16.mxu0 0
        %1810 = vmatpush1.bf16.msra.mxu0 0
        %1811 = vmatprep.mubr.bf16.mxu0 0
        %1812 = vmatmul.mubr.bf16.gmra.mrb[0].mxu0 %v1777
        %v1813 = vpop.f32.mrb[0].mxu0
        %v1814 = vadd.f32 %v1762, %v1813
        %v1815 = vpop.f32.mrb[0].mxu0
        %v1816 = vpop.f32.mrb[0].mxu0
        %v1817 = vadd.f32 %v1762, %v1816
        %v1818 = vpop.f32.mrb[0].mxu0
        %1819 = vdwg.mxu0
        %v1820 = vadd.f32 %v1073, %v1814
        %v1821 = vadd.f32 %v1074, %v1817
        %v1822 = vld [vmem:[%s871] sm:$0x1]
        %v1823 = vld [vmem:[%s879] sm:$0x1]
        %v1824 = vsel %vm1104, %v1820, 0.0
        %1825 = vadd.xlane.f32.xlu0 %v1824
        %v1826 = vpop.xlane.xlu0 %1825
        %v1827 = vsel %vm1104, %v1821, 0.0
        %1828 = vadd.xlane.f32.xlu0 %v1827
        %v1829 = vpop.xlane.xlu0 %1828
        %v1830 = vrcp.pop 32.0
        %v1831 = vmul.f32 %v1826, %v1830
        %v1832 = vmul.f32 %v1829, %v1830
        %v1833 = vsub.f32 %v1820, %v1831
        %v1834 = vsub.f32 %v1821, %v1832
        %v1835 = vmul.f32 %v1833, %v1833
        %v1836 = vmul.f32 %v1834, %v1834
        %v1837 = vsel %vm1104, %v1835, 0.0
        %1838 = vadd.xlane.f32.xlu0 %v1837
        %v1839 = vpop.xlane.xlu0 %1838
        %v1840 = vsel %vm1104, %v1836, 0.0
        %1841 = vadd.xlane.f32.xlu0 %v1840
        %v1842 = vpop.xlane.xlu0 %1841
        %v1843 = vmul.f32 %v1839, %v1830
        %v1844 = vmul.f32 %v1842, %v1830
        %v1845 = vadd.f32 %v1843, 1e-05
        %v1846 = vadd.f32 %v1844, 1e-05
        %v1847 = vrsqrt.pop %v1845
        %v1848 = vrsqrt.pop %v1846
        %v1849 = vmul.f32 %v1833, %v1847
        %v1850 = vmul.f32 %v1834, %v1848
        %v1852 = vlaneseq
        %v1853 = vshrl.u32 %v1852, 7
        %v1854 = vsub.s32 0, %v1853
        %v1855 = vrot.slane %v1822, %v1854
        %v1857 = vmul.f32 %v1849, %v1855
        %v1858 = vmul.f32 %v1850, %v1855
        %v1860 = vlaneseq
        %v1861 = vshrl.u32 %v1860, 7
        %v1862 = vsub.s32 0, %v1861
        %v1863 = vrot.slane %v1823, %v1862
        %v1865 = vadd.f32 %v1857, %v1863
        %v1866 = vadd.f32 %v1858, %v1863
        %v1867 = vld [vmem:[%s888] sm:$0xf]
        %v1868 = vld [vmem:[%s888 + $0x4] sm:$0xf]
        %v1869 = vld [vmem:[%s888 + $0x8] sm:$0xf]
        %v1870 = vld [vmem:[%s888 + $0xc] sm:$0xf]
        %v1871 = vpack.c.bf16 %v1866, %v1865
        %v1872 = vld [vmem:[%s896] sm:$0x1]
        %v1874 = vlaneseq
        %v1875 = vshrl.u32 %v1874, 7
        %v1876 = vsub.s32 0, %v1875
        %v1877 = vrot.slane %v1872, %v1876
        %v1883 = vunpack.c.l.b16 %v1867
        %v1884 = vunpack.c.l.b16 %v1868
        %v1885 = vunpack.c.l.b16 %v1869
        %v1886 = vunpack.c.l.b16 %v1870
        %v1887 = vpack.c.b16 %v1884, %v1883
        %v1888 = vpack.c.b16 %v1886, %v1885
        %v1892 = vsel %vm1104, %v1871, 0
        %1894 = vmatprep.subr.bf16.mxu0 0
        %1895 = vmatpush1.bf16.msra.mxu0 %v1887
        %1896 = vmatprep.subr.bf16.mxu0 0
        %1897 = vmatpush1.bf16.msra.mxu0 %v1888
        %1898 = vmatprep.subr.bf16.mxu0 0
        %1899 = vmatpush1.bf16.msra.mxu0 0
        %1900 = vmatprep.subr.bf16.mxu0 0
        %1901 = vmatpush1.bf16.msra.mxu0 0
        %1902 = vmatprep.subr.bf16.mxu0 0
        %1903 = vmatpush1.bf16.msra.mxu0 0
        %1904 = vmatprep.subr.bf16.mxu0 0
        %1905 = vmatpush1.bf16.msra.mxu0 0
        %1906 = vmatprep.subr.bf16.mxu0 0
        %1907 = vmatpush1.bf16.msra.mxu0 0
        %1908 = vmatprep.subr.bf16.mxu0 0
        %1909 = vmatpush1.bf16.msra.mxu0 0
        %1910 = vmatprep.subr.bf16.mxu0 0
        %1911 = vmatpush1.bf16.msra.mxu0 0
        %1912 = vmatprep.subr.bf16.mxu0 0
        %1913 = vmatpush1.bf16.msra.mxu0 0
        %1914 = vmatprep.subr.bf16.mxu0 0
        %1915 = vmatpush1.bf16.msra.mxu0 0
        %1916 = vmatprep.subr.bf16.mxu0 0
        %1917 = vmatpush1.bf16.msra.mxu0 0
        %1918 = vmatprep.subr.bf16.mxu0 0
        %1919 = vmatpush1.bf16.msra.mxu0 0
        %1920 = vmatprep.subr.bf16.mxu0 0
        %1921 = vmatpush1.bf16.msra.mxu0 0
        %1922 = vmatprep.subr.bf16.mxu0 0
        %1923 = vmatpush1.bf16.msra.mxu0 0
        %1924 = vmatprep.subr.bf16.mxu0 0
        %1925 = vmatpush1.bf16.msra.mxu0 0
        %1926 = vmatprep.mubr.bf16.mxu0 0
        %1927 = vmatmul.mubr.bf16.gmra.mrb[0].mxu0 %v1892
        %v1928 = vpop.f32.mrb[0].mxu0
        %v1929 = vadd.f32 %v1877, %v1928
        %v1930 = vpop.f32.mrb[0].mxu0
        %v1931 = vpop.f32.mrb[0].mxu0
        %v1932 = vadd.f32 %v1877, %v1931
        %v1933 = vpop.f32.mrb[0].mxu0
        %1934 = vdwg.mxu0
        %v1935 = vmax.f32 %v1929, 0.0
        %v1936 = vmax.f32 %v1932, 0.0
        %v1937 = vld [vmem:[%s1057] sm:$0xf]
        %v1938 = vld [vmem:[%s1057 + $0x4] sm:$0xf]
        %v1939 = vld [vmem:[%s1057 + $0x8] sm:$0xf]
        %v1940 = vld [vmem:[%s1057 + $0xc] sm:$0xf]
        %v1941 = vld [vmem:[%s1057 + $0x10] sm:$0xf]
        %v1942 = vld [vmem:[%s1057 + $0x14] sm:$0xf]
        %v1943 = vld [vmem:[%s1057 + $0x18] sm:$0xf]
        %v1944 = vld [vmem:[%s1057 + $0x1c] sm:$0xf]
        %v1945 = vpack.c.bf16 %v1936, %v1935
        %v1946 = vld [vmem:[%s904] sm:$0x1]
        %v1948 = vlaneseq
        %v1949 = vshrl.u32 %v1948, 7
        %v1950 = vsub.s32 0, %v1949
        %v1951 = vrot.slane %v1946, %v1950
        %v1961 = vunpack.c.l.b16 %v1937
        %v1962 = vunpack.c.l.b16 %v1938
        %v1963 = vunpack.c.l.b16 %v1939
        %v1964 = vunpack.c.l.b16 %v1940
        %v1965 = vunpack.c.l.b16 %v1941
        %v1966 = vunpack.c.l.b16 %v1942
        %v1967 = vunpack.c.l.b16 %v1943
        %v1968 = vunpack.c.l.b16 %v1944
        %v1969 = vpack.c.b16 %v1962, %v1961
        %v1970 = vpack.c.b16 %v1964, %v1963
        %v1971 = vpack.c.b16 %v1966, %v1965
        %v1972 = vpack.c.b16 %v1968, %v1967
        %vm1977 = vcmask 523264
        %v1979 = vsel %vm1977, %v1945, 0
        %1981 = vmatprep.subr.bf16.mxu0 0
        %1982 = vmatpush1.bf16.msra.mxu0 %v1969
        %1983 = vmatprep.subr.bf16.mxu0 0
        %1984 = vmatpush1.bf16.msra.mxu0 %v1970
        %1985 = vmatprep.subr.bf16.mxu0 0
        %1986 = vmatpush1.bf16.msra.mxu0 %v1971
        %1987 = vmatprep.subr.bf16.mxu0 0
        %1988 = vmatpush1.bf16.msra.mxu0 %v1972
        %1989 = vmatprep.subr.bf16.mxu0 0
        %1990 = vmatpush1.bf16.msra.mxu0 0
        %1991 = vmatprep.subr.bf16.mxu0 0
        %1992 = vmatpush1.bf16.msra.mxu0 0
        %1993 = vmatprep.subr.bf16.mxu0 0
        %1994 = vmatpush1.bf16.msra.mxu0 0
        %1995 = vmatprep.subr.bf16.mxu0 0
        %1996 = vmatpush1.bf16.msra.mxu0 0
        %1997 = vmatprep.subr.bf16.mxu0 0
        %1998 = vmatpush1.bf16.msra.mxu0 0
        %1999 = vmatprep.subr.bf16.mxu0 0
        %2000 = vmatpush1.bf16.msra.mxu0 0
        %2001 = vmatprep.subr.bf16.mxu0 0
        %2002 = vmatpush1.bf16.msra.mxu0 0
        %2003 = vmatprep.subr.bf16.mxu0 0
        %2004 = vmatpush1.bf16.msra.mxu0 0
        %2005 = vmatprep.subr.bf16.mxu0 0
        %2006 = vmatpush1.bf16.msra.mxu0 0
        %2007 = vmatprep.subr.bf16.mxu0 0
        %2008 = vmatpush1.bf16.msra.mxu0 0
        %2009 = vmatprep.subr.bf16.mxu0 0
        %2010 = vmatpush1.bf16.msra.mxu0 0
        %2011 = vmatprep.subr.bf16.mxu0 0
        %2012 = vmatpush1.bf16.msra.mxu0 0
        %2013 = vmatprep.mubr.bf16.mxu0 0
        %2014 = vmatmul.mubr.bf16.gmra.mrb[0].mxu0 %v1979
        %v2015 = vpop.f32.mrb[0].mxu0
        %v2016 = vadd.f32 %v1951, %v2015
        %v2017 = vpop.f32.mrb[0].mxu0
        %v2018 = vpop.f32.mrb[0].mxu0
        %v2019 = vadd.f32 %v1951, %v2018
        %v2020 = vpop.f32.mrb[0].mxu0
        %2021 = vdwg.mxu0
        %v2022 = vadd.f32 %v1865, %v2016
        %v2023 = vadd.f32 %v1866, %v2019
        %v2024 = vld [vmem:[%s912] sm:$0x1]
        %v2025 = vld [vmem:[%s920] sm:$0x1]
        %v2026 = vsel %vm1104, %v2022, 0.0
        %2027 = vadd.xlane.f32.xlu0 %v2026
        %v2028 = vpop.xlane.xlu0 %2027
        %v2029 = vsel %vm1104, %v2023, 0.0
        %2030 = vadd.xlane.f32.xlu0 %v2029
        %v2031 = vpop.xlane.xlu0 %2030
        %v2032 = vmul.f32 %v2028, %v1830
        %v2033 = vmul.f32 %v2031, %v1830
        %v2034 = vsub.f32 %v2022, %v2032
        %v2035 = vsub.f32 %v2023, %v2033
        %v2036 = vmul.f32 %v2034, %v2034
        %v2037 = vmul.f32 %v2035, %v2035
        %v2038 = vsel %vm1104, %v2036, 0.0
        %2039 = vadd.xlane.f32.xlu0 %v2038
        %v2040 = vpop.xlane.xlu0 %2039
        %v2041 = vsel %vm1104, %v2037, 0.0
        %2042 = vadd.xlane.f32.xlu0 %v2041
        %v2043 = vpop.xlane.xlu0 %2042
        %v2044 = vmul.f32 %v2040, %v1830
        %v2045 = vmul.f32 %v2043, %v1830
        %v2046 = vadd.f32 %v2044, 1e-05
        %v2047 = vadd.f32 %v2045, 1e-05
        %v2048 = vrsqrt.pop %v2046
        %v2049 = vrsqrt.pop %v2047
        %v2050 = vmul.f32 %v2034, %v2048
        %v2051 = vmul.f32 %v2035, %v2049
        %v2053 = vlaneseq
        %v2054 = vshrl.u32 %v2053, 7
        %v2055 = vsub.s32 0, %v2054
        %v2056 = vrot.slane %v2024, %v2055
        %v2058 = vmul.f32 %v2050, %v2056
        %v2059 = vmul.f32 %v2051, %v2056
        %v2061 = vlaneseq
        %v2062 = vshrl.u32 %v2061, 7
        %v2063 = vsub.s32 0, %v2062
        %v2064 = vrot.slane %v2025, %v2063
        %v2066 = vadd.f32 %v2058, %v2064
        %v2067 = vadd.f32 %v2059, %v2064
        %2068 = vst.msk [vmem:[%s1062] sm:$0xff] %vm1104, %v2066
        %2069 = vst.msk [vmem:[%s1062 + $0x8] sm:$0xff] %vm1104, %v2067
        %p2070 = scmp.lt.s32.totalorder %s53, 1
        %s2071 = scalar_select %p2070, %s53, 1
        %s2072 = smul.addr %s2071, 2
        %s2073 = smul.addr %s2072, 8
        %s2074 = scalar_lea.vmem %s17, %s2073
        // Predicated region
        $region145: #{transformer_forward.2} parent=87 // pred_check
          %p2075 = pneg %p521
        $region146: #{transformer_forward.2} parent=87 // pred_check_branch
          %2077 = sbr.rel (%p2075) target = $region148
        $region147: #{transformer_forward.2} parent=87 // pred_region
          _
        $region148: #{transformer_forward.2} parent=87 // pred_fallthru
          _
      $region88: #{transformer_forward.2} parent=5 // pred_fallthru
        _
      %p2078 = scmp.le.s32.totalorder 2, %s44
      // Predicated region
      $region149: #{transformer_forward.2} parent=5 // pred_check
        %p2079 = pneg %p2078
      $region150: #{transformer_forward.2} parent=5 // pred_check_branch
        %2081 = sbr.rel (%p2079) target = $region152
      $region151: #{transformer_forward.2} parent=5 // pred_region
        %s2082 = ssub.s32 %s44, 2
        // Predicated region
        $region153: #{transformer_forward.2} parent=151 // pred_check
          %p2083 = pneg %p527
        $region154: #{transformer_forward.2} parent=151 // pred_check_branch
          %2085 = sbr.rel (%p2083) target = $region156
        $region155: #{transformer_forward.2} parent=151 // pred_region
          %p2086 = scmp.lt.s32.totalorder %s55, 1
          %s2087 = scalar_select %p2086, %s55, 1
          %s2088 = smul.addr %s2087, 2
          %s2089 = smul.addr %s2088, 8
          %s2090 = scalar_lea.vmem %s17, %s2089
        $region156: #{transformer_forward.2} parent=151 // pred_fallthru
          _
      $region152: #{transformer_forward.2} parent=5 // pred_fallthru
        _
    $region6: #{transformer_forward.2} parent=1 // loop_footer
      %s48 = sadd.s32 1, %s44
    $region7: #{transformer_forward.2} parent=1 // loop_footer_branch
      %43 = sbr.rel target = $region3
    $region8: #{transformer_forward.2} parent=1 // loop_exit
      _
    %2091 = vsyncpa [#allocation3], 1
    %s2092 = scalar_lea.sflag [#allocation3], 1
    %2093 = vsyncpa %s2092, 1
    %2094 = vsyncpa [#allocation5], 1
    %s2095 = scalar_lea.sflag [#allocation5], 1
    %2096 = vsyncpa %s2095, 1
    %2097 = vsyncpa [#allocation8], 1
    %s2098 = scalar_lea.sflag [#allocation8], 1
    %2099 = vsyncpa %s2098, 1
    %2100 = vsyncpa [#allocation11], 1
    %s2101 = scalar_lea.sflag [#allocation11], 1
    %2102 = vsyncpa %s2101, 1
    %2103 = vsyncpa [#allocation14], 1
    %s2104 = scalar_lea.sflag [#allocation14], 1
    %2105 = vsyncpa %s2104, 1
    %2106 = vsyncpa [#allocation17], 1
    %s2107 = scalar_lea.sflag [#allocation17], 1
    %2108 = vsyncpa %s2107, 1
    %2109 = vsyncpa [#allocation20], 1
    %s2110 = scalar_lea.sflag [#allocation20], 1
    %2111 = vsyncpa %s2110, 1

// kernel: transformer_forward.3
$region0: #{transformer_forward.3}
  #allocation0 [shape = 'u32[]', space=smem, size = 0x4, offset = 0x4, fixed_abs, tag = 'smem constant byte address 0x4 - core index']
  #allocation1 [shape = 'u32[144,128]{1,0:T(1,128)}', space=vmem, size = 0x12000, scoped, tag = 'internal scratch']
  %s0 = inlined_call_operand.smem [shape: u32[34], index: -1, kind: input, shape index: {}]
  %s1 = sld [smem:[%s0]]
  %s2 = scalar_lea.smem %s0, 1
  %s3 = sld [smem:[%s2]]
  %s4 = scalar_lea.smem %s0, 2
  %s5 = sld [smem:[%s4]]
  %s6 = scalar_lea.smem %s0, 3
  %s7 = sld [smem:[%s6]]
  %s8 = scalar_lea.smem %s0, 4
  %s9 = sld [smem:[%s8]]
  %s10 = scalar_lea.smem %s0, 5
  %s11 = sld [smem:[%s10]]
  %s12 = scalar_lea.smem %s0, 6
  %s13 = sld [smem:[%s12]]
  %s14 = scalar_lea.smem %s0, 7
  %s15 = sld [smem:[%s14]]
  %s16 = scalar_lea.smem %s0, 8
  %s17 = sld [smem:[%s16]]
  %s18 = scalar_lea.smem %s0, 9
  %s19 = sld [smem:[%s18]]
  %s20 = scalar_lea.smem %s0, 10
  %s21 = sld [smem:[%s20]]
  %s22 = scalar_lea.smem %s0, 11
  %s23 = sld [smem:[%s22]]
  %s24 = scalar_lea.smem %s0, 12
  %s25 = sld [smem:[%s24]]
  %s26 = scalar_lea.smem %s0, 13
  %s27 = sld [smem:[%s26]]
  %s28 = scalar_lea.smem %s0, 14
  %s29 = sld [smem:[%s28]]
  %s30 = scalar_lea.smem %s0, 15
  %s31 = sld [smem:[%s30]]
  %s32 = scalar_lea.smem %s0, 16
  %s33 = sld [smem:[%s32]]
  %s34 = scalar_lea.smem %s0, 17
  %s35 = sld [smem:[%s34]]
  %s36 = scalar_lea.smem %s0, 18
  %s37 = sld [smem:[%s36]]
  %s38 = scalar_lea.smem %s0, 19
  %s39 = sld [smem:[%s38]]
  %s40 = scalar_lea.smem %s0, 20
  %s41 = sld [smem:[%s40]]
  %s42 = scalar_lea.smem %s0, 21
  %s43 = sld [smem:[%s42]]
  %s44 = scalar_lea.smem %s0, 22
  %s45 = sld [smem:[%s44]]
  %s46 = scalar_lea.smem %s0, 23
  %s47 = sld [smem:[%s46]]
  %s48 = scalar_lea.smem %s0, 24
  %s49 = sld [smem:[%s48]]
  %s50 = scalar_lea.smem %s0, 25
  %s51 = sld [smem:[%s50]]
  %s52 = scalar_lea.smem %s0, 26
  %s53 = sld [smem:[%s52]]
  %s54 = scalar_lea.smem %s0, 27
  %s55 = sld [smem:[%s54]]
  %s56 = scalar_lea.smem %s0, 28
  %s57 = sld [smem:[%s56]]
  %s58 = scalar_lea.smem %s0, 29
  %s59 = sld [smem:[%s58]]
  %s60 = scalar_lea.smem %s0, 30
  %s61 = sld [smem:[%s60]]
  %s62 = scalar_lea.smem %s0, 31
  %s63 = sld [smem:[%s62]]
  %s64 = scalar_lea.smem %s0, 32
  %s65 = sld [smem:[%s64]]
  %s66 = scalar_lea.smem %s0, 33
  %s67 = sld [smem:[%s66]]
  %68 = xla_tuple %s65, %s67
  %s69 = sld [smem:[#allocation0]]
  $region249: #{transformer_forward.3} parent=0
    _
  %s71 = ssub.s32 1, %s69
  %s72 = scalar_select 0, %s71, %s69
  $region1: #{transformer_forward.3} parent=0
    #allocation2 [shape = 'u8[1024]{0}', space=vmem, size = 0x400, scoped, tag = 'input window, operand 7']
    #allocation3 [shape = 's32[2]{0}', space=sflag, size = 0x8, scoped, tag = 'scoped memory for transformer_forward.3']
    #allocation4 [shape = 's32[2]{0}', space=sflag, size = 0x8, scoped, tag = 'scoped memory for transformer_forward.3']
    #allocation5 [shape = 'u8[1024]{0}', space=vmem, size = 0x400, scoped, tag = 'input window, operand 9']
    #allocation6 [shape = 's32[2]{0}', space=sflag, size = 0x8, scoped, tag = 'scoped memory for transformer_forward.3']
    #allocation7 [shape = 'u8[1024]{0}', space=vmem, size = 0x400, scoped, tag = 'input window, operand 11']
    #allocation8 [shape = 'u8[1024]{0}', space=vmem, size = 0x400, scoped, tag = 'input window, operand 12']
    #allocation9 [shape = 's32[2]{0}', space=sflag, size = 0x8, scoped, tag = 'scoped memory for transformer_forward.3']
    #allocation10 [shape = 'u8[1024]{0}', space=vmem, size = 0x400, scoped, tag = 'input window, operand 13']
    #allocation11 [shape = 'u8[1024]{0}', space=vmem, size = 0x400, scoped, tag = 'input window, operand 15']
    #allocation12 [shape = 's32[2]{0}', space=sflag, size = 0x8, scoped, tag = 'scoped memory for transformer_forward.3']
    #allocation13 [shape = 'u8[1024]{0}', space=vmem, size = 0x400, scoped, tag = 'input window, operand 17']
    #allocation14 [shape = 'u8[16384]{0}', space=vmem, size = 0x4000, scoped, tag = 'input window, operand 18']
    #allocation15 [shape = 's32[2]{0}', space=sflag, size = 0x8, scoped, tag = 'scoped memory for transformer_forward.3']
    #allocation16 [shape = 'u8[1024]{0}', space=vmem, size = 0x400, scoped, tag = 'input window, operand 19']
    #allocation17 [shape = 'u8[16384]{0}', space=vmem, size = 0x4000, scoped, tag = 'input window, operand 20']
    #allocation18 [shape = 's32[2]{0}', space=sflag, size = 0x8, scoped, tag = 'scoped memory for transformer_forward.3']
    #allocation19 [shape = 'u8[1024]{0}', space=vmem, size = 0x400, scoped, tag = 'input window, operand 21']
    #allocation20 [shape = 'u8[1024]{0}', space=vmem, size = 0x400, scoped, tag = 'input window, operand 22']
    #allocation21 [shape = 's32[2]{0}', space=sflag, size = 0x8, scoped, tag = 'scoped memory for transformer_forward.3']
    #allocation22 [shape = 'u8[1024]{0}', space=vmem, size = 0x400, scoped, tag = 'input window, operand 23']
    #allocation23 [shape = 'u8[1024]{0}', space=vmem, size = 0x400, scoped, tag = 'input window, operand 25']
    #allocation24 [shape = 's32[2]{0}', space=sflag, size = 0x8, scoped, tag = 'scoped memory for transformer_forward.3']
    #allocation25 [shape = 'u8[1024]{0}', space=vmem, size = 0x400, scoped, tag = 'input window, operand 27']
    #allocation26 [shape = 'u8[1024]{0}', space=vmem, size = 0x400, scoped, tag = 'input window, operand 28']
    #allocation27 [shape = 's32[2]{0}', space=sflag, size = 0x8, scoped, tag = 'scoped memory for transformer_forward.3']
    #allocation28 [shape = 'u8[1024]{0}', space=vmem, size = 0x400, scoped, tag = 'input window, operand 29']
    #allocation29 [shape = 'u8[1024]{0}', space=vmem, size = 0x400, scoped, tag = 'input window, operand 30']
    #allocation30 [shape = 's32[2]{0}', space=sflag, size = 0x8, scoped, tag = 'scoped memory for transformer_forward.3']
    #allocation31 [shape = 'u8[1024]{0}', space=vmem, size = 0x400, scoped, tag = 'input window, operand 31']
    #allocation32 [shape = 'u8[65536]{0}', space=vmem, size = 0x10000, scoped, tag = 'output window, operand 0']
    %73 = vsyncpa [#allocation3], 0
    %s74 = scalar_lea.sflag [#allocation3], 1
    %75 = vsyncpa %s74, 0
    %76 = vsyncpa [#allocation6], 0
    %s77 = scalar_lea.sflag [#allocation6], 1
    %78 = vsyncpa %s77, 0
    %79 = vsyncpa [#allocation9], 0
    %s80 = scalar_lea.sflag [#allocation9], 1
    %81 = vsyncpa %s80, 0
    %82 = vsyncpa [#allocation12], 0
    %s83 = scalar_lea.sflag [#allocation12], 1
    %84 = vsyncpa %s83, 0
    %85 = vsyncpa [#allocation15], 0
    %s86 = scalar_lea.sflag [#allocation15], 1
    %87 = vsyncpa %s86, 0
    %88 = vsyncpa [#allocation18], 0
    %s89 = scalar_lea.sflag [#allocation18], 1
    %90 = vsyncpa %s89, 0
    %91 = vsyncpa [#allocation21], 0
    %s92 = scalar_lea.sflag [#allocation21], 1
    %93 = vsyncpa %s92, 0
    %94 = vsyncpa [#allocation24], 0
    %s95 = scalar_lea.sflag [#allocation24], 1
    %96 = vsyncpa %s95, 0
    %97 = vsyncpa [#allocation27], 0
    %s98 = scalar_lea.sflag [#allocation27], 1
    %99 = vsyncpa %s98, 0
    %100 = vsyncpa [#allocation30], 0
    %s101 = scalar_lea.sflag [#allocation30], 1
    %102 = vsyncpa %s101, 0
    %103 = vsyncpa [#allocation4], 0
    %s104 = scalar_lea.sflag [#allocation4], 1
    %105 = vsyncpa %s104, 0
    loop: start=0, step=1, limit=10
    $region2: #{transformer_forward.3} parent=1 // loop_pre_header
      _
    $region3: #{transformer_forward.3} parent=1 // loop_header
      %s107 = sphi 0, %s111
      %p108 = scmp.ge.s32.totalorder %s107, 10
      %s114 = sphi 0, %s133
      %s115 = sphi 0, %s129
      %s116 = sphi 0, %s125
      %s117 = sphi 0, %s114
      %s118 = sphi 0, %s115
      %s119 = sphi 0, %s116
      %s120 = sphi 0, %s117
      %s121 = sphi 0, %s118
      %s122 = sphi 0, %s119
      %s136 = sphi 0, %s138
      %s139 = sphi 0, %s136
      %s140 = sphi 0, %s139
      %s156 = sphi 0, %s140
      %s162 = sphi 0, %s164
      %s165 = sphi 0, %s162
      %s166 = sphi 0, %s165
      %s182 = sphi 0, %s166
      %s188 = sphi 0, %s190
      %s191 = sphi 0, %s188
      %s192 = sphi 0, %s191
      %s208 = sphi 0, %s192
      %s214 = sphi 0, %s216
      %s217 = sphi 0, %s214
      %s218 = sphi 0, %s217
      %s234 = sphi 0, %s218
      %s240 = sphi 0, %s242
      %s243 = sphi 0, %s240
      %s244 = sphi 0, %s243
      %s260 = sphi 0, %s244
      %s266 = sphi 0, %s268
      %s269 = sphi 0, %s266
      %s270 = sphi 0, %s269
      %s286 = sphi 0, %s270
      %s294 = sphi 0, %s296
      %s297 = sphi 0, %s294
      %s298 = sphi 0, %s297
      %s314 = sphi 0, %s298
      %s322 = sphi 0, %s324
      %s325 = sphi 0, %s322
      %s326 = sphi 0, %s325
      %s342 = sphi 0, %s326
      %s350 = sphi 0, %s352
      %s353 = sphi 0, %s350
      %s354 = sphi 0, %s353
      %s370 = sphi 0, %s354
      %s378 = sphi 0, %s380
      %s381 = sphi 0, %s378
      %s382 = sphi 0, %s381
      %s398 = sphi 0, %s382
      %s406 = sphi 0, %s408
      %s409 = sphi 0, %s406
      %s410 = sphi 0, %s409
      %s426 = sphi 0, %s410
      %s434 = sphi 0, %s436
      %s437 = sphi 0, %s434
      %s438 = sphi 0, %s437
      %s454 = sphi 0, %s438
      %s462 = sphi 0, %s464
      %s465 = sphi 0, %s462
      %s466 = sphi 0, %s465
      %s482 = sphi 0, %s466
      %s490 = sphi 0, %s492
      %s493 = sphi 0, %s490
      %s494 = sphi 0, %s493
      %s510 = sphi 0, %s494
      %s518 = sphi 0, %s520
      %s521 = sphi 0, %s518
      %s522 = sphi 0, %s521
      %s538 = sphi 0, %s522
      %s546 = sphi 0, %s548
      %s549 = sphi 0, %s546
      %s550 = sphi 0, %s549
      %s566 = sphi 0, %s550
      %s574 = sphi 0, %s576
      %s577 = sphi 0, %s574
      %s578 = sphi 0, %s577
      %s594 = sphi 0, %s578
      %s602 = sphi 0, %s604
      %s605 = sphi 0, %s602
      %s606 = sphi 0, %s605
      %s622 = sphi 0, %s606
      %s630 = sphi 0, %s632
      %s633 = sphi 0, %s630
      %s634 = sphi 0, %s633
      %s650 = sphi 0, %s634
      %s658 = sphi 0, %s660
      %s661 = sphi 0, %s658
      %s662 = sphi 0, %s661
      %s678 = sphi 0, %s662
      %s686 = sphi 0, %s688
      %s689 = sphi 0, %s686
      %s690 = sphi 0, %s689
      %s706 = sphi 0, %s690
      %s714 = sphi 0, %s716
      %s717 = sphi 0, %s714
      %s718 = sphi 0, %s717
      %s734 = sphi 0, %s718
      %s742 = sphi 0, %s744
      %s745 = sphi 0, %s742
      %s746 = sphi 0, %s745
      %s762 = sphi 0, %s746
      %s770 = sphi 0, %s772
      %s773 = sphi 0, %s770
      %s774 = sphi 0, %s773
      %s790 = sphi 0, %s774
      %s798 = sphi 0, %s800
      %s801 = sphi 0, %s798
      %s802 = sphi 0, %s801
      %s818 = sphi 0, %s802
      %s826 = sphi 0, %s828
      %s829 = sphi 0, %s826
      %s830 = sphi 0, %s829
      %s846 = sphi 0, %s830
      %s854 = sphi 0, %s856
      %s857 = sphi 0, %s854
      %s858 = sphi 0, %s857
      %s874 = sphi 0, %s858
      %s882 = sphi 0, %s884
      %s885 = sphi 0, %s882
      %s886 = sphi 0, %s885
      %s902 = sphi 0, %s886
      %s910 = sphi 0, %s912
      %s913 = sphi 0, %s910
      %s914 = sphi 0, %s913
      %s930 = sphi 0, %s914
      %s938 = sphi 0, %s940
      %s941 = sphi 0, %s938
      %s942 = sphi 0, %s941
      %s958 = sphi 0, %s942
      %s964 = sphi 0, %s966
      %s967 = sphi 0, %s964
      %s968 = sphi 0, %s967
      %s984 = sphi 0, %s968
      %s990 = sphi 0, %s992
      %s993 = sphi 0, %s990
      %s994 = sphi 0, %s993
      %s1010 = sphi 0, %s994
      %s1018 = sphi 0, %s1020
      %s1021 = sphi 0, %s1018
      %s1022 = sphi 0, %s1021
      %s1038 = sphi 0, %s1022
      %s1048 = sphi 0, %s1050
      %s1051 = sphi 0, %s1048
      %s1052 = sphi 0, %s1051
      %s1068 = sphi 0, %s1052
    $region4: #{transformer_forward.3} parent=1 // loop_header_branch
      %110 = sbr.rel (%p108) target = $region8
    $region5: #{transformer_forward.3} parent=1 // loop_body
      %s112 = ssub.s32 %s107, 1
      %s113 = ssub.s32 %s107, 2
      %s123 = sadd.s32 1, %s116
      %p124 = scmp.ge.s32.totalorder %s123, 2
      %s125 = scalar_select %p124, 0, %s123
      %s126 = sadd.s32 1, %s115
      %s127 = scalar_select %p124, %s126, %s115
      %p128 = scmp.ge.s32.totalorder %s127, 2
      %s129 = scalar_select %p128, 0, %s127
      %s130 = sadd.s32 1, %s114
      %s131 = scalar_select %p128, %s130, %s114
      %p132 = scmp.ge.s32.totalorder %s131, 2
      %s133 = scalar_select %p132, 0, %s131
      %s134 = ssub.s32 %s115, %s129
      %p135 = scmp.eq.s32.totalorder %s134, 0
      %s137 = sadd.s32 %s136, 1
      %s138 = scalar_select %p135, %s136, %s137
      %p141 = pneg %p135
      %p142 = scmp.eq.s32.totalorder %s107, 7
      %p143 = por %p141, %p142
      %p144 = scmp.ne.s32.totalorder %s136, %s139
      %p145 = scmp.eq.s32.totalorder %s107, 0
      %p146 = por %p144, %p145
      %p147 = scmp.ne.s32.totalorder %s136, %s139
      %p148 = scmp.eq.s32.totalorder %s112, 7
      %p149 = por %p147, %p148
      %p150 = scmp.ne.s32.totalorder %s139, %s140
      %p151 = scmp.eq.s32.totalorder %s112, 0
      %p152 = por %p150, %p151
      %p153 = scmp.ne.s32.totalorder %s139, %s140
      %p154 = scmp.eq.s32.totalorder %s113, 7
      %p155 = por %p153, %p154
      %p157 = scmp.ne.s32.totalorder %s140, %s156
      %p158 = scmp.eq.s32.totalorder %s113, 0
      %p159 = por %p157, %p158
      %s160 = ssub.s32 %s115, %s129
      %p161 = scmp.eq.s32.totalorder %s160, 0
      %s163 = sadd.s32 %s162, 1
      %s164 = scalar_select %p161, %s162, %s163
      %p167 = pneg %p161
      %p168 = scmp.eq.s32.totalorder %s107, 7
      %p169 = por %p167, %p168
      %p170 = scmp.ne.s32.totalorder %s162, %s165
      %p171 = scmp.eq.s32.totalorder %s107, 0
      %p172 = por %p170, %p171
      %p173 = scmp.ne.s32.totalorder %s162, %s165
      %p174 = scmp.eq.s32.totalorder %s112, 7
      %p175 = por %p173, %p174
      %p176 = scmp.ne.s32.totalorder %s165, %s166
      %p177 = scmp.eq.s32.totalorder %s112, 0
      %p178 = por %p176, %p177
      %p179 = scmp.ne.s32.totalorder %s165, %s166
      %p180 = scmp.eq.s32.totalorder %s113, 7
      %p181 = por %p179, %p180
      %p183 = scmp.ne.s32.totalorder %s166, %s182
      %p184 = scmp.eq.s32.totalorder %s113, 0
      %p185 = por %p183, %p184
      %s186 = ssub.s32 %s115, %s129
      %p187 = scmp.eq.s32.totalorder %s186, 0
      %s189 = sadd.s32 %s188, 1
      %s190 = scalar_select %p187, %s188, %s189
      %p193 = pneg %p187
      %p194 = scmp.eq.s32.totalorder %s107, 7
      %p195 = por %p193, %p194
      %p196 = scmp.ne.s32.totalorder %s188, %s191
      %p197 = scmp.eq.s32.totalorder %s107, 0
      %p198 = por %p196, %p197
      %p199 = scmp.ne.s32.totalorder %s188, %s191
      %p200 = scmp.eq.s32.totalorder %s112, 7
      %p201 = por %p199, %p200
      %p202 = scmp.ne.s32.totalorder %s191, %s192
      %p203 = scmp.eq.s32.totalorder %s112, 0
      %p204 = por %p202, %p203
      %p205 = scmp.ne.s32.totalorder %s191, %s192
      %p206 = scmp.eq.s32.totalorder %s113, 7
      %p207 = por %p205, %p206
      %p209 = scmp.ne.s32.totalorder %s192, %s208
      %p210 = scmp.eq.s32.totalorder %s113, 0
      %p211 = por %p209, %p210
      %s212 = ssub.s32 %s115, %s129
      %p213 = scmp.eq.s32.totalorder %s212, 0
      %s215 = sadd.s32 %s214, 1
      %s216 = scalar_select %p213, %s214, %s215
      %p219 = pneg %p213
      %p220 = scmp.eq.s32.totalorder %s107, 7
      %p221 = por %p219, %p220
      %p222 = scmp.ne.s32.totalorder %s214, %s217
      %p223 = scmp.eq.s32.totalorder %s107, 0
      %p224 = por %p222, %p223
      %p225 = scmp.ne.s32.totalorder %s214, %s217
      %p226 = scmp.eq.s32.totalorder %s112, 7
      %p227 = por %p225, %p226
      %p228 = scmp.ne.s32.totalorder %s217, %s218
      %p229 = scmp.eq.s32.totalorder %s112, 0
      %p230 = por %p228, %p229
      %p231 = scmp.ne.s32.totalorder %s217, %s218
      %p232 = scmp.eq.s32.totalorder %s113, 7
      %p233 = por %p231, %p232
      %p235 = scmp.ne.s32.totalorder %s218, %s234
      %p236 = scmp.eq.s32.totalorder %s113, 0
      %p237 = por %p235, %p236
      %s238 = ssub.s32 %s115, %s129
      %p239 = scmp.eq.s32.totalorder %s238, 0
      %s241 = sadd.s32 %s240, 1
      %s242 = scalar_select %p239, %s240, %s241
      %p245 = pneg %p239
      %p246 = scmp.eq.s32.totalorder %s107, 7
      %p247 = por %p245, %p246
      %p248 = scmp.ne.s32.totalorder %s240, %s243
      %p249 = scmp.eq.s32.totalorder %s107, 0
      %p250 = por %p248, %p249
      %p251 = scmp.ne.s32.totalorder %s240, %s243
      %p252 = scmp.eq.s32.totalorder %s112, 7
      %p253 = por %p251, %p252
      %p254 = scmp.ne.s32.totalorder %s243, %s244
      %p255 = scmp.eq.s32.totalorder %s112, 0
      %p256 = por %p254, %p255
      %p257 = scmp.ne.s32.totalorder %s243, %s244
      %p258 = scmp.eq.s32.totalorder %s113, 7
      %p259 = por %p257, %p258
      %p261 = scmp.ne.s32.totalorder %s244, %s260
      %p262 = scmp.eq.s32.totalorder %s113, 0
      %p263 = por %p261, %p262
      %s264 = ssub.s32 %s115, %s129
      %p265 = scmp.eq.s32.totalorder %s264, 0
      %s267 = sadd.s32 %s266, 1
      %s268 = scalar_select %p265, %s266, %s267
      %p271 = pneg %p265
      %p272 = scmp.eq.s32.totalorder %s107, 7
      %p273 = por %p271, %p272
      %p274 = scmp.ne.s32.totalorder %s266, %s269
      %p275 = scmp.eq.s32.totalorder %s107, 0
      %p276 = por %p274, %p275
      %p277 = scmp.ne.s32.totalorder %s266, %s269
      %p278 = scmp.eq.s32.totalorder %s112, 7
      %p279 = por %p277, %p278
      %p280 = scmp.ne.s32.totalorder %s269, %s270
      %p281 = scmp.eq.s32.totalorder %s112, 0
      %p282 = por %p280, %p281
      %p283 = scmp.ne.s32.totalorder %s269, %s270
      %p284 = scmp.eq.s32.totalorder %s113, 7
      %p285 = por %p283, %p284
      %p287 = scmp.ne.s32.totalorder %s270, %s286
      %p288 = scmp.eq.s32.totalorder %s113, 0
      %p289 = por %p287, %p288
      %s290 = ssub.s32 %s114, %s133
      %s291 = ssub.s32 %s116, %s125
      %s292 = sor.u32 %s290, %s291
      %p293 = scmp.eq.s32.totalorder %s292, 0
      %s295 = sadd.s32 %s294, 1
      %s296 = scalar_select %p293, %s294, %s295
      %p299 = pneg %p293
      %p300 = scmp.eq.s32.totalorder %s107, 7
      %p301 = por %p299, %p300
      %p302 = scmp.ne.s32.totalorder %s294, %s297
      %p303 = scmp.eq.s32.totalorder %s107, 0
      %p304 = por %p302, %p303
      %p305 = scmp.ne.s32.totalorder %s294, %s297
      %p306 = scmp.eq.s32.totalorder %s112, 7
      %p307 = por %p305, %p306
      %p308 = scmp.ne.s32.totalorder %s297, %s298
      %p309 = scmp.eq.s32.totalorder %s112, 0
      %p310 = por %p308, %p309
      %p311 = scmp.ne.s32.totalorder %s297, %s298
      %p312 = scmp.eq.s32.totalorder %s113, 7
      %p313 = por %p311, %p312
      %p315 = scmp.ne.s32.totalorder %s298, %s314
      %p316 = scmp.eq.s32.totalorder %s113, 0
      %p317 = por %p315, %p316
      %s318 = ssub.s32 %s114, %s133
      %s319 = ssub.s32 %s116, %s125
      %s320 = sor.u32 %s318, %s319
      %p321 = scmp.eq.s32.totalorder %s320, 0
      %s323 = sadd.s32 %s322, 1
      %s324 = scalar_select %p321, %s322, %s323
      %p327 = pneg %p321
      %p328 = scmp.eq.s32.totalorder %s107, 7
      %p329 = por %p327, %p328
      %p330 = scmp.ne.s32.totalorder %s322, %s325
      %p331 = scmp.eq.s32.totalorder %s107, 0
      %p332 = por %p330, %p331
      %p333 = scmp.ne.s32.totalorder %s322, %s325
      %p334 = scmp.eq.s32.totalorder %s112, 7
      %p335 = por %p333, %p334
      %p336 = scmp.ne.s32.totalorder %s325, %s326
      %p337 = scmp.eq.s32.totalorder %s112, 0
      %p338 = por %p336, %p337
      %p339 = scmp.ne.s32.totalorder %s325, %s326
      %p340 = scmp.eq.s32.totalorder %s113, 7
      %p341 = por %p339, %p340
      %p343 = scmp.ne.s32.totalorder %s326, %s342
      %p344 = scmp.eq.s32.totalorder %s113, 0
      %p345 = por %p343, %p344
      %s346 = ssub.s32 %s114, %s133
      %s347 = ssub.s32 %s116, %s125
      %s348 = sor.u32 %s346, %s347
      %p349 = scmp.eq.s32.totalorder %s348, 0
      %s351 = sadd.s32 %s350, 1
      %s352 = scalar_select %p349, %s350, %s351
      %p355 = pneg %p349
      %p356 = scmp.eq.s32.totalorder %s107, 7
      %p357 = por %p355, %p356
      %p358 = scmp.ne.s32.totalorder %s350, %s353
      %p359 = scmp.eq.s32.totalorder %s107, 0
      %p360 = por %p358, %p359
      %p361 = scmp.ne.s32.totalorder %s350, %s353
      %p362 = scmp.eq.s32.totalorder %s112, 7
      %p363 = por %p361, %p362
      %p364 = scmp.ne.s32.totalorder %s353, %s354
      %p365 = scmp.eq.s32.totalorder %s112, 0
      %p366 = por %p364, %p365
      %p367 = scmp.ne.s32.totalorder %s353, %s354
      %p368 = scmp.eq.s32.totalorder %s113, 7
      %p369 = por %p367, %p368
      %p371 = scmp.ne.s32.totalorder %s354, %s370
      %p372 = scmp.eq.s32.totalorder %s113, 0
      %p373 = por %p371, %p372
      %s374 = ssub.s32 %s114, %s133
      %s375 = ssub.s32 %s116, %s125
      %s376 = sor.u32 %s374, %s375
      %p377 = scmp.eq.s32.totalorder %s376, 0
      %s379 = sadd.s32 %s378, 1
      %s380 = scalar_select %p377, %s378, %s379
      %p383 = pneg %p377
      %p384 = scmp.eq.s32.totalorder %s107, 7
      %p385 = por %p383, %p384
      %p386 = scmp.ne.s32.totalorder %s378, %s381
      %p387 = scmp.eq.s32.totalorder %s107, 0
      %p388 = por %p386, %p387
      %p389 = scmp.ne.s32.totalorder %s378, %s381
      %p390 = scmp.eq.s32.totalorder %s112, 7
      %p391 = por %p389, %p390
      %p392 = scmp.ne.s32.totalorder %s381, %s382
      %p393 = scmp.eq.s32.totalorder %s112, 0
      %p394 = por %p392, %p393
      %p395 = scmp.ne.s32.totalorder %s381, %s382
      %p396 = scmp.eq.s32.totalorder %s113, 7
      %p397 = por %p395, %p396
      %p399 = scmp.ne.s32.totalorder %s382, %s398
      %p400 = scmp.eq.s32.totalorder %s113, 0
      %p401 = por %p399, %p400
      %s402 = ssub.s32 %s114, %s133
      %s403 = ssub.s32 %s116, %s125
      %s404 = sor.u32 %s402, %s403
      %p405 = scmp.eq.s32.totalorder %s404, 0
      %s407 = sadd.s32 %s406, 1
      %s408 = scalar_select %p405, %s406, %s407
      %p411 = pneg %p405
      %p412 = scmp.eq.s32.totalorder %s107, 7
      %p413 = por %p411, %p412
      %p414 = scmp.ne.s32.totalorder %s406, %s409
      %p415 = scmp.eq.s32.totalorder %s107, 0
      %p416 = por %p414, %p415
      %p417 = scmp.ne.s32.totalorder %s406, %s409
      %p418 = scmp.eq.s32.totalorder %s112, 7
      %p419 = por %p417, %p418
      %p420 = scmp.ne.s32.totalorder %s409, %s410
      %p421 = scmp.eq.s32.totalorder %s112, 0
      %p422 = por %p420, %p421
      %p423 = scmp.ne.s32.totalorder %s409, %s410
      %p424 = scmp.eq.s32.totalorder %s113, 7
      %p425 = por %p423, %p424
      %p427 = scmp.ne.s32.totalorder %s410, %s426
      %p428 = scmp.eq.s32.totalorder %s113, 0
      %p429 = por %p427, %p428
      %s430 = ssub.s32 %s114, %s133
      %s431 = ssub.s32 %s116, %s125
      %s432 = sor.u32 %s430, %s431
      %p433 = scmp.eq.s32.totalorder %s432, 0
      %s435 = sadd.s32 %s434, 1
      %s436 = scalar_select %p433, %s434, %s435
      %p439 = pneg %p433
      %p440 = scmp.eq.s32.totalorder %s107, 7
      %p441 = por %p439, %p440
      %p442 = scmp.ne.s32.totalorder %s434, %s437
      %p443 = scmp.eq.s32.totalorder %s107, 0
      %p444 = por %p442, %p443
      %p445 = scmp.ne.s32.totalorder %s434, %s437
      %p446 = scmp.eq.s32.totalorder %s112, 7
      %p447 = por %p445, %p446
      %p448 = scmp.ne.s32.totalorder %s437, %s438
      %p449 = scmp.eq.s32.totalorder %s112, 0
      %p450 = por %p448, %p449
      %p451 = scmp.ne.s32.totalorder %s437, %s438
      %p452 = scmp.eq.s32.totalorder %s113, 7
      %p453 = por %p451, %p452
      %p455 = scmp.ne.s32.totalorder %s438, %s454
      %p456 = scmp.eq.s32.totalorder %s113, 0
      %p457 = por %p455, %p456
      %s458 = ssub.s32 %s114, %s133
      %s459 = ssub.s32 %s116, %s125
      %s460 = sor.u32 %s458, %s459
      %p461 = scmp.eq.s32.totalorder %s460, 0
      %s463 = sadd.s32 %s462, 1
      %s464 = scalar_select %p461, %s462, %s463
      %p467 = pneg %p461
      %p468 = scmp.eq.s32.totalorder %s107, 7
      %p469 = por %p467, %p468
      %p470 = scmp.ne.s32.totalorder %s462, %s465
      %p471 = scmp.eq.s32.totalorder %s107, 0
      %p472 = por %p470, %p471
      %p473 = scmp.ne.s32.totalorder %s462, %s465
      %p474 = scmp.eq.s32.totalorder %s112, 7
      %p475 = por %p473, %p474
      %p476 = scmp.ne.s32.totalorder %s465, %s466
      %p477 = scmp.eq.s32.totalorder %s112, 0
      %p478 = por %p476, %p477
      %p479 = scmp.ne.s32.totalorder %s465, %s466
      %p480 = scmp.eq.s32.totalorder %s113, 7
      %p481 = por %p479, %p480
      %p483 = scmp.ne.s32.totalorder %s466, %s482
      %p484 = scmp.eq.s32.totalorder %s113, 0
      %p485 = por %p483, %p484
      %s486 = ssub.s32 %s114, %s133
      %s487 = ssub.s32 %s116, %s125
      %s488 = sor.u32 %s486, %s487
      %p489 = scmp.eq.s32.totalorder %s488, 0
      %s491 = sadd.s32 %s490, 1
      %s492 = scalar_select %p489, %s490, %s491
      %p495 = pneg %p489
      %p496 = scmp.eq.s32.totalorder %s107, 7
      %p497 = por %p495, %p496
      %p498 = scmp.ne.s32.totalorder %s490, %s493
      %p499 = scmp.eq.s32.totalorder %s107, 0
      %p500 = por %p498, %p499
      %p501 = scmp.ne.s32.totalorder %s490, %s493
      %p502 = scmp.eq.s32.totalorder %s112, 7
      %p503 = por %p501, %p502
      %p504 = scmp.ne.s32.totalorder %s493, %s494
      %p505 = scmp.eq.s32.totalorder %s112, 0
      %p506 = por %p504, %p505
      %p507 = scmp.ne.s32.totalorder %s493, %s494
      %p508 = scmp.eq.s32.totalorder %s113, 7
      %p509 = por %p507, %p508
      %p511 = scmp.ne.s32.totalorder %s494, %s510
      %p512 = scmp.eq.s32.totalorder %s113, 0
      %p513 = por %p511, %p512
      %s514 = ssub.s32 %s114, %s133
      %s515 = ssub.s32 %s116, %s125
      %s516 = sor.u32 %s514, %s515
      %p517 = scmp.eq.s32.totalorder %s516, 0
      %s519 = sadd.s32 %s518, 1
      %s520 = scalar_select %p517, %s518, %s519
      %p523 = pneg %p517
      %p524 = scmp.eq.s32.totalorder %s107, 7
      %p525 = por %p523, %p524
      %p526 = scmp.ne.s32.totalorder %s518, %s521
      %p527 = scmp.eq.s32.totalorder %s107, 0
      %p528 = por %p526, %p527
      %p529 = scmp.ne.s32.totalorder %s518, %s521
      %p530 = scmp.eq.s32.totalorder %s112, 7
      %p531 = por %p529, %p530
      %p532 = scmp.ne.s32.totalorder %s521, %s522
      %p533 = scmp.eq.s32.totalorder %s112, 0
      %p534 = por %p532, %p533
      %p535 = scmp.ne.s32.totalorder %s521, %s522
      %p536 = scmp.eq.s32.totalorder %s113, 7
      %p537 = por %p535, %p536
      %p539 = scmp.ne.s32.totalorder %s522, %s538
      %p540 = scmp.eq.s32.totalorder %s113, 0
      %p541 = por %p539, %p540
      %s542 = ssub.s32 %s114, %s133
      %s543 = ssub.s32 %s116, %s125
      %s544 = sor.u32 %s542, %s543
      %p545 = scmp.eq.s32.totalorder %s544, 0
      %s547 = sadd.s32 %s546, 1
      %s548 = scalar_select %p545, %s546, %s547
      %p551 = pneg %p545
      %p552 = scmp.eq.s32.totalorder %s107, 7
      %p553 = por %p551, %p552
      %p554 = scmp.ne.s32.totalorder %s546, %s549
      %p555 = scmp.eq.s32.totalorder %s107, 0
      %p556 = por %p554, %p555
      %p557 = scmp.ne.s32.totalorder %s546, %s549
      %p558 = scmp.eq.s32.totalorder %s112, 7
      %p559 = por %p557, %p558
      %p560 = scmp.ne.s32.totalorder %s549, %s550
      %p561 = scmp.eq.s32.totalorder %s112, 0
      %p562 = por %p560, %p561
      %p563 = scmp.ne.s32.totalorder %s549, %s550
      %p564 = scmp.eq.s32.totalorder %s113, 7
      %p565 = por %p563, %p564
      %p567 = scmp.ne.s32.totalorder %s550, %s566
      %p568 = scmp.eq.s32.totalorder %s113, 0
      %p569 = por %p567, %p568
      %s570 = ssub.s32 %s114, %s133
      %s571 = ssub.s32 %s116, %s125
      %s572 = sor.u32 %s570, %s571
      %p573 = scmp.eq.s32.totalorder %s572, 0
      %s575 = sadd.s32 %s574, 1
      %s576 = scalar_select %p573, %s574, %s575
      %p579 = pneg %p573
      %p580 = scmp.eq.s32.totalorder %s107, 7
      %p581 = por %p579, %p580
      %p582 = scmp.ne.s32.totalorder %s574, %s577
      %p583 = scmp.eq.s32.totalorder %s107, 0
      %p584 = por %p582, %p583
      %p585 = scmp.ne.s32.totalorder %s574, %s577
      %p586 = scmp.eq.s32.totalorder %s112, 7
      %p587 = por %p585, %p586
      %p588 = scmp.ne.s32.totalorder %s577, %s578
      %p589 = scmp.eq.s32.totalorder %s112, 0
      %p590 = por %p588, %p589
      %p591 = scmp.ne.s32.totalorder %s577, %s578
      %p592 = scmp.eq.s32.totalorder %s113, 7
      %p593 = por %p591, %p592
      %p595 = scmp.ne.s32.totalorder %s578, %s594
      %p596 = scmp.eq.s32.totalorder %s113, 0
      %p597 = por %p595, %p596
      %s598 = ssub.s32 %s114, %s133
      %s599 = ssub.s32 %s116, %s125
      %s600 = sor.u32 %s598, %s599
      %p601 = scmp.eq.s32.totalorder %s600, 0
      %s603 = sadd.s32 %s602, 1
      %s604 = scalar_select %p601, %s602, %s603
      %p607 = pneg %p601
      %p608 = scmp.eq.s32.totalorder %s107, 7
      %p609 = por %p607, %p608
      %p610 = scmp.ne.s32.totalorder %s602, %s605
      %p611 = scmp.eq.s32.totalorder %s107, 0
      %p612 = por %p610, %p611
      %p613 = scmp.ne.s32.totalorder %s602, %s605
      %p614 = scmp.eq.s32.totalorder %s112, 7
      %p615 = por %p613, %p614
      %p616 = scmp.ne.s32.totalorder %s605, %s606
      %p617 = scmp.eq.s32.totalorder %s112, 0
      %p618 = por %p616, %p617
      %p619 = scmp.ne.s32.totalorder %s605, %s606
      %p620 = scmp.eq.s32.totalorder %s113, 7
      %p621 = por %p619, %p620
      %p623 = scmp.ne.s32.totalorder %s606, %s622
      %p624 = scmp.eq.s32.totalorder %s113, 0
      %p625 = por %p623, %p624
      %s626 = ssub.s32 %s114, %s133
      %s627 = ssub.s32 %s116, %s125
      %s628 = sor.u32 %s626, %s627
      %p629 = scmp.eq.s32.totalorder %s628, 0
      %s631 = sadd.s32 %s630, 1
      %s632 = scalar_select %p629, %s630, %s631
      %p635 = pneg %p629
      %p636 = scmp.eq.s32.totalorder %s107, 7
      %p637 = por %p635, %p636
      %p638 = scmp.ne.s32.totalorder %s630, %s633
      %p639 = scmp.eq.s32.totalorder %s107, 0
      %p640 = por %p638, %p639
      %p641 = scmp.ne.s32.totalorder %s630, %s633
      %p642 = scmp.eq.s32.totalorder %s112, 7
      %p643 = por %p641, %p642
      %p644 = scmp.ne.s32.totalorder %s633, %s634
      %p645 = scmp.eq.s32.totalorder %s112, 0
      %p646 = por %p644, %p645
      %p647 = scmp.ne.s32.totalorder %s633, %s634
      %p648 = scmp.eq.s32.totalorder %s113, 7
      %p649 = por %p647, %p648
      %p651 = scmp.ne.s32.totalorder %s634, %s650
      %p652 = scmp.eq.s32.totalorder %s113, 0
      %p653 = por %p651, %p652
      %s654 = ssub.s32 %s114, %s133
      %s655 = ssub.s32 %s116, %s125
      %s656 = sor.u32 %s654, %s655
      %p657 = scmp.eq.s32.totalorder %s656, 0
      %s659 = sadd.s32 %s658, 1
      %s660 = scalar_select %p657, %s658, %s659
      %p663 = pneg %p657
      %p664 = scmp.eq.s32.totalorder %s107, 7
      %p665 = por %p663, %p664
      %p666 = scmp.ne.s32.totalorder %s658, %s661
      %p667 = scmp.eq.s32.totalorder %s107, 0
      %p668 = por %p666, %p667
      %p669 = scmp.ne.s32.totalorder %s658, %s661
      %p670 = scmp.eq.s32.totalorder %s112, 7
      %p671 = por %p669, %p670
      %p672 = scmp.ne.s32.totalorder %s661, %s662
      %p673 = scmp.eq.s32.totalorder %s112, 0
      %p674 = por %p672, %p673
      %p675 = scmp.ne.s32.totalorder %s661, %s662
      %p676 = scmp.eq.s32.totalorder %s113, 7
      %p677 = por %p675, %p676
      %p679 = scmp.ne.s32.totalorder %s662, %s678
      %p680 = scmp.eq.s32.totalorder %s113, 0
      %p681 = por %p679, %p680
      %s682 = ssub.s32 %s114, %s133
      %s683 = ssub.s32 %s116, %s125
      %s684 = sor.u32 %s682, %s683
      %p685 = scmp.eq.s32.totalorder %s684, 0
      %s687 = sadd.s32 %s686, 1
      %s688 = scalar_select %p685, %s686, %s687
      %p691 = pneg %p685
      %p692 = scmp.eq.s32.totalorder %s107, 7
      %p693 = por %p691, %p692
      %p694 = scmp.ne.s32.totalorder %s686, %s689
      %p695 = scmp.eq.s32.totalorder %s107, 0
      %p696 = por %p694, %p695
      %p697 = scmp.ne.s32.totalorder %s686, %s689
      %p698 = scmp.eq.s32.totalorder %s112, 7
      %p699 = por %p697, %p698
      %p700 = scmp.ne.s32.totalorder %s689, %s690
      %p701 = scmp.eq.s32.totalorder %s112, 0
      %p702 = por %p700, %p701
      %p703 = scmp.ne.s32.totalorder %s689, %s690
      %p704 = scmp.eq.s32.totalorder %s113, 7
      %p705 = por %p703, %p704
      %p707 = scmp.ne.s32.totalorder %s690, %s706
      %p708 = scmp.eq.s32.totalorder %s113, 0
      %p709 = por %p707, %p708
      %s710 = ssub.s32 %s114, %s133
      %s711 = ssub.s32 %s116, %s125
      %s712 = sor.u32 %s710, %s711
      %p713 = scmp.eq.s32.totalorder %s712, 0
      %s715 = sadd.s32 %s714, 1
      %s716 = scalar_select %p713, %s714, %s715
      %p719 = pneg %p713
      %p720 = scmp.eq.s32.totalorder %s107, 7
      %p721 = por %p719, %p720
      %p722 = scmp.ne.s32.totalorder %s714, %s717
      %p723 = scmp.eq.s32.totalorder %s107, 0
      %p724 = por %p722, %p723
      %p725 = scmp.ne.s32.totalorder %s714, %s717
      %p726 = scmp.eq.s32.totalorder %s112, 7
      %p727 = por %p725, %p726
      %p728 = scmp.ne.s32.totalorder %s717, %s718
      %p729 = scmp.eq.s32.totalorder %s112, 0
      %p730 = por %p728, %p729
      %p731 = scmp.ne.s32.totalorder %s717, %s718
      %p732 = scmp.eq.s32.totalorder %s113, 7
      %p733 = por %p731, %p732
      %p735 = scmp.ne.s32.totalorder %s718, %s734
      %p736 = scmp.eq.s32.totalorder %s113, 0
      %p737 = por %p735, %p736
      %s738 = ssub.s32 %s114, %s133
      %s739 = ssub.s32 %s116, %s125
      %s740 = sor.u32 %s738, %s739
      %p741 = scmp.eq.s32.totalorder %s740, 0
      %s743 = sadd.s32 %s742, 1
      %s744 = scalar_select %p741, %s742, %s743
      %p747 = pneg %p741
      %p748 = scmp.eq.s32.totalorder %s107, 7
      %p749 = por %p747, %p748
      %p750 = scmp.ne.s32.totalorder %s742, %s745
      %p751 = scmp.eq.s32.totalorder %s107, 0
      %p752 = por %p750, %p751
      %p753 = scmp.ne.s32.totalorder %s742, %s745
      %p754 = scmp.eq.s32.totalorder %s112, 7
      %p755 = por %p753, %p754
      %p756 = scmp.ne.s32.totalorder %s745, %s746
      %p757 = scmp.eq.s32.totalorder %s112, 0
      %p758 = por %p756, %p757
      %p759 = scmp.ne.s32.totalorder %s745, %s746
      %p760 = scmp.eq.s32.totalorder %s113, 7
      %p761 = por %p759, %p760
      %p763 = scmp.ne.s32.totalorder %s746, %s762
      %p764 = scmp.eq.s32.totalorder %s113, 0
      %p765 = por %p763, %p764
      %s766 = ssub.s32 %s114, %s133
      %s767 = ssub.s32 %s116, %s125
      %s768 = sor.u32 %s766, %s767
      %p769 = scmp.eq.s32.totalorder %s768, 0
      %s771 = sadd.s32 %s770, 1
      %s772 = scalar_select %p769, %s770, %s771
      %p775 = pneg %p769
      %p776 = scmp.eq.s32.totalorder %s107, 7
      %p777 = por %p775, %p776
      %p778 = scmp.ne.s32.totalorder %s770, %s773
      %p779 = scmp.eq.s32.totalorder %s107, 0
      %p780 = por %p778, %p779
      %p781 = scmp.ne.s32.totalorder %s770, %s773
      %p782 = scmp.eq.s32.totalorder %s112, 7
      %p783 = por %p781, %p782
      %p784 = scmp.ne.s32.totalorder %s773, %s774
      %p785 = scmp.eq.s32.totalorder %s112, 0
      %p786 = por %p784, %p785
      %p787 = scmp.ne.s32.totalorder %s773, %s774
      %p788 = scmp.eq.s32.totalorder %s113, 7
      %p789 = por %p787, %p788
      %p791 = scmp.ne.s32.totalorder %s774, %s790
      %p792 = scmp.eq.s32.totalorder %s113, 0
      %p793 = por %p791, %p792
      %s794 = ssub.s32 %s114, %s133
      %s795 = ssub.s32 %s116, %s125
      %s796 = sor.u32 %s794, %s795
      %p797 = scmp.eq.s32.totalorder %s796, 0
      %s799 = sadd.s32 %s798, 1
      %s800 = scalar_select %p797, %s798, %s799
      %p803 = pneg %p797
      %p804 = scmp.eq.s32.totalorder %s107, 7
      %p805 = por %p803, %p804
      %p806 = scmp.ne.s32.totalorder %s798, %s801
      %p807 = scmp.eq.s32.totalorder %s107, 0
      %p808 = por %p806, %p807
      %p809 = scmp.ne.s32.totalorder %s798, %s801
      %p810 = scmp.eq.s32.totalorder %s112, 7
      %p811 = por %p809, %p810
      %p812 = scmp.ne.s32.totalorder %s801, %s802
      %p813 = scmp.eq.s32.totalorder %s112, 0
      %p814 = por %p812, %p813
      %p815 = scmp.ne.s32.totalorder %s801, %s802
      %p816 = scmp.eq.s32.totalorder %s113, 7
      %p817 = por %p815, %p816
      %p819 = scmp.ne.s32.totalorder %s802, %s818
      %p820 = scmp.eq.s32.totalorder %s113, 0
      %p821 = por %p819, %p820
      %s822 = ssub.s32 %s114, %s133
      %s823 = ssub.s32 %s116, %s125
      %s824 = sor.u32 %s822, %s823
      %p825 = scmp.eq.s32.totalorder %s824, 0
      %s827 = sadd.s32 %s826, 1
      %s828 = scalar_select %p825, %s826, %s827
      %p831 = pneg %p825
      %p832 = scmp.eq.s32.totalorder %s107, 7
      %p833 = por %p831, %p832
      %p834 = scmp.ne.s32.totalorder %s826, %s829
      %p835 = scmp.eq.s32.totalorder %s107, 0
      %p836 = por %p834, %p835
      %p837 = scmp.ne.s32.totalorder %s826, %s829
      %p838 = scmp.eq.s32.totalorder %s112, 7
      %p839 = por %p837, %p838
      %p840 = scmp.ne.s32.totalorder %s829, %s830
      %p841 = scmp.eq.s32.totalorder %s112, 0
      %p842 = por %p840, %p841
      %p843 = scmp.ne.s32.totalorder %s829, %s830
      %p844 = scmp.eq.s32.totalorder %s113, 7
      %p845 = por %p843, %p844
      %p847 = scmp.ne.s32.totalorder %s830, %s846
      %p848 = scmp.eq.s32.totalorder %s113, 0
      %p849 = por %p847, %p848
      %s850 = ssub.s32 %s114, %s133
      %s851 = ssub.s32 %s116, %s125
      %s852 = sor.u32 %s850, %s851
      %p853 = scmp.eq.s32.totalorder %s852, 0
      %s855 = sadd.s32 %s854, 1
      %s856 = scalar_select %p853, %s854, %s855
      %p859 = pneg %p853
      %p860 = scmp.eq.s32.totalorder %s107, 7
      %p861 = por %p859, %p860
      %p862 = scmp.ne.s32.totalorder %s854, %s857
      %p863 = scmp.eq.s32.totalorder %s107, 0
      %p864 = por %p862, %p863
      %p865 = scmp.ne.s32.totalorder %s854, %s857
      %p866 = scmp.eq.s32.totalorder %s112, 7
      %p867 = por %p865, %p866
      %p868 = scmp.ne.s32.totalorder %s857, %s858
      %p869 = scmp.eq.s32.totalorder %s112, 0
      %p870 = por %p868, %p869
      %p871 = scmp.ne.s32.totalorder %s857, %s858
      %p872 = scmp.eq.s32.totalorder %s113, 7
      %p873 = por %p871, %p872
      %p875 = scmp.ne.s32.totalorder %s858, %s874
      %p876 = scmp.eq.s32.totalorder %s113, 0
      %p877 = por %p875, %p876
      %s878 = ssub.s32 %s114, %s133
      %s879 = ssub.s32 %s116, %s125
      %s880 = sor.u32 %s878, %s879
      %p881 = scmp.eq.s32.totalorder %s880, 0
      %s883 = sadd.s32 %s882, 1
      %s884 = scalar_select %p881, %s882, %s883
      %p887 = pneg %p881
      %p888 = scmp.eq.s32.totalorder %s107, 7
      %p889 = por %p887, %p888
      %p890 = scmp.ne.s32.totalorder %s882, %s885
      %p891 = scmp.eq.s32.totalorder %s107, 0
      %p892 = por %p890, %p891
      %p893 = scmp.ne.s32.totalorder %s882, %s885
      %p894 = scmp.eq.s32.totalorder %s112, 7
      %p895 = por %p893, %p894
      %p896 = scmp.ne.s32.totalorder %s885, %s886
      %p897 = scmp.eq.s32.totalorder %s112, 0
      %p898 = por %p896, %p897
      %p899 = scmp.ne.s32.totalorder %s885, %s886
      %p900 = scmp.eq.s32.totalorder %s113, 7
      %p901 = por %p899, %p900
      %p903 = scmp.ne.s32.totalorder %s886, %s902
      %p904 = scmp.eq.s32.totalorder %s113, 0
      %p905 = por %p903, %p904
      %s906 = ssub.s32 %s114, %s133
      %s907 = ssub.s32 %s116, %s125
      %s908 = sor.u32 %s906, %s907
      %p909 = scmp.eq.s32.totalorder %s908, 0
      %s911 = sadd.s32 %s910, 1
      %s912 = scalar_select %p909, %s910, %s911
      %p915 = pneg %p909
      %p916 = scmp.eq.s32.totalorder %s107, 7
      %p917 = por %p915, %p916
      %p918 = scmp.ne.s32.totalorder %s910, %s913
      %p919 = scmp.eq.s32.totalorder %s107, 0
      %p920 = por %p918, %p919
      %p921 = scmp.ne.s32.totalorder %s910, %s913
      %p922 = scmp.eq.s32.totalorder %s112, 7
      %p923 = por %p921, %p922
      %p924 = scmp.ne.s32.totalorder %s913, %s914
      %p925 = scmp.eq.s32.totalorder %s112, 0
      %p926 = por %p924, %p925
      %p927 = scmp.ne.s32.totalorder %s913, %s914
      %p928 = scmp.eq.s32.totalorder %s113, 7
      %p929 = por %p927, %p928
      %p931 = scmp.ne.s32.totalorder %s914, %s930
      %p932 = scmp.eq.s32.totalorder %s113, 0
      %p933 = por %p931, %p932
      %s934 = ssub.s32 %s114, %s133
      %s935 = ssub.s32 %s116, %s125
      %s936 = sor.u32 %s934, %s935
      %p937 = scmp.eq.s32.totalorder %s936, 0
      %s939 = sadd.s32 %s938, 1
      %s940 = scalar_select %p937, %s938, %s939
      %p943 = pneg %p937
      %p944 = scmp.eq.s32.totalorder %s107, 7
      %p945 = por %p943, %p944
      %p946 = scmp.ne.s32.totalorder %s938, %s941
      %p947 = scmp.eq.s32.totalorder %s107, 0
      %p948 = por %p946, %p947
      %p949 = scmp.ne.s32.totalorder %s938, %s941
      %p950 = scmp.eq.s32.totalorder %s112, 7
      %p951 = por %p949, %p950
      %p952 = scmp.ne.s32.totalorder %s941, %s942
      %p953 = scmp.eq.s32.totalorder %s112, 0
      %p954 = por %p952, %p953
      %p955 = scmp.ne.s32.totalorder %s941, %s942
      %p956 = scmp.eq.s32.totalorder %s113, 7
      %p957 = por %p955, %p956
      %p959 = scmp.ne.s32.totalorder %s942, %s958
      %p960 = scmp.eq.s32.totalorder %s113, 0
      %p961 = por %p959, %p960
      %s962 = ssub.s32 %s114, %s133
      %p963 = scmp.eq.s32.totalorder %s962, 0
      %s965 = sadd.s32 %s964, 1
      %s966 = scalar_select %p963, %s964, %s965
      %p969 = pneg %p963
      %p970 = scmp.eq.s32.totalorder %s107, 7
      %p971 = por %p969, %p970
      %p972 = scmp.ne.s32.totalorder %s964, %s967
      %p973 = scmp.eq.s32.totalorder %s107, 0
      %p974 = por %p972, %p973
      %p975 = scmp.ne.s32.totalorder %s964, %s967
      %p976 = scmp.eq.s32.totalorder %s112, 7
      %p977 = por %p975, %p976
      %p978 = scmp.ne.s32.totalorder %s967, %s968
      %p979 = scmp.eq.s32.totalorder %s112, 0
      %p980 = por %p978, %p979
      %p981 = scmp.ne.s32.totalorder %s967, %s968
      %p982 = scmp.eq.s32.totalorder %s113, 7
      %p983 = por %p981, %p982
      %p985 = scmp.ne.s32.totalorder %s968, %s984
      %p986 = scmp.eq.s32.totalorder %s113, 0
      %p987 = por %p985, %p986
      %s988 = ssub.s32 %s114, %s133
      %p989 = scmp.eq.s32.totalorder %s988, 0
      %s991 = sadd.s32 %s990, 1
      %s992 = scalar_select %p989, %s990, %s991
      %p995 = pneg %p989
      %p996 = scmp.eq.s32.totalorder %s107, 7
      %p997 = por %p995, %p996
      %p998 = scmp.ne.s32.totalorder %s990, %s993
      %p999 = scmp.eq.s32.totalorder %s107, 0
      %p1000 = por %p998, %p999
      %p1001 = scmp.ne.s32.totalorder %s990, %s993
      %p1002 = scmp.eq.s32.totalorder %s112, 7
      %p1003 = por %p1001, %p1002
      %p1004 = scmp.ne.s32.totalorder %s993, %s994
      %p1005 = scmp.eq.s32.totalorder %s112, 0
      %p1006 = por %p1004, %p1005
      %p1007 = scmp.ne.s32.totalorder %s993, %s994
      %p1008 = scmp.eq.s32.totalorder %s113, 7
      %p1009 = por %p1007, %p1008
      %p1011 = scmp.ne.s32.totalorder %s994, %s1010
      %p1012 = scmp.eq.s32.totalorder %s113, 0
      %p1013 = por %p1011, %p1012
      %s1014 = ssub.s32 %s114, %s133
      %s1015 = ssub.s32 %s115, %s129
      %s1016 = sor.u32 %s1014, %s1015
      %p1017 = scmp.eq.s32.totalorder %s1016, 0
      %s1019 = sadd.s32 %s1018, 1
      %s1020 = scalar_select %p1017, %s1018, %s1019
      %p1023 = pneg %p1017
      %p1024 = scmp.eq.s32.totalorder %s107, 7
      %p1025 = por %p1023, %p1024
      %p1026 = scmp.ne.s32.totalorder %s1018, %s1021
      %p1027 = scmp.eq.s32.totalorder %s107, 0
      %p1028 = por %p1026, %p1027
      %p1029 = scmp.ne.s32.totalorder %s1018, %s1021
      %p1030 = scmp.eq.s32.totalorder %s112, 7
      %p1031 = por %p1029, %p1030
      %p1032 = scmp.ne.s32.totalorder %s1021, %s1022
      %p1033 = scmp.eq.s32.totalorder %s112, 0
      %p1034 = por %p1032, %p1033
      %p1035 = scmp.ne.s32.totalorder %s1021, %s1022
      %p1036 = scmp.eq.s32.totalorder %s113, 7
      %p1037 = por %p1035, %p1036
      %p1039 = scmp.ne.s32.totalorder %s1022, %s1038
      %p1040 = scmp.eq.s32.totalorder %s113, 0
      %p1041 = por %p1039, %p1040
      %s1042 = ssub.s32 %s116, %s125
      %s1043 = ssub.s32 %s114, %s133
      %s1044 = sor.u32 %s1042, %s1043
      %s1045 = ssub.s32 %s115, %s129
      %s1046 = sor.u32 %s1044, %s1045
      %p1047 = scmp.eq.s32.totalorder %s1046, 0
      %s1049 = sadd.s32 %s1048, 1
      %s1050 = scalar_select %p1047, %s1048, %s1049
      %p1053 = pneg %p1047
      %p1054 = scmp.eq.s32.totalorder %s107, 7
      %p1055 = por %p1053, %p1054
      %p1056 = scmp.ne.s32.totalorder %s1048, %s1051
      %p1057 = scmp.eq.s32.totalorder %s107, 0
      %p1058 = por %p1056, %p1057
      %p1059 = scmp.ne.s32.totalorder %s1048, %s1051
      %p1060 = scmp.eq.s32.totalorder %s112, 7
      %p1061 = por %p1059, %p1060
      %p1062 = scmp.ne.s32.totalorder %s1051, %s1052
      %p1063 = scmp.eq.s32.totalorder %s112, 0
      %p1064 = por %p1062, %p1063
      %p1065 = scmp.ne.s32.totalorder %s1051, %s1052
      %p1066 = scmp.eq.s32.totalorder %s113, 7
      %p1067 = por %p1065, %p1066
      %p1069 = scmp.ne.s32.totalorder %s1052, %s1068
      %p1070 = scmp.eq.s32.totalorder %s113, 0
      %p1071 = por %p1069, %p1070
      %p1072 = scmp.le.s32.totalorder 1, %s107
      %p1073 = scmp.lt.s32.totalorder %s107, 9
      %p1074 = pnand %p1072, %p1073
      %p1075 = pneg %p1074
      // Predicated region
      $region9: #{transformer_forward.3} parent=5 // pred_check
        _
      $region10: #{transformer_forward.3} parent=5 // pred_check_branch
        %1077 = sbr.rel (%p1074) target = $region12
      $region11: #{transformer_forward.3} parent=5 // pred_region
        %s1078 = ssub.s32 %s107, 1
      $region12: #{transformer_forward.3} parent=5 // pred_fallthru
        _
      %p1079 = scmp.lt.s32.totalorder %s107, 8
      // Predicated region
      $region13: #{transformer_forward.3} parent=5 // pred_check
        %p1080 = pneg %p1079
      $region14: #{transformer_forward.3} parent=5 // pred_check_branch
        %1082 = sbr.rel (%p1080) target = $region16
      $region15: #{transformer_forward.3} parent=5 // pred_region
        // Predicated region
        $region17: #{transformer_forward.3} parent=15 // pred_check
          %p1083 = pneg %p146
        $region18: #{transformer_forward.3} parent=15 // pred_check_branch
          %1085 = sbr.rel (%p1083) target = $region20
        $region19: #{transformer_forward.3} parent=15 // pred_region
          %p1086 = scmp.lt.s32.totalorder %s115, 1
          %s1087 = scalar_select %p1086, %s115, 1
          %s1088 = smul.addr %s1087, 8
          %s1089 = smul.addr %s1088, 8
          %s1090 = scalar_lea.vmem %s1, %s1089
        $region20: #{transformer_forward.3} parent=15 // pred_fallthru
          _
        // Predicated region
        $region21: #{transformer_forward.3} parent=15 // pred_check
          %p1091 = pneg %p172
        $region22: #{transformer_forward.3} parent=15 // pred_check_branch
          %1093 = sbr.rel (%p1091) target = $region24
        $region23: #{transformer_forward.3} parent=15 // pred_region
          %p1094 = scmp.lt.s32.totalorder %s115, 1
          %s1095 = scalar_select %p1094, %s115, 1
          %s1096 = smul.addr %s1095, 2
          %s1097 = smul.addr %s1096, 8
          %s1098 = scalar_lea.vmem %s3, %s1097
        $region24: #{transformer_forward.3} parent=15 // pred_fallthru
          _
        // Predicated region
        $region25: #{transformer_forward.3} parent=15 // pred_check
          %p1099 = pneg %p198
        $region26: #{transformer_forward.3} parent=15 // pred_check_branch
          %1101 = sbr.rel (%p1099) target = $region28
        $region27: #{transformer_forward.3} parent=15 // pred_region
          %p1102 = scmp.lt.s32.totalorder %s115, 1
          %s1103 = scalar_select %p1102, %s115, 1
          %s1104 = smul.addr %s1103, 8
          %s1105 = smul.addr %s1104, 8
          %s1106 = scalar_lea.vmem %s5, %s1105
        $region28: #{transformer_forward.3} parent=15 // pred_fallthru
          _
        // Predicated region
        $region29: #{transformer_forward.3} parent=15 // pred_check
          %p1107 = pneg %p224
        $region30: #{transformer_forward.3} parent=15 // pred_check_branch
          %1109 = sbr.rel (%p1107) target = $region32
        $region31: #{transformer_forward.3} parent=15 // pred_region
          %p1110 = scmp.lt.s32.totalorder %s115, 1
          %s1111 = scalar_select %p1110, %s115, 1
          %s1112 = smul.addr %s1111, 2
          %s1113 = smul.addr %s1112, 8
          %s1114 = scalar_lea.vmem %s7, %s1113
        $region32: #{transformer_forward.3} parent=15 // pred_fallthru
          _
        // Predicated region
        $region33: #{transformer_forward.3} parent=15 // pred_check
          %p1115 = pneg %p250
        $region34: #{transformer_forward.3} parent=15 // pred_check_branch
          %1117 = sbr.rel (%p1115) target = $region36
        $region35: #{transformer_forward.3} parent=15 // pred_region
          %p1118 = scmp.lt.s32.totalorder %s115, 1
          %s1119 = scalar_select %p1118, %s115, 1
          %s1120 = scalar_lea.vmem %s9, %s1119
        $region36: #{transformer_forward.3} parent=15 // pred_fallthru
          _
        // Predicated region
        $region37: #{transformer_forward.3} parent=15 // pred_check
          %p1121 = pneg %p276
        $region38: #{transformer_forward.3} parent=15 // pred_check_branch
          %1123 = sbr.rel (%p1121) target = $region40
        $region39: #{transformer_forward.3} parent=15 // pred_region
          %p1124 = scmp.lt.s32.totalorder %s115, 1
          %s1125 = scalar_select %p1124, %s115, 1
          %s1126 = scalar_lea.vmem %s11, %s1125
        $region40: #{transformer_forward.3} parent=15 // pred_fallthru
          _
        // Predicated region
        $region41: #{transformer_forward.3} parent=15 // pred_check
          %p1127 = pneg %p304
        $region42: #{transformer_forward.3} parent=15 // pred_check_branch
          %1129 = sbr.rel (%p1127) target = $region44
        $region43: #{transformer_forward.3} parent=15 // pred_region
          %p1130 = scmp.lt.s32.totalorder %s114, 1
          %s1131 = scalar_select %p1130, %s114, 1
          %p1132 = scmp.lt.s32.totalorder %s116, 1
          %s1133 = scalar_select %p1132, %s116, 1
          %s1134 = smul.addr %s1133, 4
          %s1135 = smul.addr %s1131, 8
          %s1136 = sadd.s32 %s1134, %s1135
          %s1137 = smul.addr %s1136, 4
          %s1138 = scalar_lea.vmem %s13, %s1137
        $region44: #{transformer_forward.3} parent=15 // pred_fallthru
          _
        // Predicated region
        $region45: #{transformer_forward.3} parent=15 // pred_check
          %p1139 = pneg %p332
        $region46: #{transformer_forward.3} parent=15 // pred_check_branch
          %1141 = sbr.rel (%p1139) target = $region48
        $region47: #{transformer_forward.3} parent=15 // pred_region
          %s1142 = sand.u32 %s322, 1
          %s1143 = scalar_lea.sflag [#allocation3], %s1142
          %s1144 = sand.u32 %s322, 1
          %s1145 = scalar_lea.vmem [#allocation2], %s1144
          %s1147 = ssub.s32 16, 16
          %1148 = vsyncadd %s1143, %s1147
          %s1149 = smul.addr %s114, 2
          %s1150 = sadd.s32 %s116, %s1149
          %s1151 = smul.addr %s1150, 16
          %s1152 = scalar_lea.hbm %s15, %s1151
          %s1154 = sshll.u32 %s1145, 4
          %s1155 = int_to_ptr.vmem [resolvable:$true] %s1154
          %1157 = dma.hbm_to_vmem [thread:$0]  %s1152, 16, %s1155, %s1143
        $region48: #{transformer_forward.3} parent=15 // pred_fallthru
          _
        // Predicated region
        $region49: #{transformer_forward.3} parent=15 // pred_check
          %p1158 = pneg %p360
        $region50: #{transformer_forward.3} parent=15 // pred_check_branch
          %1160 = sbr.rel (%p1158) target = $region52
        $region51: #{transformer_forward.3} parent=15 // pred_region
          %p1161 = scmp.lt.s32.totalorder %s114, 1
          %s1162 = scalar_select %p1161, %s114, 1
          %p1163 = scmp.lt.s32.totalorder %s116, 1
          %s1164 = scalar_select %p1163, %s116, 1
          %s1165 = smul.addr %s1164, 4
          %s1166 = smul.addr %s1162, 8
          %s1167 = sadd.s32 %s1165, %s1166
          %s1168 = smul.addr %s1167, 4
          %s1169 = scalar_lea.vmem %s17, %s1168
        $region52: #{transformer_forward.3} parent=15 // pred_fallthru
          _
        // Predicated region
        $region53: #{transformer_forward.3} parent=15 // pred_check
          %p1170 = pneg %p388
        $region54: #{transformer_forward.3} parent=15 // pred_check_branch
          %1172 = sbr.rel (%p1170) target = $region56
        $region55: #{transformer_forward.3} parent=15 // pred_region
          %s1173 = sand.u32 %s107, 1
          %s1174 = scalar_lea.sflag [#allocation6], %s1173
          %s1175 = sand.u32 %s378, 1
          %s1176 = scalar_lea.vmem [#allocation5], %s1175
          %s1178 = ssub.s32 16, 16
          %1179 = vsyncadd %s1174, %s1178
          %s1180 = smul.addr %s114, 2
          %s1181 = sadd.s32 %s116, %s1180
          %s1182 = smul.addr %s1181, 16
          %s1183 = scalar_lea.hbm %s19, %s1182
          %s1185 = sshll.u32 %s1176, 4
          %s1186 = int_to_ptr.vmem [resolvable:$true] %s1185
          %1188 = dma.hbm_to_vmem [thread:$0]  %s1183, 16, %s1186, %s1174
        $region56: #{transformer_forward.3} parent=15 // pred_fallthru
          _
        // Predicated region
        $region57: #{transformer_forward.3} parent=15 // pred_check
          %p1189 = pneg %p416
        $region58: #{transformer_forward.3} parent=15 // pred_check_branch
          %1191 = sbr.rel (%p1189) target = $region60
        $region59: #{transformer_forward.3} parent=15 // pred_region
          %p1192 = scmp.lt.s32.totalorder %s114, 1
          %s1193 = scalar_select %p1192, %s114, 1
          %p1194 = scmp.lt.s32.totalorder %s116, 1
          %s1195 = scalar_select %p1194, %s116, 1
          %s1196 = smul.addr %s1195, 4
          %s1197 = smul.addr %s1193, 8
          %s1198 = sadd.s32 %s1196, %s1197
          %s1199 = smul.addr %s1198, 4
          %s1200 = scalar_lea.vmem %s21, %s1199
        $region60: #{transformer_forward.3} parent=15 // pred_fallthru
          _
        // Predicated region
        $region61: #{transformer_forward.3} parent=15 // pred_check
          %p1201 = pneg %p444
        $region62: #{transformer_forward.3} parent=15 // pred_check_branch
          %1203 = sbr.rel (%p1201) target = $region64
        $region63: #{transformer_forward.3} parent=15 // pred_region
          %s1204 = sand.u32 %s107, 1
          %s1205 = scalar_lea.sflag [#allocation6], %s1204
          %s1206 = sand.u32 %s434, 1
          %s1207 = scalar_lea.vmem [#allocation7], %s1206
          %s1209 = ssub.s32 16, 16
          %1210 = vsyncadd %s1205, %s1209
          %s1211 = smul.addr %s114, 2
          %s1212 = sadd.s32 %s116, %s1211
          %s1213 = smul.addr %s1212, 16
          %s1214 = scalar_lea.hbm %s23, %s1213
          %s1216 = sshll.u32 %s1207, 4
          %s1217 = int_to_ptr.vmem [resolvable:$true] %s1216
          %1219 = dma.hbm_to_vmem [thread:$0]  %s1214, 16, %s1217, %s1205
        $region64: #{transformer_forward.3} parent=15 // pred_fallthru
          _
        // Predicated region
        $region65: #{transformer_forward.3} parent=15 // pred_check
          %p1220 = pneg %p472
        $region66: #{transformer_forward.3} parent=15 // pred_check_branch
          %1222 = sbr.rel (%p1220) target = $region68
        $region67: #{transformer_forward.3} parent=15 // pred_region
          %s1223 = sand.u32 %s107, 1
          %s1224 = scalar_lea.sflag [#allocation9], %s1223
          %s1225 = sand.u32 %s462, 1
          %s1226 = scalar_lea.vmem [#allocation8], %s1225
          %s1228 = ssub.s32 16, 16
          %1229 = vsyncadd %s1224, %s1228
          %s1230 = smul.addr %s114, 2
          %s1231 = sadd.s32 %s116, %s1230
          %s1232 = smul.addr %s1231, 16
          %s1233 = scalar_lea.hbm %s25, %s1232
          %s1235 = sshll.u32 %s1226, 4
          %s1236 = int_to_ptr.vmem [resolvable:$true] %s1235
          %1238 = dma.hbm_to_vmem [thread:$0]  %s1233, 16, %s1236, %s1224
        $region68: #{transformer_forward.3} parent=15 // pred_fallthru
          _
        // Predicated region
        $region69: #{transformer_forward.3} parent=15 // pred_check
          %p1239 = pneg %p500
        $region70: #{transformer_forward.3} parent=15 // pred_check_branch
          %1241 = sbr.rel (%p1239) target = $region72
        $region71: #{transformer_forward.3} parent=15 // pred_region
          %s1242 = sand.u32 %s107, 1
          %s1243 = scalar_lea.sflag [#allocation9], %s1242
          %s1244 = sand.u32 %s490, 1
          %s1245 = scalar_lea.vmem [#allocation10], %s1244
          %s1247 = ssub.s32 16, 16
          %1248 = vsyncadd %s1243, %s1247
          %s1249 = smul.addr %s114, 2
          %s1250 = sadd.s32 %s116, %s1249
          %s1251 = smul.addr %s1250, 16
          %s1252 = scalar_lea.hbm %s27, %s1251
          %s1254 = sshll.u32 %s1245, 4
          %s1255 = int_to_ptr.vmem [resolvable:$true] %s1254
          %1257 = dma.hbm_to_vmem [thread:$0]  %s1252, 16, %s1255, %s1243
        $region72: #{transformer_forward.3} parent=15 // pred_fallthru
          _
        // Predicated region
        $region73: #{transformer_forward.3} parent=15 // pred_check
          %p1258 = pneg %p528
        $region74: #{transformer_forward.3} parent=15 // pred_check_branch
          %1260 = sbr.rel (%p1258) target = $region76
        $region75: #{transformer_forward.3} parent=15 // pred_region
          %p1261 = scmp.lt.s32.totalorder %s114, 1
          %s1262 = scalar_select %p1261, %s114, 1
          %p1263 = scmp.lt.s32.totalorder %s116, 1
          %s1264 = scalar_select %p1263, %s116, 1
          %s1265 = smul.addr %s1264, 4
          %s1266 = smul.addr %s1262, 8
          %s1267 = sadd.s32 %s1265, %s1266
          %s1268 = smul.addr %s1267, 4
          %s1269 = scalar_lea.vmem %s29, %s1268
        $region76: #{transformer_forward.3} parent=15 // pred_fallthru
          _
        // Predicated region
        $region77: #{transformer_forward.3} parent=15 // pred_check
          %p1270 = pneg %p556
        $region78: #{transformer_forward.3} parent=15 // pred_check_branch
          %1272 = sbr.rel (%p1270) target = $region80
        $region79: #{transformer_forward.3} parent=15 // pred_region
          %s1273 = sand.u32 %s107, 1
          %s1274 = scalar_lea.sflag [#allocation12], %s1273
          %s1275 = sand.u32 %s546, 1
          %s1276 = scalar_lea.vmem [#allocation11], %s1275
          %s1278 = ssub.s32 16, 16
          %1279 = vsyncadd %s1274, %s1278
          %s1280 = smul.addr %s114, 2
          %s1281 = sadd.s32 %s116, %s1280
          %s1282 = smul.addr %s1281, 16
          %s1283 = scalar_lea.hbm %s31, %s1282
          %s1285 = sshll.u32 %s1276, 4
          %s1286 = int_to_ptr.vmem [resolvable:$true] %s1285
          %1288 = dma.hbm_to_vmem [thread:$0]  %s1283, 16, %s1286, %s1274
        $region80: #{transformer_forward.3} parent=15 // pred_fallthru
          _
        // Predicated region
        $region81: #{transformer_forward.3} parent=15 // pred_check
          %p1289 = pneg %p584
        $region82: #{transformer_forward.3} parent=15 // pred_check_branch
          %1291 = sbr.rel (%p1289) target = $region84
        $region83: #{transformer_forward.3} parent=15 // pred_region
          %p1292 = scmp.lt.s32.totalorder %s114, 1
          %s1293 = scalar_select %p1292, %s114, 1
          %p1294 = scmp.lt.s32.totalorder %s116, 1
          %s1295 = scalar_select %p1294, %s116, 1
          %s1296 = smul.addr %s1295, 4
          %s1297 = smul.addr %s1293, 8
          %s1298 = sadd.s32 %s1296, %s1297
          %s1299 = smul.addr %s1298, 4
          %s1300 = scalar_lea.vmem %s33, %s1299
        $region84: #{transformer_forward.3} parent=15 // pred_fallthru
          _
        // Predicated region
        $region85: #{transformer_forward.3} parent=15 // pred_check
          %p1301 = pneg %p612
        $region86: #{transformer_forward.3} parent=15 // pred_check_branch
          %1303 = sbr.rel (%p1301) target = $region88
        $region87: #{transformer_forward.3} parent=15 // pred_region
          %s1304 = sand.u32 %s107, 1
          %s1305 = scalar_lea.sflag [#allocation12], %s1304
          %s1306 = sand.u32 %s602, 1
          %s1307 = scalar_lea.vmem [#allocation13], %s1306
          %s1309 = ssub.s32 16, 16
          %1310 = vsyncadd %s1305, %s1309
          %s1311 = smul.addr %s114, 2
          %s1312 = sadd.s32 %s116, %s1311
          %s1313 = smul.addr %s1312, 16
          %s1314 = scalar_lea.hbm %s35, %s1313
          %s1316 = sshll.u32 %s1307, 4
          %s1317 = int_to_ptr.vmem [resolvable:$true] %s1316
          %1319 = dma.hbm_to_vmem [thread:$0]  %s1314, 16, %s1317, %s1305
        $region88: #{transformer_forward.3} parent=15 // pred_fallthru
          _
        // Predicated region
        $region89: #{transformer_forward.3} parent=15 // pred_check
          %p1320 = pneg %p640
        $region90: #{transformer_forward.3} parent=15 // pred_check_branch
          %1322 = sbr.rel (%p1320) target = $region92
        $region91: #{transformer_forward.3} parent=15 // pred_region
          %s1323 = sand.u32 %s107, 1
          %s1324 = scalar_lea.sflag [#allocation15], %s1323
          %s1325 = sand.u32 %s630, 1
          %s1326 = smul.addr %s1325, 16
          %s1327 = scalar_lea.vmem [#allocation14], %s1326
          %s1329 = ssub.s32 256, 256
          %1330 = vsyncadd %s1324, %s1329
          %s1331 = smul.addr %s116, 4
          %s1332 = smul.addr %s114, 8
          %s1333 = sadd.s32 %s1331, %s1332
          %s1334 = smul.addr %s1333, 64
          %s1335 = scalar_lea.hbm %s37, %s1334
          %s1336 = sshll.u32 %s1327, 4
          %s1337 = int_to_ptr.vmem [resolvable:$true] %s1336
          %1342 = dma.hbm_to_vmem [thread:$0]  %s1335, 256, %s1337, %s1324, 64, 64, 4
        $region92: #{transformer_forward.3} parent=15 // pred_fallthru
          _
        // Predicated region
        $region93: #{transformer_forward.3} parent=15 // pred_check
          %p1343 = pneg %p668
        $region94: #{transformer_forward.3} parent=15 // pred_check_branch
          %1345 = sbr.rel (%p1343) target = $region96
        $region95: #{transformer_forward.3} parent=15 // pred_region
          %s1346 = sand.u32 %s107, 1
          %s1347 = scalar_lea.sflag [#allocation15], %s1346
          %s1348 = sand.u32 %s658, 1
          %s1349 = scalar_lea.vmem [#allocation16], %s1348
          %s1351 = ssub.s32 16, 16
          %1352 = vsyncadd %s1347, %s1351
          %s1353 = smul.addr %s114, 2
          %s1354 = sadd.s32 %s116, %s1353
          %s1355 = smul.addr %s1354, 16
          %s1356 = scalar_lea.hbm %s39, %s1355
          %s1358 = sshll.u32 %s1349, 4
          %s1359 = int_to_ptr.vmem [resolvable:$true] %s1358
          %1361 = dma.hbm_to_vmem [thread:$0]  %s1356, 16, %s1359, %s1347
        $region96: #{transformer_forward.3} parent=15 // pred_fallthru
          _
        // Predicated region
        $region97: #{transformer_forward.3} parent=15 // pred_check
          %p1362 = pneg %p696
        $region98: #{transformer_forward.3} parent=15 // pred_check_branch
          %1364 = sbr.rel (%p1362) target = $region100
        $region99: #{transformer_forward.3} parent=15 // pred_region
          %s1365 = sand.u32 %s107, 1
          %s1366 = scalar_lea.sflag [#allocation18], %s1365
          %s1367 = sand.u32 %s686, 1
          %s1368 = smul.addr %s1367, 16
          %s1369 = scalar_lea.vmem [#allocation17], %s1368
          %s1371 = ssub.s32 256, 256
          %1372 = vsyncadd %s1366, %s1371
          %s1373 = smul.addr %s116, 4
          %s1374 = smul.addr %s114, 8
          %s1375 = sadd.s32 %s1373, %s1374
          %s1376 = smul.addr %s1375, 64
          %s1377 = scalar_lea.hbm %s41, %s1376
          %s1378 = sshll.u32 %s1369, 4
          %s1379 = int_to_ptr.vmem [resolvable:$true] %s1378
          %1384 = dma.hbm_to_vmem [thread:$0]  %s1377, 256, %s1379, %s1366, 64, 64, 4
        $region100: #{transformer_forward.3} parent=15 // pred_fallthru
          _
        // Predicated region
        $region101: #{transformer_forward.3} parent=15 // pred_check
          %p1385 = pneg %p724
        $region102: #{transformer_forward.3} parent=15 // pred_check_branch
          %1387 = sbr.rel (%p1385) target = $region104
        $region103: #{transformer_forward.3} parent=15 // pred_region
          %s1388 = sand.u32 %s107, 1
          %s1389 = scalar_lea.sflag [#allocation18], %s1388
          %s1390 = sand.u32 %s714, 1
          %s1391 = scalar_lea.vmem [#allocation19], %s1390
          %s1393 = ssub.s32 16, 16
          %1394 = vsyncadd %s1389, %s1393
          %s1395 = smul.addr %s114, 2
          %s1396 = sadd.s32 %s116, %s1395
          %s1397 = smul.addr %s1396, 16
          %s1398 = scalar_lea.hbm %s43, %s1397
          %s1400 = sshll.u32 %s1391, 4
          %s1401 = int_to_ptr.vmem [resolvable:$true] %s1400
          %1403 = dma.hbm_to_vmem [thread:$0]  %s1398, 16, %s1401, %s1389
        $region104: #{transformer_forward.3} parent=15 // pred_fallthru
          _
        // Predicated region
        $region105: #{transformer_forward.3} parent=15 // pred_check
          %p1404 = pneg %p752
        $region106: #{transformer_forward.3} parent=15 // pred_check_branch
          %1406 = sbr.rel (%p1404) target = $region108
        $region107: #{transformer_forward.3} parent=15 // pred_region
          %s1407 = sand.u32 %s107, 1
          %s1408 = scalar_lea.sflag [#allocation21], %s1407
          %s1409 = sand.u32 %s742, 1
          %s1410 = scalar_lea.vmem [#allocation20], %s1409
          %s1412 = ssub.s32 16, 16
          %1413 = vsyncadd %s1408, %s1412
          %s1414 = smul.addr %s114, 2
          %s1415 = sadd.s32 %s116, %s1414
          %s1416 = smul.addr %s1415, 16
          %s1417 = scalar_lea.hbm %s45, %s1416
          %s1419 = sshll.u32 %s1410, 4
          %s1420 = int_to_ptr.vmem [resolvable:$true] %s1419
          %1422 = dma.hbm_to_vmem [thread:$0]  %s1417, 16, %s1420, %s1408
        $region108: #{transformer_forward.3} parent=15 // pred_fallthru
          _
        // Predicated region
        $region109: #{transformer_forward.3} parent=15 // pred_check
          %p1423 = pneg %p780
        $region110: #{transformer_forward.3} parent=15 // pred_check_branch
          %1425 = sbr.rel (%p1423) target = $region112
        $region111: #{transformer_forward.3} parent=15 // pred_region
          %s1426 = sand.u32 %s107, 1
          %s1427 = scalar_lea.sflag [#allocation21], %s1426
          %s1428 = sand.u32 %s770, 1
          %s1429 = scalar_lea.vmem [#allocation22], %s1428
          %s1431 = ssub.s32 16, 16
          %1432 = vsyncadd %s1427, %s1431
          %s1433 = smul.addr %s114, 2
          %s1434 = sadd.s32 %s116, %s1433
          %s1435 = smul.addr %s1434, 16
          %s1436 = scalar_lea.hbm %s47, %s1435
          %s1438 = sshll.u32 %s1429, 4
          %s1439 = int_to_ptr.vmem [resolvable:$true] %s1438
          %1441 = dma.hbm_to_vmem [thread:$0]  %s1436, 16, %s1439, %s1427
        $region112: #{transformer_forward.3} parent=15 // pred_fallthru
          _
        // Predicated region
        $region113: #{transformer_forward.3} parent=15 // pred_check
          %p1442 = pneg %p808
        $region114: #{transformer_forward.3} parent=15 // pred_check_branch
          %1444 = sbr.rel (%p1442) target = $region116
        $region115: #{transformer_forward.3} parent=15 // pred_region
          %p1445 = scmp.lt.s32.totalorder %s114, 1
          %s1446 = scalar_select %p1445, %s114, 1
          %p1447 = scmp.lt.s32.totalorder %s116, 1
          %s1448 = scalar_select %p1447, %s116, 1
          %s1449 = smul.addr %s1448, 4
          %s1450 = smul.addr %s1446, 8
          %s1451 = sadd.s32 %s1449, %s1450
          %s1452 = smul.addr %s1451, 4
          %s1453 = scalar_lea.vmem %s49, %s1452
        $region116: #{transformer_forward.3} parent=15 // pred_fallthru
          _
        // Predicated region
        $region117: #{transformer_forward.3} parent=15 // pred_check
          %p1454 = pneg %p836
        $region118: #{transformer_forward.3} parent=15 // pred_check_branch
          %1456 = sbr.rel (%p1454) target = $region120
        $region119: #{transformer_forward.3} parent=15 // pred_region
          %s1457 = sand.u32 %s107, 1
          %s1458 = scalar_lea.sflag [#allocation24], %s1457
          %s1459 = sand.u32 %s826, 1
          %s1460 = scalar_lea.vmem [#allocation23], %s1459
          %s1462 = ssub.s32 16, 16
          %1463 = vsyncadd %s1458, %s1462
          %s1464 = smul.addr %s114, 2
          %s1465 = sadd.s32 %s116, %s1464
          %s1466 = smul.addr %s1465, 16
          %s1467 = scalar_lea.hbm %s51, %s1466
          %s1469 = sshll.u32 %s1460, 4
          %s1470 = int_to_ptr.vmem [resolvable:$true] %s1469
          %1472 = dma.hbm_to_vmem [thread:$0]  %s1467, 16, %s1470, %s1458
        $region120: #{transformer_forward.3} parent=15 // pred_fallthru
          _
        // Predicated region
        $region121: #{transformer_forward.3} parent=15 // pred_check
          %p1473 = pneg %p864
        $region122: #{transformer_forward.3} parent=15 // pred_check_branch
          %1475 = sbr.rel (%p1473) target = $region124
        $region123: #{transformer_forward.3} parent=15 // pred_region
          %p1476 = scmp.lt.s32.totalorder %s114, 1
          %s1477 = scalar_select %p1476, %s114, 1
          %p1478 = scmp.lt.s32.totalorder %s116, 1
          %s1479 = scalar_select %p1478, %s116, 1
          %s1480 = smul.addr %s1479, 8
          %s1481 = smul.addr %s1477, 16
          %s1482 = sadd.s32 %s1480, %s1481
          %s1483 = smul.addr %s1482, 4
          %s1484 = scalar_lea.vmem %s53, %s1483
        $region124: #{transformer_forward.3} parent=15 // pred_fallthru
          _
        // Predicated region
        $region125: #{transformer_forward.3} parent=15 // pred_check
          %p1485 = pneg %p892
        $region126: #{transformer_forward.3} parent=15 // pred_check_branch
          %1487 = sbr.rel (%p1485) target = $region128
        $region127: #{transformer_forward.3} parent=15 // pred_region
          %s1488 = sand.u32 %s107, 1
          %s1489 = scalar_lea.sflag [#allocation24], %s1488
          %s1490 = sand.u32 %s882, 1
          %s1491 = scalar_lea.vmem [#allocation25], %s1490
          %s1493 = ssub.s32 16, 16
          %1494 = vsyncadd %s1489, %s1493
          %s1495 = smul.addr %s114, 2
          %s1496 = sadd.s32 %s116, %s1495
          %s1497 = smul.addr %s1496, 16
          %s1498 = scalar_lea.hbm %s55, %s1497
          %s1500 = sshll.u32 %s1491, 4
          %s1501 = int_to_ptr.vmem [resolvable:$true] %s1500
          %1503 = dma.hbm_to_vmem [thread:$0]  %s1498, 16, %s1501, %s1489
        $region128: #{transformer_forward.3} parent=15 // pred_fallthru
          _
        // Predicated region
        $region129: #{transformer_forward.3} parent=15 // pred_check
          %p1504 = pneg %p920
        $region130: #{transformer_forward.3} parent=15 // pred_check_branch
          %1506 = sbr.rel (%p1504) target = $region132
        $region131: #{transformer_forward.3} parent=15 // pred_region
          %s1507 = sand.u32 %s107, 1
          %s1508 = scalar_lea.sflag [#allocation27], %s1507
          %s1509 = sand.u32 %s910, 1
          %s1510 = scalar_lea.vmem [#allocation26], %s1509
          %s1512 = ssub.s32 16, 16
          %1513 = vsyncadd %s1508, %s1512
          %s1514 = smul.addr %s114, 2
          %s1515 = sadd.s32 %s116, %s1514
          %s1516 = smul.addr %s1515, 16
          %s1517 = scalar_lea.hbm %s57, %s1516
          %s1519 = sshll.u32 %s1510, 4
          %s1520 = int_to_ptr.vmem [resolvable:$true] %s1519
          %1522 = dma.hbm_to_vmem [thread:$0]  %s1517, 16, %s1520, %s1508
        $region132: #{transformer_forward.3} parent=15 // pred_fallthru
          _
        // Predicated region
        $region133: #{transformer_forward.3} parent=15 // pred_check
          %p1523 = pneg %p948
        $region134: #{transformer_forward.3} parent=15 // pred_check_branch
          %1525 = sbr.rel (%p1523) target = $region136
        $region135: #{transformer_forward.3} parent=15 // pred_region
          %s1526 = sand.u32 %s107, 1
          %s1527 = scalar_lea.sflag [#allocation27], %s1526
          %s1528 = sand.u32 %s938, 1
          %s1529 = scalar_lea.vmem [#allocation28], %s1528
          %s1531 = ssub.s32 16, 16
          %1532 = vsyncadd %s1527, %s1531
          %s1533 = smul.addr %s114, 2
          %s1534 = sadd.s32 %s116, %s1533
          %s1535 = smul.addr %s1534, 16
          %s1536 = scalar_lea.hbm %s59, %s1535
          %s1538 = sshll.u32 %s1529, 4
          %s1539 = int_to_ptr.vmem [resolvable:$true] %s1538
          %1541 = dma.hbm_to_vmem [thread:$0]  %s1536, 16, %s1539, %s1527
        $region136: #{transformer_forward.3} parent=15 // pred_fallthru
          _
        // Predicated region
        $region137: #{transformer_forward.3} parent=15 // pred_check
          %p1542 = pneg %p974
        $region138: #{transformer_forward.3} parent=15 // pred_check_branch
          %1544 = sbr.rel (%p1542) target = $region140
        $region139: #{transformer_forward.3} parent=15 // pred_region
          %s1545 = sand.u32 %s107, 1
          %s1546 = scalar_lea.sflag [#allocation30], %s1545
          %s1547 = sand.u32 %s964, 1
          %s1548 = scalar_lea.vmem [#allocation29], %s1547
          %s1550 = ssub.s32 16, 16
          %1551 = vsyncadd %s1546, %s1550
          %s1552 = smul.addr %s114, 16
          %s1553 = scalar_lea.hbm %s61, %s1552
          %s1555 = sshll.u32 %s1548, 4
          %s1556 = int_to_ptr.vmem [resolvable:$true] %s1555
          %1558 = dma.hbm_to_vmem [thread:$0]  %s1553, 16, %s1556, %s1546
        $region140: #{transformer_forward.3} parent=15 // pred_fallthru
          _
        // Predicated region
        $region141: #{transformer_forward.3} parent=15 // pred_check
          %p1559 = pneg %p1000
        $region142: #{transformer_forward.3} parent=15 // pred_check_branch
          %1561 = sbr.rel (%p1559) target = $region144
        $region143: #{transformer_forward.3} parent=15 // pred_region
          %s1562 = sand.u32 %s107, 1
          %s1563 = scalar_lea.sflag [#allocation30], %s1562
          %s1564 = sand.u32 %s990, 1
          %s1565 = scalar_lea.vmem [#allocation31], %s1564
          %s1567 = ssub.s32 16, 16
          %1568 = vsyncadd %s1563, %s1567
          %s1569 = smul.addr %s114, 16
          %s1570 = scalar_lea.hbm %s63, %s1569
          %s1572 = sshll.u32 %s1565, 4
          %s1573 = int_to_ptr.vmem [resolvable:$true] %s1572
          %1575 = dma.hbm_to_vmem [thread:$0]  %s1570, 16, %s1573, %s1563
        $region144: #{transformer_forward.3} parent=15 // pred_fallthru
          _
      $region16: #{transformer_forward.3} parent=5 // pred_fallthru
        _
      %p1576 = scmp.le.s32.totalorder 1, %s107
      %p1577 = scmp.lt.s32.totalorder %s107, 9
      %p1578 = pnand %p1576, %p1577
      %p1579 = pneg %p1578
      // Predicated region
      $region145: #{transformer_forward.3} parent=5 // pred_check
        _
      $region146: #{transformer_forward.3} parent=5 // pred_check_branch
        %1581 = sbr.rel (%p1578) target = $region148
      $region147: #{transformer_forward.3} parent=5 // pred_region
        %s1582 = ssub.s32 %s107, 1
        %s1583 = sand.u32 %s325, 1
        %s1584 = scalar_lea.sflag [#allocation3], %s1583
        %s1585 = sand.u32 %s325, 1
        %s1586 = scalar_lea.vmem [#allocation2], %s1585
        // Predicated region
        $region149: #{transformer_forward.3} parent=147 // pred_check
          %p1587 = pneg %p338
        $region150: #{transformer_forward.3} parent=147 // pred_check_branch
          %1589 = sbr.rel (%p1587) target = $region152
        $region151: #{transformer_forward.3} parent=147 // pred_region
          %1590 = dma.done %s1584, 16
        $region152: #{transformer_forward.3} parent=147 // pred_fallthru
          _
        %s1591 = sand.u32 %s112, 1
        %s1592 = scalar_lea.sflag [#allocation6], %s1591
        %s1593 = sand.u32 %s381, 1
        %s1594 = scalar_lea.vmem [#allocation5], %s1593
        // Predicated region
        $region153: #{transformer_forward.3} parent=147 // pred_check
          %p1595 = pneg %p394
        $region154: #{transformer_forward.3} parent=147 // pred_check_branch
          %1597 = sbr.rel (%p1595) target = $region156
        $region155: #{transformer_forward.3} parent=147 // pred_region
          %1598 = dma.done %s1592, 16
        $region156: #{transformer_forward.3} parent=147 // pred_fallthru
          _
        %s1599 = sand.u32 %s112, 1
        %s1600 = scalar_lea.sflag [#allocation6], %s1599
        %s1601 = sand.u32 %s437, 1
        %s1602 = scalar_lea.vmem [#allocation7], %s1601
        // Predicated region
        $region157: #{transformer_forward.3} parent=147 // pred_check
          %p1603 = pneg %p450
        $region158: #{transformer_forward.3} parent=147 // pred_check_branch
          %1605 = sbr.rel (%p1603) target = $region160
        $region159: #{transformer_forward.3} parent=147 // pred_region
          %1606 = dma.done %s1600, 16
        $region160: #{transformer_forward.3} parent=147 // pred_fallthru
          _
        %s1607 = sand.u32 %s112, 1
        %s1608 = scalar_lea.sflag [#allocation9], %s1607
        %s1609 = sand.u32 %s465, 1
        %s1610 = scalar_lea.vmem [#allocation8], %s1609
        // Predicated region
        $region161: #{transformer_forward.3} parent=147 // pred_check
          %p1611 = pneg %p478
        $region162: #{transformer_forward.3} parent=147 // pred_check_branch
          %1613 = sbr.rel (%p1611) target = $region164
        $region163: #{transformer_forward.3} parent=147 // pred_region
          %1614 = dma.done %s1608, 16
        $region164: #{transformer_forward.3} parent=147 // pred_fallthru
          _
        %s1615 = sand.u32 %s112, 1
        %s1616 = scalar_lea.sflag [#allocation9], %s1615
        %s1617 = sand.u32 %s493, 1
        %s1618 = scalar_lea.vmem [#allocation10], %s1617
        // Predicated region
        $region165: #{transformer_forward.3} parent=147 // pred_check
          %p1619 = pneg %p506
        $region166: #{transformer_forward.3} parent=147 // pred_check_branch
          %1621 = sbr.rel (%p1619) target = $region168
        $region167: #{transformer_forward.3} parent=147 // pred_region
          %1622 = dma.done %s1616, 16
        $region168: #{transformer_forward.3} parent=147 // pred_fallthru
          _
        %s1623 = sand.u32 %s112, 1
        %s1624 = scalar_lea.sflag [#allocation12], %s1623
        %s1625 = sand.u32 %s549, 1
        %s1626 = scalar_lea.vmem [#allocation11], %s1625
        // Predicated region
        $region169: #{transformer_forward.3} parent=147 // pred_check
          %p1627 = pneg %p562
        $region170: #{transformer_forward.3} parent=147 // pred_check_branch
          %1629 = sbr.rel (%p1627) target = $region172
        $region171: #{transformer_forward.3} parent=147 // pred_region
          %1630 = dma.done %s1624, 16
        $region172: #{transformer_forward.3} parent=147 // pred_fallthru
          _
        %s1631 = sand.u32 %s112, 1
        %s1632 = scalar_lea.sflag [#allocation12], %s1631
        %s1633 = sand.u32 %s605, 1
        %s1634 = scalar_lea.vmem [#allocation13], %s1633
        // Predicated region
        $region173: #{transformer_forward.3} parent=147 // pred_check
          %p1635 = pneg %p618
        $region174: #{transformer_forward.3} parent=147 // pred_check_branch
          %1637 = sbr.rel (%p1635) target = $region176
        $region175: #{transformer_forward.3} parent=147 // pred_region
          %1638 = dma.done %s1632, 16
        $region176: #{transformer_forward.3} parent=147 // pred_fallthru
          _
        %s1639 = sand.u32 %s112, 1
        %s1640 = scalar_lea.sflag [#allocation15], %s1639
        %s1641 = sand.u32 %s633, 1
        %s1642 = smul.addr %s1641, 16
        %s1643 = scalar_lea.vmem [#allocation14], %s1642
        // Predicated region
        $region177: #{transformer_forward.3} parent=147 // pred_check
          %p1644 = pneg %p646
        $region178: #{transformer_forward.3} parent=147 // pred_check_branch
          %1646 = sbr.rel (%p1644) target = $region180
        $region179: #{transformer_forward.3} parent=147 // pred_region
          %1647 = dma.done %s1640, 256
        $region180: #{transformer_forward.3} parent=147 // pred_fallthru
          _
        %s1648 = sand.u32 %s112, 1
        %s1649 = scalar_lea.sflag [#allocation15], %s1648
        %s1650 = sand.u32 %s661, 1
        %s1651 = scalar_lea.vmem [#allocation16], %s1650
        // Predicated region
        $region181: #{transformer_forward.3} parent=147 // pred_check
          %p1652 = pneg %p674
        $region182: #{transformer_forward.3} parent=147 // pred_check_branch
          %1654 = sbr.rel (%p1652) target = $region184
        $region183: #{transformer_forward.3} parent=147 // pred_region
          %1655 = dma.done %s1649, 16
        $region184: #{transformer_forward.3} parent=147 // pred_fallthru
          _
        %s1656 = sand.u32 %s112, 1
        %s1657 = scalar_lea.sflag [#allocation18], %s1656
        %s1658 = sand.u32 %s689, 1
        %s1659 = smul.addr %s1658, 16
        %s1660 = scalar_lea.vmem [#allocation17], %s1659
        // Predicated region
        $region185: #{transformer_forward.3} parent=147 // pred_check
          %p1661 = pneg %p702
        $region186: #{transformer_forward.3} parent=147 // pred_check_branch
          %1663 = sbr.rel (%p1661) target = $region188
        $region187: #{transformer_forward.3} parent=147 // pred_region
          %1664 = dma.done %s1657, 256
        $region188: #{transformer_forward.3} parent=147 // pred_fallthru
          _
        %s1665 = sand.u32 %s112, 1
        %s1666 = scalar_lea.sflag [#allocation18], %s1665
        %s1667 = sand.u32 %s717, 1
        %s1668 = scalar_lea.vmem [#allocation19], %s1667
        // Predicated region
        $region189: #{transformer_forward.3} parent=147 // pred_check
          %p1669 = pneg %p730
        $region190: #{transformer_forward.3} parent=147 // pred_check_branch
          %1671 = sbr.rel (%p1669) target = $region192
        $region191: #{transformer_forward.3} parent=147 // pred_region
          %1672 = dma.done %s1666, 16
        $region192: #{transformer_forward.3} parent=147 // pred_fallthru
          _
        %s1673 = sand.u32 %s112, 1
        %s1674 = scalar_lea.sflag [#allocation21], %s1673
        %s1675 = sand.u32 %s745, 1
        %s1676 = scalar_lea.vmem [#allocation20], %s1675
        // Predicated region
        $region193: #{transformer_forward.3} parent=147 // pred_check
          %p1677 = pneg %p758
        $region194: #{transformer_forward.3} parent=147 // pred_check_branch
          %1679 = sbr.rel (%p1677) target = $region196
        $region195: #{transformer_forward.3} parent=147 // pred_region
          %1680 = dma.done %s1674, 16
        $region196: #{transformer_forward.3} parent=147 // pred_fallthru
          _
        %s1681 = sand.u32 %s112, 1
        %s1682 = scalar_lea.sflag [#allocation21], %s1681
        %s1683 = sand.u32 %s773, 1
        %s1684 = scalar_lea.vmem [#allocation22], %s1683
        // Predicated region
        $region197: #{transformer_forward.3} parent=147 // pred_check
          %p1685 = pneg %p786
        $region198: #{transformer_forward.3} parent=147 // pred_check_branch
          %1687 = sbr.rel (%p1685) target = $region200
        $region199: #{transformer_forward.3} parent=147 // pred_region
          %1688 = dma.done %s1682, 16
        $region200: #{transformer_forward.3} parent=147 // pred_fallthru
          _
        %s1689 = sand.u32 %s112, 1
        %s1690 = scalar_lea.sflag [#allocation24], %s1689
        %s1691 = sand.u32 %s829, 1
        %s1692 = scalar_lea.vmem [#allocation23], %s1691
        // Predicated region
        $region201: #{transformer_forward.3} parent=147 // pred_check
          %p1693 = pneg %p842
        $region202: #{transformer_forward.3} parent=147 // pred_check_branch
          %1695 = sbr.rel (%p1693) target = $region204
        $region203: #{transformer_forward.3} parent=147 // pred_region
          %1696 = dma.done %s1690, 16
        $region204: #{transformer_forward.3} parent=147 // pred_fallthru
          _
        %s1697 = sand.u32 %s112, 1
        %s1698 = scalar_lea.sflag [#allocation24], %s1697
        %s1699 = sand.u32 %s885, 1
        %s1700 = scalar_lea.vmem [#allocation25], %s1699
        // Predicated region
        $region205: #{transformer_forward.3} parent=147 // pred_check
          %p1701 = pneg %p898
        $region206: #{transformer_forward.3} parent=147 // pred_check_branch
          %1703 = sbr.rel (%p1701) target = $region208
        $region207: #{transformer_forward.3} parent=147 // pred_region
          %1704 = dma.done %s1698, 16
        $region208: #{transformer_forward.3} parent=147 // pred_fallthru
          _
        %s1705 = sand.u32 %s112, 1
        %s1706 = scalar_lea.sflag [#allocation27], %s1705
        %s1707 = sand.u32 %s913, 1
        %s1708 = scalar_lea.vmem [#allocation26], %s1707
        // Predicated region
        $region209: #{transformer_forward.3} parent=147 // pred_check
          %p1709 = pneg %p926
        $region210: #{transformer_forward.3} parent=147 // pred_check_branch
          %1711 = sbr.rel (%p1709) target = $region212
        $region211: #{transformer_forward.3} parent=147 // pred_region
          %1712 = dma.done %s1706, 16
        $region212: #{transformer_forward.3} parent=147 // pred_fallthru
          _
        %s1713 = sand.u32 %s112, 1
        %s1714 = scalar_lea.sflag [#allocation27], %s1713
        %s1715 = sand.u32 %s941, 1
        %s1716 = scalar_lea.vmem [#allocation28], %s1715
        // Predicated region
        $region213: #{transformer_forward.3} parent=147 // pred_check
          %p1717 = pneg %p954
        $region214: #{transformer_forward.3} parent=147 // pred_check_branch
          %1719 = sbr.rel (%p1717) target = $region216
        $region215: #{transformer_forward.3} parent=147 // pred_region
          %1720 = dma.done %s1714, 16
        $region216: #{transformer_forward.3} parent=147 // pred_fallthru
          _
        %s1721 = sand.u32 %s112, 1
        %s1722 = scalar_lea.sflag [#allocation30], %s1721
        %s1723 = sand.u32 %s967, 1
        %s1724 = scalar_lea.vmem [#allocation29], %s1723
        // Predicated region
        $region217: #{transformer_forward.3} parent=147 // pred_check
          %p1725 = pneg %p980
        $region218: #{transformer_forward.3} parent=147 // pred_check_branch
          %1727 = sbr.rel (%p1725) target = $region220
        $region219: #{transformer_forward.3} parent=147 // pred_region
          %1728 = dma.done %s1722, 16
        $region220: #{transformer_forward.3} parent=147 // pred_fallthru
          _
        %s1729 = sand.u32 %s112, 1
        %s1730 = scalar_lea.sflag [#allocation30], %s1729
        %s1731 = sand.u32 %s993, 1
        %s1732 = scalar_lea.vmem [#allocation31], %s1731
        // Predicated region
        $region221: #{transformer_forward.3} parent=147 // pred_check
          %p1733 = pneg %p1006
        $region222: #{transformer_forward.3} parent=147 // pred_check_branch
          %1735 = sbr.rel (%p1733) target = $region224
        $region223: #{transformer_forward.3} parent=147 // pred_region
          %1736 = dma.done %s1730, 16
        $region224: #{transformer_forward.3} parent=147 // pred_fallthru
          _
        %p1737 = scmp.lt.s32.totalorder %s118, 1
        %s1738 = scalar_select %p1737, %s118, 1
        %s1739 = smul.addr %s1738, 8
        %s1740 = smul.addr %s1739, 8
        %s1741 = scalar_lea.vmem %s1, %s1740
        %p1742 = pneg %p152
        %p1743 = pneg %p149
        %p1744 = scmp.lt.s32.totalorder %s118, 1
        %s1745 = scalar_select %p1744, %s118, 1
        %s1746 = smul.addr %s1745, 2
        %s1747 = smul.addr %s1746, 8
        %s1748 = scalar_lea.vmem %s3, %s1747
        %p1749 = pneg %p178
        %p1750 = pneg %p175
        %p1751 = scmp.lt.s32.totalorder %s118, 1
        %s1752 = scalar_select %p1751, %s118, 1
        %s1753 = smul.addr %s1752, 8
        %s1754 = smul.addr %s1753, 8
        %s1755 = scalar_lea.vmem %s5, %s1754
        %p1756 = pneg %p204
        %p1757 = pneg %p201
        %p1758 = scmp.lt.s32.totalorder %s118, 1
        %s1759 = scalar_select %p1758, %s118, 1
        %s1760 = smul.addr %s1759, 2
        %s1761 = smul.addr %s1760, 8
        %s1762 = scalar_lea.vmem %s7, %s1761
        %p1763 = pneg %p230
        %p1764 = pneg %p227
        %p1765 = scmp.lt.s32.totalorder %s118, 1
        %s1766 = scalar_select %p1765, %s118, 1
        %s1767 = scalar_lea.vmem %s9, %s1766
        %p1768 = pneg %p256
        %p1769 = pneg %p253
        %p1770 = scmp.lt.s32.totalorder %s118, 1
        %s1771 = scalar_select %p1770, %s118, 1
        %s1772 = scalar_lea.vmem %s11, %s1771
        %p1773 = pneg %p282
        %p1774 = pneg %p279
        %p1775 = scmp.lt.s32.totalorder %s117, 1
        %s1776 = scalar_select %p1775, %s117, 1
        %p1777 = scmp.lt.s32.totalorder %s119, 1
        %s1778 = scalar_select %p1777, %s119, 1
        %s1779 = smul.addr %s1778, 4
        %s1780 = smul.addr %s1776, 8
        %s1781 = sadd.s32 %s1779, %s1780
        %s1782 = smul.addr %s1781, 4
        %s1783 = scalar_lea.vmem %s13, %s1782
        %p1784 = pneg %p310
        %p1785 = pneg %p307
        %s1786 = sand.u32 %s325, 1
        %s1787 = scalar_lea.sflag [#allocation3], %s1786
        %s1788 = sand.u32 %s325, 1
        %s1789 = scalar_lea.vmem [#allocation2], %s1788
        %p1790 = pneg %p338
        %p1791 = pneg %p335
        %p1792 = scmp.lt.s32.totalorder %s117, 1
        %s1793 = scalar_select %p1792, %s117, 1
        %p1794 = scmp.lt.s32.totalorder %s119, 1
        %s1795 = scalar_select %p1794, %s119, 1
        %s1796 = smul.addr %s1795, 4
        %s1797 = smul.addr %s1793, 8
        %s1798 = sadd.s32 %s1796, %s1797
        %s1799 = smul.addr %s1798, 4
        %s1800 = scalar_lea.vmem %s17, %s1799
        %p1801 = pneg %p366
        %p1802 = pneg %p363
        %s1803 = sand.u32 %s112, 1
        %s1804 = scalar_lea.sflag [#allocation6], %s1803
        %s1805 = sand.u32 %s381, 1
        %s1806 = scalar_lea.vmem [#allocation5], %s1805
        %p1807 = pneg %p394
        %p1808 = pneg %p391
        %p1809 = scmp.lt.s32.totalorder %s117, 1
        %s1810 = scalar_select %p1809, %s117, 1
        %p1811 = scmp.lt.s32.totalorder %s119, 1
        %s1812 = scalar_select %p1811, %s119, 1
        %s1813 = smul.addr %s1812, 4
        %s1814 = smul.addr %s1810, 8
        %s1815 = sadd.s32 %s1813, %s1814
        %s1816 = smul.addr %s1815, 4
        %s1817 = scalar_lea.vmem %s21, %s1816
        %p1818 = pneg %p422
        %p1819 = pneg %p419
        %s1820 = sand.u32 %s112, 1
        %s1821 = scalar_lea.sflag [#allocation6], %s1820
        %s1822 = sand.u32 %s437, 1
        %s1823 = scalar_lea.vmem [#allocation7], %s1822
        %p1824 = pneg %p450
        %p1825 = pneg %p447
        %s1826 = sand.u32 %s112, 1
        %s1827 = scalar_lea.sflag [#allocation9], %s1826
        %s1828 = sand.u32 %s465, 1
        %s1829 = scalar_lea.vmem [#allocation8], %s1828
        %p1830 = pneg %p478
        %p1831 = pneg %p475
        %s1832 = sand.u32 %s112, 1
        %s1833 = scalar_lea.sflag [#allocation9], %s1832
        %s1834 = sand.u32 %s493, 1
        %s1835 = scalar_lea.vmem [#allocation10], %s1834
        %p1836 = pneg %p506
        %p1837 = pneg %p503
        %p1838 = scmp.lt.s32.totalorder %s117, 1
        %s1839 = scalar_select %p1838, %s117, 1
        %p1840 = scmp.lt.s32.totalorder %s119, 1
        %s1841 = scalar_select %p1840, %s119, 1
        %s1842 = smul.addr %s1841, 4
        %s1843 = smul.addr %s1839, 8
        %s1844 = sadd.s32 %s1842, %s1843
        %s1845 = smul.addr %s1844, 4
        %s1846 = scalar_lea.vmem %s29, %s1845
        %p1847 = pneg %p534
        %p1848 = pneg %p531
        %s1849 = sand.u32 %s112, 1
        %s1850 = scalar_lea.sflag [#allocation12], %s1849
        %s1851 = sand.u32 %s549, 1
        %s1852 = scalar_lea.vmem [#allocation11], %s1851
        %p1853 = pneg %p562
        %p1854 = pneg %p559
        %p1855 = scmp.lt.s32.totalorder %s117, 1
        %s1856 = scalar_select %p1855, %s117, 1
        %p1857 = scmp.lt.s32.totalorder %s119, 1
        %s1858 = scalar_select %p1857, %s119, 1
        %s1859 = smul.addr %s1858, 4
        %s1860 = smul.addr %s1856, 8
        %s1861 = sadd.s32 %s1859, %s1860
        %s1862 = smul.addr %s1861, 4
        %s1863 = scalar_lea.vmem %s33, %s1862
        %p1864 = pneg %p590
        %p1865 = pneg %p587
        %s1866 = sand.u32 %s112, 1
        %s1867 = scalar_lea.sflag [#allocation12], %s1866
        %s1868 = sand.u32 %s605, 1
        %s1869 = scalar_lea.vmem [#allocation13], %s1868
        %p1870 = pneg %p618
        %p1871 = pneg %p615
        %s1872 = sand.u32 %s112, 1
        %s1873 = scalar_lea.sflag [#allocation15], %s1872
        %s1874 = sand.u32 %s633, 1
        %s1875 = smul.addr %s1874, 16
        %s1876 = scalar_lea.vmem [#allocation14], %s1875
        %p1877 = pneg %p646
        %p1878 = pneg %p643
        %s1879 = sand.u32 %s112, 1
        %s1880 = scalar_lea.sflag [#allocation15], %s1879
        %s1881 = sand.u32 %s661, 1
        %s1882 = scalar_lea.vmem [#allocation16], %s1881
        %p1883 = pneg %p674
        %p1884 = pneg %p671
        %s1885 = sand.u32 %s112, 1
        %s1886 = scalar_lea.sflag [#allocation18], %s1885
        %s1887 = sand.u32 %s689, 1
        %s1888 = smul.addr %s1887, 16
        %s1889 = scalar_lea.vmem [#allocation17], %s1888
        %p1890 = pneg %p702
        %p1891 = pneg %p699
        %s1892 = sand.u32 %s112, 1
        %s1893 = scalar_lea.sflag [#allocation18], %s1892
        %s1894 = sand.u32 %s717, 1
        %s1895 = scalar_lea.vmem [#allocation19], %s1894
        %p1896 = pneg %p730
        %p1897 = pneg %p727
        %s1898 = sand.u32 %s112, 1
        %s1899 = scalar_lea.sflag [#allocation21], %s1898
        %s1900 = sand.u32 %s745, 1
        %s1901 = scalar_lea.vmem [#allocation20], %s1900
        %p1902 = pneg %p758
        %p1903 = pneg %p755
        %s1904 = sand.u32 %s112, 1
        %s1905 = scalar_lea.sflag [#allocation21], %s1904
        %s1906 = sand.u32 %s773, 1
        %s1907 = scalar_lea.vmem [#allocation22], %s1906
        %p1908 = pneg %p786
        %p1909 = pneg %p783
        %p1910 = scmp.lt.s32.totalorder %s117, 1
        %s1911 = scalar_select %p1910, %s117, 1
        %p1912 = scmp.lt.s32.totalorder %s119, 1
        %s1913 = scalar_select %p1912, %s119, 1
        %s1914 = smul.addr %s1913, 4
        %s1915 = smul.addr %s1911, 8
        %s1916 = sadd.s32 %s1914, %s1915
        %s1917 = smul.addr %s1916, 4
        %s1918 = scalar_lea.vmem %s49, %s1917
        %p1919 = pneg %p814
        %p1920 = pneg %p811
        %s1921 = sand.u32 %s112, 1
        %s1922 = scalar_lea.sflag [#allocation24], %s1921
        %s1923 = sand.u32 %s829, 1
        %s1924 = scalar_lea.vmem [#allocation23], %s1923
        %p1925 = pneg %p842
        %p1926 = pneg %p839
        %p1927 = scmp.lt.s32.totalorder %s117, 1
        %s1928 = scalar_select %p1927, %s117, 1
        %p1929 = scmp.lt.s32.totalorder %s119, 1
        %s1930 = scalar_select %p1929, %s119, 1
        %s1931 = smul.addr %s1930, 8
        %s1932 = smul.addr %s1928, 16
        %s1933 = sadd.s32 %s1931, %s1932
        %s1934 = smul.addr %s1933, 4
        %s1935 = scalar_lea.vmem %s53, %s1934
        %p1936 = pneg %p870
        %p1937 = pneg %p867
        %s1938 = sand.u32 %s112, 1
        %s1939 = scalar_lea.sflag [#allocation24], %s1938
        %s1940 = sand.u32 %s885, 1
        %s1941 = scalar_lea.vmem [#allocation25], %s1940
        %p1942 = pneg %p898
        %p1943 = pneg %p895
        %s1944 = sand.u32 %s112, 1
        %s1945 = scalar_lea.sflag [#allocation27], %s1944
        %s1946 = sand.u32 %s913, 1
        %s1947 = scalar_lea.vmem [#allocation26], %s1946
        %p1948 = pneg %p926
        %p1949 = pneg %p923
        %s1950 = sand.u32 %s112, 1
        %s1951 = scalar_lea.sflag [#allocation27], %s1950
        %s1952 = sand.u32 %s941, 1
        %s1953 = scalar_lea.vmem [#allocation28], %s1952
        %p1954 = pneg %p954
        %p1955 = pneg %p951
        %s1956 = sand.u32 %s112, 1
        %s1957 = scalar_lea.sflag [#allocation30], %s1956
        %s1958 = sand.u32 %s967, 1
        %s1959 = scalar_lea.vmem [#allocation29], %s1958
        %p1960 = pneg %p980
        %p1961 = pneg %p977
        %s1962 = sand.u32 %s112, 1
        %s1963 = scalar_lea.sflag [#allocation30], %s1962
        %s1964 = sand.u32 %s993, 1
        %s1965 = scalar_lea.vmem [#allocation31], %s1964
        %p1966 = pneg %p1006
        %p1967 = pneg %p1003
        %p1968 = pneg %p1034
        %p1969 = pneg %p1031
        %s1970 = sand.u32 %s1021, 1
        %s1971 = scalar_lea.sflag [#allocation4], %s1970
        %s1972 = sand.u32 %s1021, 1
        %s1973 = smul.addr %s1972, 64
        %s1974 = scalar_lea.vmem [#allocation32], %s1973
        %p1975 = pneg %p1064
        %p1976 = pneg %p1061
        %p1977 = scmp.lt.s32.totalorder %s119, 1
        %s1978 = scalar_select %p1977, %s119, 1
        %p1979 = scmp.lt.s32.totalorder %s117, 1
        %s1980 = scalar_select %p1979, %s117, 1
        %p1981 = scmp.lt.s32.totalorder %s118, 1
        %s1982 = scalar_select %p1981, %s118, 1
        %s1983 = smul.addr %s1982, 8
        %s1984 = smul.addr %s1980, 16
        %s1985 = sadd.s32 %s1983, %s1984
        %s1986 = smul.addr %s1978, 32
        %s1987 = sadd.s32 %s1985, %s1986
        %s1988 = smul.addr %s1987, 8
        %s1989 = scalar_lea.vmem %s67, %s1988
        %p1990 = scmp.lt.s32.totalorder %s118, 1
        %s1991 = scalar_select %p1990, %s118, 1
        %s1992 = smul.addr %s1991, 8
        %s1993 = smul.addr %s1992, 8
        %s1994 = scalar_lea.vmem %s1, %s1993
        %p1995 = scmp.lt.s32.totalorder %s118, 1
        %s1996 = scalar_select %p1995, %s118, 1
        %s1997 = smul.addr %s1996, 2
        %s1998 = smul.addr %s1997, 8
        %s1999 = scalar_lea.vmem %s3, %s1998
        %p2000 = scmp.lt.s32.totalorder %s118, 1
        %s2001 = scalar_select %p2000, %s118, 1
        %s2002 = smul.addr %s2001, 8
        %s2003 = smul.addr %s2002, 8
        %s2004 = scalar_lea.vmem %s5, %s2003
        %p2005 = scmp.lt.s32.totalorder %s118, 1
        %s2006 = scalar_select %p2005, %s118, 1
        %s2007 = smul.addr %s2006, 2
        %s2008 = smul.addr %s2007, 8
        %s2009 = scalar_lea.vmem %s7, %s2008
        %p2010 = scmp.lt.s32.totalorder %s118, 1
        %s2011 = scalar_select %p2010, %s118, 1
        %s2012 = scalar_lea.vmem %s9, %s2011
        %p2013 = scmp.lt.s32.totalorder %s118, 1
        %s2014 = scalar_select %p2013, %s118, 1
        %s2015 = scalar_lea.vmem %s11, %s2014
        %p2016 = scmp.lt.s32.totalorder %s117, 1
        %s2017 = scalar_select %p2016, %s117, 1
        %p2018 = scmp.lt.s32.totalorder %s119, 1
        %s2019 = scalar_select %p2018, %s119, 1
        %s2020 = smul.addr %s2019, 4
        %s2021 = smul.addr %s2017, 8
        %s2022 = sadd.s32 %s2020, %s2021
        %s2023 = smul.addr %s2022, 4
        %s2024 = scalar_lea.vmem %s13, %s2023
        %p2025 = scmp.lt.s32.totalorder %s117, 1
        %s2026 = scalar_select %p2025, %s117, 1
        %p2027 = scmp.lt.s32.totalorder %s119, 1
        %s2028 = scalar_select %p2027, %s119, 1
        %s2029 = smul.addr %s2028, 4
        %s2030 = smul.addr %s2026, 8
        %s2031 = sadd.s32 %s2029, %s2030
        %s2032 = smul.addr %s2031, 4
        %s2033 = scalar_lea.vmem %s17, %s2032
        %p2034 = scmp.lt.s32.totalorder %s117, 1
        %s2035 = scalar_select %p2034, %s117, 1
        %p2036 = scmp.lt.s32.totalorder %s119, 1
        %s2037 = scalar_select %p2036, %s119, 1
        %s2038 = smul.addr %s2037, 4
        %s2039 = smul.addr %s2035, 8
        %s2040 = sadd.s32 %s2038, %s2039
        %s2041 = smul.addr %s2040, 4
        %s2042 = scalar_lea.vmem %s21, %s2041
        %p2043 = scmp.lt.s32.totalorder %s117, 1
        %s2044 = scalar_select %p2043, %s117, 1
        %p2045 = scmp.lt.s32.totalorder %s119, 1
        %s2046 = scalar_select %p2045, %s119, 1
        %s2047 = smul.addr %s2046, 4
        %s2048 = smul.addr %s2044, 8
        %s2049 = sadd.s32 %s2047, %s2048
        %s2050 = smul.addr %s2049, 4
        %s2051 = scalar_lea.vmem %s29, %s2050
        %p2052 = scmp.lt.s32.totalorder %s117, 1
        %s2053 = scalar_select %p2052, %s117, 1
        %p2054 = scmp.lt.s32.totalorder %s119, 1
        %s2055 = scalar_select %p2054, %s119, 1
        %s2056 = smul.addr %s2055, 4
        %s2057 = smul.addr %s2053, 8
        %s2058 = sadd.s32 %s2056, %s2057
        %s2059 = smul.addr %s2058, 4
        %s2060 = scalar_lea.vmem %s33, %s2059
        %p2061 = scmp.lt.s32.totalorder %s117, 1
        %s2062 = scalar_select %p2061, %s117, 1
        %p2063 = scmp.lt.s32.totalorder %s119, 1
        %s2064 = scalar_select %p2063, %s119, 1
        %s2065 = smul.addr %s2064, 4
        %s2066 = smul.addr %s2062, 8
        %s2067 = sadd.s32 %s2065, %s2066
        %s2068 = smul.addr %s2067, 4
        %s2069 = scalar_lea.vmem %s49, %s2068
        %p2070 = scmp.lt.s32.totalorder %s117, 1
        %s2071 = scalar_select %p2070, %s117, 1
        %p2072 = scmp.lt.s32.totalorder %s119, 1
        %s2073 = scalar_select %p2072, %s119, 1
        %s2074 = smul.addr %s2073, 8
        %s2075 = smul.addr %s2071, 16
        %s2076 = sadd.s32 %s2074, %s2075
        %s2077 = smul.addr %s2076, 4
        %s2078 = scalar_lea.vmem %s53, %s2077
        %p2079 = scmp.lt.s32.totalorder %s119, 1
        %s2080 = scalar_select %p2079, %s119, 1
        %p2081 = scmp.lt.s32.totalorder %s117, 1
        %s2082 = scalar_select %p2081, %s117, 1
        %p2083 = scmp.lt.s32.totalorder %s118, 1
        %s2084 = scalar_select %p2083, %s118, 1
        %s2085 = smul.addr %s2084, 8
        %s2086 = smul.addr %s2082, 16
        %s2087 = sadd.s32 %s2085, %s2086
        %s2088 = smul.addr %s2080, 32
        %s2089 = sadd.s32 %s2087, %s2088
        %s2090 = smul.addr %s2089, 8
        %s2091 = scalar_lea.vmem %s67, %s2090
        %p2093 = scmp.eq.s32.totalorder %s119, 0
        // Predicated region
        $region225: #{transformer_forward.3} parent=147 // pred_check
          %p2094 = pneg %p2093
        $region226: #{transformer_forward.3} parent=147 // pred_check_branch
          %2096 = sbr.rel (%p2094) target = $region228
        $region227: #{transformer_forward.3} parent=147 // pred_region
          %v2097 = vld [vmem:[%s1994] sm:$0xff]
          %v2098 = vld [vmem:[%s1994 + $0x8] sm:$0xff]
          %v2099 = vld [vmem:[%s1994 + $0x10] sm:$0xff]
          %v2100 = vld [vmem:[%s1994 + $0x18] sm:$0xff]
          %v2101 = vld [vmem:[%s1994 + $0x20] sm:$0xff]
          %v2102 = vld [vmem:[%s1994 + $0x28] sm:$0xff]
          %v2103 = vld [vmem:[%s1994 + $0x30] sm:$0xff]
          %v2104 = vld [vmem:[%s1994 + $0x38] sm:$0xff]
          %vm2105 = vcmask 261120
          %2106 = vst.msk [vmem:[%s1974] sm:$0xff] %vm2105, %v2097
          %2107 = vst.msk [vmem:[%s1974 + $0x8] sm:$0xff] %vm2105, %v2098
          %2108 = vst.msk [vmem:[%s1974 + $0x10] sm:$0xff] %vm2105, %v2099
          %2109 = vst.msk [vmem:[%s1974 + $0x18] sm:$0xff] %vm2105, %v2100
          %2110 = vst.msk [vmem:[%s1974 + $0x20] sm:$0xff] %vm2105, %v2101
          %2111 = vst.msk [vmem:[%s1974 + $0x28] sm:$0xff] %vm2105, %v2102
          %2112 = vst.msk [vmem:[%s1974 + $0x30] sm:$0xff] %vm2105, %v2103
          %2113 = vst.msk [vmem:[%s1974 + $0x38] sm:$0xff] %vm2105, %v2104
        $region228: #{transformer_forward.3} parent=147 // pred_fallthru
          _
        %v2114 = vld [vmem:[%s1974] sm:$0xff]
        %v2115 = vld [vmem:[%s1974 + $0x8] sm:$0xff]
        %v2116 = vld [vmem:[%s1974 + $0x10] sm:$0xff]
        %v2117 = vld [vmem:[%s1974 + $0x18] sm:$0xff]
        %v2118 = vld [vmem:[%s1974 + $0x20] sm:$0xff]
        %v2119 = vld [vmem:[%s1974 + $0x28] sm:$0xff]
        %v2120 = vld [vmem:[%s1974 + $0x30] sm:$0xff]
        %v2121 = vld [vmem:[%s1974 + $0x38] sm:$0xff]
        %v2122 = vld [vmem:[%s1999] sm:$0xff]
        %v2123 = vld [vmem:[%s1999 + $0x8] sm:$0xff]
        %v2124 = vld [vmem:[%s2004] sm:$0xff]
        %v2125 = vld [vmem:[%s2004 + $0x8] sm:$0xff]
        %v2126 = vld [vmem:[%s2004 + $0x10] sm:$0xff]
        %v2127 = vld [vmem:[%s2004 + $0x18] sm:$0xff]
        %v2128 = vld [vmem:[%s2004 + $0x20] sm:$0xff]
        %v2129 = vld [vmem:[%s2004 + $0x28] sm:$0xff]
        %v2130 = vld [vmem:[%s2004 + $0x30] sm:$0xff]
        %v2131 = vld [vmem:[%s2004 + $0x38] sm:$0xff]
        %v2132 = vld [vmem:[%s2009] sm:$0xff]
        %v2133 = vld [vmem:[%s2009 + $0x8] sm:$0xff]
        %v2134 = vld [vmem:[%s2012] sm:$0x1]
        %v2135 = vld [vmem:[%s2015] sm:$0x1]
        %v2136 = vadd.f32 %v2114, %v2124
        %v2137 = vadd.f32 %v2115, %v2125
        %v2138 = vadd.f32 %v2116, %v2126
        %v2139 = vadd.f32 %v2117, %v2127
        %v2140 = vadd.f32 %v2118, %v2128
        %v2141 = vadd.f32 %v2119, %v2129
        %v2142 = vadd.f32 %v2120, %v2130
        %v2143 = vadd.f32 %v2121, %v2131
        %v2144 = vld [vmem:[%s2024] sm:$0xf]
        %v2145 = vld [vmem:[%s2024 + $0x4] sm:$0xf]
        %v2146 = vld [vmem:[%s2024 + $0x8] sm:$0xf]
        %v2147 = vld [vmem:[%s2024 + $0xc] sm:$0xf]
        %v2148 = vpack.c.bf16 %v2137, %v2136
        %v2149 = vpack.c.bf16 %v2139, %v2138
        %v2150 = vpack.c.bf16 %v2141, %v2140
        %v2151 = vpack.c.bf16 %v2143, %v2142
        %v2152 = vld [vmem:[%s1586] sm:$0x1]
        %v2154 = vlaneseq
        %v2155 = vshrl.u32 %v2154, 7
        %v2156 = vsub.s32 0, %v2155
        %v2157 = vrot.slane %v2152, %v2156
        %v2163 = vunpack.c.l.b16 %v2144
        %v2164 = vunpack.c.l.b16 %v2145
        %v2165 = vunpack.c.l.b16 %v2146
        %v2166 = vunpack.c.l.b16 %v2147
        %v2167 = vpack.c.b16 %v2164, %v2163
        %v2168 = vpack.c.b16 %v2166, %v2165
        %vm2171 = vcmask 261120
        %v2173 = vsel %vm2171, %v2148, 0
        %v2176 = vsel %vm2171, %v2149, 0
        %v2179 = vsel %vm2171, %v2150, 0
        %v2182 = vsel %vm2171, %v2151, 0
        %2184 = vmatprep.subr.bf16.mxu0 0
        %2185 = vmatpush1.bf16.msra.mxu0 %v2167
        %2186 = vmatprep.subr.bf16.mxu0 0
        %2187 = vmatpush1.bf16.msra.mxu0 %v2168
        %2188 = vmatprep.subr.bf16.mxu0 0
        %2189 = vmatpush1.bf16.msra.mxu0 0
        %2190 = vmatprep.subr.bf16.mxu0 0
        %2191 = vmatpush1.bf16.msra.mxu0 0
        %2192 = vmatprep.subr.bf16.mxu0 0
        %2193 = vmatpush1.bf16.msra.mxu0 0
        %2194 = vmatprep.subr.bf16.mxu0 0
        %2195 = vmatpush1.bf16.msra.mxu0 0
        %2196 = vmatprep.subr.bf16.mxu0 0
        %2197 = vmatpush1.bf16.msra.mxu0 0
        %2198 = vmatprep.subr.bf16.mxu0 0
        %2199 = vmatpush1.bf16.msra.mxu0 0
        %2200 = vmatprep.subr.bf16.mxu0 0
        %2201 = vmatpush1.bf16.msra.mxu0 0
        %2202 = vmatprep.subr.bf16.mxu0 0
        %2203 = vmatpush1.bf16.msra.mxu0 0
        %2204 = vmatprep.subr.bf16.mxu0 0
        %2205 = vmatpush1.bf16.msra.mxu0 0
        %2206 = vmatprep.subr.bf16.mxu0 0
        %2207 = vmatpush1.bf16.msra.mxu0 0
        %2208 = vmatprep.subr.bf16.mxu0 0
        %2209 = vmatpush1.bf16.msra.mxu0 0
        %2210 = vmatprep.subr.bf16.mxu0 0
        %2211 = vmatpush1.bf16.msra.mxu0 0
        %2212 = vmatprep.subr.bf16.mxu0 0
        %2213 = vmatpush1.bf16.msra.mxu0 0
        %2214 = vmatprep.subr.bf16.mxu0 0
        %2215 = vmatpush1.bf16.msra.mxu0 0
        %2216 = vmatprep.mubr.bf16.mxu0 0
        %2217 = vmatmul.mubr.bf16.gmra.mrb[0].mxu0 %v2173
        %v2218 = vpop.f32.mrb[0].mxu0
        %v2219 = vadd.f32 %v2157, %v2218
        %v2220 = vpop.f32.mrb[0].mxu0
        %v2221 = vpop.f32.mrb[0].mxu0
        %v2222 = vadd.f32 %v2157, %v2221
        %v2223 = vpop.f32.mrb[0].mxu0
        %2224 = vmatprep.mubr.bf16.mxu0 0
        %2225 = vmatmul.mubr.bf16.gmra.mrb[0].mxu0 %v2176
        %v2226 = vpop.f32.mrb[0].mxu0
        %v2227 = vadd.f32 %v2157, %v2226
        %v2228 = vpop.f32.mrb[0].mxu0
        %v2229 = vpop.f32.mrb[0].mxu0
        %v2230 = vadd.f32 %v2157, %v2229
        %v2231 = vpop.f32.mrb[0].mxu0
        %2232 = vmatprep.mubr.bf16.mxu0 0
        %2233 = vmatmul.mubr.bf16.gmra.mrb[0].mxu0 %v2179
        %v2234 = vpop.f32.mrb[0].mxu0
        %v2235 = vadd.f32 %v2157, %v2234
        %v2236 = vpop.f32.mrb[0].mxu0
        %v2237 = vpop.f32.mrb[0].mxu0
        %v2238 = vadd.f32 %v2157, %v2237
        %v2239 = vpop.f32.mrb[0].mxu0
        %2240 = vmatprep.mubr.bf16.mxu0 0
        %2241 = vmatmul.mubr.bf16.gmra.mrb[0].mxu0 %v2182
        %v2242 = vpop.f32.mrb[0].mxu0
        %v2243 = vadd.f32 %v2157, %v2242
        %v2244 = vpop.f32.mrb[0].mxu0
        %v2245 = vpop.f32.mrb[0].mxu0
        %v2246 = vadd.f32 %v2157, %v2245
        %v2247 = vpop.f32.mrb[0].mxu0
        %2248 = vdwg.mxu0
        %v2249 = vld [vmem:[%s2033] sm:$0xf]
        %v2250 = vld [vmem:[%s2033 + $0x4] sm:$0xf]
        %v2251 = vld [vmem:[%s2033 + $0x8] sm:$0xf]
        %v2252 = vld [vmem:[%s2033 + $0xc] sm:$0xf]
        %v2253 = vpack.c.bf16 %v2115, %v2114
        %v2254 = vpack.c.bf16 %v2117, %v2116
        %v2255 = vpack.c.bf16 %v2119, %v2118
        %v2256 = vpack.c.bf16 %v2121, %v2120
        %v2257 = vld [vmem:[%s1594] sm:$0x1]
        %v2259 = vlaneseq
        %v2260 = vshrl.u32 %v2259, 7
        %v2261 = vsub.s32 0, %v2260
        %v2262 = vrot.slane %v2257, %v2261
        %v2268 = vunpack.c.l.b16 %v2249
        %v2269 = vunpack.c.l.b16 %v2250
        %v2270 = vunpack.c.l.b16 %v2251
        %v2271 = vunpack.c.l.b16 %v2252
        %v2272 = vpack.c.b16 %v2269, %v2268
        %v2273 = vpack.c.b16 %v2271, %v2270
        %v2277 = vsel %vm2171, %v2253, 0
        %v2280 = vsel %vm2171, %v2254, 0
        %v2283 = vsel %vm2171, %v2255, 0
        %v2286 = vsel %vm2171, %v2256, 0
        %2288 = vmatprep.subr.bf16.mxu0 0
        %2289 = vmatpush1.bf16.msra.mxu0 %v2272
        %2290 = vmatprep.subr.bf16.mxu0 0
        %2291 = vmatpush1.bf16.msra.mxu0 %v2273
        %2292 = vmatprep.subr.bf16.mxu0 0
        %2293 = vmatpush1.bf16.msra.mxu0 0
        %2294 = vmatprep.subr.bf16.mxu0 0
        %2295 = vmatpush1.bf16.msra.mxu0 0
        %2296 = vmatprep.subr.bf16.mxu0 0
        %2297 = vmatpush1.bf16.msra.mxu0 0
        %2298 = vmatprep.subr.bf16.mxu0 0
        %2299 = vmatpush1.bf16.msra.mxu0 0
        %2300 = vmatprep.subr.bf16.mxu0 0
        %2301 = vmatpush1.bf16.msra.mxu0 0
        %2302 = vmatprep.subr.bf16.mxu0 0
        %2303 = vmatpush1.bf16.msra.mxu0 0
        %2304 = vmatprep.subr.bf16.mxu0 0
        %2305 = vmatpush1.bf16.msra.mxu0 0
        %2306 = vmatprep.subr.bf16.mxu0 0
        %2307 = vmatpush1.bf16.msra.mxu0 0
        %2308 = vmatprep.subr.bf16.mxu0 0
        %2309 = vmatpush1.bf16.msra.mxu0 0
        %2310 = vmatprep.subr.bf16.mxu0 0
        %2311 = vmatpush1.bf16.msra.mxu0 0
        %2312 = vmatprep.subr.bf16.mxu0 0
        %2313 = vmatpush1.bf16.msra.mxu0 0
        %2314 = vmatprep.subr.bf16.mxu0 0
        %2315 = vmatpush1.bf16.msra.mxu0 0
        %2316 = vmatprep.subr.bf16.mxu0 0
        %2317 = vmatpush1.bf16.msra.mxu0 0
        %2318 = vmatprep.subr.bf16.mxu0 0
        %2319 = vmatpush1.bf16.msra.mxu0 0
        %2320 = vmatprep.mubr.bf16.mxu0 0
        %2321 = vmatmul.mubr.bf16.gmra.mrb[0].mxu0 %v2277
        %v2322 = vpop.f32.mrb[0].mxu0
        %v2323 = vadd.f32 %v2262, %v2322
        %v2324 = vpop.f32.mrb[0].mxu0
        %v2325 = vpop.f32.mrb[0].mxu0
        %v2326 = vadd.f32 %v2262, %v2325
        %v2327 = vpop.f32.mrb[0].mxu0
        %2328 = vmatprep.mubr.bf16.mxu0 0
        %2329 = vmatmul.mubr.bf16.gmra.mrb[0].mxu0 %v2280
        %v2330 = vpop.f32.mrb[0].mxu0
        %v2331 = vadd.f32 %v2262, %v2330
        %v2332 = vpop.f32.mrb[0].mxu0
        %v2333 = vpop.f32.mrb[0].mxu0
        %v2334 = vadd.f32 %v2262, %v2333
        %v2335 = vpop.f32.mrb[0].mxu0
        %2336 = vmatprep.mubr.bf16.mxu0 0
        %2337 = vmatmul.mubr.bf16.gmra.mrb[0].mxu0 %v2283
        %v2338 = vpop.f32.mrb[0].mxu0
        %v2339 = vadd.f32 %v2262, %v2338
        %v2340 = vpop.f32.mrb[0].mxu0
        %v2341 = vpop.f32.mrb[0].mxu0
        %v2342 = vadd.f32 %v2262, %v2341
        %v2343 = vpop.f32.mrb[0].mxu0
        %2344 = vmatprep.mubr.bf16.mxu0 0
        %2345 = vmatmul.mubr.bf16.gmra.mrb[0].mxu0 %v2286
        %v2346 = vpop.f32.mrb[0].mxu0
        %v2347 = vadd.f32 %v2262, %v2346
        %v2348 = vpop.f32.mrb[0].mxu0
        %v2349 = vpop.f32.mrb[0].mxu0
        %v2350 = vadd.f32 %v2262, %v2349
        %v2351 = vpop.f32.mrb[0].mxu0
        %2352 = vdwg.mxu0
        %v2353 = vlaneseq
        %v2354 = vand.u32 %v2353, 127
        %v2355 = vmul.f32 %v2219, 0.35355338
        %v2356 = vmul.f32 %v2222, 0.35355338
        %v2357 = vmul.f32 %v2227, 0.35355338
        %v2358 = vmul.f32 %v2230, 0.35355338
        %v2359 = vmul.f32 %v2235, 0.35355338
        %v2360 = vmul.f32 %v2238, 0.35355338
        %v2361 = vmul.f32 %v2243, 0.35355338
        %v2362 = vmul.f32 %v2246, 0.35355338
        %v2363 = vpack.c.bf16 %v2356, %v2355
        %v2364 = vpack.c.bf16 %v2358, %v2357
        %v2365 = vpack.c.bf16 %v2360, %v2359
        %v2366 = vpack.c.bf16 %v2362, %v2361
        %vm2367 = vcmp.ge.s32.totalorder %v2354, 0
        %vm2368 = vcmp.lt.s32.totalorder %v2354, 8
        %vm2369 = vmand %vm2367, %vm2368
        %v2370 = vsel %vm2369, 1, 0
        %v2371 = vcvt.s32.f32 %v2370
        %2373 = vrot.lane.b32.xlu0 %v2371, 32
        %v2374 = vpop.permute.xlu0 %2373
        %v2376 = vmul.f32 %v2219, %v2374
        %v2377 = vmul.f32 %v2222, %v2374
        %v2378 = vmul.f32 %v2227, %v2374
        %v2379 = vmul.f32 %v2230, %v2374
        %v2380 = vmul.f32 %v2235, %v2374
        %v2381 = vmul.f32 %v2238, %v2374
        %v2382 = vmul.f32 %v2243, %v2374
        %v2383 = vmul.f32 %v2246, %v2374
        %v2384 = vpack.c.bf16 %v2377, %v2376
        %v2385 = vpack.c.bf16 %v2379, %v2378
        %v2386 = vpack.c.bf16 %v2381, %v2380
        %v2387 = vpack.c.bf16 %v2383, %v2382
        %v2388 = vmul.f32 %v2323, %v2371
        %v2389 = vmul.f32 %v2326, %v2371
        %v2390 = vmul.f32 %v2331, %v2371
        %v2391 = vmul.f32 %v2334, %v2371
        %v2392 = vmul.f32 %v2339, %v2371
        %v2393 = vmul.f32 %v2342, %v2371
        %v2394 = vmul.f32 %v2347, %v2371
        %v2395 = vmul.f32 %v2350, %v2371
        %v2396 = vpack.c.bf16 %v2389, %v2388
        %v2397 = vpack.c.bf16 %v2391, %v2390
        %v2398 = vpack.c.bf16 %v2393, %v2392
        %v2399 = vpack.c.bf16 %v2395, %v2394
        %v2401 = vlaneseq
        %v2402 = vshrl.u32 %v2401, 7
        %v2403 = vsub.s32 0, %v2402
        %v2404 = vrot.slane %v2134, %v2403
        %2410 = vrot.lane.b32.xlu0 %v2384, 96
        %v2411 = vpop.permute.xlu0 %2410
        %2412 = vrot.lane.b32.xlu0 %v2385, 96
        %v2413 = vpop.permute.xlu0 %2412
        %2414 = vrot.lane.b32.xlu0 %v2386, 96
        %v2415 = vpop.permute.xlu0 %2414
        %2416 = vrot.lane.b32.xlu0 %v2387, 96
        %v2417 = vpop.permute.xlu0 %2416
        %v2419 = vsel %vm2171, %v2363, 0
        %v2422 = vsel %vm2171, %v2364, 0
        %v2425 = vsel %vm2171, %v2365, 0
        %v2428 = vsel %vm2171, %v2366, 0
        %v2431 = vsel %vm2171, %v2411, 0
        %v2434 = vsel %vm2171, %v2413, 0
        %v2437 = vsel %vm2171, %v2415, 0
        %v2440 = vsel %vm2171, %v2417, 0
        %2442 = vmatprep.subr.bf16.mxu0 0
        %2443 = vmatpush1.bf16.xpose.msra.mxu0 %v2431
        %2444 = vmatprep.subr.bf16.mxu0 0
        %2445 = vmatpush1.bf16.xpose.msra.mxu0 %v2434
        %2446 = vmatprep.subr.bf16.mxu0 0
        %2447 = vmatpush1.bf16.xpose.msra.mxu0 %v2437
        %2448 = vmatprep.subr.bf16.mxu0 0
        %2449 = vmatpush1.bf16.xpose.msra.mxu0 %v2440
        %2450 = vmatprep.subr.bf16.mxu0 0
        %2451 = vmatpush1.bf16.xpose.msra.mxu0 0
        %2452 = vmatprep.subr.bf16.mxu0 0
        %2453 = vmatpush1.bf16.xpose.msra.mxu0 0
        %2454 = vmatprep.subr.bf16.mxu0 0
        %2455 = vmatpush1.bf16.xpose.msra.mxu0 0
        %2456 = vmatprep.subr.bf16.mxu0 0
        %2457 = vmatpush1.bf16.xpose.msra.mxu0 0
        %2458 = vmatprep.subr.bf16.mxu0 0
        %2459 = vmatpush1.bf16.xpose.msra.mxu0 0
        %2460 = vmatprep.subr.bf16.mxu0 0
        %2461 = vmatpush1.bf16.xpose.msra.mxu0 0
        %2462 = vmatprep.subr.bf16.mxu0 0
        %2463 = vmatpush1.bf16.xpose.msra.mxu0 0
        %2464 = vmatprep.subr.bf16.mxu0 0
        %2465 = vmatpush1.bf16.xpose.msra.mxu0 0
        %2466 = vmatprep.subr.bf16.mxu0 0
        %2467 = vmatpush1.bf16.xpose.msra.mxu0 0
        %2468 = vmatprep.subr.bf16.mxu0 0
        %2469 = vmatpush1.bf16.xpose.msra.mxu0 0
        %2470 = vmatprep.subr.bf16.mxu0 0
        %2471 = vmatpush1.bf16.xpose.msra.mxu0 0
        %2472 = vmatprep.subr.bf16.mxu0 0
        %2473 = vmatpush1.bf16.xpose.msra.mxu0 0
        %2474 = vmatprep.mubr.bf16.mxu0 0
        %2475 = vmatmul.mubr.bf16.gmra.mrb[0].mxu0 %v2419
        %v2476 = vpop.f32.mrb[0].mxu0
        %v2477 = vadd.f32 %v2404, %v2476
        %v2478 = vpop.f32.mrb[0].mxu0
        %v2479 = vpop.f32.mrb[0].mxu0
        %v2480 = vadd.f32 %v2404, %v2479
        %v2481 = vpop.f32.mrb[0].mxu0
        %2482 = vmatprep.mubr.bf16.mxu0 0
        %2483 = vmatmul.mubr.bf16.gmra.mrb[0].mxu0 %v2422
        %v2484 = vpop.f32.mrb[0].mxu0
        %v2485 = vadd.f32 %v2404, %v2484
        %v2486 = vpop.f32.mrb[0].mxu0
        %v2487 = vpop.f32.mrb[0].mxu0
        %v2488 = vadd.f32 %v2404, %v2487
        %v2489 = vpop.f32.mrb[0].mxu0
        %2490 = vmatprep.mubr.bf16.mxu0 0
        %2491 = vmatmul.mubr.bf16.gmra.mrb[0].mxu0 %v2425
        %v2492 = vpop.f32.mrb[0].mxu0
        %v2493 = vadd.f32 %v2404, %v2492
        %v2494 = vpop.f32.mrb[0].mxu0
        %v2495 = vpop.f32.mrb[0].mxu0
        %v2496 = vadd.f32 %v2404, %v2495
        %v2497 = vpop.f32.mrb[0].mxu0
        %2498 = vmatprep.mubr.bf16.mxu0 0
        %2499 = vmatmul.mubr.bf16.gmra.mrb[0].mxu0 %v2428
        %v2500 = vpop.f32.mrb[0].mxu0
        %v2501 = vadd.f32 %v2404, %v2500
        %v2502 = vpop.f32.mrb[0].mxu0
        %v2503 = vpop.f32.mrb[0].mxu0
        %v2504 = vadd.f32 %v2404, %v2503
        %v2505 = vpop.f32.mrb[0].mxu0
        %2506 = vdwg.mxu0
        %vm2507 = vcmask 523264
        %v2508 = vsel %vm2507, %v2477, -inf
        %2509 = vmax.xlane.f32.xlu0 %v2508
        %v2510 = vpop.xlane.xlu0 %2509
        %v2511 = vsel %vm2507, %v2480, -inf
        %2512 = vmax.xlane.f32.xlu0 %v2511
        %v2513 = vpop.xlane.xlu0 %2512
        %v2514 = vsel %vm2507, %v2485, -inf
        %2515 = vmax.xlane.f32.xlu0 %v2514
        %v2516 = vpop.xlane.xlu0 %2515
        %v2517 = vsel %vm2507, %v2488, -inf
        %2518 = vmax.xlane.f32.xlu0 %v2517
        %v2519 = vpop.xlane.xlu0 %2518
        %v2520 = vsel %vm2507, %v2493, -inf
        %2521 = vmax.xlane.f32.xlu0 %v2520
        %v2522 = vpop.xlane.xlu0 %2521
        %v2523 = vsel %vm2507, %v2496, -inf
        %2524 = vmax.xlane.f32.xlu0 %v2523
        %v2525 = vpop.xlane.xlu0 %2524
        %v2526 = vsel %vm2507, %v2501, -inf
        %2527 = vmax.xlane.f32.xlu0 %v2526
        %v2528 = vpop.xlane.xlu0 %2527
        %v2529 = vsel %vm2507, %v2504, -inf
        %2530 = vmax.xlane.f32.xlu0 %v2529
        %v2531 = vpop.xlane.xlu0 %2530
        %v2532 = vsub.f32 %v2477, %v2510
        %v2533 = vsub.f32 %v2480, %v2513
        %v2534 = vsub.f32 %v2485, %v2516
        %v2535 = vsub.f32 %v2488, %v2519
        %v2536 = vsub.f32 %v2493, %v2522
        %v2537 = vsub.f32 %v2496, %v2525
        %v2538 = vsub.f32 %v2501, %v2528
        %v2539 = vsub.f32 %v2504, %v2531
        %v2540 = vmul.f32 %v2532, 1.442695
        %v2541 = vpow.pop %v2540
        %v2542 = vmul.f32 %v2533, 1.442695
        %v2543 = vpow.pop %v2542
        %v2544 = vmul.f32 %v2534, 1.442695
        %v2545 = vpow.pop %v2544
        %v2546 = vmul.f32 %v2535, 1.442695
        %v2547 = vpow.pop %v2546
        %v2548 = vmul.f32 %v2536, 1.442695
        %v2549 = vpow.pop %v2548
        %v2550 = vmul.f32 %v2537, 1.442695
        %v2551 = vpow.pop %v2550
        %v2552 = vmul.f32 %v2538, 1.442695
        %v2553 = vpow.pop %v2552
        %v2554 = vmul.f32 %v2539, 1.442695
        %v2555 = vpow.pop %v2554
        %v2556 = vsel %vm2507, %v2541, 0.0
        %2557 = vadd.xlane.f32.xlu0 %v2556
        %v2558 = vpop.xlane.xlu0 %2557
        %v2559 = vsel %vm2507, %v2543, 0.0
        %2560 = vadd.xlane.f32.xlu0 %v2559
        %v2561 = vpop.xlane.xlu0 %2560
        %v2562 = vsel %vm2507, %v2545, 0.0
        %2563 = vadd.xlane.f32.xlu0 %v2562
        %v2564 = vpop.xlane.xlu0 %2563
        %v2565 = vsel %vm2507, %v2547, 0.0
        %2566 = vadd.xlane.f32.xlu0 %v2565
        %v2567 = vpop.xlane.xlu0 %2566
        %v2568 = vsel %vm2507, %v2549, 0.0
        %2569 = vadd.xlane.f32.xlu0 %v2568
        %v2570 = vpop.xlane.xlu0 %2569
        %v2571 = vsel %vm2507, %v2551, 0.0
        %2572 = vadd.xlane.f32.xlu0 %v2571
        %v2573 = vpop.xlane.xlu0 %2572
        %v2574 = vsel %vm2507, %v2553, 0.0
        %2575 = vadd.xlane.f32.xlu0 %v2574
        %v2576 = vpop.xlane.xlu0 %2575
        %v2577 = vsel %vm2507, %v2555, 0.0
        %2578 = vadd.xlane.f32.xlu0 %v2577
        %v2579 = vpop.xlane.xlu0 %2578
        %v2580 = vrcp.pop %v2558
        %v2581 = vrcp.pop %v2561
        %v2582 = vrcp.pop %v2564
        %v2583 = vrcp.pop %v2567
        %v2584 = vrcp.pop %v2570
        %v2585 = vrcp.pop %v2573
        %v2586 = vrcp.pop %v2576
        %v2587 = vrcp.pop %v2579
        %v2588 = vmul.f32 %v2541, %v2580
        %v2589 = vmul.f32 %v2543, %v2581
        %v2590 = vmul.f32 %v2545, %v2582
        %v2591 = vmul.f32 %v2547, %v2583
        %v2592 = vmul.f32 %v2549, %v2584
        %v2593 = vmul.f32 %v2551, %v2585
        %v2594 = vmul.f32 %v2553, %v2586
        %v2595 = vmul.f32 %v2555, %v2587
        %v2596 = vpack.c.bf16 %v2589, %v2588
        %v2597 = vpack.c.bf16 %v2591, %v2590
        %v2598 = vpack.c.bf16 %v2593, %v2592
        %v2599 = vpack.c.bf16 %v2595, %v2594
        %vm2600 = vcmp.ge.s32.totalorder %v2354, 8
        %vm2601 = vcmp.lt.s32.totalorder %v2354, 16
        %vm2602 = vmand %vm2600, %vm2601
        %v2603 = vsel %vm2602, 1, 0
        %v2604 = vcvt.s32.f32 %v2603
        %2606 = vrot.lane.b32.xlu0 %v2604, 32
        %v2607 = vpop.permute.xlu0 %2606
        %v2609 = vmul.f32 %v2219, %v2607
        %v2610 = vmul.f32 %v2222, %v2607
        %v2611 = vmul.f32 %v2227, %v2607
        %v2612 = vmul.f32 %v2230, %v2607
        %v2613 = vmul.f32 %v2235, %v2607
        %v2614 = vmul.f32 %v2238, %v2607
        %v2615 = vmul.f32 %v2243, %v2607
        %v2616 = vmul.f32 %v2246, %v2607
        %v2617 = vpack.c.bf16 %v2610, %v2609
        %v2618 = vpack.c.bf16 %v2612, %v2611
        %v2619 = vpack.c.bf16 %v2614, %v2613
        %v2620 = vpack.c.bf16 %v2616, %v2615
        %v2621 = vmul.f32 %v2323, %v2604
        %v2622 = vmul.f32 %v2326, %v2604
        %v2623 = vmul.f32 %v2331, %v2604
        %v2624 = vmul.f32 %v2334, %v2604
        %v2625 = vmul.f32 %v2339, %v2604
        %v2626 = vmul.f32 %v2342, %v2604
        %v2627 = vmul.f32 %v2347, %v2604
        %v2628 = vmul.f32 %v2350, %v2604
        %v2629 = vpack.c.bf16 %v2622, %v2621
        %v2630 = vpack.c.bf16 %v2624, %v2623
        %v2631 = vpack.c.bf16 %v2626, %v2625
        %v2632 = vpack.c.bf16 %v2628, %v2627
        %2637 = vrot.lane.b32.xlu0 %v2617, 96
        %v2638 = vpop.permute.xlu0 %2637
        %2639 = vrot.lane.b32.xlu0 %v2618, 96
        %v2640 = vpop.permute.xlu0 %2639
        %2641 = vrot.lane.b32.xlu0 %v2619, 96
        %v2642 = vpop.permute.xlu0 %2641
        %2643 = vrot.lane.b32.xlu0 %v2620, 96
        %v2644 = vpop.permute.xlu0 %2643
        %v2646 = vsel %vm2171, %v2638, 0
        %v2649 = vsel %vm2171, %v2640, 0
        %v2652 = vsel %vm2171, %v2642, 0
        %v2655 = vsel %vm2171, %v2644, 0
        %2657 = vmatprep.subr.bf16.mxu0 0
        %2658 = vmatpush1.bf16.xpose.msra.mxu0 %v2646
        %2659 = vmatprep.subr.bf16.mxu0 0
        %2660 = vmatpush1.bf16.xpose.msra.mxu0 %v2649
        %2661 = vmatprep.subr.bf16.mxu0 0
        %2662 = vmatpush1.bf16.xpose.msra.mxu0 %v2652
        %2663 = vmatprep.subr.bf16.mxu0 0
        %2664 = vmatpush1.bf16.xpose.msra.mxu0 %v2655
        %2665 = vmatprep.subr.bf16.mxu0 0
        %2666 = vmatpush1.bf16.xpose.msra.mxu0 0
        %2667 = vmatprep.subr.bf16.mxu0 0
        %2668 = vmatpush1.bf16.xpose.msra.mxu0 0
        %2669 = vmatprep.subr.bf16.mxu0 0
        %2670 = vmatpush1.bf16.xpose.msra.mxu0 0
        %2671 = vmatprep.subr.bf16.mxu0 0
        %2672 = vmatpush1.bf16.xpose.msra.mxu0 0
        %2673 = vmatprep.subr.bf16.mxu0 0
        %2674 = vmatpush1.bf16.xpose.msra.mxu0 0
        %2675 = vmatprep.subr.bf16.mxu0 0
        %2676 = vmatpush1.bf16.xpose.msra.mxu0 0
        %2677 = vmatprep.subr.bf16.mxu0 0
        %2678 = vmatpush1.bf16.xpose.msra.mxu0 0
        %2679 = vmatprep.subr.bf16.mxu0 0
        %2680 = vmatpush1.bf16.xpose.msra.mxu0 0
        %2681 = vmatprep.subr.bf16.mxu0 0
        %2682 = vmatpush1.bf16.xpose.msra.mxu0 0
        %2683 = vmatprep.subr.bf16.mxu0 0
        %2684 = vmatpush1.bf16.xpose.msra.mxu0 0
        %2685 = vmatprep.subr.bf16.mxu0 0
        %2686 = vmatpush1.bf16.xpose.msra.mxu0 0
        %2687 = vmatprep.subr.bf16.mxu0 0
        %2688 = vmatpush1.bf16.xpose.msra.mxu0 0
        %2689 = vmatprep.mubr.bf16.mxu0 0
        %2690 = vmatmul.mubr.bf16.gmra.mrb[0].mxu0 %v2419
        %v2691 = vpop.f32.mrb[0].mxu0
        %v2692 = vadd.f32 %v2404, %v2691
        %v2693 = vpop.f32.mrb[0].mxu0
        %v2694 = vpop.f32.mrb[0].mxu0
        %v2695 = vadd.f32 %v2404, %v2694
        %v2696 = vpop.f32.mrb[0].mxu0
        %2697 = vmatprep.mubr.bf16.mxu0 0
        %2698 = vmatmul.mubr.bf16.gmra.mrb[0].mxu0 %v2422
        %v2699 = vpop.f32.mrb[0].mxu0
        %v2700 = vadd.f32 %v2404, %v2699
        %v2701 = vpop.f32.mrb[0].mxu0
        %v2702 = vpop.f32.mrb[0].mxu0
        %v2703 = vadd.f32 %v2404, %v2702
        %v2704 = vpop.f32.mrb[0].mxu0
        %2705 = vmatprep.mubr.bf16.mxu0 0
        %2706 = vmatmul.mubr.bf16.gmra.mrb[0].mxu0 %v2425
        %v2707 = vpop.f32.mrb[0].mxu0
        %v2708 = vadd.f32 %v2404, %v2707
        %v2709 = vpop.f32.mrb[0].mxu0
        %v2710 = vpop.f32.mrb[0].mxu0
        %v2711 = vadd.f32 %v2404, %v2710
        %v2712 = vpop.f32.mrb[0].mxu0
        %2713 = vmatprep.mubr.bf16.mxu0 0
        %2714 = vmatmul.mubr.bf16.gmra.mrb[0].mxu0 %v2428
        %v2715 = vpop.f32.mrb[0].mxu0
        %v2716 = vadd.f32 %v2404, %v2715
        %v2717 = vpop.f32.mrb[0].mxu0
        %v2718 = vpop.f32.mrb[0].mxu0
        %v2719 = vadd.f32 %v2404, %v2718
        %v2720 = vpop.f32.mrb[0].mxu0
        %2721 = vdwg.mxu0
        %v2722 = vsel %vm2507, %v2692, -inf
        %2723 = vmax.xlane.f32.xlu0 %v2722
        %v2724 = vpop.xlane.xlu0 %2723
        %v2725 = vsel %vm2507, %v2695, -inf
        %2726 = vmax.xlane.f32.xlu0 %v2725
        %v2727 = vpop.xlane.xlu0 %2726
        %v2728 = vsel %vm2507, %v2700, -inf
        %2729 = vmax.xlane.f32.xlu0 %v2728
        %v2730 = vpop.xlane.xlu0 %2729
        %v2731 = vsel %vm2507, %v2703, -inf
        %2732 = vmax.xlane.f32.xlu0 %v2731
        %v2733 = vpop.xlane.xlu0 %2732
        %v2734 = vsel %vm2507, %v2708, -inf
        %2735 = vmax.xlane.f32.xlu0 %v2734
        %v2736 = vpop.xlane.xlu0 %2735
        %v2737 = vsel %vm2507, %v2711, -inf
        %2738 = vmax.xlane.f32.xlu0 %v2737
        %v2739 = vpop.xlane.xlu0 %2738
        %v2740 = vsel %vm2507, %v2716, -inf
        %2741 = vmax.xlane.f32.xlu0 %v2740
        %v2742 = vpop.xlane.xlu0 %2741
        %v2743 = vsel %vm2507, %v2719, -inf
        %2744 = vmax.xlane.f32.xlu0 %v2743
        %v2745 = vpop.xlane.xlu0 %2744
        %v2746 = vsub.f32 %v2692, %v2724
        %v2747 = vsub.f32 %v2695, %v2727
        %v2748 = vsub.f32 %v2700, %v2730
        %v2749 = vsub.f32 %v2703, %v2733
        %v2750 = vsub.f32 %v2708, %v2736
        %v2751 = vsub.f32 %v2711, %v2739
        %v2752 = vsub.f32 %v2716, %v2742
        %v2753 = vsub.f32 %v2719, %v2745
        %v2754 = vmul.f32 %v2746, 1.442695
        %v2755 = vpow.pop %v2754
        %v2756 = vmul.f32 %v2747, 1.442695
        %v2757 = vpow.pop %v2756
        %v2758 = vmul.f32 %v2748, 1.442695
        %v2759 = vpow.pop %v2758
        %v2760 = vmul.f32 %v2749, 1.442695
        %v2761 = vpow.pop %v2760
        %v2762 = vmul.f32 %v2750, 1.442695
        %v2763 = vpow.pop %v2762
        %v2764 = vmul.f32 %v2751, 1.442695
        %v2765 = vpow.pop %v2764
        %v2766 = vmul.f32 %v2752, 1.442695
        %v2767 = vpow.pop %v2766
        %v2768 = vmul.f32 %v2753, 1.442695
        %v2769 = vpow.pop %v2768
        %v2770 = vsel %vm2507, %v2755, 0.0
        %2771 = vadd.xlane.f32.xlu0 %v2770
        %v2772 = vpop.xlane.xlu0 %2771
        %v2773 = vsel %vm2507, %v2757, 0.0
        %2774 = vadd.xlane.f32.xlu0 %v2773
        %v2775 = vpop.xlane.xlu0 %2774
        %v2776 = vsel %vm2507, %v2759, 0.0
        %2777 = vadd.xlane.f32.xlu0 %v2776
        %v2778 = vpop.xlane.xlu0 %2777
        %v2779 = vsel %vm2507, %v2761, 0.0
        %2780 = vadd.xlane.f32.xlu0 %v2779
        %v2781 = vpop.xlane.xlu0 %2780
        %v2782 = vsel %vm2507, %v2763, 0.0
        %2783 = vadd.xlane.f32.xlu0 %v2782
        %v2784 = vpop.xlane.xlu0 %2783
        %v2785 = vsel %vm2507, %v2765, 0.0
        %2786 = vadd.xlane.f32.xlu0 %v2785
        %v2787 = vpop.xlane.xlu0 %2786
        %v2788 = vsel %vm2507, %v2767, 0.0
        %2789 = vadd.xlane.f32.xlu0 %v2788
        %v2790 = vpop.xlane.xlu0 %2789
        %v2791 = vsel %vm2507, %v2769, 0.0
        %2792 = vadd.xlane.f32.xlu0 %v2791
        %v2793 = vpop.xlane.xlu0 %2792
        %v2794 = vrcp.pop %v2772
        %v2795 = vrcp.pop %v2775
        %v2796 = vrcp.pop %v2778
        %v2797 = vrcp.pop %v2781
        %v2798 = vrcp.pop %v2784
        %v2799 = vrcp.pop %v2787
        %v2800 = vrcp.pop %v2790
        %v2801 = vrcp.pop %v2793
        %v2802 = vmul.f32 %v2755, %v2794
        %v2803 = vmul.f32 %v2757, %v2795
        %v2804 = vmul.f32 %v2759, %v2796
        %v2805 = vmul.f32 %v2761, %v2797
        %v2806 = vmul.f32 %v2763, %v2798
        %v2807 = vmul.f32 %v2765, %v2799
        %v2808 = vmul.f32 %v2767, %v2800
        %v2809 = vmul.f32 %v2769, %v2801
        %v2810 = vpack.c.bf16 %v2803, %v2802
        %v2811 = vpack.c.bf16 %v2805, %v2804
        %v2812 = vpack.c.bf16 %v2807, %v2806
        %v2813 = vpack.c.bf16 %v2809, %v2808
        %v2815 = vsel %vm2507, %v2810, 0
        %v2818 = vsel %vm2507, %v2811, 0
        %v2821 = vsel %vm2507, %v2812, 0
        %v2824 = vsel %vm2507, %v2813, 0
        %2826 = vmatprep.subr.bf16.mxu0 0
        %2827 = vmatpush1.bf16.msra.mxu0 %v2629
        %2828 = vmatprep.subr.bf16.mxu0 0
        %2829 = vmatpush1.bf16.msra.mxu0 %v2630
        %2830 = vmatprep.subr.bf16.mxu0 0
        %2831 = vmatpush1.bf16.msra.mxu0 %v2631
        %2832 = vmatprep.subr.bf16.mxu0 0
        %2833 = vmatpush1.bf16.msra.mxu0 %v2632
        %2834 = vmatprep.subr.bf16.mxu0 0
        %2835 = vmatpush1.bf16.msra.mxu0 0
        %2836 = vmatprep.subr.bf16.mxu0 0
        %2837 = vmatpush1.bf16.msra.mxu0 0
        %2838 = vmatprep.subr.bf16.mxu0 0
        %2839 = vmatpush1.bf16.msra.mxu0 0
        %2840 = vmatprep.subr.bf16.mxu0 0
        %2841 = vmatpush1.bf16.msra.mxu0 0
        %2842 = vmatprep.subr.bf16.mxu0 0
        %2843 = vmatpush1.bf16.msra.mxu0 0
        %2844 = vmatprep.subr.bf16.mxu0 0
        %2845 = vmatpush1.bf16.msra.mxu0 0
        %2846 = vmatprep.subr.bf16.mxu0 0
        %2847 = vmatpush1.bf16.msra.mxu0 0
        %2848 = vmatprep.subr.bf16.mxu0 0
        %2849 = vmatpush1.bf16.msra.mxu0 0
        %2850 = vmatprep.subr.bf16.mxu0 0
        %2851 = vmatpush1.bf16.msra.mxu0 0
        %2852 = vmatprep.subr.bf16.mxu0 0
        %2853 = vmatpush1.bf16.msra.mxu0 0
        %2854 = vmatprep.subr.bf16.mxu0 0
        %2855 = vmatpush1.bf16.msra.mxu0 0
        %2856 = vmatprep.subr.bf16.mxu0 0
        %2857 = vmatpush1.bf16.msra.mxu0 0
        %2858 = vmatprep.mubr.bf16.mxu0 0
        %2859 = vmatmul.mubr.bf16.gmra.mrb[0].mxu0 %v2815
        %v2860 = vpop.f32.mrb[0].mxu0
        %v2861 = vadd.f32 0.0, %v2860
        %v2862 = vpop.f32.mrb[0].mxu0
        %v2863 = vpop.f32.mrb[0].mxu0
        %v2864 = vadd.f32 0.0, %v2863
        %v2865 = vpop.f32.mrb[0].mxu0
        %2866 = vmatprep.mubr.bf16.mxu0 0
        %2867 = vmatmul.mubr.bf16.gmra.mrb[0].mxu0 %v2818
        %v2868 = vpop.f32.mrb[0].mxu0
        %v2869 = vadd.f32 0.0, %v2868
        %v2870 = vpop.f32.mrb[0].mxu0
        %v2871 = vpop.f32.mrb[0].mxu0
        %v2872 = vadd.f32 0.0, %v2871
        %v2873 = vpop.f32.mrb[0].mxu0
        %2874 = vmatprep.mubr.bf16.mxu0 0
        %2875 = vmatmul.mubr.bf16.gmra.mrb[0].mxu0 %v2821
        %v2876 = vpop.f32.mrb[0].mxu0
        %v2877 = vadd.f32 0.0, %v2876
        %v2878 = vpop.f32.mrb[0].mxu0
        %v2879 = vpop.f32.mrb[0].mxu0
        %v2880 = vadd.f32 0.0, %v2879
        %v2881 = vpop.f32.mrb[0].mxu0
        %2882 = vmatprep.mubr.bf16.mxu0 0
        %2883 = vmatmul.mubr.bf16.gmra.mrb[0].mxu0 %v2824
        %v2884 = vpop.f32.mrb[0].mxu0
        %v2885 = vadd.f32 0.0, %v2884
        %v2886 = vpop.f32.mrb[0].mxu0
        %v2887 = vpop.f32.mrb[0].mxu0
        %v2888 = vadd.f32 0.0, %v2887
        %v2889 = vpop.f32.mrb[0].mxu0
        %2890 = vdwg.mxu0
        %v2892 = vsel %vm2507, %v2596, 0
        %v2895 = vsel %vm2507, %v2597, 0
        %v2898 = vsel %vm2507, %v2598, 0
        %v2901 = vsel %vm2507, %v2599, 0
        %2903 = vmatprep.subr.bf16.mxu0 0
        %2904 = vmatpush1.bf16.msra.mxu0 %v2396
        %2905 = vmatprep.subr.bf16.mxu0 0
        %2906 = vmatpush1.bf16.msra.mxu0 %v2397
        %2907 = vmatprep.subr.bf16.mxu0 0
        %2908 = vmatpush1.bf16.msra.mxu0 %v2398
        %2909 = vmatprep.subr.bf16.mxu0 0
        %2910 = vmatpush1.bf16.msra.mxu0 %v2399
        %2911 = vmatprep.subr.bf16.mxu0 0
        %2912 = vmatpush1.bf16.msra.mxu0 0
        %2913 = vmatprep.subr.bf16.mxu0 0
        %2914 = vmatpush1.bf16.msra.mxu0 0
        %2915 = vmatprep.subr.bf16.mxu0 0
        %2916 = vmatpush1.bf16.msra.mxu0 0
        %2917 = vmatprep.subr.bf16.mxu0 0
        %2918 = vmatpush1.bf16.msra.mxu0 0
        %2919 = vmatprep.subr.bf16.mxu0 0
        %2920 = vmatpush1.bf16.msra.mxu0 0
        %2921 = vmatprep.subr.bf16.mxu0 0
        %2922 = vmatpush1.bf16.msra.mxu0 0
        %2923 = vmatprep.subr.bf16.mxu0 0
        %2924 = vmatpush1.bf16.msra.mxu0 0
        %2925 = vmatprep.subr.bf16.mxu0 0
        %2926 = vmatpush1.bf16.msra.mxu0 0
        %2927 = vmatprep.subr.bf16.mxu0 0
        %2928 = vmatpush1.bf16.msra.mxu0 0
        %2929 = vmatprep.subr.bf16.mxu0 0
        %2930 = vmatpush1.bf16.msra.mxu0 0
        %2931 = vmatprep.subr.bf16.mxu0 0
        %2932 = vmatpush1.bf16.msra.mxu0 0
        %2933 = vmatprep.subr.bf16.mxu0 0
        %2934 = vmatpush1.bf16.msra.mxu0 0
        %2935 = vmatprep.mubr.bf16.mxu0 0
        %2936 = vmatmul.mubr.bf16.gmra.mrb[0].mxu0 %v2892
        %v2937 = vpop.f32.mrb[0].mxu0
        %v2938 = vadd.f32 %v2861, %v2937
        %v2939 = vpop.f32.mrb[0].mxu0
        %v2940 = vpop.f32.mrb[0].mxu0
        %v2941 = vadd.f32 %v2864, %v2940
        %v2942 = vpop.f32.mrb[0].mxu0
        %2943 = vmatprep.mubr.bf16.mxu0 0
        %2944 = vmatmul.mubr.bf16.gmra.mrb[0].mxu0 %v2895
        %v2945 = vpop.f32.mrb[0].mxu0
        %v2946 = vadd.f32 %v2869, %v2945
        %v2947 = vpop.f32.mrb[0].mxu0
        %v2948 = vpop.f32.mrb[0].mxu0
        %v2949 = vadd.f32 %v2872, %v2948
        %v2950 = vpop.f32.mrb[0].mxu0
        %2951 = vmatprep.mubr.bf16.mxu0 0
        %2952 = vmatmul.mubr.bf16.gmra.mrb[0].mxu0 %v2898
        %v2953 = vpop.f32.mrb[0].mxu0
        %v2954 = vadd.f32 %v2877, %v2953
        %v2955 = vpop.f32.mrb[0].mxu0
        %v2956 = vpop.f32.mrb[0].mxu0
        %v2957 = vadd.f32 %v2880, %v2956
        %v2958 = vpop.f32.mrb[0].mxu0
        %2959 = vmatprep.mubr.bf16.mxu0 0
        %2960 = vmatmul.mubr.bf16.gmra.mrb[0].mxu0 %v2901
        %v2961 = vpop.f32.mrb[0].mxu0
        %v2962 = vadd.f32 %v2885, %v2961
        %v2963 = vpop.f32.mrb[0].mxu0
        %v2964 = vpop.f32.mrb[0].mxu0
        %v2965 = vadd.f32 %v2888, %v2964
        %v2966 = vpop.f32.mrb[0].mxu0
        %2967 = vdwg.mxu0
        %vm2968 = vcmp.ge.s32.totalorder %v2354, 16
        %vm2969 = vcmp.lt.s32.totalorder %v2354, 24
        %vm2970 = vmand %vm2968, %vm2969
        %v2971 = vsel %vm2970, 1, 0
        %v2972 = vcvt.s32.f32 %v2971
        %2974 = vrot.lane.b32.xlu0 %v2972, 32
        %v2975 = vpop.permute.xlu0 %2974
        %v2977 = vmul.f32 %v2219, %v2975
        %v2978 = vmul.f32 %v2222, %v2975
        %v2979 = vmul.f32 %v2227, %v2975
        %v2980 = vmul.f32 %v2230, %v2975
        %v2981 = vmul.f32 %v2235, %v2975
        %v2982 = vmul.f32 %v2238, %v2975
        %v2983 = vmul.f32 %v2243, %v2975
        %v2984 = vmul.f32 %v2246, %v2975
        %v2985 = vpack.c.bf16 %v2978, %v2977
        %v2986 = vpack.c.bf16 %v2980, %v2979
        %v2987 = vpack.c.bf16 %v2982, %v2981
        %v2988 = vpack.c.bf16 %v2984, %v2983
        %v2989 = vmul.f32 %v2323, %v2972
        %v2990 = vmul.f32 %v2326, %v2972
        %v2991 = vmul.f32 %v2331, %v2972
        %v2992 = vmul.f32 %v2334, %v2972
        %v2993 = vmul.f32 %v2339, %v2972
        %v2994 = vmul.f32 %v2342, %v2972
        %v2995 = vmul.f32 %v2347, %v2972
        %v2996 = vmul.f32 %v2350, %v2972
        %v2997 = vpack.c.bf16 %v2990, %v2989
        %v2998 = vpack.c.bf16 %v2992, %v2991
        %v2999 = vpack.c.bf16 %v2994, %v2993
        %v3000 = vpack.c.bf16 %v2996, %v2995
        %3005 = vrot.lane.b32.xlu0 %v2985, 96
        %v3006 = vpop.permute.xlu0 %3005
        %3007 = vrot.lane.b32.xlu0 %v2986, 96
        %v3008 = vpop.permute.xlu0 %3007
        %3009 = vrot.lane.b32.xlu0 %v2987, 96
        %v3010 = vpop.permute.xlu0 %3009
        %3011 = vrot.lane.b32.xlu0 %v2988, 96
        %v3012 = vpop.permute.xlu0 %3011
        %v3014 = vsel %vm2171, %v3006, 0
        %v3017 = vsel %vm2171, %v3008, 0
        %v3020 = vsel %vm2171, %v3010, 0
        %v3023 = vsel %vm2171, %v3012, 0
        %3025 = vmatprep.subr.bf16.mxu0 0
        %3026 = vmatpush1.bf16.xpose.msra.mxu0 %v3014
        %3027 = vmatprep.subr.bf16.mxu0 0
        %3028 = vmatpush1.bf16.xpose.msra.mxu0 %v3017
        %3029 = vmatprep.subr.bf16.mxu0 0
        %3030 = vmatpush1.bf16.xpose.msra.mxu0 %v3020
        %3031 = vmatprep.subr.bf16.mxu0 0
        %3032 = vmatpush1.bf16.xpose.msra.mxu0 %v3023
        %3033 = vmatprep.subr.bf16.mxu0 0
        %3034 = vmatpush1.bf16.xpose.msra.mxu0 0
        %3035 = vmatprep.subr.bf16.mxu0 0
        %3036 = vmatpush1.bf16.xpose.msra.mxu0 0
        %3037 = vmatprep.subr.bf16.mxu0 0
        %3038 = vmatpush1.bf16.xpose.msra.mxu0 0
        %3039 = vmatprep.subr.bf16.mxu0 0
        %3040 = vmatpush1.bf16.xpose.msra.mxu0 0
        %3041 = vmatprep.subr.bf16.mxu0 0
        %3042 = vmatpush1.bf16.xpose.msra.mxu0 0
        %3043 = vmatprep.subr.bf16.mxu0 0
        %3044 = vmatpush1.bf16.xpose.msra.mxu0 0
        %3045 = vmatprep.subr.bf16.mxu0 0
        %3046 = vmatpush1.bf16.xpose.msra.mxu0 0
        %3047 = vmatprep.subr.bf16.mxu0 0
        %3048 = vmatpush1.bf16.xpose.msra.mxu0 0
        %3049 = vmatprep.subr.bf16.mxu0 0
        %3050 = vmatpush1.bf16.xpose.msra.mxu0 0
        %3051 = vmatprep.subr.bf16.mxu0 0
        %3052 = vmatpush1.bf16.xpose.msra.mxu0 0
        %3053 = vmatprep.subr.bf16.mxu0 0
        %3054 = vmatpush1.bf16.xpose.msra.mxu0 0
        %3055 = vmatprep.subr.bf16.mxu0 0
        %3056 = vmatpush1.bf16.xpose.msra.mxu0 0
        %3057 = vmatprep.mubr.bf16.mxu0 0
        %3058 = vmatmul.mubr.bf16.gmra.mrb[0].mxu0 %v2419
        %v3059 = vpop.f32.mrb[0].mxu0
        %v3060 = vadd.f32 %v2404, %v3059
        %v3061 = vpop.f32.mrb[0].mxu0
        %v3062 = vpop.f32.mrb[0].mxu0
        %v3063 = vadd.f32 %v2404, %v3062
        %v3064 = vpop.f32.mrb[0].mxu0
        %3065 = vmatprep.mubr.bf16.mxu0 0
        %3066 = vmatmul.mubr.bf16.gmra.mrb[0].mxu0 %v2422
        %v3067 = vpop.f32.mrb[0].mxu0
        %v3068 = vadd.f32 %v2404, %v3067
        %v3069 = vpop.f32.mrb[0].mxu0
        %v3070 = vpop.f32.mrb[0].mxu0
        %v3071 = vadd.f32 %v2404, %v3070
        %v3072 = vpop.f32.mrb[0].mxu0
        %3073 = vmatprep.mubr.bf16.mxu0 0
        %3074 = vmatmul.mubr.bf16.gmra.mrb[0].mxu0 %v2425
        %v3075 = vpop.f32.mrb[0].mxu0
        %v3076 = vadd.f32 %v2404, %v3075
        %v3077 = vpop.f32.mrb[0].mxu0
        %v3078 = vpop.f32.mrb[0].mxu0
        %v3079 = vadd.f32 %v2404, %v3078
        %v3080 = vpop.f32.mrb[0].mxu0
        %3081 = vmatprep.mubr.bf16.mxu0 0
        %3082 = vmatmul.mubr.bf16.gmra.mrb[0].mxu0 %v2428
        %v3083 = vpop.f32.mrb[0].mxu0
        %v3084 = vadd.f32 %v2404, %v3083
        %v3085 = vpop.f32.mrb[0].mxu0
        %v3086 = vpop.f32.mrb[0].mxu0
        %v3087 = vadd.f32 %v2404, %v3086
        %v3088 = vpop.f32.mrb[0].mxu0
        %3089 = vdwg.mxu0
        %v3090 = vsel %vm2507, %v3060, -inf
        %3091 = vmax.xlane.f32.xlu0 %v3090
        %v3092 = vpop.xlane.xlu0 %3091
        %v3093 = vsel %vm2507, %v3063, -inf
        %3094 = vmax.xlane.f32.xlu0 %v3093
        %v3095 = vpop.xlane.xlu0 %3094
        %v3096 = vsel %vm2507, %v3068, -inf
        %3097 = vmax.xlane.f32.xlu0 %v3096
        %v3098 = vpop.xlane.xlu0 %3097
        %v3099 = vsel %vm2507, %v3071, -inf
        %3100 = vmax.xlane.f32.xlu0 %v3099
        %v3101 = vpop.xlane.xlu0 %3100
        %v3102 = vsel %vm2507, %v3076, -inf
        %3103 = vmax.xlane.f32.xlu0 %v3102
        %v3104 = vpop.xlane.xlu0 %3103
        %v3105 = vsel %vm2507, %v3079, -inf
        %3106 = vmax.xlane.f32.xlu0 %v3105
        %v3107 = vpop.xlane.xlu0 %3106
        %v3108 = vsel %vm2507, %v3084, -inf
        %3109 = vmax.xlane.f32.xlu0 %v3108
        %v3110 = vpop.xlane.xlu0 %3109
        %v3111 = vsel %vm2507, %v3087, -inf
        %3112 = vmax.xlane.f32.xlu0 %v3111
        %v3113 = vpop.xlane.xlu0 %3112
        %v3114 = vsub.f32 %v3060, %v3092
        %v3115 = vsub.f32 %v3063, %v3095
        %v3116 = vsub.f32 %v3068, %v3098
        %v3117 = vsub.f32 %v3071, %v3101
        %v3118 = vsub.f32 %v3076, %v3104
        %v3119 = vsub.f32 %v3079, %v3107
        %v3120 = vsub.f32 %v3084, %v3110
        %v3121 = vsub.f32 %v3087, %v3113
        %v3122 = vmul.f32 %v3114, 1.442695
        %v3123 = vpow.pop %v3122
        %v3124 = vmul.f32 %v3115, 1.442695
        %v3125 = vpow.pop %v3124
        %v3126 = vmul.f32 %v3116, 1.442695
        %v3127 = vpow.pop %v3126
        %v3128 = vmul.f32 %v3117, 1.442695
        %v3129 = vpow.pop %v3128
        %v3130 = vmul.f32 %v3118, 1.442695
        %v3131 = vpow.pop %v3130
        %v3132 = vmul.f32 %v3119, 1.442695
        %v3133 = vpow.pop %v3132
        %v3134 = vmul.f32 %v3120, 1.442695
        %v3135 = vpow.pop %v3134
        %v3136 = vmul.f32 %v3121, 1.442695
        %v3137 = vpow.pop %v3136
        %v3138 = vsel %vm2507, %v3123, 0.0
        %3139 = vadd.xlane.f32.xlu0 %v3138
        %v3140 = vpop.xlane.xlu0 %3139
        %v3141 = vsel %vm2507, %v3125, 0.0
        %3142 = vadd.xlane.f32.xlu0 %v3141
        %v3143 = vpop.xlane.xlu0 %3142
        %v3144 = vsel %vm2507, %v3127, 0.0
        %3145 = vadd.xlane.f32.xlu0 %v3144
        %v3146 = vpop.xlane.xlu0 %3145
        %v3147 = vsel %vm2507, %v3129, 0.0
        %3148 = vadd.xlane.f32.xlu0 %v3147
        %v3149 = vpop.xlane.xlu0 %3148
        %v3150 = vsel %vm2507, %v3131, 0.0
        %3151 = vadd.xlane.f32.xlu0 %v3150
        %v3152 = vpop.xlane.xlu0 %3151
        %v3153 = vsel %vm2507, %v3133, 0.0
        %3154 = vadd.xlane.f32.xlu0 %v3153
        %v3155 = vpop.xlane.xlu0 %3154
        %v3156 = vsel %vm2507, %v3135, 0.0
        %3157 = vadd.xlane.f32.xlu0 %v3156
        %v3158 = vpop.xlane.xlu0 %3157
        %v3159 = vsel %vm2507, %v3137, 0.0
        %3160 = vadd.xlane.f32.xlu0 %v3159
        %v3161 = vpop.xlane.xlu0 %3160
        %v3162 = vrcp.pop %v3140
        %v3163 = vrcp.pop %v3143
        %v3164 = vrcp.pop %v3146
        %v3165 = vrcp.pop %v3149
        %v3166 = vrcp.pop %v3152
        %v3167 = vrcp.pop %v3155
        %v3168 = vrcp.pop %v3158
        %v3169 = vrcp.pop %v3161
        %v3170 = vmul.f32 %v3123, %v3162
        %v3171 = vmul.f32 %v3125, %v3163
        %v3172 = vmul.f32 %v3127, %v3164
        %v3173 = vmul.f32 %v3129, %v3165
        %v3174 = vmul.f32 %v3131, %v3166
        %v3175 = vmul.f32 %v3133, %v3167
        %v3176 = vmul.f32 %v3135, %v3168
        %v3177 = vmul.f32 %v3137, %v3169
        %v3178 = vpack.c.bf16 %v3171, %v3170
        %v3179 = vpack.c.bf16 %v3173, %v3172
        %v3180 = vpack.c.bf16 %v3175, %v3174
        %v3181 = vpack.c.bf16 %v3177, %v3176
        %v3183 = vsel %vm2507, %v3178, 0
        %v3186 = vsel %vm2507, %v3179, 0
        %v3189 = vsel %vm2507, %v3180, 0
        %v3192 = vsel %vm2507, %v3181, 0
        %3194 = vmatprep.subr.bf16.mxu0 0
        %3195 = vmatpush1.bf16.msra.mxu0 %v2997
        %3196 = vmatprep.subr.bf16.mxu0 0
        %3197 = vmatpush1.bf16.msra.mxu0 %v2998
        %3198 = vmatprep.subr.bf16.mxu0 0
        %3199 = vmatpush1.bf16.msra.mxu0 %v2999
        %3200 = vmatprep.subr.bf16.mxu0 0
        %3201 = vmatpush1.bf16.msra.mxu0 %v3000
        %3202 = vmatprep.subr.bf16.mxu0 0
        %3203 = vmatpush1.bf16.msra.mxu0 0
        %3204 = vmatprep.subr.bf16.mxu0 0
        %3205 = vmatpush1.bf16.msra.mxu0 0
        %3206 = vmatprep.subr.bf16.mxu0 0
        %3207 = vmatpush1.bf16.msra.mxu0 0
        %3208 = vmatprep.subr.bf16.mxu0 0
        %3209 = vmatpush1.bf16.msra.mxu0 0
        %3210 = vmatprep.subr.bf16.mxu0 0
        %3211 = vmatpush1.bf16.msra.mxu0 0
        %3212 = vmatprep.subr.bf16.mxu0 0
        %3213 = vmatpush1.bf16.msra.mxu0 0
        %3214 = vmatprep.subr.bf16.mxu0 0
        %3215 = vmatpush1.bf16.msra.mxu0 0
        %3216 = vmatprep.subr.bf16.mxu0 0
        %3217 = vmatpush1.bf16.msra.mxu0 0
        %3218 = vmatprep.subr.bf16.mxu0 0
        %3219 = vmatpush1.bf16.msra.mxu0 0
        %3220 = vmatprep.subr.bf16.mxu0 0
        %3221 = vmatpush1.bf16.msra.mxu0 0
        %3222 = vmatprep.subr.bf16.mxu0 0
        %3223 = vmatpush1.bf16.msra.mxu0 0
        %3224 = vmatprep.subr.bf16.mxu0 0
        %3225 = vmatpush1.bf16.msra.mxu0 0
        %3226 = vmatprep.mubr.bf16.mxu0 0
        %3227 = vmatmul.mubr.bf16.gmra.mrb[0].mxu0 %v3183
        %v3228 = vpop.f32.mrb[0].mxu0
        %v3229 = vadd.f32 0.0, %v3228
        %v3230 = vpop.f32.mrb[0].mxu0
        %v3231 = vpop.f32.mrb[0].mxu0
        %v3232 = vadd.f32 0.0, %v3231
        %v3233 = vpop.f32.mrb[0].mxu0
        %3234 = vmatprep.mubr.bf16.mxu0 0
        %3235 = vmatmul.mubr.bf16.gmra.mrb[0].mxu0 %v3186
        %v3236 = vpop.f32.mrb[0].mxu0
        %v3237 = vadd.f32 0.0, %v3236
        %v3238 = vpop.f32.mrb[0].mxu0
        %v3239 = vpop.f32.mrb[0].mxu0
        %v3240 = vadd.f32 0.0, %v3239
        %v3241 = vpop.f32.mrb[0].mxu0
        %3242 = vmatprep.mubr.bf16.mxu0 0
        %3243 = vmatmul.mubr.bf16.gmra.mrb[0].mxu0 %v3189
        %v3244 = vpop.f32.mrb[0].mxu0
        %v3245 = vadd.f32 0.0, %v3244
        %v3246 = vpop.f32.mrb[0].mxu0
        %v3247 = vpop.f32.mrb[0].mxu0
        %v3248 = vadd.f32 0.0, %v3247
        %v3249 = vpop.f32.mrb[0].mxu0
        %3250 = vmatprep.mubr.bf16.mxu0 0
        %3251 = vmatmul.mubr.bf16.gmra.mrb[0].mxu0 %v3192
        %v3252 = vpop.f32.mrb[0].mxu0
        %v3253 = vadd.f32 0.0, %v3252
        %v3254 = vpop.f32.mrb[0].mxu0
        %v3255 = vpop.f32.mrb[0].mxu0
        %v3256 = vadd.f32 0.0, %v3255
        %v3257 = vpop.f32.mrb[0].mxu0
        %3258 = vdwg.mxu0
        %v3259 = vadd.f32 %v2938, %v3229
        %v3260 = vadd.f32 %v2941, %v3232
        %v3261 = vadd.f32 %v2946, %v3237
        %v3262 = vadd.f32 %v2949, %v3240
        %v3263 = vadd.f32 %v2954, %v3245
        %v3264 = vadd.f32 %v2957, %v3248
        %v3265 = vadd.f32 %v2962, %v3253
        %v3266 = vadd.f32 %v2965, %v3256
        %vm3267 = vcmp.ge.s32.totalorder %v2354, 24
        %vm3268 = vcmp.lt.s32.totalorder %v2354, 32
        %vm3269 = vmand %vm3267, %vm3268
        %v3270 = vsel %vm3269, 1, 0
        %v3271 = vcvt.s32.f32 %v3270
        %3273 = vrot.lane.b32.xlu0 %v3271, 32
        %v3274 = vpop.permute.xlu0 %3273
        %v3276 = vmul.f32 %v2219, %v3274
        %v3277 = vmul.f32 %v2222, %v3274
        %v3278 = vmul.f32 %v2227, %v3274
        %v3279 = vmul.f32 %v2230, %v3274
        %v3280 = vmul.f32 %v2235, %v3274
        %v3281 = vmul.f32 %v2238, %v3274
        %v3282 = vmul.f32 %v2243, %v3274
        %v3283 = vmul.f32 %v2246, %v3274
        %v3284 = vpack.c.bf16 %v3277, %v3276
        %v3285 = vpack.c.bf16 %v3279, %v3278
        %v3286 = vpack.c.bf16 %v3281, %v3280
        %v3287 = vpack.c.bf16 %v3283, %v3282
        %v3288 = vmul.f32 %v2323, %v3271
        %v3289 = vmul.f32 %v2326, %v3271
        %v3290 = vmul.f32 %v2331, %v3271
        %v3291 = vmul.f32 %v2334, %v3271
        %v3292 = vmul.f32 %v2339, %v3271
        %v3293 = vmul.f32 %v2342, %v3271
        %v3294 = vmul.f32 %v2347, %v3271
        %v3295 = vmul.f32 %v2350, %v3271
        %v3296 = vpack.c.bf16 %v3289, %v3288
        %v3297 = vpack.c.bf16 %v3291, %v3290
        %v3298 = vpack.c.bf16 %v3293, %v3292
        %v3299 = vpack.c.bf16 %v3295, %v3294
        %3304 = vrot.lane.b32.xlu0 %v3284, 96
        %v3305 = vpop.permute.xlu0 %3304
        %3306 = vrot.lane.b32.xlu0 %v3285, 96
        %v3307 = vpop.permute.xlu0 %3306
        %3308 = vrot.lane.b32.xlu0 %v3286, 96
        %v3309 = vpop.permute.xlu0 %3308
        %3310 = vrot.lane.b32.xlu0 %v3287, 96
        %v3311 = vpop.permute.xlu0 %3310
        %v3313 = vsel %vm2171, %v3305, 0
        %v3316 = vsel %vm2171, %v3307, 0
        %v3319 = vsel %vm2171, %v3309, 0
        %v3322 = vsel %vm2171, %v3311, 0
        %3324 = vmatprep.subr.bf16.mxu0 0
        %3325 = vmatpush1.bf16.xpose.msra.mxu0 %v3313
        %3326 = vmatprep.subr.bf16.mxu0 0
        %3327 = vmatpush1.bf16.xpose.msra.mxu0 %v3316
        %3328 = vmatprep.subr.bf16.mxu0 0
        %3329 = vmatpush1.bf16.xpose.msra.mxu0 %v3319
        %3330 = vmatprep.subr.bf16.mxu0 0
        %3331 = vmatpush1.bf16.xpose.msra.mxu0 %v3322
        %3332 = vmatprep.subr.bf16.mxu0 0
        %3333 = vmatpush1.bf16.xpose.msra.mxu0 0
        %3334 = vmatprep.subr.bf16.mxu0 0
        %3335 = vmatpush1.bf16.xpose.msra.mxu0 0
        %3336 = vmatprep.subr.bf16.mxu0 0
        %3337 = vmatpush1.bf16.xpose.msra.mxu0 0
        %3338 = vmatprep.subr.bf16.mxu0 0
        %3339 = vmatpush1.bf16.xpose.msra.mxu0 0
        %3340 = vmatprep.subr.bf16.mxu0 0
        %3341 = vmatpush1.bf16.xpose.msra.mxu0 0
        %3342 = vmatprep.subr.bf16.mxu0 0
        %3343 = vmatpush1.bf16.xpose.msra.mxu0 0
        %3344 = vmatprep.subr.bf16.mxu0 0
        %3345 = vmatpush1.bf16.xpose.msra.mxu0 0
        %3346 = vmatprep.subr.bf16.mxu0 0
        %3347 = vmatpush1.bf16.xpose.msra.mxu0 0
        %3348 = vmatprep.subr.bf16.mxu0 0
        %3349 = vmatpush1.bf16.xpose.msra.mxu0 0
        %3350 = vmatprep.subr.bf16.mxu0 0
        %3351 = vmatpush1.bf16.xpose.msra.mxu0 0
        %3352 = vmatprep.subr.bf16.mxu0 0
        %3353 = vmatpush1.bf16.xpose.msra.mxu0 0
        %3354 = vmatprep.subr.bf16.mxu0 0
        %3355 = vmatpush1.bf16.xpose.msra.mxu0 0
        %3356 = vmatprep.mubr.bf16.mxu0 0
        %3357 = vmatmul.mubr.bf16.gmra.mrb[0].mxu0 %v2419
        %v3358 = vpop.f32.mrb[0].mxu0
        %v3359 = vadd.f32 %v2404, %v3358
        %v3360 = vpop.f32.mrb[0].mxu0
        %v3361 = vpop.f32.mrb[0].mxu0
        %v3362 = vadd.f32 %v2404, %v3361
        %v3363 = vpop.f32.mrb[0].mxu0
        %3364 = vmatprep.mubr.bf16.mxu0 0
        %3365 = vmatmul.mubr.bf16.gmra.mrb[0].mxu0 %v2422
        %v3366 = vpop.f32.mrb[0].mxu0
        %v3367 = vadd.f32 %v2404, %v3366
        %v3368 = vpop.f32.mrb[0].mxu0
        %v3369 = vpop.f32.mrb[0].mxu0
        %v3370 = vadd.f32 %v2404, %v3369
        %v3371 = vpop.f32.mrb[0].mxu0
        %3372 = vmatprep.mubr.bf16.mxu0 0
        %3373 = vmatmul.mubr.bf16.gmra.mrb[0].mxu0 %v2425
        %v3374 = vpop.f32.mrb[0].mxu0
        %v3375 = vadd.f32 %v2404, %v3374
        %v3376 = vpop.f32.mrb[0].mxu0
        %v3377 = vpop.f32.mrb[0].mxu0
        %v3378 = vadd.f32 %v2404, %v3377
        %v3379 = vpop.f32.mrb[0].mxu0
        %3380 = vmatprep.mubr.bf16.mxu0 0
        %3381 = vmatmul.mubr.bf16.gmra.mrb[0].mxu0 %v2428
        %v3382 = vpop.f32.mrb[0].mxu0
        %v3383 = vadd.f32 %v2404, %v3382
        %v3384 = vpop.f32.mrb[0].mxu0
        %v3385 = vpop.f32.mrb[0].mxu0
        %v3386 = vadd.f32 %v2404, %v3385
        %v3387 = vpop.f32.mrb[0].mxu0
        %3388 = vdwg.mxu0
        %v3389 = vsel %vm2507, %v3359, -inf
        %3390 = vmax.xlane.f32.xlu0 %v3389
        %v3391 = vpop.xlane.xlu0 %3390
        %v3392 = vsel %vm2507, %v3362, -inf
        %3393 = vmax.xlane.f32.xlu0 %v3392
        %v3394 = vpop.xlane.xlu0 %3393
        %v3395 = vsel %vm2507, %v3367, -inf
        %3396 = vmax.xlane.f32.xlu0 %v3395
        %v3397 = vpop.xlane.xlu0 %3396
        %v3398 = vsel %vm2507, %v3370, -inf
        %3399 = vmax.xlane.f32.xlu0 %v3398
        %v3400 = vpop.xlane.xlu0 %3399
        %v3401 = vsel %vm2507, %v3375, -inf
        %3402 = vmax.xlane.f32.xlu0 %v3401
        %v3403 = vpop.xlane.xlu0 %3402
        %v3404 = vsel %vm2507, %v3378, -inf
        %3405 = vmax.xlane.f32.xlu0 %v3404
        %v3406 = vpop.xlane.xlu0 %3405
        %v3407 = vsel %vm2507, %v3383, -inf
        %3408 = vmax.xlane.f32.xlu0 %v3407
        %v3409 = vpop.xlane.xlu0 %3408
        %v3410 = vsel %vm2507, %v3386, -inf
        %3411 = vmax.xlane.f32.xlu0 %v3410
        %v3412 = vpop.xlane.xlu0 %3411
        %v3413 = vsub.f32 %v3359, %v3391
        %v3414 = vsub.f32 %v3362, %v3394
        %v3415 = vsub.f32 %v3367, %v3397
        %v3416 = vsub.f32 %v3370, %v3400
        %v3417 = vsub.f32 %v3375, %v3403
        %v3418 = vsub.f32 %v3378, %v3406
        %v3419 = vsub.f32 %v3383, %v3409
        %v3420 = vsub.f32 %v3386, %v3412
        %v3421 = vmul.f32 %v3413, 1.442695
        %v3422 = vpow.pop %v3421
        %v3423 = vmul.f32 %v3414, 1.442695
        %v3424 = vpow.pop %v3423
        %v3425 = vmul.f32 %v3415, 1.442695
        %v3426 = vpow.pop %v3425
        %v3427 = vmul.f32 %v3416, 1.442695
        %v3428 = vpow.pop %v3427
        %v3429 = vmul.f32 %v3417, 1.442695
        %v3430 = vpow.pop %v3429
        %v3431 = vmul.f32 %v3418, 1.442695
        %v3432 = vpow.pop %v3431
        %v3433 = vmul.f32 %v3419, 1.442695
        %v3434 = vpow.pop %v3433
        %v3435 = vmul.f32 %v3420, 1.442695
        %v3436 = vpow.pop %v3435
        %v3437 = vsel %vm2507, %v3422, 0.0
        %3438 = vadd.xlane.f32.xlu0 %v3437
        %v3439 = vpop.xlane.xlu0 %3438
        %v3440 = vsel %vm2507, %v3424, 0.0
        %3441 = vadd.xlane.f32.xlu0 %v3440
        %v3442 = vpop.xlane.xlu0 %3441
        %v3443 = vsel %vm2507, %v3426, 0.0
        %3444 = vadd.xlane.f32.xlu0 %v3443
        %v3445 = vpop.xlane.xlu0 %3444
        %v3446 = vsel %vm2507, %v3428, 0.0
        %3447 = vadd.xlane.f32.xlu0 %v3446
        %v3448 = vpop.xlane.xlu0 %3447
        %v3449 = vsel %vm2507, %v3430, 0.0
        %3450 = vadd.xlane.f32.xlu0 %v3449
        %v3451 = vpop.xlane.xlu0 %3450
        %v3452 = vsel %vm2507, %v3432, 0.0
        %3453 = vadd.xlane.f32.xlu0 %v3452
        %v3454 = vpop.xlane.xlu0 %3453
        %v3455 = vsel %vm2507, %v3434, 0.0
        %3456 = vadd.xlane.f32.xlu0 %v3455
        %v3457 = vpop.xlane.xlu0 %3456
        %v3458 = vsel %vm2507, %v3436, 0.0
        %3459 = vadd.xlane.f32.xlu0 %v3458
        %v3460 = vpop.xlane.xlu0 %3459
        %v3461 = vrcp.pop %v3439
        %v3462 = vrcp.pop %v3442
        %v3463 = vrcp.pop %v3445
        %v3464 = vrcp.pop %v3448
        %v3465 = vrcp.pop %v3451
        %v3466 = vrcp.pop %v3454
        %v3467 = vrcp.pop %v3457
        %v3468 = vrcp.pop %v3460
        %v3469 = vmul.f32 %v3422, %v3461
        %v3470 = vmul.f32 %v3424, %v3462
        %v3471 = vmul.f32 %v3426, %v3463
        %v3472 = vmul.f32 %v3428, %v3464
        %v3473 = vmul.f32 %v3430, %v3465
        %v3474 = vmul.f32 %v3432, %v3466
        %v3475 = vmul.f32 %v3434, %v3467
        %v3476 = vmul.f32 %v3436, %v3468
        %v3477 = vpack.c.bf16 %v3470, %v3469
        %v3478 = vpack.c.bf16 %v3472, %v3471
        %v3479 = vpack.c.bf16 %v3474, %v3473
        %v3480 = vpack.c.bf16 %v3476, %v3475
        %v3482 = vsel %vm2507, %v3477, 0
        %v3485 = vsel %vm2507, %v3478, 0
        %v3488 = vsel %vm2507, %v3479, 0
        %v3491 = vsel %vm2507, %v3480, 0
        %3493 = vmatprep.subr.bf16.mxu0 0
        %3494 = vmatpush1.bf16.msra.mxu0 %v3296
        %3495 = vmatprep.subr.bf16.mxu0 0
        %3496 = vmatpush1.bf16.msra.mxu0 %v3297
        %3497 = vmatprep.subr.bf16.mxu0 0
        %3498 = vmatpush1.bf16.msra.mxu0 %v3298
        %3499 = vmatprep.subr.bf16.mxu0 0
        %3500 = vmatpush1.bf16.msra.mxu0 %v3299
        %3501 = vmatprep.subr.bf16.mxu0 0
        %3502 = vmatpush1.bf16.msra.mxu0 0
        %3503 = vmatprep.subr.bf16.mxu0 0
        %3504 = vmatpush1.bf16.msra.mxu0 0
        %3505 = vmatprep.subr.bf16.mxu0 0
        %3506 = vmatpush1.bf16.msra.mxu0 0
        %3507 = vmatprep.subr.bf16.mxu0 0
        %3508 = vmatpush1.bf16.msra.mxu0 0
        %3509 = vmatprep.subr.bf16.mxu0 0
        %3510 = vmatpush1.bf16.msra.mxu0 0
        %3511 = vmatprep.subr.bf16.mxu0 0
        %3512 = vmatpush1.bf16.msra.mxu0 0
        %3513 = vmatprep.subr.bf16.mxu0 0
        %3514 = vmatpush1.bf16.msra.mxu0 0
        %3515 = vmatprep.subr.bf16.mxu0 0
        %3516 = vmatpush1.bf16.msra.mxu0 0
        %3517 = vmatprep.subr.bf16.mxu0 0
        %3518 = vmatpush1.bf16.msra.mxu0 0
        %3519 = vmatprep.subr.bf16.mxu0 0
        %3520 = vmatpush1.bf16.msra.mxu0 0
        %3521 = vmatprep.subr.bf16.mxu0 0
        %3522 = vmatpush1.bf16.msra.mxu0 0
        %3523 = vmatprep.subr.bf16.mxu0 0
        %3524 = vmatpush1.bf16.msra.mxu0 0
        %3525 = vmatprep.mubr.bf16.mxu0 0
        %3526 = vmatmul.mubr.bf16.gmra.mrb[0].mxu0 %v3482
        %v3527 = vpop.f32.mrb[0].mxu0
        %v3528 = vadd.f32 0.0, %v3527
        %v3529 = vpop.f32.mrb[0].mxu0
        %v3530 = vpop.f32.mrb[0].mxu0
        %v3531 = vadd.f32 0.0, %v3530
        %v3532 = vpop.f32.mrb[0].mxu0
        %3533 = vmatprep.mubr.bf16.mxu0 0
        %3534 = vmatmul.mubr.bf16.gmra.mrb[0].mxu0 %v3485
        %v3535 = vpop.f32.mrb[0].mxu0
        %v3536 = vadd.f32 0.0, %v3535
        %v3537 = vpop.f32.mrb[0].mxu0
        %v3538 = vpop.f32.mrb[0].mxu0
        %v3539 = vadd.f32 0.0, %v3538
        %v3540 = vpop.f32.mrb[0].mxu0
        %3541 = vmatprep.mubr.bf16.mxu0 0
        %3542 = vmatmul.mubr.bf16.gmra.mrb[0].mxu0 %v3488
        %v3543 = vpop.f32.mrb[0].mxu0
        %v3544 = vadd.f32 0.0, %v3543
        %v3545 = vpop.f32.mrb[0].mxu0
        %v3546 = vpop.f32.mrb[0].mxu0
        %v3547 = vadd.f32 0.0, %v3546
        %v3548 = vpop.f32.mrb[0].mxu0
        %3549 = vmatprep.mubr.bf16.mxu0 0
        %3550 = vmatmul.mubr.bf16.gmra.mrb[0].mxu0 %v3491
        %v3551 = vpop.f32.mrb[0].mxu0
        %v3552 = vadd.f32 0.0, %v3551
        %v3553 = vpop.f32.mrb[0].mxu0
        %v3554 = vpop.f32.mrb[0].mxu0
        %v3555 = vadd.f32 0.0, %v3554
        %v3556 = vpop.f32.mrb[0].mxu0
        %3557 = vdwg.mxu0
        %v3558 = vadd.f32 %v3259, %v3528
        %v3559 = vadd.f32 %v3260, %v3531
        %v3560 = vadd.f32 %v3261, %v3536
        %v3561 = vadd.f32 %v3262, %v3539
        %v3562 = vadd.f32 %v3263, %v3544
        %v3563 = vadd.f32 %v3264, %v3547
        %v3564 = vadd.f32 %v3265, %v3552
        %v3565 = vadd.f32 %v3266, %v3555
        %v3566 = vld [vmem:[%s2042] sm:$0xf]
        %v3567 = vld [vmem:[%s2042 + $0x4] sm:$0xf]
        %v3568 = vld [vmem:[%s2042 + $0x8] sm:$0xf]
        %v3569 = vld [vmem:[%s2042 + $0xc] sm:$0xf]
        %v3570 = vpack.c.bf16 %v3559, %v3558
        %v3571 = vpack.c.bf16 %v3561, %v3560
        %v3572 = vpack.c.bf16 %v3563, %v3562
        %v3573 = vpack.c.bf16 %v3565, %v3564
        %v3574 = vld [vmem:[%s1602] sm:$0x1]
        %v3576 = vlaneseq
        %v3577 = vshrl.u32 %v3576, 7
        %v3578 = vsub.s32 0, %v3577
        %v3579 = vrot.slane %v3574, %v3578
        %v3585 = vunpack.c.l.b16 %v3566
        %v3586 = vunpack.c.l.b16 %v3567
        %v3587 = vunpack.c.l.b16 %v3568
        %v3588 = vunpack.c.l.b16 %v3569
        %v3589 = vpack.c.b16 %v3586, %v3585
        %v3590 = vpack.c.b16 %v3588, %v3587
        %v3594 = vsel %vm2171, %v3570, 0
        %v3597 = vsel %vm2171, %v3571, 0
        %v3600 = vsel %vm2171, %v3572, 0
        %v3603 = vsel %vm2171, %v3573, 0
        %3605 = vmatprep.subr.bf16.mxu0 0
        %3606 = vmatpush1.bf16.msra.mxu0 %v3589
        %3607 = vmatprep.subr.bf16.mxu0 0
        %3608 = vmatpush1.bf16.msra.mxu0 %v3590
        %3609 = vmatprep.subr.bf16.mxu0 0
        %3610 = vmatpush1.bf16.msra.mxu0 0
        %3611 = vmatprep.subr.bf16.mxu0 0
        %3612 = vmatpush1.bf16.msra.mxu0 0
        %3613 = vmatprep.subr.bf16.mxu0 0
        %3614 = vmatpush1.bf16.msra.mxu0 0
        %3615 = vmatprep.subr.bf16.mxu0 0
        %3616 = vmatpush1.bf16.msra.mxu0 0
        %3617 = vmatprep.subr.bf16.mxu0 0
        %3618 = vmatpush1.bf16.msra.mxu0 0
        %3619 = vmatprep.subr.bf16.mxu0 0
        %3620 = vmatpush1.bf16.msra.mxu0 0
        %3621 = vmatprep.subr.bf16.mxu0 0
        %3622 = vmatpush1.bf16.msra.mxu0 0
        %3623 = vmatprep.subr.bf16.mxu0 0
        %3624 = vmatpush1.bf16.msra.mxu0 0
        %3625 = vmatprep.subr.bf16.mxu0 0
        %3626 = vmatpush1.bf16.msra.mxu0 0
        %3627 = vmatprep.subr.bf16.mxu0 0
        %3628 = vmatpush1.bf16.msra.mxu0 0
        %3629 = vmatprep.subr.bf16.mxu0 0
        %3630 = vmatpush1.bf16.msra.mxu0 0
        %3631 = vmatprep.subr.bf16.mxu0 0
        %3632 = vmatpush1.bf16.msra.mxu0 0
        %3633 = vmatprep.subr.bf16.mxu0 0
        %3634 = vmatpush1.bf16.msra.mxu0 0
        %3635 = vmatprep.subr.bf16.mxu0 0
        %3636 = vmatpush1.bf16.msra.mxu0 0
        %3637 = vmatprep.mubr.bf16.mxu0 0
        %3638 = vmatmul.mubr.bf16.gmra.mrb[0].mxu0 %v3594
        %v3639 = vpop.f32.mrb[0].mxu0
        %v3640 = vadd.f32 %v3579, %v3639
        %v3641 = vpop.f32.mrb[0].mxu0
        %v3642 = vpop.f32.mrb[0].mxu0
        %v3643 = vadd.f32 %v3579, %v3642
        %v3644 = vpop.f32.mrb[0].mxu0
        %3645 = vmatprep.mubr.bf16.mxu0 0
        %3646 = vmatmul.mubr.bf16.gmra.mrb[0].mxu0 %v3597
        %v3647 = vpop.f32.mrb[0].mxu0
        %v3648 = vadd.f32 %v3579, %v3647
        %v3649 = vpop.f32.mrb[0].mxu0
        %v3650 = vpop.f32.mrb[0].mxu0
        %v3651 = vadd.f32 %v3579, %v3650
        %v3652 = vpop.f32.mrb[0].mxu0
        %3653 = vmatprep.mubr.bf16.mxu0 0
        %3654 = vmatmul.mubr.bf16.gmra.mrb[0].mxu0 %v3600
        %v3655 = vpop.f32.mrb[0].mxu0
        %v3656 = vadd.f32 %v3579, %v3655
        %v3657 = vpop.f32.mrb[0].mxu0
        %v3658 = vpop.f32.mrb[0].mxu0
        %v3659 = vadd.f32 %v3579, %v3658
        %v3660 = vpop.f32.mrb[0].mxu0
        %3661 = vmatprep.mubr.bf16.mxu0 0
        %3662 = vmatmul.mubr.bf16.gmra.mrb[0].mxu0 %v3603
        %v3663 = vpop.f32.mrb[0].mxu0
        %v3664 = vadd.f32 %v3579, %v3663
        %v3665 = vpop.f32.mrb[0].mxu0
        %v3666 = vpop.f32.mrb[0].mxu0
        %v3667 = vadd.f32 %v3579, %v3666
        %v3668 = vpop.f32.mrb[0].mxu0
        %3669 = vdwg.mxu0
        %v3670 = vadd.f32 %v2114, %v3640
        %v3671 = vadd.f32 %v2115, %v3643
        %v3672 = vadd.f32 %v2116, %v3648
        %v3673 = vadd.f32 %v2117, %v3651
        %v3674 = vadd.f32 %v2118, %v3656
        %v3675 = vadd.f32 %v2119, %v3659
        %v3676 = vadd.f32 %v2120, %v3664
        %v3677 = vadd.f32 %v2121, %v3667
        %v3678 = vld [vmem:[%s1610] sm:$0x1]
        %v3679 = vld [vmem:[%s1618] sm:$0x1]
        %v3680 = vsel %vm2171, %v3670, 0.0
        %3681 = vadd.xlane.f32.xlu0 %v3680
        %v3682 = vpop.xlane.xlu0 %3681
        %v3683 = vsel %vm2171, %v3671, 0.0
        %3684 = vadd.xlane.f32.xlu0 %v3683
        %v3685 = vpop.xlane.xlu0 %3684
        %v3686 = vsel %vm2171, %v3672, 0.0
        %3687 = vadd.xlane.f32.xlu0 %v3686
        %v3688 = vpop.xlane.xlu0 %3687
        %v3689 = vsel %vm2171, %v3673, 0.0
        %3690 = vadd.xlane.f32.xlu0 %v3689
        %v3691 = vpop.xlane.xlu0 %3690
        %v3692 = vsel %vm2171, %v3674, 0.0
        %3693 = vadd.xlane.f32.xlu0 %v3692
        %v3694 = vpop.xlane.xlu0 %3693
        %v3695 = vsel %vm2171, %v3675, 0.0
        %3696 = vadd.xlane.f32.xlu0 %v3695
        %v3697 = vpop.xlane.xlu0 %3696
        %v3698 = vsel %vm2171, %v3676, 0.0
        %3699 = vadd.xlane.f32.xlu0 %v3698
        %v3700 = vpop.xlane.xlu0 %3699
        %v3701 = vsel %vm2171, %v3677, 0.0
        %3702 = vadd.xlane.f32.xlu0 %v3701
        %v3703 = vpop.xlane.xlu0 %3702
        %v3704 = vrcp.pop 32.0
        %v3705 = vmul.f32 %v3682, %v3704
        %v3706 = vmul.f32 %v3685, %v3704
        %v3707 = vmul.f32 %v3688, %v3704
        %v3708 = vmul.f32 %v3691, %v3704
        %v3709 = vmul.f32 %v3694, %v3704
        %v3710 = vmul.f32 %v3697, %v3704
        %v3711 = vmul.f32 %v3700, %v3704
        %v3712 = vmul.f32 %v3703, %v3704
        %v3713 = vsub.f32 %v3670, %v3705
        %v3714 = vsub.f32 %v3671, %v3706
        %v3715 = vsub.f32 %v3672, %v3707
        %v3716 = vsub.f32 %v3673, %v3708
        %v3717 = vsub.f32 %v3674, %v3709
        %v3718 = vsub.f32 %v3675, %v3710
        %v3719 = vsub.f32 %v3676, %v3711
        %v3720 = vsub.f32 %v3677, %v3712
        %v3721 = vmul.f32 %v3713, %v3713
        %v3722 = vmul.f32 %v3714, %v3714
        %v3723 = vmul.f32 %v3715, %v3715
        %v3724 = vmul.f32 %v3716, %v3716
        %v3725 = vmul.f32 %v3717, %v3717
        %v3726 = vmul.f32 %v3718, %v3718
        %v3727 = vmul.f32 %v3719, %v3719
        %v3728 = vmul.f32 %v3720, %v3720
        %v3729 = vsel %vm2171, %v3721, 0.0
        %3730 = vadd.xlane.f32.xlu0 %v3729
        %v3731 = vpop.xlane.xlu0 %3730
        %v3732 = vsel %vm2171, %v3722, 0.0
        %3733 = vadd.xlane.f32.xlu0 %v3732
        %v3734 = vpop.xlane.xlu0 %3733
        %v3735 = vsel %vm2171, %v3723, 0.0
        %3736 = vadd.xlane.f32.xlu0 %v3735
        %v3737 = vpop.xlane.xlu0 %3736
        %v3738 = vsel %vm2171, %v3724, 0.0
        %3739 = vadd.xlane.f32.xlu0 %v3738
        %v3740 = vpop.xlane.xlu0 %3739
        %v3741 = vsel %vm2171, %v3725, 0.0
        %3742 = vadd.xlane.f32.xlu0 %v3741
        %v3743 = vpop.xlane.xlu0 %3742
        %v3744 = vsel %vm2171, %v3726, 0.0
        %3745 = vadd.xlane.f32.xlu0 %v3744
        %v3746 = vpop.xlane.xlu0 %3745
        %v3747 = vsel %vm2171, %v3727, 0.0
        %3748 = vadd.xlane.f32.xlu0 %v3747
        %v3749 = vpop.xlane.xlu0 %3748
        %v3750 = vsel %vm2171, %v3728, 0.0
        %3751 = vadd.xlane.f32.xlu0 %v3750
        %v3752 = vpop.xlane.xlu0 %3751
        %v3753 = vmul.f32 %v3731, %v3704
        %v3754 = vmul.f32 %v3734, %v3704
        %v3755 = vmul.f32 %v3737, %v3704
        %v3756 = vmul.f32 %v3740, %v3704
        %v3757 = vmul.f32 %v3743, %v3704
        %v3758 = vmul.f32 %v3746, %v3704
        %v3759 = vmul.f32 %v3749, %v3704
        %v3760 = vmul.f32 %v3752, %v3704
        %v3761 = vadd.f32 %v3753, 1e-05
        %v3762 = vadd.f32 %v3754, 1e-05
        %v3763 = vadd.f32 %v3755, 1e-05
        %v3764 = vadd.f32 %v3756, 1e-05
        %v3765 = vadd.f32 %v3757, 1e-05
        %v3766 = vadd.f32 %v3758, 1e-05
        %v3767 = vadd.f32 %v3759, 1e-05
        %v3768 = vadd.f32 %v3760, 1e-05
        %v3769 = vrsqrt.pop %v3761
        %v3770 = vrsqrt.pop %v3762
        %v3771 = vrsqrt.pop %v3763
        %v3772 = vrsqrt.pop %v3764
        %v3773 = vrsqrt.pop %v3765
        %v3774 = vrsqrt.pop %v3766
        %v3775 = vrsqrt.pop %v3767
        %v3776 = vrsqrt.pop %v3768
        %v3777 = vmul.f32 %v3713, %v3769
        %v3778 = vmul.f32 %v3714, %v3770
        %v3779 = vmul.f32 %v3715, %v3771
        %v3780 = vmul.f32 %v3716, %v3772
        %v3781 = vmul.f32 %v3717, %v3773
        %v3782 = vmul.f32 %v3718, %v3774
        %v3783 = vmul.f32 %v3719, %v3775
        %v3784 = vmul.f32 %v3720, %v3776
        %v3786 = vlaneseq
        %v3787 = vshrl.u32 %v3786, 7
        %v3788 = vsub.s32 0, %v3787
        %v3789 = vrot.slane %v3678, %v3788
        %v3791 = vmul.f32 %v3777, %v3789
        %v3792 = vmul.f32 %v3778, %v3789
        %v3793 = vmul.f32 %v3779, %v3789
        %v3794 = vmul.f32 %v3780, %v3789
        %v3795 = vmul.f32 %v3781, %v3789
        %v3796 = vmul.f32 %v3782, %v3789
        %v3797 = vmul.f32 %v3783, %v3789
        %v3798 = vmul.f32 %v3784, %v3789
        %v3800 = vlaneseq
        %v3801 = vshrl.u32 %v3800, 7
        %v3802 = vsub.s32 0, %v3801
        %v3803 = vrot.slane %v3679, %v3802
        %v3805 = vadd.f32 %v3791, %v3803
        %v3806 = vadd.f32 %v3792, %v3803
        %v3807 = vadd.f32 %v3793, %v3803
        %v3808 = vadd.f32 %v3794, %v3803
        %v3809 = vadd.f32 %v3795, %v3803
        %v3810 = vadd.f32 %v3796, %v3803
        %v3811 = vadd.f32 %v3797, %v3803
        %v3812 = vadd.f32 %v3798, %v3803
        %v3813 = vadd.f32 %v3805, %v2124
        %v3814 = vadd.f32 %v3806, %v2125
        %v3815 = vadd.f32 %v3807, %v2126
        %v3816 = vadd.f32 %v3808, %v2127
        %v3817 = vadd.f32 %v3809, %v2128
        %v3818 = vadd.f32 %v3810, %v2129
        %v3819 = vadd.f32 %v3811, %v2130
        %v3820 = vadd.f32 %v3812, %v2131
        %v3821 = vld [vmem:[%s2051] sm:$0xf]
        %v3822 = vld [vmem:[%s2051 + $0x4] sm:$0xf]
        %v3823 = vld [vmem:[%s2051 + $0x8] sm:$0xf]
        %v3824 = vld [vmem:[%s2051 + $0xc] sm:$0xf]
        %v3825 = vpack.c.bf16 %v3814, %v3813
        %v3826 = vpack.c.bf16 %v3816, %v3815
        %v3827 = vpack.c.bf16 %v3818, %v3817
        %v3828 = vpack.c.bf16 %v3820, %v3819
        %v3829 = vld [vmem:[%s1626] sm:$0x1]
        %v3831 = vlaneseq
        %v3832 = vshrl.u32 %v3831, 7
        %v3833 = vsub.s32 0, %v3832
        %v3834 = vrot.slane %v3829, %v3833
        %v3840 = vunpack.c.l.b16 %v3821
        %v3841 = vunpack.c.l.b16 %v3822
        %v3842 = vunpack.c.l.b16 %v3823
        %v3843 = vunpack.c.l.b16 %v3824
        %v3844 = vpack.c.b16 %v3841, %v3840
        %v3845 = vpack.c.b16 %v3843, %v3842
        %v3849 = vsel %vm2171, %v3825, 0
        %v3852 = vsel %vm2171, %v3826, 0
        %v3855 = vsel %vm2171, %v3827, 0
        %v3858 = vsel %vm2171, %v3828, 0
        %3860 = vmatprep.subr.bf16.mxu0 0
        %3861 = vmatpush1.bf16.msra.mxu0 %v3844
        %3862 = vmatprep.subr.bf16.mxu0 0
        %3863 = vmatpush1.bf16.msra.mxu0 %v3845
        %3864 = vmatprep.subr.bf16.mxu0 0
        %3865 = vmatpush1.bf16.msra.mxu0 0
        %3866 = vmatprep.subr.bf16.mxu0 0
        %3867 = vmatpush1.bf16.msra.mxu0 0
        %3868 = vmatprep.subr.bf16.mxu0 0
        %3869 = vmatpush1.bf16.msra.mxu0 0
        %3870 = vmatprep.subr.bf16.mxu0 0
        %3871 = vmatpush1.bf16.msra.mxu0 0
        %3872 = vmatprep.subr.bf16.mxu0 0
        %3873 = vmatpush1.bf16.msra.mxu0 0
        %3874 = vmatprep.subr.bf16.mxu0 0
        %3875 = vmatpush1.bf16.msra.mxu0 0
        %3876 = vmatprep.subr.bf16.mxu0 0
        %3877 = vmatpush1.bf16.msra.mxu0 0
        %3878 = vmatprep.subr.bf16.mxu0 0
        %3879 = vmatpush1.bf16.msra.mxu0 0
        %3880 = vmatprep.subr.bf16.mxu0 0
        %3881 = vmatpush1.bf16.msra.mxu0 0
        %3882 = vmatprep.subr.bf16.mxu0 0
        %3883 = vmatpush1.bf16.msra.mxu0 0
        %3884 = vmatprep.subr.bf16.mxu0 0
        %3885 = vmatpush1.bf16.msra.mxu0 0
        %3886 = vmatprep.subr.bf16.mxu0 0
        %3887 = vmatpush1.bf16.msra.mxu0 0
        %3888 = vmatprep.subr.bf16.mxu0 0
        %3889 = vmatpush1.bf16.msra.mxu0 0
        %3890 = vmatprep.subr.bf16.mxu0 0
        %3891 = vmatpush1.bf16.msra.mxu0 0
        %3892 = vmatprep.mubr.bf16.mxu0 0
        %3893 = vmatmul.mubr.bf16.gmra.mrb[0].mxu0 %v3849
        %v3894 = vpop.f32.mrb[0].mxu0
        %v3895 = vadd.f32 %v3834, %v3894
        %v3896 = vpop.f32.mrb[0].mxu0
        %v3897 = vpop.f32.mrb[0].mxu0
        %v3898 = vadd.f32 %v3834, %v3897
        %v3899 = vpop.f32.mrb[0].mxu0
        %3900 = vmatprep.mubr.bf16.mxu0 0
        %3901 = vmatmul.mubr.bf16.gmra.mrb[0].mxu0 %v3852
        %v3902 = vpop.f32.mrb[0].mxu0
        %v3903 = vadd.f32 %v3834, %v3902
        %v3904 = vpop.f32.mrb[0].mxu0
        %v3905 = vpop.f32.mrb[0].mxu0
        %v3906 = vadd.f32 %v3834, %v3905
        %v3907 = vpop.f32.mrb[0].mxu0
        %3908 = vmatprep.mubr.bf16.mxu0 0
        %3909 = vmatmul.mubr.bf16.gmra.mrb[0].mxu0 %v3855
        %v3910 = vpop.f32.mrb[0].mxu0
        %v3911 = vadd.f32 %v3834, %v3910
        %v3912 = vpop.f32.mrb[0].mxu0
        %v3913 = vpop.f32.mrb[0].mxu0
        %v3914 = vadd.f32 %v3834, %v3913
        %v3915 = vpop.f32.mrb[0].mxu0
        %3916 = vmatprep.mubr.bf16.mxu0 0
        %3917 = vmatmul.mubr.bf16.gmra.mrb[0].mxu0 %v3858
        %v3918 = vpop.f32.mrb[0].mxu0
        %v3919 = vadd.f32 %v3834, %v3918
        %v3920 = vpop.f32.mrb[0].mxu0
        %v3921 = vpop.f32.mrb[0].mxu0
        %v3922 = vadd.f32 %v3834, %v3921
        %v3923 = vpop.f32.mrb[0].mxu0
        %3924 = vdwg.mxu0
        %v3925 = vadd.f32 %v2122, %v2132
        %v3926 = vadd.f32 %v2123, %v2133
        %v3927 = vld [vmem:[%s2060] sm:$0xf]
        %v3928 = vld [vmem:[%s2060 + $0x4] sm:$0xf]
        %v3929 = vld [vmem:[%s2060 + $0x8] sm:$0xf]
        %v3930 = vld [vmem:[%s2060 + $0xc] sm:$0xf]
        %v3931 = vpack.c.bf16 %v3926, %v3925
        %v3932 = vld [vmem:[%s1634] sm:$0x1]
        %v3934 = vlaneseq
        %v3935 = vshrl.u32 %v3934, 7
        %v3936 = vsub.s32 0, %v3935
        %v3937 = vrot.slane %v3932, %v3936
        %v3943 = vunpack.c.l.b16 %v3927
        %v3944 = vunpack.c.l.b16 %v3928
        %v3945 = vunpack.c.l.b16 %v3929
        %v3946 = vunpack.c.l.b16 %v3930
        %v3947 = vpack.c.b16 %v3944, %v3943
        %v3948 = vpack.c.b16 %v3946, %v3945
        %v3952 = vsel %vm2171, %v3931, 0
        %3954 = vmatprep.subr.bf16.mxu0 0
        %3955 = vmatpush1.bf16.msra.mxu0 %v3947
        %3956 = vmatprep.subr.bf16.mxu0 0
        %3957 = vmatpush1.bf16.msra.mxu0 %v3948
        %3958 = vmatprep.subr.bf16.mxu0 0
        %3959 = vmatpush1.bf16.msra.mxu0 0
        %3960 = vmatprep.subr.bf16.mxu0 0
        %3961 = vmatpush1.bf16.msra.mxu0 0
        %3962 = vmatprep.subr.bf16.mxu0 0
        %3963 = vmatpush1.bf16.msra.mxu0 0
        %3964 = vmatprep.subr.bf16.mxu0 0
        %3965 = vmatpush1.bf16.msra.mxu0 0
        %3966 = vmatprep.subr.bf16.mxu0 0
        %3967 = vmatpush1.bf16.msra.mxu0 0
        %3968 = vmatprep.subr.bf16.mxu0 0
        %3969 = vmatpush1.bf16.msra.mxu0 0
        %3970 = vmatprep.subr.bf16.mxu0 0
        %3971 = vmatpush1.bf16.msra.mxu0 0
        %3972 = vmatprep.subr.bf16.mxu0 0
        %3973 = vmatpush1.bf16.msra.mxu0 0
        %3974 = vmatprep.subr.bf16.mxu0 0
        %3975 = vmatpush1.bf16.msra.mxu0 0
        %3976 = vmatprep.subr.bf16.mxu0 0
        %3977 = vmatpush1.bf16.msra.mxu0 0
        %3978 = vmatprep.subr.bf16.mxu0 0
        %3979 = vmatpush1.bf16.msra.mxu0 0
        %3980 = vmatprep.subr.bf16.mxu0 0
        %3981 = vmatpush1.bf16.msra.mxu0 0
        %3982 = vmatprep.subr.bf16.mxu0 0
        %3983 = vmatpush1.bf16.msra.mxu0 0
        %3984 = vmatprep.subr.bf16.mxu0 0
        %3985 = vmatpush1.bf16.msra.mxu0 0
        %3986 = vmatprep.mubr.bf16.mxu0 0
        %3987 = vmatmul.mubr.bf16.gmra.mrb[0].mxu0 %v3952
        %v3988 = vpop.f32.mrb[0].mxu0
        %v3989 = vadd.f32 %v3937, %v3988
        %v3990 = vpop.f32.mrb[0].mxu0
        %v3991 = vpop.f32.mrb[0].mxu0
        %v3992 = vadd.f32 %v3937, %v3991
        %v3993 = vpop.f32.mrb[0].mxu0
        %3994 = vdwg.mxu0
        %v3995 = vld [vmem:[%s1643] sm:$0xf]
        %v3996 = vld [vmem:[%s1643 + $0x4] sm:$0xf]
        %v3997 = vld [vmem:[%s1643 + $0x8] sm:$0xf]
        %v3998 = vld [vmem:[%s1643 + $0xc] sm:$0xf]
        %v3999 = vpack.c.bf16 %v2123, %v2122
        %v4000 = vld [vmem:[%s1651] sm:$0x1]
        %v4002 = vlaneseq
        %v4003 = vshrl.u32 %v4002, 7
        %v4004 = vsub.s32 0, %v4003
        %v4005 = vrot.slane %v4000, %v4004
        %v4011 = vunpack.c.l.b16 %v3995
        %v4012 = vunpack.c.l.b16 %v3996
        %v4013 = vunpack.c.l.b16 %v3997
        %v4014 = vunpack.c.l.b16 %v3998
        %v4015 = vpack.c.b16 %v4012, %v4011
        %v4016 = vpack.c.b16 %v4014, %v4013
        %v4020 = vsel %vm2171, %v3999, 0
        %4022 = vmatprep.subr.bf16.mxu0 0
        %4023 = vmatpush1.bf16.msra.mxu0 %v4015
        %4024 = vmatprep.subr.bf16.mxu0 0
        %4025 = vmatpush1.bf16.msra.mxu0 %v4016
        %4026 = vmatprep.subr.bf16.mxu0 0
        %4027 = vmatpush1.bf16.msra.mxu0 0
        %4028 = vmatprep.subr.bf16.mxu0 0
        %4029 = vmatpush1.bf16.msra.mxu0 0
        %4030 = vmatprep.subr.bf16.mxu0 0
        %4031 = vmatpush1.bf16.msra.mxu0 0
        %4032 = vmatprep.subr.bf16.mxu0 0
        %4033 = vmatpush1.bf16.msra.mxu0 0
        %4034 = vmatprep.subr.bf16.mxu0 0
        %4035 = vmatpush1.bf16.msra.mxu0 0
        %4036 = vmatprep.subr.bf16.mxu0 0
        %4037 = vmatpush1.bf16.msra.mxu0 0
        %4038 = vmatprep.subr.bf16.mxu0 0
        %4039 = vmatpush1.bf16.msra.mxu0 0
        %4040 = vmatprep.subr.bf16.mxu0 0
        %4041 = vmatpush1.bf16.msra.mxu0 0
        %4042 = vmatprep.subr.bf16.mxu0 0
        %4043 = vmatpush1.bf16.msra.mxu0 0
        %4044 = vmatprep.subr.bf16.mxu0 0
        %4045 = vmatpush1.bf16.msra.mxu0 0
        %4046 = vmatprep.subr.bf16.mxu0 0
        %4047 = vmatpush1.bf16.msra.mxu0 0
        %4048 = vmatprep.subr.bf16.mxu0 0
        %4049 = vmatpush1.bf16.msra.mxu0 0
        %4050 = vmatprep.subr.bf16.mxu0 0
        %4051 = vmatpush1.bf16.msra.mxu0 0
        %4052 = vmatprep.subr.bf16.mxu0 0
        %4053 = vmatpush1.bf16.msra.mxu0 0
        %4054 = vmatprep.mubr.bf16.mxu0 0
        %4055 = vmatmul.mubr.bf16.gmra.mrb[0].mxu0 %v4020
        %v4056 = vpop.f32.mrb[0].mxu0
        %v4057 = vadd.f32 %v4005, %v4056
        %v4058 = vpop.f32.mrb[0].mxu0
        %v4059 = vpop.f32.mrb[0].mxu0
        %v4060 = vadd.f32 %v4005, %v4059
        %v4061 = vpop.f32.mrb[0].mxu0
        %4062 = vdwg.mxu0
        %v4063 = vmul.f32 %v3895, 0.35355338
        %v4064 = vmul.f32 %v3898, 0.35355338
        %v4065 = vmul.f32 %v3903, 0.35355338
        %v4066 = vmul.f32 %v3906, 0.35355338
        %v4067 = vmul.f32 %v3911, 0.35355338
        %v4068 = vmul.f32 %v3914, 0.35355338
        %v4069 = vmul.f32 %v3919, 0.35355338
        %v4070 = vmul.f32 %v3922, 0.35355338
        %v4071 = vpack.c.bf16 %v4064, %v4063
        %v4072 = vpack.c.bf16 %v4066, %v4065
        %v4073 = vpack.c.bf16 %v4068, %v4067
        %v4074 = vpack.c.bf16 %v4070, %v4069
        %v4075 = vmul.f32 %v3989, %v2371
        %v4076 = vmul.f32 %v3992, %v2371
        %v4077 = vpack.c.bf16 %v4076, %v4075
        %v4078 = vmul.f32 %v4057, %v2371
        %v4079 = vmul.f32 %v4060, %v2371
        %v4080 = vpack.c.bf16 %v4079, %v4078
        %v4082 = vlaneseq
        %v4083 = vshrl.u32 %v4082, 7
        %v4084 = vsub.s32 0, %v4083
        %v4085 = vrot.slane %v2135, %v4084
        %v4088 = vsel %vm2171, %v4071, 0
        %v4091 = vsel %vm2171, %v4072, 0
        %v4094 = vsel %vm2171, %v4073, 0
        %v4097 = vsel %vm2171, %v4074, 0
        %v4100 = vsel %vm2171, %v4077, 0
        %4102 = vmatprep.subr.bf16.mxu0 0
        %4103 = vmatpush1.bf16.xpose.msra.mxu0 %v4100
        %4104 = vmatprep.subr.bf16.mxu0 0
        %4105 = vmatpush1.bf16.xpose.msra.mxu0 0
        %4106 = vmatprep.subr.bf16.mxu0 0
        %4107 = vmatpush1.bf16.xpose.msra.mxu0 0
        %4108 = vmatprep.subr.bf16.mxu0 0
        %4109 = vmatpush1.bf16.xpose.msra.mxu0 0
        %4110 = vmatprep.subr.bf16.mxu0 0
        %4111 = vmatpush1.bf16.xpose.msra.mxu0 0
        %4112 = vmatprep.subr.bf16.mxu0 0
        %4113 = vmatpush1.bf16.xpose.msra.mxu0 0
        %4114 = vmatprep.subr.bf16.mxu0 0
        %4115 = vmatpush1.bf16.xpose.msra.mxu0 0
        %4116 = vmatprep.subr.bf16.mxu0 0
        %4117 = vmatpush1.bf16.xpose.msra.mxu0 0
        %4118 = vmatprep.subr.bf16.mxu0 0
        %4119 = vmatpush1.bf16.xpose.msra.mxu0 0
        %4120 = vmatprep.subr.bf16.mxu0 0
        %4121 = vmatpush1.bf16.xpose.msra.mxu0 0
        %4122 = vmatprep.subr.bf16.mxu0 0
        %4123 = vmatpush1.bf16.xpose.msra.mxu0 0
        %4124 = vmatprep.subr.bf16.mxu0 0
        %4125 = vmatpush1.bf16.xpose.msra.mxu0 0
        %4126 = vmatprep.subr.bf16.mxu0 0
        %4127 = vmatpush1.bf16.xpose.msra.mxu0 0
        %4128 = vmatprep.subr.bf16.mxu0 0
        %4129 = vmatpush1.bf16.xpose.msra.mxu0 0
        %4130 = vmatprep.subr.bf16.mxu0 0
        %4131 = vmatpush1.bf16.xpose.msra.mxu0 0
        %4132 = vmatprep.subr.bf16.mxu0 0
        %4133 = vmatpush1.bf16.xpose.msra.mxu0 0
        %4134 = vmatprep.mubr.bf16.mxu0 0
        %4135 = vmatmul.mubr.bf16.gmra.mrb[0].mxu0 %v4088
        %v4136 = vpop.f32.mrb[0].mxu0
        %v4137 = vadd.f32 %v4085, %v4136
        %v4138 = vpop.f32.mrb[0].mxu0
        %v4139 = vpop.f32.mrb[0].mxu0
        %v4140 = vadd.f32 %v4085, %v4139
        %v4141 = vpop.f32.mrb[0].mxu0
        %4142 = vmatprep.mubr.bf16.mxu0 0
        %4143 = vmatmul.mubr.bf16.gmra.mrb[0].mxu0 %v4091
        %v4144 = vpop.f32.mrb[0].mxu0
        %v4145 = vadd.f32 %v4085, %v4144
        %v4146 = vpop.f32.mrb[0].mxu0
        %v4147 = vpop.f32.mrb[0].mxu0
        %v4148 = vadd.f32 %v4085, %v4147
        %v4149 = vpop.f32.mrb[0].mxu0
        %4150 = vmatprep.mubr.bf16.mxu0 0
        %4151 = vmatmul.mubr.bf16.gmra.mrb[0].mxu0 %v4094
        %v4152 = vpop.f32.mrb[0].mxu0
        %v4153 = vadd.f32 %v4085, %v4152
        %v4154 = vpop.f32.mrb[0].mxu0
        %v4155 = vpop.f32.mrb[0].mxu0
        %v4156 = vadd.f32 %v4085, %v4155
        %v4157 = vpop.f32.mrb[0].mxu0
        %4158 = vmatprep.mubr.bf16.mxu0 0
        %4159 = vmatmul.mubr.bf16.gmra.mrb[0].mxu0 %v4097
        %v4160 = vpop.f32.mrb[0].mxu0
        %v4161 = vadd.f32 %v4085, %v4160
        %v4162 = vpop.f32.mrb[0].mxu0
        %v4163 = vpop.f32.mrb[0].mxu0
        %v4164 = vadd.f32 %v4085, %v4163
        %v4165 = vpop.f32.mrb[0].mxu0
        %4166 = vdwg.mxu0
        %vm4167 = vcmask 130048
        %v4168 = vsel %vm4167, %v4137, -inf
        %4169 = vmax.xlane.f32.xlu0 %v4168
        %v4170 = vpop.xlane.xlu0 %4169
        %v4171 = vsel %vm4167, %v4140, -inf
        %4172 = vmax.xlane.f32.xlu0 %v4171
        %v4173 = vpop.xlane.xlu0 %4172
        %v4174 = vsel %vm4167, %v4145, -inf
        %4175 = vmax.xlane.f32.xlu0 %v4174
        %v4176 = vpop.xlane.xlu0 %4175
        %v4177 = vsel %vm4167, %v4148, -inf
        %4178 = vmax.xlane.f32.xlu0 %v4177
        %v4179 = vpop.xlane.xlu0 %4178
        %v4180 = vsel %vm4167, %v4153, -inf
        %4181 = vmax.xlane.f32.xlu0 %v4180
        %v4182 = vpop.xlane.xlu0 %4181
        %v4183 = vsel %vm4167, %v4156, -inf
        %4184 = vmax.xlane.f32.xlu0 %v4183
        %v4185 = vpop.xlane.xlu0 %4184
        %v4186 = vsel %vm4167, %v4161, -inf
        %4187 = vmax.xlane.f32.xlu0 %v4186
        %v4188 = vpop.xlane.xlu0 %4187
        %v4189 = vsel %vm4167, %v4164, -inf
        %4190 = vmax.xlane.f32.xlu0 %v4189
        %v4191 = vpop.xlane.xlu0 %4190
        %v4192 = vsub.f32 %v4137, %v4170
        %v4193 = vsub.f32 %v4140, %v4173
        %v4194 = vsub.f32 %v4145, %v4176
        %v4195 = vsub.f32 %v4148, %v4179
        %v4196 = vsub.f32 %v4153, %v4182
        %v4197 = vsub.f32 %v4156, %v4185
        %v4198 = vsub.f32 %v4161, %v4188
        %v4199 = vsub.f32 %v4164, %v4191
        %v4200 = vmul.f32 %v4192, 1.442695
        %v4201 = vpow.pop %v4200
        %v4202 = vmul.f32 %v4193, 1.442695
        %v4203 = vpow.pop %v4202
        %v4204 = vmul.f32 %v4194, 1.442695
        %v4205 = vpow.pop %v4204
        %v4206 = vmul.f32 %v4195, 1.442695
        %v4207 = vpow.pop %v4206
        %v4208 = vmul.f32 %v4196, 1.442695
        %v4209 = vpow.pop %v4208
        %v4210 = vmul.f32 %v4197, 1.442695
        %v4211 = vpow.pop %v4210
        %v4212 = vmul.f32 %v4198, 1.442695
        %v4213 = vpow.pop %v4212
        %v4214 = vmul.f32 %v4199, 1.442695
        %v4215 = vpow.pop %v4214
        %v4216 = vsel %vm4167, %v4201, 0.0
        %4217 = vadd.xlane.f32.xlu0 %v4216
        %v4218 = vpop.xlane.xlu0 %4217
        %v4219 = vsel %vm4167, %v4203, 0.0
        %4220 = vadd.xlane.f32.xlu0 %v4219
        %v4221 = vpop.xlane.xlu0 %4220
        %v4222 = vsel %vm4167, %v4205, 0.0
        %4223 = vadd.xlane.f32.xlu0 %v4222
        %v4224 = vpop.xlane.xlu0 %4223
        %v4225 = vsel %vm4167, %v4207, 0.0
        %4226 = vadd.xlane.f32.xlu0 %v4225
        %v4227 = vpop.xlane.xlu0 %4226
        %v4228 = vsel %vm4167, %v4209, 0.0
        %4229 = vadd.xlane.f32.xlu0 %v4228
        %v4230 = vpop.xlane.xlu0 %4229
        %v4231 = vsel %vm4167, %v4211, 0.0
        %4232 = vadd.xlane.f32.xlu0 %v4231
        %v4233 = vpop.xlane.xlu0 %4232
        %v4234 = vsel %vm4167, %v4213, 0.0
        %4235 = vadd.xlane.f32.xlu0 %v4234
        %v4236 = vpop.xlane.xlu0 %4235
        %v4237 = vsel %vm4167, %v4215, 0.0
        %4238 = vadd.xlane.f32.xlu0 %v4237
        %v4239 = vpop.xlane.xlu0 %4238
        %v4240 = vrcp.pop %v4218
        %v4241 = vrcp.pop %v4221
        %v4242 = vrcp.pop %v4224
        %v4243 = vrcp.pop %v4227
        %v4244 = vrcp.pop %v4230
        %v4245 = vrcp.pop %v4233
        %v4246 = vrcp.pop %v4236
        %v4247 = vrcp.pop %v4239
        %v4248 = vmul.f32 %v4201, %v4240
        %v4249 = vmul.f32 %v4203, %v4241
        %v4250 = vmul.f32 %v4205, %v4242
        %v4251 = vmul.f32 %v4207, %v4243
        %v4252 = vmul.f32 %v4209, %v4244
        %v4253 = vmul.f32 %v4211, %v4245
        %v4254 = vmul.f32 %v4213, %v4246
        %v4255 = vmul.f32 %v4215, %v4247
        %v4256 = vpack.c.bf16 %v4249, %v4248
        %v4257 = vpack.c.bf16 %v4251, %v4250
        %v4258 = vpack.c.bf16 %v4253, %v4252
        %v4259 = vpack.c.bf16 %v4255, %v4254
        %v4260 = vmul.f32 %v3989, %v2604
        %v4261 = vmul.f32 %v3992, %v2604
        %v4262 = vpack.c.bf16 %v4261, %v4260
        %v4263 = vmul.f32 %v4057, %v2604
        %v4264 = vmul.f32 %v4060, %v2604
        %v4265 = vpack.c.bf16 %v4264, %v4263
        %v4267 = vsel %vm2171, %v4262, 0
        %4269 = vmatprep.subr.bf16.mxu0 0
        %4270 = vmatpush1.bf16.xpose.msra.mxu0 %v4267
        %4271 = vmatprep.subr.bf16.mxu0 0
        %4272 = vmatpush1.bf16.xpose.msra.mxu0 0
        %4273 = vmatprep.subr.bf16.mxu0 0
        %4274 = vmatpush1.bf16.xpose.msra.mxu0 0
        %4275 = vmatprep.subr.bf16.mxu0 0
        %4276 = vmatpush1.bf16.xpose.msra.mxu0 0
        %4277 = vmatprep.subr.bf16.mxu0 0
        %4278 = vmatpush1.bf16.xpose.msra.mxu0 0
        %4279 = vmatprep.subr.bf16.mxu0 0
        %4280 = vmatpush1.bf16.xpose.msra.mxu0 0
        %4281 = vmatprep.subr.bf16.mxu0 0
        %4282 = vmatpush1.bf16.xpose.msra.mxu0 0
        %4283 = vmatprep.subr.bf16.mxu0 0
        %4284 = vmatpush1.bf16.xpose.msra.mxu0 0
        %4285 = vmatprep.subr.bf16.mxu0 0
        %4286 = vmatpush1.bf16.xpose.msra.mxu0 0
        %4287 = vmatprep.subr.bf16.mxu0 0
        %4288 = vmatpush1.bf16.xpose.msra.mxu0 0
        %4289 = vmatprep.subr.bf16.mxu0 0
        %4290 = vmatpush1.bf16.xpose.msra.mxu0 0
        %4291 = vmatprep.subr.bf16.mxu0 0
        %4292 = vmatpush1.bf16.xpose.msra.mxu0 0
        %4293 = vmatprep.subr.bf16.mxu0 0
        %4294 = vmatpush1.bf16.xpose.msra.mxu0 0
        %4295 = vmatprep.subr.bf16.mxu0 0
        %4296 = vmatpush1.bf16.xpose.msra.mxu0 0
        %4297 = vmatprep.subr.bf16.mxu0 0
        %4298 = vmatpush1.bf16.xpose.msra.mxu0 0
        %4299 = vmatprep.subr.bf16.mxu0 0
        %4300 = vmatpush1.bf16.xpose.msra.mxu0 0
        %4301 = vmatprep.mubr.bf16.mxu0 0
        %4302 = vmatmul.mubr.bf16.gmra.mrb[0].mxu0 %v4088
        %v4303 = vpop.f32.mrb[0].mxu0
        %v4304 = vadd.f32 %v4085, %v4303
        %v4305 = vpop.f32.mrb[0].mxu0
        %v4306 = vpop.f32.mrb[0].mxu0
        %v4307 = vadd.f32 %v4085, %v4306
        %v4308 = vpop.f32.mrb[0].mxu0
        %4309 = vmatprep.mubr.bf16.mxu0 0
        %4310 = vmatmul.mubr.bf16.gmra.mrb[0].mxu0 %v4091
        %v4311 = vpop.f32.mrb[0].mxu0
        %v4312 = vadd.f32 %v4085, %v4311
        %v4313 = vpop.f32.mrb[0].mxu0
        %v4314 = vpop.f32.mrb[0].mxu0
        %v4315 = vadd.f32 %v4085, %v4314
        %v4316 = vpop.f32.mrb[0].mxu0
        %4317 = vmatprep.mubr.bf16.mxu0 0
        %4318 = vmatmul.mubr.bf16.gmra.mrb[0].mxu0 %v4094
        %v4319 = vpop.f32.mrb[0].mxu0
        %v4320 = vadd.f32 %v4085, %v4319
        %v4321 = vpop.f32.mrb[0].mxu0
        %v4322 = vpop.f32.mrb[0].mxu0
        %v4323 = vadd.f32 %v4085, %v4322
        %v4324 = vpop.f32.mrb[0].mxu0
        %4325 = vmatprep.mubr.bf16.mxu0 0
        %4326 = vmatmul.mubr.bf16.gmra.mrb[0].mxu0 %v4097
        %v4327 = vpop.f32.mrb[0].mxu0
        %v4328 = vadd.f32 %v4085, %v4327
        %v4329 = vpop.f32.mrb[0].mxu0
        %v4330 = vpop.f32.mrb[0].mxu0
        %v4331 = vadd.f32 %v4085, %v4330
        %v4332 = vpop.f32.mrb[0].mxu0
        %4333 = vdwg.mxu0
        %v4334 = vsel %vm4167, %v4304, -inf
        %4335 = vmax.xlane.f32.xlu0 %v4334
        %v4336 = vpop.xlane.xlu0 %4335
        %v4337 = vsel %vm4167, %v4307, -inf
        %4338 = vmax.xlane.f32.xlu0 %v4337
        %v4339 = vpop.xlane.xlu0 %4338
        %v4340 = vsel %vm4167, %v4312, -inf
        %4341 = vmax.xlane.f32.xlu0 %v4340
        %v4342 = vpop.xlane.xlu0 %4341
        %v4343 = vsel %vm4167, %v4315, -inf
        %4344 = vmax.xlane.f32.xlu0 %v4343
        %v4345 = vpop.xlane.xlu0 %4344
        %v4346 = vsel %vm4167, %v4320, -inf
        %4347 = vmax.xlane.f32.xlu0 %v4346
        %v4348 = vpop.xlane.xlu0 %4347
        %v4349 = vsel %vm4167, %v4323, -inf
        %4350 = vmax.xlane.f32.xlu0 %v4349
        %v4351 = vpop.xlane.xlu0 %4350
        %v4352 = vsel %vm4167, %v4328, -inf
        %4353 = vmax.xlane.f32.xlu0 %v4352
        %v4354 = vpop.xlane.xlu0 %4353
        %v4355 = vsel %vm4167, %v4331, -inf
        %4356 = vmax.xlane.f32.xlu0 %v4355
        %v4357 = vpop.xlane.xlu0 %4356
        %v4358 = vsub.f32 %v4304, %v4336
        %v4359 = vsub.f32 %v4307, %v4339
        %v4360 = vsub.f32 %v4312, %v4342
        %v4361 = vsub.f32 %v4315, %v4345
        %v4362 = vsub.f32 %v4320, %v4348
        %v4363 = vsub.f32 %v4323, %v4351
        %v4364 = vsub.f32 %v4328, %v4354
        %v4365 = vsub.f32 %v4331, %v4357
        %v4366 = vmul.f32 %v4358, 1.442695
        %v4367 = vpow.pop %v4366
        %v4368 = vmul.f32 %v4359, 1.442695
        %v4369 = vpow.pop %v4368
        %v4370 = vmul.f32 %v4360, 1.442695
        %v4371 = vpow.pop %v4370
        %v4372 = vmul.f32 %v4361, 1.442695
        %v4373 = vpow.pop %v4372
        %v4374 = vmul.f32 %v4362, 1.442695
        %v4375 = vpow.pop %v4374
        %v4376 = vmul.f32 %v4363, 1.442695
        %v4377 = vpow.pop %v4376
        %v4378 = vmul.f32 %v4364, 1.442695
        %v4379 = vpow.pop %v4378
        %v4380 = vmul.f32 %v4365, 1.442695
        %v4381 = vpow.pop %v4380
        %v4382 = vsel %vm4167, %v4367, 0.0
        %4383 = vadd.xlane.f32.xlu0 %v4382
        %v4384 = vpop.xlane.xlu0 %4383
        %v4385 = vsel %vm4167, %v4369, 0.0
        %4386 = vadd.xlane.f32.xlu0 %v4385
        %v4387 = vpop.xlane.xlu0 %4386
        %v4388 = vsel %vm4167, %v4371, 0.0
        %4389 = vadd.xlane.f32.xlu0 %v4388
        %v4390 = vpop.xlane.xlu0 %4389
        %v4391 = vsel %vm4167, %v4373, 0.0
        %4392 = vadd.xlane.f32.xlu0 %v4391
        %v4393 = vpop.xlane.xlu0 %4392
        %v4394 = vsel %vm4167, %v4375, 0.0
        %4395 = vadd.xlane.f32.xlu0 %v4394
        %v4396 = vpop.xlane.xlu0 %4395
        %v4397 = vsel %vm4167, %v4377, 0.0
        %4398 = vadd.xlane.f32.xlu0 %v4397
        %v4399 = vpop.xlane.xlu0 %4398
        %v4400 = vsel %vm4167, %v4379, 0.0
        %4401 = vadd.xlane.f32.xlu0 %v4400
        %v4402 = vpop.xlane.xlu0 %4401
        %v4403 = vsel %vm4167, %v4381, 0.0
        %4404 = vadd.xlane.f32.xlu0 %v4403
        %v4405 = vpop.xlane.xlu0 %4404
        %v4406 = vrcp.pop %v4384
        %v4407 = vrcp.pop %v4387
        %v4408 = vrcp.pop %v4390
        %v4409 = vrcp.pop %v4393
        %v4410 = vrcp.pop %v4396
        %v4411 = vrcp.pop %v4399
        %v4412 = vrcp.pop %v4402
        %v4413 = vrcp.pop %v4405
        %v4414 = vmul.f32 %v4367, %v4406
        %v4415 = vmul.f32 %v4369, %v4407
        %v4416 = vmul.f32 %v4371, %v4408
        %v4417 = vmul.f32 %v4373, %v4409
        %v4418 = vmul.f32 %v4375, %v4410
        %v4419 = vmul.f32 %v4377, %v4411
        %v4420 = vmul.f32 %v4379, %v4412
        %v4421 = vmul.f32 %v4381, %v4413
        %v4422 = vpack.c.bf16 %v4415, %v4414
        %v4423 = vpack.c.bf16 %v4417, %v4416
        %v4424 = vpack.c.bf16 %v4419, %v4418
        %v4425 = vpack.c.bf16 %v4421, %v4420
        %v4427 = vsel %vm4167, %v4422, 0
        %v4430 = vsel %vm4167, %v4423, 0
        %v4433 = vsel %vm4167, %v4424, 0
        %v4436 = vsel %vm4167, %v4425, 0
        %4438 = vmatprep.subr.bf16.mxu0 0
        %4439 = vmatpush1.bf16.msra.mxu0 %v4265
        %4440 = vmatprep.subr.bf16.mxu0 0
        %4441 = vmatpush1.bf16.msra.mxu0 0
        %4442 = vmatprep.subr.bf16.mxu0 0
        %4443 = vmatpush1.bf16.msra.mxu0 0
        %4444 = vmatprep.subr.bf16.mxu0 0
        %4445 = vmatpush1.bf16.msra.mxu0 0
        %4446 = vmatprep.subr.bf16.mxu0 0
        %4447 = vmatpush1.bf16.msra.mxu0 0
        %4448 = vmatprep.subr.bf16.mxu0 0
        %4449 = vmatpush1.bf16.msra.mxu0 0
        %4450 = vmatprep.subr.bf16.mxu0 0
        %4451 = vmatpush1.bf16.msra.mxu0 0
        %4452 = vmatprep.subr.bf16.mxu0 0
        %4453 = vmatpush1.bf16.msra.mxu0 0
        %4454 = vmatprep.subr.bf16.mxu0 0
        %4455 = vmatpush1.bf16.msra.mxu0 0
        %4456 = vmatprep.subr.bf16.mxu0 0
        %4457 = vmatpush1.bf16.msra.mxu0 0
        %4458 = vmatprep.subr.bf16.mxu0 0
        %4459 = vmatpush1.bf16.msra.mxu0 0
        %4460 = vmatprep.subr.bf16.mxu0 0
        %4461 = vmatpush1.bf16.msra.mxu0 0
        %4462 = vmatprep.subr.bf16.mxu0 0
        %4463 = vmatpush1.bf16.msra.mxu0 0
        %4464 = vmatprep.subr.bf16.mxu0 0
        %4465 = vmatpush1.bf16.msra.mxu0 0
        %4466 = vmatprep.subr.bf16.mxu0 0
        %4467 = vmatpush1.bf16.msra.mxu0 0
        %4468 = vmatprep.subr.bf16.mxu0 0
        %4469 = vmatpush1.bf16.msra.mxu0 0
        %4470 = vmatprep.mubr.bf16.mxu0 0
        %4471 = vmatmul.mubr.bf16.gmra.mrb[0].mxu0 %v4427
        %v4472 = vpop.f32.mrb[0].mxu0
        %v4473 = vadd.f32 0.0, %v4472
        %v4474 = vpop.f32.mrb[0].mxu0
        %v4475 = vpop.f32.mrb[0].mxu0
        %v4476 = vadd.f32 0.0, %v4475
        %v4477 = vpop.f32.mrb[0].mxu0
        %4478 = vmatprep.mubr.bf16.mxu0 0
        %4479 = vmatmul.mubr.bf16.gmra.mrb[0].mxu0 %v4430
        %v4480 = vpop.f32.mrb[0].mxu0
        %v4481 = vadd.f32 0.0, %v4480
        %v4482 = vpop.f32.mrb[0].mxu0
        %v4483 = vpop.f32.mrb[0].mxu0
        %v4484 = vadd.f32 0.0, %v4483
        %v4485 = vpop.f32.mrb[0].mxu0
        %4486 = vmatprep.mubr.bf16.mxu0 0
        %4487 = vmatmul.mubr.bf16.gmra.mrb[0].mxu0 %v4433
        %v4488 = vpop.f32.mrb[0].mxu0
        %v4489 = vadd.f32 0.0, %v4488
        %v4490 = vpop.f32.mrb[0].mxu0
        %v4491 = vpop.f32.mrb[0].mxu0
        %v4492 = vadd.f32 0.0, %v4491
        %v4493 = vpop.f32.mrb[0].mxu0
        %4494 = vmatprep.mubr.bf16.mxu0 0
        %4495 = vmatmul.mubr.bf16.gmra.mrb[0].mxu0 %v4436
        %v4496 = vpop.f32.mrb[0].mxu0
        %v4497 = vadd.f32 0.0, %v4496
        %v4498 = vpop.f32.mrb[0].mxu0
        %v4499 = vpop.f32.mrb[0].mxu0
        %v4500 = vadd.f32 0.0, %v4499
        %v4501 = vpop.f32.mrb[0].mxu0
        %4502 = vdwg.mxu0
        %v4504 = vsel %vm4167, %v4256, 0
        %v4507 = vsel %vm4167, %v4257, 0
        %v4510 = vsel %vm4167, %v4258, 0
        %v4513 = vsel %vm4167, %v4259, 0
        %4515 = vmatprep.subr.bf16.mxu0 0
        %4516 = vmatpush1.bf16.msra.mxu0 %v4080
        %4517 = vmatprep.subr.bf16.mxu0 0
        %4518 = vmatpush1.bf16.msra.mxu0 0
        %4519 = vmatprep.subr.bf16.mxu0 0
        %4520 = vmatpush1.bf16.msra.mxu0 0
        %4521 = vmatprep.subr.bf16.mxu0 0
        %4522 = vmatpush1.bf16.msra.mxu0 0
        %4523 = vmatprep.subr.bf16.mxu0 0
        %4524 = vmatpush1.bf16.msra.mxu0 0
        %4525 = vmatprep.subr.bf16.mxu0 0
        %4526 = vmatpush1.bf16.msra.mxu0 0
        %4527 = vmatprep.subr.bf16.mxu0 0
        %4528 = vmatpush1.bf16.msra.mxu0 0
        %4529 = vmatprep.subr.bf16.mxu0 0
        %4530 = vmatpush1.bf16.msra.mxu0 0
        %4531 = vmatprep.subr.bf16.mxu0 0
        %4532 = vmatpush1.bf16.msra.mxu0 0
        %4533 = vmatprep.subr.bf16.mxu0 0
        %4534 = vmatpush1.bf16.msra.mxu0 0
        %4535 = vmatprep.subr.bf16.mxu0 0
        %4536 = vmatpush1.bf16.msra.mxu0 0
        %4537 = vmatprep.subr.bf16.mxu0 0
        %4538 = vmatpush1.bf16.msra.mxu0 0
        %4539 = vmatprep.subr.bf16.mxu0 0
        %4540 = vmatpush1.bf16.msra.mxu0 0
        %4541 = vmatprep.subr.bf16.mxu0 0
        %4542 = vmatpush1.bf16.msra.mxu0 0
        %4543 = vmatprep.subr.bf16.mxu0 0
        %4544 = vmatpush1.bf16.msra.mxu0 0
        %4545 = vmatprep.subr.bf16.mxu0 0
        %4546 = vmatpush1.bf16.msra.mxu0 0
        %4547 = vmatprep.mubr.bf16.mxu0 0
        %4548 = vmatmul.mubr.bf16.gmra.mrb[0].mxu0 %v4504
        %v4549 = vpop.f32.mrb[0].mxu0
        %v4550 = vadd.f32 %v4473, %v4549
        %v4551 = vpop.f32.mrb[0].mxu0
        %v4552 = vpop.f32.mrb[0].mxu0
        %v4553 = vadd.f32 %v4476, %v4552
        %v4554 = vpop.f32.mrb[0].mxu0
        %4555 = vmatprep.mubr.bf16.mxu0 0
        %4556 = vmatmul.mubr.bf16.gmra.mrb[0].mxu0 %v4507
        %v4557 = vpop.f32.mrb[0].mxu0
        %v4558 = vadd.f32 %v4481, %v4557
        %v4559 = vpop.f32.mrb[0].mxu0
        %v4560 = vpop.f32.mrb[0].mxu0
        %v4561 = vadd.f32 %v4484, %v4560
        %v4562 = vpop.f32.mrb[0].mxu0
        %4563 = vmatprep.mubr.bf16.mxu0 0
        %4564 = vmatmul.mubr.bf16.gmra.mrb[0].mxu0 %v4510
        %v4565 = vpop.f32.mrb[0].mxu0
        %v4566 = vadd.f32 %v4489, %v4565
        %v4567 = vpop.f32.mrb[0].mxu0
        %v4568 = vpop.f32.mrb[0].mxu0
        %v4569 = vadd.f32 %v4492, %v4568
        %v4570 = vpop.f32.mrb[0].mxu0
        %4571 = vmatprep.mubr.bf16.mxu0 0
        %4572 = vmatmul.mubr.bf16.gmra.mrb[0].mxu0 %v4513
        %v4573 = vpop.f32.mrb[0].mxu0
        %v4574 = vadd.f32 %v4497, %v4573
        %v4575 = vpop.f32.mrb[0].mxu0
        %v4576 = vpop.f32.mrb[0].mxu0
        %v4577 = vadd.f32 %v4500, %v4576
        %v4578 = vpop.f32.mrb[0].mxu0
        %4579 = vdwg.mxu0
        %v4580 = vmul.f32 %v3989, %v2972
        %v4581 = vmul.f32 %v3992, %v2972
        %v4582 = vpack.c.bf16 %v4581, %v4580
        %v4583 = vmul.f32 %v4057, %v2972
        %v4584 = vmul.f32 %v4060, %v2972
        %v4585 = vpack.c.bf16 %v4584, %v4583
        %v4587 = vsel %vm2171, %v4582, 0
        %4589 = vmatprep.subr.bf16.mxu0 0
        %4590 = vmatpush1.bf16.xpose.msra.mxu0 %v4587
        %4591 = vmatprep.subr.bf16.mxu0 0
        %4592 = vmatpush1.bf16.xpose.msra.mxu0 0
        %4593 = vmatprep.subr.bf16.mxu0 0
        %4594 = vmatpush1.bf16.xpose.msra.mxu0 0
        %4595 = vmatprep.subr.bf16.mxu0 0
        %4596 = vmatpush1.bf16.xpose.msra.mxu0 0
        %4597 = vmatprep.subr.bf16.mxu0 0
        %4598 = vmatpush1.bf16.xpose.msra.mxu0 0
        %4599 = vmatprep.subr.bf16.mxu0 0
        %4600 = vmatpush1.bf16.xpose.msra.mxu0 0
        %4601 = vmatprep.subr.bf16.mxu0 0
        %4602 = vmatpush1.bf16.xpose.msra.mxu0 0
        %4603 = vmatprep.subr.bf16.mxu0 0
        %4604 = vmatpush1.bf16.xpose.msra.mxu0 0
        %4605 = vmatprep.subr.bf16.mxu0 0
        %4606 = vmatpush1.bf16.xpose.msra.mxu0 0
        %4607 = vmatprep.subr.bf16.mxu0 0
        %4608 = vmatpush1.bf16.xpose.msra.mxu0 0
        %4609 = vmatprep.subr.bf16.mxu0 0
        %4610 = vmatpush1.bf16.xpose.msra.mxu0 0
        %4611 = vmatprep.subr.bf16.mxu0 0
        %4612 = vmatpush1.bf16.xpose.msra.mxu0 0
        %4613 = vmatprep.subr.bf16.mxu0 0
        %4614 = vmatpush1.bf16.xpose.msra.mxu0 0
        %4615 = vmatprep.subr.bf16.mxu0 0
        %4616 = vmatpush1.bf16.xpose.msra.mxu0 0
        %4617 = vmatprep.subr.bf16.mxu0 0
        %4618 = vmatpush1.bf16.xpose.msra.mxu0 0
        %4619 = vmatprep.subr.bf16.mxu0 0
        %4620 = vmatpush1.bf16.xpose.msra.mxu0 0
        %4621 = vmatprep.mubr.bf16.mxu0 0
        %4622 = vmatmul.mubr.bf16.gmra.mrb[0].mxu0 %v4088
        %v4623 = vpop.f32.mrb[0].mxu0
        %v4624 = vadd.f32 %v4085, %v4623
        %v4625 = vpop.f32.mrb[0].mxu0
        %v4626 = vpop.f32.mrb[0].mxu0
        %v4627 = vadd.f32 %v4085, %v4626
        %v4628 = vpop.f32.mrb[0].mxu0
        %4629 = vmatprep.mubr.bf16.mxu0 0
        %4630 = vmatmul.mubr.bf16.gmra.mrb[0].mxu0 %v4091
        %v4631 = vpop.f32.mrb[0].mxu0
        %v4632 = vadd.f32 %v4085, %v4631
        %v4633 = vpop.f32.mrb[0].mxu0
        %v4634 = vpop.f32.mrb[0].mxu0
        %v4635 = vadd.f32 %v4085, %v4634
        %v4636 = vpop.f32.mrb[0].mxu0
        %4637 = vmatprep.mubr.bf16.mxu0 0
        %4638 = vmatmul.mubr.bf16.gmra.mrb[0].mxu0 %v4094
        %v4639 = vpop.f32.mrb[0].mxu0
        %v4640 = vadd.f32 %v4085, %v4639
        %v4641 = vpop.f32.mrb[0].mxu0
        %v4642 = vpop.f32.mrb[0].mxu0
        %v4643 = vadd.f32 %v4085, %v4642
        %v4644 = vpop.f32.mrb[0].mxu0
        %4645 = vmatprep.mubr.bf16.mxu0 0
        %4646 = vmatmul.mubr.bf16.gmra.mrb[0].mxu0 %v4097
        %v4647 = vpop.f32.mrb[0].mxu0
        %v4648 = vadd.f32 %v4085, %v4647
        %v4649 = vpop.f32.mrb[0].mxu0
        %v4650 = vpop.f32.mrb[0].mxu0
        %v4651 = vadd.f32 %v4085, %v4650
        %v4652 = vpop.f32.mrb[0].mxu0
        %4653 = vdwg.mxu0
        %v4654 = vsel %vm4167, %v4624, -inf
        %4655 = vmax.xlane.f32.xlu0 %v4654
        %v4656 = vpop.xlane.xlu0 %4655
        %v4657 = vsel %vm4167, %v4627, -inf
        %4658 = vmax.xlane.f32.xlu0 %v4657
        %v4659 = vpop.xlane.xlu0 %4658
        %v4660 = vsel %vm4167, %v4632, -inf
        %4661 = vmax.xlane.f32.xlu0 %v4660
        %v4662 = vpop.xlane.xlu0 %4661
        %v4663 = vsel %vm4167, %v4635, -inf
        %4664 = vmax.xlane.f32.xlu0 %v4663
        %v4665 = vpop.xlane.xlu0 %4664
        %v4666 = vsel %vm4167, %v4640, -inf
        %4667 = vmax.xlane.f32.xlu0 %v4666
        %v4668 = vpop.xlane.xlu0 %4667
        %v4669 = vsel %vm4167, %v4643, -inf
        %4670 = vmax.xlane.f32.xlu0 %v4669
        %v4671 = vpop.xlane.xlu0 %4670
        %v4672 = vsel %vm4167, %v4648, -inf
        %4673 = vmax.xlane.f32.xlu0 %v4672
        %v4674 = vpop.xlane.xlu0 %4673
        %v4675 = vsel %vm4167, %v4651, -inf
        %4676 = vmax.xlane.f32.xlu0 %v4675
        %v4677 = vpop.xlane.xlu0 %4676
        %v4678 = vsub.f32 %v4624, %v4656
        %v4679 = vsub.f32 %v4627, %v4659
        %v4680 = vsub.f32 %v4632, %v4662
        %v4681 = vsub.f32 %v4635, %v4665
        %v4682 = vsub.f32 %v4640, %v4668
        %v4683 = vsub.f32 %v4643, %v4671
        %v4684 = vsub.f32 %v4648, %v4674
        %v4685 = vsub.f32 %v4651, %v4677
        %v4686 = vmul.f32 %v4678, 1.442695
        %v4687 = vpow.pop %v4686
        %v4688 = vmul.f32 %v4679, 1.442695
        %v4689 = vpow.pop %v4688
        %v4690 = vmul.f32 %v4680, 1.442695
        %v4691 = vpow.pop %v4690
        %v4692 = vmul.f32 %v4681, 1.442695
        %v4693 = vpow.pop %v4692
        %v4694 = vmul.f32 %v4682, 1.442695
        %v4695 = vpow.pop %v4694
        %v4696 = vmul.f32 %v4683, 1.442695
        %v4697 = vpow.pop %v4696
        %v4698 = vmul.f32 %v4684, 1.442695
        %v4699 = vpow.pop %v4698
        %v4700 = vmul.f32 %v4685, 1.442695
        %v4701 = vpow.pop %v4700
        %v4702 = vsel %vm4167, %v4687, 0.0
        %4703 = vadd.xlane.f32.xlu0 %v4702
        %v4704 = vpop.xlane.xlu0 %4703
        %v4705 = vsel %vm4167, %v4689, 0.0
        %4706 = vadd.xlane.f32.xlu0 %v4705
        %v4707 = vpop.xlane.xlu0 %4706
        %v4708 = vsel %vm4167, %v4691, 0.0
        %4709 = vadd.xlane.f32.xlu0 %v4708
        %v4710 = vpop.xlane.xlu0 %4709
        %v4711 = vsel %vm4167, %v4693, 0.0
        %4712 = vadd.xlane.f32.xlu0 %v4711
        %v4713 = vpop.xlane.xlu0 %4712
        %v4714 = vsel %vm4167, %v4695, 0.0
        %4715 = vadd.xlane.f32.xlu0 %v4714
        %v4716 = vpop.xlane.xlu0 %4715
        %v4717 = vsel %vm4167, %v4697, 0.0
        %4718 = vadd.xlane.f32.xlu0 %v4717
        %v4719 = vpop.xlane.xlu0 %4718
        %v4720 = vsel %vm4167, %v4699, 0.0
        %4721 = vadd.xlane.f32.xlu0 %v4720
        %v4722 = vpop.xlane.xlu0 %4721
        %v4723 = vsel %vm4167, %v4701, 0.0
        %4724 = vadd.xlane.f32.xlu0 %v4723
        %v4725 = vpop.xlane.xlu0 %4724
        %v4726 = vrcp.pop %v4704
        %v4727 = vrcp.pop %v4707
        %v4728 = vrcp.pop %v4710
        %v4729 = vrcp.pop %v4713
        %v4730 = vrcp.pop %v4716
        %v4731 = vrcp.pop %v4719
        %v4732 = vrcp.pop %v4722
        %v4733 = vrcp.pop %v4725
        %v4734 = vmul.f32 %v4687, %v4726
        %v4735 = vmul.f32 %v4689, %v4727
        %v4736 = vmul.f32 %v4691, %v4728
        %v4737 = vmul.f32 %v4693, %v4729
        %v4738 = vmul.f32 %v4695, %v4730
        %v4739 = vmul.f32 %v4697, %v4731
        %v4740 = vmul.f32 %v4699, %v4732
        %v4741 = vmul.f32 %v4701, %v4733
        %v4742 = vpack.c.bf16 %v4735, %v4734
        %v4743 = vpack.c.bf16 %v4737, %v4736
        %v4744 = vpack.c.bf16 %v4739, %v4738
        %v4745 = vpack.c.bf16 %v4741, %v4740
        %v4747 = vsel %vm4167, %v4742, 0
        %v4750 = vsel %vm4167, %v4743, 0
        %v4753 = vsel %vm4167, %v4744, 0
        %v4756 = vsel %vm4167, %v4745, 0
        %4758 = vmatprep.subr.bf16.mxu0 0
        %4759 = vmatpush1.bf16.msra.mxu0 %v4585
        %4760 = vmatprep.subr.bf16.mxu0 0
        %4761 = vmatpush1.bf16.msra.mxu0 0
        %4762 = vmatprep.subr.bf16.mxu0 0
        %4763 = vmatpush1.bf16.msra.mxu0 0
        %4764 = vmatprep.subr.bf16.mxu0 0
        %4765 = vmatpush1.bf16.msra.mxu0 0
        %4766 = vmatprep.subr.bf16.mxu0 0
        %4767 = vmatpush1.bf16.msra.mxu0 0
        %4768 = vmatprep.subr.bf16.mxu0 0
        %4769 = vmatpush1.bf16.msra.mxu0 0
        %4770 = vmatprep.subr.bf16.mxu0 0
        %4771 = vmatpush1.bf16.msra.mxu0 0
        %4772 = vmatprep.subr.bf16.mxu0 0
        %4773 = vmatpush1.bf16.msra.mxu0 0
        %4774 = vmatprep.subr.bf16.mxu0 0
        %4775 = vmatpush1.bf16.msra.mxu0 0
        %4776 = vmatprep.subr.bf16.mxu0 0
        %4777 = vmatpush1.bf16.msra.mxu0 0
        %4778 = vmatprep.subr.bf16.mxu0 0
        %4779 = vmatpush1.bf16.msra.mxu0 0
        %4780 = vmatprep.subr.bf16.mxu0 0
        %4781 = vmatpush1.bf16.msra.mxu0 0
        %4782 = vmatprep.subr.bf16.mxu0 0
        %4783 = vmatpush1.bf16.msra.mxu0 0
        %4784 = vmatprep.subr.bf16.mxu0 0
        %4785 = vmatpush1.bf16.msra.mxu0 0
        %4786 = vmatprep.subr.bf16.mxu0 0
        %4787 = vmatpush1.bf16.msra.mxu0 0
        %4788 = vmatprep.subr.bf16.mxu0 0
        %4789 = vmatpush1.bf16.msra.mxu0 0
        %4790 = vmatprep.mubr.bf16.mxu0 0
        %4791 = vmatmul.mubr.bf16.gmra.mrb[0].mxu0 %v4747
        %v4792 = vpop.f32.mrb[0].mxu0
        %v4793 = vadd.f32 0.0, %v4792
        %v4794 = vpop.f32.mrb[0].mxu0
        %v4795 = vpop.f32.mrb[0].mxu0
        %v4796 = vadd.f32 0.0, %v4795
        %v4797 = vpop.f32.mrb[0].mxu0
        %4798 = vmatprep.mubr.bf16.mxu0 0
        %4799 = vmatmul.mubr.bf16.gmra.mrb[0].mxu0 %v4750
        %v4800 = vpop.f32.mrb[0].mxu0
        %v4801 = vadd.f32 0.0, %v4800
        %v4802 = vpop.f32.mrb[0].mxu0
        %v4803 = vpop.f32.mrb[0].mxu0
        %v4804 = vadd.f32 0.0, %v4803
        %v4805 = vpop.f32.mrb[0].mxu0
        %4806 = vmatprep.mubr.bf16.mxu0 0
        %4807 = vmatmul.mubr.bf16.gmra.mrb[0].mxu0 %v4753
        %v4808 = vpop.f32.mrb[0].mxu0
        %v4809 = vadd.f32 0.0, %v4808
        %v4810 = vpop.f32.mrb[0].mxu0
        %v4811 = vpop.f32.mrb[0].mxu0
        %v4812 = vadd.f32 0.0, %v4811
        %v4813 = vpop.f32.mrb[0].mxu0
        %4814 = vmatprep.mubr.bf16.mxu0 0
        %4815 = vmatmul.mubr.bf16.gmra.mrb[0].mxu0 %v4756
        %v4816 = vpop.f32.mrb[0].mxu0
        %v4817 = vadd.f32 0.0, %v4816
        %v4818 = vpop.f32.mrb[0].mxu0
        %v4819 = vpop.f32.mrb[0].mxu0
        %v4820 = vadd.f32 0.0, %v4819
        %v4821 = vpop.f32.mrb[0].mxu0
        %4822 = vdwg.mxu0
        %v4823 = vadd.f32 %v4550, %v4793
        %v4824 = vadd.f32 %v4553, %v4796
        %v4825 = vadd.f32 %v4558, %v4801
        %v4826 = vadd.f32 %v4561, %v4804
        %v4827 = vadd.f32 %v4566, %v4809
        %v4828 = vadd.f32 %v4569, %v4812
        %v4829 = vadd.f32 %v4574, %v4817
        %v4830 = vadd.f32 %v4577, %v4820
        %v4831 = vmul.f32 %v3989, %v3271
        %v4832 = vmul.f32 %v3992, %v3271
        %v4833 = vpack.c.bf16 %v4832, %v4831
        %v4834 = vmul.f32 %v4057, %v3271
        %v4835 = vmul.f32 %v4060, %v3271
        %v4836 = vpack.c.bf16 %v4835, %v4834
        %v4838 = vsel %vm2171, %v4833, 0
        %4840 = vmatprep.subr.bf16.mxu0 0
        %4841 = vmatpush1.bf16.xpose.msra.mxu0 %v4838
        %4842 = vmatprep.subr.bf16.mxu0 0
        %4843 = vmatpush1.bf16.xpose.msra.mxu0 0
        %4844 = vmatprep.subr.bf16.mxu0 0
        %4845 = vmatpush1.bf16.xpose.msra.mxu0 0
        %4846 = vmatprep.subr.bf16.mxu0 0
        %4847 = vmatpush1.bf16.xpose.msra.mxu0 0
        %4848 = vmatprep.subr.bf16.mxu0 0
        %4849 = vmatpush1.bf16.xpose.msra.mxu0 0
        %4850 = vmatprep.subr.bf16.mxu0 0
        %4851 = vmatpush1.bf16.xpose.msra.mxu0 0
        %4852 = vmatprep.subr.bf16.mxu0 0
        %4853 = vmatpush1.bf16.xpose.msra.mxu0 0
        %4854 = vmatprep.subr.bf16.mxu0 0
        %4855 = vmatpush1.bf16.xpose.msra.mxu0 0
        %4856 = vmatprep.subr.bf16.mxu0 0
        %4857 = vmatpush1.bf16.xpose.msra.mxu0 0
        %4858 = vmatprep.subr.bf16.mxu0 0
        %4859 = vmatpush1.bf16.xpose.msra.mxu0 0
        %4860 = vmatprep.subr.bf16.mxu0 0
        %4861 = vmatpush1.bf16.xpose.msra.mxu0 0
        %4862 = vmatprep.subr.bf16.mxu0 0
        %4863 = vmatpush1.bf16.xpose.msra.mxu0 0
        %4864 = vmatprep.subr.bf16.mxu0 0
        %4865 = vmatpush1.bf16.xpose.msra.mxu0 0
        %4866 = vmatprep.subr.bf16.mxu0 0
        %4867 = vmatpush1.bf16.xpose.msra.mxu0 0
        %4868 = vmatprep.subr.bf16.mxu0 0
        %4869 = vmatpush1.bf16.xpose.msra.mxu0 0
        %4870 = vmatprep.subr.bf16.mxu0 0
        %4871 = vmatpush1.bf16.xpose.msra.mxu0 0
        %4872 = vmatprep.mubr.bf16.mxu0 0
        %4873 = vmatmul.mubr.bf16.gmra.mrb[0].mxu0 %v4088
        %v4874 = vpop.f32.mrb[0].mxu0
        %v4875 = vadd.f32 %v4085, %v4874
        %v4876 = vpop.f32.mrb[0].mxu0
        %v4877 = vpop.f32.mrb[0].mxu0
        %v4878 = vadd.f32 %v4085, %v4877
        %v4879 = vpop.f32.mrb[0].mxu0
        %4880 = vmatprep.mubr.bf16.mxu0 0
        %4881 = vmatmul.mubr.bf16.gmra.mrb[0].mxu0 %v4091
        %v4882 = vpop.f32.mrb[0].mxu0
        %v4883 = vadd.f32 %v4085, %v4882
        %v4884 = vpop.f32.mrb[0].mxu0
        %v4885 = vpop.f32.mrb[0].mxu0
        %v4886 = vadd.f32 %v4085, %v4885
        %v4887 = vpop.f32.mrb[0].mxu0
        %4888 = vmatprep.mubr.bf16.mxu0 0
        %4889 = vmatmul.mubr.bf16.gmra.mrb[0].mxu0 %v4094
        %v4890 = vpop.f32.mrb[0].mxu0
        %v4891 = vadd.f32 %v4085, %v4890
        %v4892 = vpop.f32.mrb[0].mxu0
        %v4893 = vpop.f32.mrb[0].mxu0
        %v4894 = vadd.f32 %v4085, %v4893
        %v4895 = vpop.f32.mrb[0].mxu0
        %4896 = vmatprep.mubr.bf16.mxu0 0
        %4897 = vmatmul.mubr.bf16.gmra.mrb[0].mxu0 %v4097
        %v4898 = vpop.f32.mrb[0].mxu0
        %v4899 = vadd.f32 %v4085, %v4898
        %v4900 = vpop.f32.mrb[0].mxu0
        %v4901 = vpop.f32.mrb[0].mxu0
        %v4902 = vadd.f32 %v4085, %v4901
        %v4903 = vpop.f32.mrb[0].mxu0
        %4904 = vdwg.mxu0
        %v4905 = vsel %vm4167, %v4875, -inf
        %4906 = vmax.xlane.f32.xlu0 %v4905
        %v4907 = vpop.xlane.xlu0 %4906
        %v4908 = vsel %vm4167, %v4878, -inf
        %4909 = vmax.xlane.f32.xlu0 %v4908
        %v4910 = vpop.xlane.xlu0 %4909
        %v4911 = vsel %vm4167, %v4883, -inf
        %4912 = vmax.xlane.f32.xlu0 %v4911
        %v4913 = vpop.xlane.xlu0 %4912
        %v4914 = vsel %vm4167, %v4886, -inf
        %4915 = vmax.xlane.f32.xlu0 %v4914
        %v4916 = vpop.xlane.xlu0 %4915
        %v4917 = vsel %vm4167, %v4891, -inf
        %4918 = vmax.xlane.f32.xlu0 %v4917
        %v4919 = vpop.xlane.xlu0 %4918
        %v4920 = vsel %vm4167, %v4894, -inf
        %4921 = vmax.xlane.f32.xlu0 %v4920
        %v4922 = vpop.xlane.xlu0 %4921
        %v4923 = vsel %vm4167, %v4899, -inf
        %4924 = vmax.xlane.f32.xlu0 %v4923
        %v4925 = vpop.xlane.xlu0 %4924
        %v4926 = vsel %vm4167, %v4902, -inf
        %4927 = vmax.xlane.f32.xlu0 %v4926
        %v4928 = vpop.xlane.xlu0 %4927
        %v4929 = vsub.f32 %v4875, %v4907
        %v4930 = vsub.f32 %v4878, %v4910
        %v4931 = vsub.f32 %v4883, %v4913
        %v4932 = vsub.f32 %v4886, %v4916
        %v4933 = vsub.f32 %v4891, %v4919
        %v4934 = vsub.f32 %v4894, %v4922
        %v4935 = vsub.f32 %v4899, %v4925
        %v4936 = vsub.f32 %v4902, %v4928
        %v4937 = vmul.f32 %v4929, 1.442695
        %v4938 = vpow.pop %v4937
        %v4939 = vmul.f32 %v4930, 1.442695
        %v4940 = vpow.pop %v4939
        %v4941 = vmul.f32 %v4931, 1.442695
        %v4942 = vpow.pop %v4941
        %v4943 = vmul.f32 %v4932, 1.442695
        %v4944 = vpow.pop %v4943
        %v4945 = vmul.f32 %v4933, 1.442695
        %v4946 = vpow.pop %v4945
        %v4947 = vmul.f32 %v4934, 1.442695
        %v4948 = vpow.pop %v4947
        %v4949 = vmul.f32 %v4935, 1.442695
        %v4950 = vpow.pop %v4949
        %v4951 = vmul.f32 %v4936, 1.442695
        %v4952 = vpow.pop %v4951
        %v4953 = vsel %vm4167, %v4938, 0.0
        %4954 = vadd.xlane.f32.xlu0 %v4953
        %v4955 = vpop.xlane.xlu0 %4954
        %v4956 = vsel %vm4167, %v4940, 0.0
        %4957 = vadd.xlane.f32.xlu0 %v4956
        %v4958 = vpop.xlane.xlu0 %4957
        %v4959 = vsel %vm4167, %v4942, 0.0
        %4960 = vadd.xlane.f32.xlu0 %v4959
        %v4961 = vpop.xlane.xlu0 %4960
        %v4962 = vsel %vm4167, %v4944, 0.0
        %4963 = vadd.xlane.f32.xlu0 %v4962
        %v4964 = vpop.xlane.xlu0 %4963
        %v4965 = vsel %vm4167, %v4946, 0.0
        %4966 = vadd.xlane.f32.xlu0 %v4965
        %v4967 = vpop.xlane.xlu0 %4966
        %v4968 = vsel %vm4167, %v4948, 0.0
        %4969 = vadd.xlane.f32.xlu0 %v4968
        %v4970 = vpop.xlane.xlu0 %4969
        %v4971 = vsel %vm4167, %v4950, 0.0
        %4972 = vadd.xlane.f32.xlu0 %v4971
        %v4973 = vpop.xlane.xlu0 %4972
        %v4974 = vsel %vm4167, %v4952, 0.0
        %4975 = vadd.xlane.f32.xlu0 %v4974
        %v4976 = vpop.xlane.xlu0 %4975
        %v4977 = vrcp.pop %v4955
        %v4978 = vrcp.pop %v4958
        %v4979 = vrcp.pop %v4961
        %v4980 = vrcp.pop %v4964
        %v4981 = vrcp.pop %v4967
        %v4982 = vrcp.pop %v4970
        %v4983 = vrcp.pop %v4973
        %v4984 = vrcp.pop %v4976
        %v4985 = vmul.f32 %v4938, %v4977
        %v4986 = vmul.f32 %v4940, %v4978
        %v4987 = vmul.f32 %v4942, %v4979
        %v4988 = vmul.f32 %v4944, %v4980
        %v4989 = vmul.f32 %v4946, %v4981
        %v4990 = vmul.f32 %v4948, %v4982
        %v4991 = vmul.f32 %v4950, %v4983
        %v4992 = vmul.f32 %v4952, %v4984
        %v4993 = vpack.c.bf16 %v4986, %v4985
        %v4994 = vpack.c.bf16 %v4988, %v4987
        %v4995 = vpack.c.bf16 %v4990, %v4989
        %v4996 = vpack.c.bf16 %v4992, %v4991
        %v4998 = vsel %vm4167, %v4993, 0
        %v5001 = vsel %vm4167, %v4994, 0
        %v5004 = vsel %vm4167, %v4995, 0
        %v5007 = vsel %vm4167, %v4996, 0
        %5009 = vmatprep.subr.bf16.mxu0 0
        %5010 = vmatpush1.bf16.msra.mxu0 %v4836
        %5011 = vmatprep.subr.bf16.mxu0 0
        %5012 = vmatpush1.bf16.msra.mxu0 0
        %5013 = vmatprep.subr.bf16.mxu0 0
        %5014 = vmatpush1.bf16.msra.mxu0 0
        %5015 = vmatprep.subr.bf16.mxu0 0
        %5016 = vmatpush1.bf16.msra.mxu0 0
        %5017 = vmatprep.subr.bf16.mxu0 0
        %5018 = vmatpush1.bf16.msra.mxu0 0
        %5019 = vmatprep.subr.bf16.mxu0 0
        %5020 = vmatpush1.bf16.msra.mxu0 0
        %5021 = vmatprep.subr.bf16.mxu0 0
        %5022 = vmatpush1.bf16.msra.mxu0 0
        %5023 = vmatprep.subr.bf16.mxu0 0
        %5024 = vmatpush1.bf16.msra.mxu0 0
        %5025 = vmatprep.subr.bf16.mxu0 0
        %5026 = vmatpush1.bf16.msra.mxu0 0
        %5027 = vmatprep.subr.bf16.mxu0 0
        %5028 = vmatpush1.bf16.msra.mxu0 0
        %5029 = vmatprep.subr.bf16.mxu0 0
        %5030 = vmatpush1.bf16.msra.mxu0 0
        %5031 = vmatprep.subr.bf16.mxu0 0
        %5032 = vmatpush1.bf16.msra.mxu0 0
        %5033 = vmatprep.subr.bf16.mxu0 0
        %5034 = vmatpush1.bf16.msra.mxu0 0
        %5035 = vmatprep.subr.bf16.mxu0 0
        %5036 = vmatpush1.bf16.msra.mxu0 0
        %5037 = vmatprep.subr.bf16.mxu0 0
        %5038 = vmatpush1.bf16.msra.mxu0 0
        %5039 = vmatprep.subr.bf16.mxu0 0
        %5040 = vmatpush1.bf16.msra.mxu0 0
        %5041 = vmatprep.mubr.bf16.mxu0 0
        %5042 = vmatmul.mubr.bf16.gmra.mrb[0].mxu0 %v4998
        %v5043 = vpop.f32.mrb[0].mxu0
        %v5044 = vadd.f32 0.0, %v5043
        %v5045 = vpop.f32.mrb[0].mxu0
        %v5046 = vpop.f32.mrb[0].mxu0
        %v5047 = vadd.f32 0.0, %v5046
        %v5048 = vpop.f32.mrb[0].mxu0
        %5049 = vmatprep.mubr.bf16.mxu0 0
        %5050 = vmatmul.mubr.bf16.gmra.mrb[0].mxu0 %v5001
        %v5051 = vpop.f32.mrb[0].mxu0
        %v5052 = vadd.f32 0.0, %v5051
        %v5053 = vpop.f32.mrb[0].mxu0
        %v5054 = vpop.f32.mrb[0].mxu0
        %v5055 = vadd.f32 0.0, %v5054
        %v5056 = vpop.f32.mrb[0].mxu0
        %5057 = vmatprep.mubr.bf16.mxu0 0
        %5058 = vmatmul.mubr.bf16.gmra.mrb[0].mxu0 %v5004
        %v5059 = vpop.f32.mrb[0].mxu0
        %v5060 = vadd.f32 0.0, %v5059
        %v5061 = vpop.f32.mrb[0].mxu0
        %v5062 = vpop.f32.mrb[0].mxu0
        %v5063 = vadd.f32 0.0, %v5062
        %v5064 = vpop.f32.mrb[0].mxu0
        %5065 = vmatprep.mubr.bf16.mxu0 0
        %5066 = vmatmul.mubr.bf16.gmra.mrb[0].mxu0 %v5007
        %v5067 = vpop.f32.mrb[0].mxu0
        %v5068 = vadd.f32 0.0, %v5067
        %v5069 = vpop.f32.mrb[0].mxu0
        %v5070 = vpop.f32.mrb[0].mxu0
        %v5071 = vadd.f32 0.0, %v5070
        %v5072 = vpop.f32.mrb[0].mxu0
        %5073 = vdwg.mxu0
        %v5074 = vadd.f32 %v4823, %v5044
        %v5075 = vadd.f32 %v4824, %v5047
        %v5076 = vadd.f32 %v4825, %v5052
        %v5077 = vadd.f32 %v4826, %v5055
        %v5078 = vadd.f32 %v4827, %v5060
        %v5079 = vadd.f32 %v4828, %v5063
        %v5080 = vadd.f32 %v4829, %v5068
        %v5081 = vadd.f32 %v4830, %v5071
        %v5082 = vld [vmem:[%s1660] sm:$0xf]
        %v5083 = vld [vmem:[%s1660 + $0x4] sm:$0xf]
        %v5084 = vld [vmem:[%s1660 + $0x8] sm:$0xf]
        %v5085 = vld [vmem:[%s1660 + $0xc] sm:$0xf]
        %v5086 = vpack.c.bf16 %v5075, %v5074
        %v5087 = vpack.c.bf16 %v5077, %v5076
        %v5088 = vpack.c.bf16 %v5079, %v5078
        %v5089 = vpack.c.bf16 %v5081, %v5080
        %v5090 = vld [vmem:[%s1668] sm:$0x1]
        %v5092 = vlaneseq
        %v5093 = vshrl.u32 %v5092, 7
        %v5094 = vsub.s32 0, %v5093
        %v5095 = vrot.slane %v5090, %v5094
        %v5101 = vunpack.c.l.b16 %v5082
        %v5102 = vunpack.c.l.b16 %v5083
        %v5103 = vunpack.c.l.b16 %v5084
        %v5104 = vunpack.c.l.b16 %v5085
        %v5105 = vpack.c.b16 %v5102, %v5101
        %v5106 = vpack.c.b16 %v5104, %v5103
        %v5110 = vsel %vm2171, %v5086, 0
        %v5113 = vsel %vm2171, %v5087, 0
        %v5116 = vsel %vm2171, %v5088, 0
        %v5119 = vsel %vm2171, %v5089, 0
        %5121 = vmatprep.subr.bf16.mxu0 0
        %5122 = vmatpush1.bf16.msra.mxu0 %v5105
        %5123 = vmatprep.subr.bf16.mxu0 0
        %5124 = vmatpush1.bf16.msra.mxu0 %v5106
        %5125 = vmatprep.subr.bf16.mxu0 0
        %5126 = vmatpush1.bf16.msra.mxu0 0
        %5127 = vmatprep.subr.bf16.mxu0 0
        %5128 = vmatpush1.bf16.msra.mxu0 0
        %5129 = vmatprep.subr.bf16.mxu0 0
        %5130 = vmatpush1.bf16.msra.mxu0 0
        %5131 = vmatprep.subr.bf16.mxu0 0
        %5132 = vmatpush1.bf16.msra.mxu0 0
        %5133 = vmatprep.subr.bf16.mxu0 0
        %5134 = vmatpush1.bf16.msra.mxu0 0
        %5135 = vmatprep.subr.bf16.mxu0 0
        %5136 = vmatpush1.bf16.msra.mxu0 0
        %5137 = vmatprep.subr.bf16.mxu0 0
        %5138 = vmatpush1.bf16.msra.mxu0 0
        %5139 = vmatprep.subr.bf16.mxu0 0
        %5140 = vmatpush1.bf16.msra.mxu0 0
        %5141 = vmatprep.subr.bf16.mxu0 0
        %5142 = vmatpush1.bf16.msra.mxu0 0
        %5143 = vmatprep.subr.bf16.mxu0 0
        %5144 = vmatpush1.bf16.msra.mxu0 0
        %5145 = vmatprep.subr.bf16.mxu0 0
        %5146 = vmatpush1.bf16.msra.mxu0 0
        %5147 = vmatprep.subr.bf16.mxu0 0
        %5148 = vmatpush1.bf16.msra.mxu0 0
        %5149 = vmatprep.subr.bf16.mxu0 0
        %5150 = vmatpush1.bf16.msra.mxu0 0
        %5151 = vmatprep.subr.bf16.mxu0 0
        %5152 = vmatpush1.bf16.msra.mxu0 0
        %5153 = vmatprep.mubr.bf16.mxu0 0
        %5154 = vmatmul.mubr.bf16.gmra.mrb[0].mxu0 %v5110
        %v5155 = vpop.f32.mrb[0].mxu0
        %v5156 = vadd.f32 %v5095, %v5155
        %v5157 = vpop.f32.mrb[0].mxu0
        %v5158 = vpop.f32.mrb[0].mxu0
        %v5159 = vadd.f32 %v5095, %v5158
        %v5160 = vpop.f32.mrb[0].mxu0
        %5161 = vmatprep.mubr.bf16.mxu0 0
        %5162 = vmatmul.mubr.bf16.gmra.mrb[0].mxu0 %v5113
        %v5163 = vpop.f32.mrb[0].mxu0
        %v5164 = vadd.f32 %v5095, %v5163
        %v5165 = vpop.f32.mrb[0].mxu0
        %v5166 = vpop.f32.mrb[0].mxu0
        %v5167 = vadd.f32 %v5095, %v5166
        %v5168 = vpop.f32.mrb[0].mxu0
        %5169 = vmatprep.mubr.bf16.mxu0 0
        %5170 = vmatmul.mubr.bf16.gmra.mrb[0].mxu0 %v5116
        %v5171 = vpop.f32.mrb[0].mxu0
        %v5172 = vadd.f32 %v5095, %v5171
        %v5173 = vpop.f32.mrb[0].mxu0
        %v5174 = vpop.f32.mrb[0].mxu0
        %v5175 = vadd.f32 %v5095, %v5174
        %v5176 = vpop.f32.mrb[0].mxu0
        %5177 = vmatprep.mubr.bf16.mxu0 0
        %5178 = vmatmul.mubr.bf16.gmra.mrb[0].mxu0 %v5119
        %v5179 = vpop.f32.mrb[0].mxu0
        %v5180 = vadd.f32 %v5095, %v5179
        %v5181 = vpop.f32.mrb[0].mxu0
        %v5182 = vpop.f32.mrb[0].mxu0
        %v5183 = vadd.f32 %v5095, %v5182
        %v5184 = vpop.f32.mrb[0].mxu0
        %5185 = vdwg.mxu0
        %v5186 = vadd.f32 %v3805, %v5156
        %v5187 = vadd.f32 %v3806, %v5159
        %v5188 = vadd.f32 %v3807, %v5164
        %v5189 = vadd.f32 %v3808, %v5167
        %v5190 = vadd.f32 %v3809, %v5172
        %v5191 = vadd.f32 %v3810, %v5175
        %v5192 = vadd.f32 %v3811, %v5180
        %v5193 = vadd.f32 %v3812, %v5183
        %v5194 = vld [vmem:[%s1676] sm:$0x1]
        %v5195 = vld [vmem:[%s1684] sm:$0x1]
        %v5196 = vsel %vm2171, %v5186, 0.0
        %5197 = vadd.xlane.f32.xlu0 %v5196
        %v5198 = vpop.xlane.xlu0 %5197
        %v5199 = vsel %vm2171, %v5187, 0.0
        %5200 = vadd.xlane.f32.xlu0 %v5199
        %v5201 = vpop.xlane.xlu0 %5200
        %v5202 = vsel %vm2171, %v5188, 0.0
        %5203 = vadd.xlane.f32.xlu0 %v5202
        %v5204 = vpop.xlane.xlu0 %5203
        %v5205 = vsel %vm2171, %v5189, 0.0
        %5206 = vadd.xlane.f32.xlu0 %v5205
        %v5207 = vpop.xlane.xlu0 %5206
        %v5208 = vsel %vm2171, %v5190, 0.0
        %5209 = vadd.xlane.f32.xlu0 %v5208
        %v5210 = vpop.xlane.xlu0 %5209
        %v5211 = vsel %vm2171, %v5191, 0.0
        %5212 = vadd.xlane.f32.xlu0 %v5211
        %v5213 = vpop.xlane.xlu0 %5212
        %v5214 = vsel %vm2171, %v5192, 0.0
        %5215 = vadd.xlane.f32.xlu0 %v5214
        %v5216 = vpop.xlane.xlu0 %5215
        %v5217 = vsel %vm2171, %v5193, 0.0
        %5218 = vadd.xlane.f32.xlu0 %v5217
        %v5219 = vpop.xlane.xlu0 %5218
        %v5220 = vmul.f32 %v5198, %v3704
        %v5221 = vmul.f32 %v5201, %v3704
        %v5222 = vmul.f32 %v5204, %v3704
        %v5223 = vmul.f32 %v5207, %v3704
        %v5224 = vmul.f32 %v5210, %v3704
        %v5225 = vmul.f32 %v5213, %v3704
        %v5226 = vmul.f32 %v5216, %v3704
        %v5227 = vmul.f32 %v5219, %v3704
        %v5228 = vsub.f32 %v5186, %v5220
        %v5229 = vsub.f32 %v5187, %v5221
        %v5230 = vsub.f32 %v5188, %v5222
        %v5231 = vsub.f32 %v5189, %v5223
        %v5232 = vsub.f32 %v5190, %v5224
        %v5233 = vsub.f32 %v5191, %v5225
        %v5234 = vsub.f32 %v5192, %v5226
        %v5235 = vsub.f32 %v5193, %v5227
        %v5236 = vmul.f32 %v5228, %v5228
        %v5237 = vmul.f32 %v5229, %v5229
        %v5238 = vmul.f32 %v5230, %v5230
        %v5239 = vmul.f32 %v5231, %v5231
        %v5240 = vmul.f32 %v5232, %v5232
        %v5241 = vmul.f32 %v5233, %v5233
        %v5242 = vmul.f32 %v5234, %v5234
        %v5243 = vmul.f32 %v5235, %v5235
        %v5244 = vsel %vm2171, %v5236, 0.0
        %5245 = vadd.xlane.f32.xlu0 %v5244
        %v5246 = vpop.xlane.xlu0 %5245
        %v5247 = vsel %vm2171, %v5237, 0.0
        %5248 = vadd.xlane.f32.xlu0 %v5247
        %v5249 = vpop.xlane.xlu0 %5248
        %v5250 = vsel %vm2171, %v5238, 0.0
        %5251 = vadd.xlane.f32.xlu0 %v5250
        %v5252 = vpop.xlane.xlu0 %5251
        %v5253 = vsel %vm2171, %v5239, 0.0
        %5254 = vadd.xlane.f32.xlu0 %v5253
        %v5255 = vpop.xlane.xlu0 %5254
        %v5256 = vsel %vm2171, %v5240, 0.0
        %5257 = vadd.xlane.f32.xlu0 %v5256
        %v5258 = vpop.xlane.xlu0 %5257
        %v5259 = vsel %vm2171, %v5241, 0.0
        %5260 = vadd.xlane.f32.xlu0 %v5259
        %v5261 = vpop.xlane.xlu0 %5260
        %v5262 = vsel %vm2171, %v5242, 0.0
        %5263 = vadd.xlane.f32.xlu0 %v5262
        %v5264 = vpop.xlane.xlu0 %5263
        %v5265 = vsel %vm2171, %v5243, 0.0
        %5266 = vadd.xlane.f32.xlu0 %v5265
        %v5267 = vpop.xlane.xlu0 %5266
        %v5268 = vmul.f32 %v5246, %v3704
        %v5269 = vmul.f32 %v5249, %v3704
        %v5270 = vmul.f32 %v5252, %v3704
        %v5271 = vmul.f32 %v5255, %v3704
        %v5272 = vmul.f32 %v5258, %v3704
        %v5273 = vmul.f32 %v5261, %v3704
        %v5274 = vmul.f32 %v5264, %v3704
        %v5275 = vmul.f32 %v5267, %v3704
        %v5276 = vadd.f32 %v5268, 1e-05
        %v5277 = vadd.f32 %v5269, 1e-05
        %v5278 = vadd.f32 %v5270, 1e-05
        %v5279 = vadd.f32 %v5271, 1e-05
        %v5280 = vadd.f32 %v5272, 1e-05
        %v5281 = vadd.f32 %v5273, 1e-05
        %v5282 = vadd.f32 %v5274, 1e-05
        %v5283 = vadd.f32 %v5275, 1e-05
        %v5284 = vrsqrt.pop %v5276
        %v5285 = vrsqrt.pop %v5277
        %v5286 = vrsqrt.pop %v5278
        %v5287 = vrsqrt.pop %v5279
        %v5288 = vrsqrt.pop %v5280
        %v5289 = vrsqrt.pop %v5281
        %v5290 = vrsqrt.pop %v5282
        %v5291 = vrsqrt.pop %v5283
        %v5292 = vmul.f32 %v5228, %v5284
        %v5293 = vmul.f32 %v5229, %v5285
        %v5294 = vmul.f32 %v5230, %v5286
        %v5295 = vmul.f32 %v5231, %v5287
        %v5296 = vmul.f32 %v5232, %v5288
        %v5297 = vmul.f32 %v5233, %v5289
        %v5298 = vmul.f32 %v5234, %v5290
        %v5299 = vmul.f32 %v5235, %v5291
        %v5301 = vlaneseq
        %v5302 = vshrl.u32 %v5301, 7
        %v5303 = vsub.s32 0, %v5302
        %v5304 = vrot.slane %v5194, %v5303
        %v5306 = vmul.f32 %v5292, %v5304
        %v5307 = vmul.f32 %v5293, %v5304
        %v5308 = vmul.f32 %v5294, %v5304
        %v5309 = vmul.f32 %v5295, %v5304
        %v5310 = vmul.f32 %v5296, %v5304
        %v5311 = vmul.f32 %v5297, %v5304
        %v5312 = vmul.f32 %v5298, %v5304
        %v5313 = vmul.f32 %v5299, %v5304
        %v5315 = vlaneseq
        %v5316 = vshrl.u32 %v5315, 7
        %v5317 = vsub.s32 0, %v5316
        %v5318 = vrot.slane %v5195, %v5317
        %v5320 = vadd.f32 %v5306, %v5318
        %v5321 = vadd.f32 %v5307, %v5318
        %v5322 = vadd.f32 %v5308, %v5318
        %v5323 = vadd.f32 %v5309, %v5318
        %v5324 = vadd.f32 %v5310, %v5318
        %v5325 = vadd.f32 %v5311, %v5318
        %v5326 = vadd.f32 %v5312, %v5318
        %v5327 = vadd.f32 %v5313, %v5318
        %v5328 = vld [vmem:[%s2069] sm:$0xf]
        %v5329 = vld [vmem:[%s2069 + $0x4] sm:$0xf]
        %v5330 = vld [vmem:[%s2069 + $0x8] sm:$0xf]
        %v5331 = vld [vmem:[%s2069 + $0xc] sm:$0xf]
        %v5332 = vpack.c.bf16 %v5321, %v5320
        %v5333 = vpack.c.bf16 %v5323, %v5322
        %v5334 = vpack.c.bf16 %v5325, %v5324
        %v5335 = vpack.c.bf16 %v5327, %v5326
        %v5336 = vld [vmem:[%s1692] sm:$0x1]
        %v5338 = vlaneseq
        %v5339 = vshrl.u32 %v5338, 7
        %v5340 = vsub.s32 0, %v5339
        %v5341 = vrot.slane %v5336, %v5340
        %v5347 = vunpack.c.l.b16 %v5328
        %v5348 = vunpack.c.l.b16 %v5329
        %v5349 = vunpack.c.l.b16 %v5330
        %v5350 = vunpack.c.l.b16 %v5331
        %v5351 = vpack.c.b16 %v5348, %v5347
        %v5352 = vpack.c.b16 %v5350, %v5349
        %v5356 = vsel %vm2171, %v5332, 0
        %v5359 = vsel %vm2171, %v5333, 0
        %v5362 = vsel %vm2171, %v5334, 0
        %v5365 = vsel %vm2171, %v5335, 0
        %5367 = vmatprep.subr.bf16.mxu0 0
        %5368 = vmatpush1.bf16.msra.mxu0 %v5351
        %5369 = vmatprep.subr.bf16.mxu0 0
        %5370 = vmatpush1.bf16.msra.mxu0 %v5352
        %5371 = vmatprep.subr.bf16.mxu0 0
        %5372 = vmatpush1.bf16.msra.mxu0 0
        %5373 = vmatprep.subr.bf16.mxu0 0
        %5374 = vmatpush1.bf16.msra.mxu0 0
        %5375 = vmatprep.subr.bf16.mxu0 0
        %5376 = vmatpush1.bf16.msra.mxu0 0
        %5377 = vmatprep.subr.bf16.mxu0 0
        %5378 = vmatpush1.bf16.msra.mxu0 0
        %5379 = vmatprep.subr.bf16.mxu0 0
        %5380 = vmatpush1.bf16.msra.mxu0 0
        %5381 = vmatprep.subr.bf16.mxu0 0
        %5382 = vmatpush1.bf16.msra.mxu0 0
        %5383 = vmatprep.subr.bf16.mxu0 0
        %5384 = vmatpush1.bf16.msra.mxu0 0
        %5385 = vmatprep.subr.bf16.mxu0 0
        %5386 = vmatpush1.bf16.msra.mxu0 0
        %5387 = vmatprep.subr.bf16.mxu0 0
        %5388 = vmatpush1.bf16.msra.mxu0 0
        %5389 = vmatprep.subr.bf16.mxu0 0
        %5390 = vmatpush1.bf16.msra.mxu0 0
        %5391 = vmatprep.subr.bf16.mxu0 0
        %5392 = vmatpush1.bf16.msra.mxu0 0
        %5393 = vmatprep.subr.bf16.mxu0 0
        %5394 = vmatpush1.bf16.msra.mxu0 0
        %5395 = vmatprep.subr.bf16.mxu0 0
        %5396 = vmatpush1.bf16.msra.mxu0 0
        %5397 = vmatprep.subr.bf16.mxu0 0
        %5398 = vmatpush1.bf16.msra.mxu0 0
        %5399 = vmatprep.mubr.bf16.mxu0 0
        %5400 = vmatmul.mubr.bf16.gmra.mrb[0].mxu0 %v5356
        %v5401 = vpop.f32.mrb[0].mxu0
        %v5402 = vadd.f32 %v5341, %v5401
        %v5403 = vpop.f32.mrb[0].mxu0
        %v5404 = vpop.f32.mrb[0].mxu0
        %v5405 = vadd.f32 %v5341, %v5404
        %v5406 = vpop.f32.mrb[0].mxu0
        %5407 = vmatprep.mubr.bf16.mxu0 0
        %5408 = vmatmul.mubr.bf16.gmra.mrb[0].mxu0 %v5359
        %v5409 = vpop.f32.mrb[0].mxu0
        %v5410 = vadd.f32 %v5341, %v5409
        %v5411 = vpop.f32.mrb[0].mxu0
        %v5412 = vpop.f32.mrb[0].mxu0
        %v5413 = vadd.f32 %v5341, %v5412
        %v5414 = vpop.f32.mrb[0].mxu0
        %5415 = vmatprep.mubr.bf16.mxu0 0
        %5416 = vmatmul.mubr.bf16.gmra.mrb[0].mxu0 %v5362
        %v5417 = vpop.f32.mrb[0].mxu0
        %v5418 = vadd.f32 %v5341, %v5417
        %v5419 = vpop.f32.mrb[0].mxu0
        %v5420 = vpop.f32.mrb[0].mxu0
        %v5421 = vadd.f32 %v5341, %v5420
        %v5422 = vpop.f32.mrb[0].mxu0
        %5423 = vmatprep.mubr.bf16.mxu0 0
        %5424 = vmatmul.mubr.bf16.gmra.mrb[0].mxu0 %v5365
        %v5425 = vpop.f32.mrb[0].mxu0
        %v5426 = vadd.f32 %v5341, %v5425
        %v5427 = vpop.f32.mrb[0].mxu0
        %v5428 = vpop.f32.mrb[0].mxu0
        %v5429 = vadd.f32 %v5341, %v5428
        %v5430 = vpop.f32.mrb[0].mxu0
        %5431 = vdwg.mxu0
        %v5432 = vmax.f32 %v5402, 0.0
        %v5433 = vmax.f32 %v5405, 0.0
        %v5434 = vmax.f32 %v5410, 0.0
        %v5435 = vmax.f32 %v5413, 0.0
        %v5436 = vmax.f32 %v5418, 0.0
        %v5437 = vmax.f32 %v5421, 0.0
        %v5438 = vmax.f32 %v5426, 0.0
        %v5439 = vmax.f32 %v5429, 0.0
        %v5440 = vld [vmem:[%s2078] sm:$0xf]
        %v5441 = vld [vmem:[%s2078 + $0x4] sm:$0xf]
        %v5442 = vld [vmem:[%s2078 + $0x8] sm:$0xf]
        %v5443 = vld [vmem:[%s2078 + $0xc] sm:$0xf]
        %v5444 = vld [vmem:[%s2078 + $0x10] sm:$0xf]
        %v5445 = vld [vmem:[%s2078 + $0x14] sm:$0xf]
        %v5446 = vld [vmem:[%s2078 + $0x18] sm:$0xf]
        %v5447 = vld [vmem:[%s2078 + $0x1c] sm:$0xf]
        %v5448 = vpack.c.bf16 %v5433, %v5432
        %v5449 = vpack.c.bf16 %v5435, %v5434
        %v5450 = vpack.c.bf16 %v5437, %v5436
        %v5451 = vpack.c.bf16 %v5439, %v5438
        %v5452 = vld [vmem:[%s1700] sm:$0x1]
        %v5454 = vlaneseq
        %v5455 = vshrl.u32 %v5454, 7
        %v5456 = vsub.s32 0, %v5455
        %v5457 = vrot.slane %v5452, %v5456
        %v5467 = vunpack.c.l.b16 %v5440
        %v5468 = vunpack.c.l.b16 %v5441
        %v5469 = vunpack.c.l.b16 %v5442
        %v5470 = vunpack.c.l.b16 %v5443
        %v5471 = vunpack.c.l.b16 %v5444
        %v5472 = vunpack.c.l.b16 %v5445
        %v5473 = vunpack.c.l.b16 %v5446
        %v5474 = vunpack.c.l.b16 %v5447
        %v5475 = vpack.c.b16 %v5468, %v5467
        %v5476 = vpack.c.b16 %v5470, %v5469
        %v5477 = vpack.c.b16 %v5472, %v5471
        %v5478 = vpack.c.b16 %v5474, %v5473
        %v5484 = vsel %vm2507, %v5448, 0
        %v5487 = vsel %vm2507, %v5449, 0
        %v5490 = vsel %vm2507, %v5450, 0
        %v5493 = vsel %vm2507, %v5451, 0
        %5495 = vmatprep.subr.bf16.mxu0 0
        %5496 = vmatpush1.bf16.msra.mxu0 %v5475
        %5497 = vmatprep.subr.bf16.mxu0 0
        %5498 = vmatpush1.bf16.msra.mxu0 %v5476
        %5499 = vmatprep.subr.bf16.mxu0 0
        %5500 = vmatpush1.bf16.msra.mxu0 %v5477
        %5501 = vmatprep.subr.bf16.mxu0 0
        %5502 = vmatpush1.bf16.msra.mxu0 %v5478
        %5503 = vmatprep.subr.bf16.mxu0 0
        %5504 = vmatpush1.bf16.msra.mxu0 0
        %5505 = vmatprep.subr.bf16.mxu0 0
        %5506 = vmatpush1.bf16.msra.mxu0 0
        %5507 = vmatprep.subr.bf16.mxu0 0
        %5508 = vmatpush1.bf16.msra.mxu0 0
        %5509 = vmatprep.subr.bf16.mxu0 0
        %5510 = vmatpush1.bf16.msra.mxu0 0
        %5511 = vmatprep.subr.bf16.mxu0 0
        %5512 = vmatpush1.bf16.msra.mxu0 0
        %5513 = vmatprep.subr.bf16.mxu0 0
        %5514 = vmatpush1.bf16.msra.mxu0 0
        %5515 = vmatprep.subr.bf16.mxu0 0
        %5516 = vmatpush1.bf16.msra.mxu0 0
        %5517 = vmatprep.subr.bf16.mxu0 0
        %5518 = vmatpush1.bf16.msra.mxu0 0
        %5519 = vmatprep.subr.bf16.mxu0 0
        %5520 = vmatpush1.bf16.msra.mxu0 0
        %5521 = vmatprep.subr.bf16.mxu0 0
        %5522 = vmatpush1.bf16.msra.mxu0 0
        %5523 = vmatprep.subr.bf16.mxu0 0
        %5524 = vmatpush1.bf16.msra.mxu0 0
        %5525 = vmatprep.subr.bf16.mxu0 0
        %5526 = vmatpush1.bf16.msra.mxu0 0
        %5527 = vmatprep.mubr.bf16.mxu0 0
        %5528 = vmatmul.mubr.bf16.gmra.mrb[0].mxu0 %v5484
        %v5529 = vpop.f32.mrb[0].mxu0
        %v5530 = vadd.f32 %v5457, %v5529
        %v5531 = vpop.f32.mrb[0].mxu0
        %v5532 = vpop.f32.mrb[0].mxu0
        %v5533 = vadd.f32 %v5457, %v5532
        %v5534 = vpop.f32.mrb[0].mxu0
        %5535 = vmatprep.mubr.bf16.mxu0 0
        %5536 = vmatmul.mubr.bf16.gmra.mrb[0].mxu0 %v5487
        %v5537 = vpop.f32.mrb[0].mxu0
        %v5538 = vadd.f32 %v5457, %v5537
        %v5539 = vpop.f32.mrb[0].mxu0
        %v5540 = vpop.f32.mrb[0].mxu0
        %v5541 = vadd.f32 %v5457, %v5540
        %v5542 = vpop.f32.mrb[0].mxu0
        %5543 = vmatprep.mubr.bf16.mxu0 0
        %5544 = vmatmul.mubr.bf16.gmra.mrb[0].mxu0 %v5490
        %v5545 = vpop.f32.mrb[0].mxu0
        %v5546 = vadd.f32 %v5457, %v5545
        %v5547 = vpop.f32.mrb[0].mxu0
        %v5548 = vpop.f32.mrb[0].mxu0
        %v5549 = vadd.f32 %v5457, %v5548
        %v5550 = vpop.f32.mrb[0].mxu0
        %5551 = vmatprep.mubr.bf16.mxu0 0
        %5552 = vmatmul.mubr.bf16.gmra.mrb[0].mxu0 %v5493
        %v5553 = vpop.f32.mrb[0].mxu0
        %v5554 = vadd.f32 %v5457, %v5553
        %v5555 = vpop.f32.mrb[0].mxu0
        %v5556 = vpop.f32.mrb[0].mxu0
        %v5557 = vadd.f32 %v5457, %v5556
        %v5558 = vpop.f32.mrb[0].mxu0
        %5559 = vdwg.mxu0
        %v5560 = vadd.f32 %v5320, %v5530
        %v5561 = vadd.f32 %v5321, %v5533
        %v5562 = vadd.f32 %v5322, %v5538
        %v5563 = vadd.f32 %v5323, %v5541
        %v5564 = vadd.f32 %v5324, %v5546
        %v5565 = vadd.f32 %v5325, %v5549
        %v5566 = vadd.f32 %v5326, %v5554
        %v5567 = vadd.f32 %v5327, %v5557
        %v5568 = vld [vmem:[%s1708] sm:$0x1]
        %v5569 = vld [vmem:[%s1716] sm:$0x1]
        %v5570 = vsel %vm2171, %v5560, 0.0
        %5571 = vadd.xlane.f32.xlu0 %v5570
        %v5572 = vpop.xlane.xlu0 %5571
        %v5573 = vsel %vm2171, %v5561, 0.0
        %5574 = vadd.xlane.f32.xlu0 %v5573
        %v5575 = vpop.xlane.xlu0 %5574
        %v5576 = vsel %vm2171, %v5562, 0.0
        %5577 = vadd.xlane.f32.xlu0 %v5576
        %v5578 = vpop.xlane.xlu0 %5577
        %v5579 = vsel %vm2171, %v5563, 0.0
        %5580 = vadd.xlane.f32.xlu0 %v5579
        %v5581 = vpop.xlane.xlu0 %5580
        %v5582 = vsel %vm2171, %v5564, 0.0
        %5583 = vadd.xlane.f32.xlu0 %v5582
        %v5584 = vpop.xlane.xlu0 %5583
        %v5585 = vsel %vm2171, %v5565, 0.0
        %5586 = vadd.xlane.f32.xlu0 %v5585
        %v5587 = vpop.xlane.xlu0 %5586
        %v5588 = vsel %vm2171, %v5566, 0.0
        %5589 = vadd.xlane.f32.xlu0 %v5588
        %v5590 = vpop.xlane.xlu0 %5589
        %v5591 = vsel %vm2171, %v5567, 0.0
        %5592 = vadd.xlane.f32.xlu0 %v5591
        %v5593 = vpop.xlane.xlu0 %5592
        %v5594 = vmul.f32 %v5572, %v3704
        %v5595 = vmul.f32 %v5575, %v3704
        %v5596 = vmul.f32 %v5578, %v3704
        %v5597 = vmul.f32 %v5581, %v3704
        %v5598 = vmul.f32 %v5584, %v3704
        %v5599 = vmul.f32 %v5587, %v3704
        %v5600 = vmul.f32 %v5590, %v3704
        %v5601 = vmul.f32 %v5593, %v3704
        %v5602 = vsub.f32 %v5560, %v5594
        %v5603 = vsub.f32 %v5561, %v5595
        %v5604 = vsub.f32 %v5562, %v5596
        %v5605 = vsub.f32 %v5563, %v5597
        %v5606 = vsub.f32 %v5564, %v5598
        %v5607 = vsub.f32 %v5565, %v5599
        %v5608 = vsub.f32 %v5566, %v5600
        %v5609 = vsub.f32 %v5567, %v5601
        %v5610 = vmul.f32 %v5602, %v5602
        %v5611 = vmul.f32 %v5603, %v5603
        %v5612 = vmul.f32 %v5604, %v5604
        %v5613 = vmul.f32 %v5605, %v5605
        %v5614 = vmul.f32 %v5606, %v5606
        %v5615 = vmul.f32 %v5607, %v5607
        %v5616 = vmul.f32 %v5608, %v5608
        %v5617 = vmul.f32 %v5609, %v5609
        %v5618 = vsel %vm2171, %v5610, 0.0
        %5619 = vadd.xlane.f32.xlu0 %v5618
        %v5620 = vpop.xlane.xlu0 %5619
        %v5621 = vsel %vm2171, %v5611, 0.0
        %5622 = vadd.xlane.f32.xlu0 %v5621
        %v5623 = vpop.xlane.xlu0 %5622
        %v5624 = vsel %vm2171, %v5612, 0.0
        %5625 = vadd.xlane.f32.xlu0 %v5624
        %v5626 = vpop.xlane.xlu0 %5625
        %v5627 = vsel %vm2171, %v5613, 0.0
        %5628 = vadd.xlane.f32.xlu0 %v5627
        %v5629 = vpop.xlane.xlu0 %5628
        %v5630 = vsel %vm2171, %v5614, 0.0
        %5631 = vadd.xlane.f32.xlu0 %v5630
        %v5632 = vpop.xlane.xlu0 %5631
        %v5633 = vsel %vm2171, %v5615, 0.0
        %5634 = vadd.xlane.f32.xlu0 %v5633
        %v5635 = vpop.xlane.xlu0 %5634
        %v5636 = vsel %vm2171, %v5616, 0.0
        %5637 = vadd.xlane.f32.xlu0 %v5636
        %v5638 = vpop.xlane.xlu0 %5637
        %v5639 = vsel %vm2171, %v5617, 0.0
        %5640 = vadd.xlane.f32.xlu0 %v5639
        %v5641 = vpop.xlane.xlu0 %5640
        %v5642 = vmul.f32 %v5620, %v3704
        %v5643 = vmul.f32 %v5623, %v3704
        %v5644 = vmul.f32 %v5626, %v3704
        %v5645 = vmul.f32 %v5629, %v3704
        %v5646 = vmul.f32 %v5632, %v3704
        %v5647 = vmul.f32 %v5635, %v3704
        %v5648 = vmul.f32 %v5638, %v3704
        %v5649 = vmul.f32 %v5641, %v3704
        %v5650 = vadd.f32 %v5642, 1e-05
        %v5651 = vadd.f32 %v5643, 1e-05
        %v5652 = vadd.f32 %v5644, 1e-05
        %v5653 = vadd.f32 %v5645, 1e-05
        %v5654 = vadd.f32 %v5646, 1e-05
        %v5655 = vadd.f32 %v5647, 1e-05
        %v5656 = vadd.f32 %v5648, 1e-05
        %v5657 = vadd.f32 %v5649, 1e-05
        %v5658 = vrsqrt.pop %v5650
        %v5659 = vrsqrt.pop %v5651
        %v5660 = vrsqrt.pop %v5652
        %v5661 = vrsqrt.pop %v5653
        %v5662 = vrsqrt.pop %v5654
        %v5663 = vrsqrt.pop %v5655
        %v5664 = vrsqrt.pop %v5656
        %v5665 = vrsqrt.pop %v5657
        %v5666 = vmul.f32 %v5602, %v5658
        %v5667 = vmul.f32 %v5603, %v5659
        %v5668 = vmul.f32 %v5604, %v5660
        %v5669 = vmul.f32 %v5605, %v5661
        %v5670 = vmul.f32 %v5606, %v5662
        %v5671 = vmul.f32 %v5607, %v5663
        %v5672 = vmul.f32 %v5608, %v5664
        %v5673 = vmul.f32 %v5609, %v5665
        %v5675 = vlaneseq
        %v5676 = vshrl.u32 %v5675, 7
        %v5677 = vsub.s32 0, %v5676
        %v5678 = vrot.slane %v5568, %v5677
        %v5680 = vmul.f32 %v5666, %v5678
        %v5681 = vmul.f32 %v5667, %v5678
        %v5682 = vmul.f32 %v5668, %v5678
        %v5683 = vmul.f32 %v5669, %v5678
        %v5684 = vmul.f32 %v5670, %v5678
        %v5685 = vmul.f32 %v5671, %v5678
        %v5686 = vmul.f32 %v5672, %v5678
        %v5687 = vmul.f32 %v5673, %v5678
        %v5689 = vlaneseq
        %v5690 = vshrl.u32 %v5689, 7
        %v5691 = vsub.s32 0, %v5690
        %v5692 = vrot.slane %v5569, %v5691
        %v5694 = vadd.f32 %v5680, %v5692
        %v5695 = vadd.f32 %v5681, %v5692
        %v5696 = vadd.f32 %v5682, %v5692
        %v5697 = vadd.f32 %v5683, %v5692
        %v5698 = vadd.f32 %v5684, %v5692
        %v5699 = vadd.f32 %v5685, %v5692
        %v5700 = vadd.f32 %v5686, %v5692
        %v5701 = vadd.f32 %v5687, %v5692
        %5702 = vst.msk [vmem:[%s1974] sm:$0xff] %vm2171, %v5694
        %5703 = vst.msk [vmem:[%s1974 + $0x8] sm:$0xff] %vm2171, %v5695
        %5704 = vst.msk [vmem:[%s1974 + $0x10] sm:$0xff] %vm2171, %v5696
        %5705 = vst.msk [vmem:[%s1974 + $0x18] sm:$0xff] %vm2171, %v5697
        %5706 = vst.msk [vmem:[%s1974 + $0x20] sm:$0xff] %vm2171, %v5698
        %5707 = vst.msk [vmem:[%s1974 + $0x28] sm:$0xff] %vm2171, %v5699
        %5708 = vst.msk [vmem:[%s1974 + $0x30] sm:$0xff] %vm2171, %v5700
        %5709 = vst.msk [vmem:[%s1974 + $0x38] sm:$0xff] %vm2171, %v5701
        %v5710 = vld [vmem:[%s1724] sm:$0x1]
        %v5711 = vld [vmem:[%s1732] sm:$0x1]
        %v5712 = vsel %vm2171, %v5694, 0.0
        %5713 = vadd.xlane.f32.xlu0 %v5712
        %v5714 = vpop.xlane.xlu0 %5713
        %v5715 = vsel %vm2171, %v5695, 0.0
        %5716 = vadd.xlane.f32.xlu0 %v5715
        %v5717 = vpop.xlane.xlu0 %5716
        %v5718 = vsel %vm2171, %v5696, 0.0
        %5719 = vadd.xlane.f32.xlu0 %v5718
        %v5720 = vpop.xlane.xlu0 %5719
        %v5721 = vsel %vm2171, %v5697, 0.0
        %5722 = vadd.xlane.f32.xlu0 %v5721
        %v5723 = vpop.xlane.xlu0 %5722
        %v5724 = vsel %vm2171, %v5698, 0.0
        %5725 = vadd.xlane.f32.xlu0 %v5724
        %v5726 = vpop.xlane.xlu0 %5725
        %v5727 = vsel %vm2171, %v5699, 0.0
        %5728 = vadd.xlane.f32.xlu0 %v5727
        %v5729 = vpop.xlane.xlu0 %5728
        %v5730 = vsel %vm2171, %v5700, 0.0
        %5731 = vadd.xlane.f32.xlu0 %v5730
        %v5732 = vpop.xlane.xlu0 %5731
        %v5733 = vsel %vm2171, %v5701, 0.0
        %5734 = vadd.xlane.f32.xlu0 %v5733
        %v5735 = vpop.xlane.xlu0 %5734
        %v5736 = vmul.f32 %v5714, %v3704
        %v5737 = vmul.f32 %v5717, %v3704
        %v5738 = vmul.f32 %v5720, %v3704
        %v5739 = vmul.f32 %v5723, %v3704
        %v5740 = vmul.f32 %v5726, %v3704
        %v5741 = vmul.f32 %v5729, %v3704
        %v5742 = vmul.f32 %v5732, %v3704
        %v5743 = vmul.f32 %v5735, %v3704
        %v5744 = vsub.f32 %v5694, %v5736
        %v5745 = vsub.f32 %v5695, %v5737
        %v5746 = vsub.f32 %v5696, %v5738
        %v5747 = vsub.f32 %v5697, %v5739
        %v5748 = vsub.f32 %v5698, %v5740
        %v5749 = vsub.f32 %v5699, %v5741
        %v5750 = vsub.f32 %v5700, %v5742
        %v5751 = vsub.f32 %v5701, %v5743
        %v5752 = vmul.f32 %v5744, %v5744
        %v5753 = vmul.f32 %v5745, %v5745
        %v5754 = vmul.f32 %v5746, %v5746
        %v5755 = vmul.f32 %v5747, %v5747
        %v5756 = vmul.f32 %v5748, %v5748
        %v5757 = vmul.f32 %v5749, %v5749
        %v5758 = vmul.f32 %v5750, %v5750
        %v5759 = vmul.f32 %v5751, %v5751
        %v5760 = vsel %vm2171, %v5752, 0.0
        %5761 = vadd.xlane.f32.xlu0 %v5760
        %v5762 = vpop.xlane.xlu0 %5761
        %v5763 = vsel %vm2171, %v5753, 0.0
        %5764 = vadd.xlane.f32.xlu0 %v5763
        %v5765 = vpop.xlane.xlu0 %5764
        %v5766 = vsel %vm2171, %v5754, 0.0
        %5767 = vadd.xlane.f32.xlu0 %v5766
        %v5768 = vpop.xlane.xlu0 %5767
        %v5769 = vsel %vm2171, %v5755, 0.0
        %5770 = vadd.xlane.f32.xlu0 %v5769
        %v5771 = vpop.xlane.xlu0 %5770
        %v5772 = vsel %vm2171, %v5756, 0.0
        %5773 = vadd.xlane.f32.xlu0 %v5772
        %v5774 = vpop.xlane.xlu0 %5773
        %v5775 = vsel %vm2171, %v5757, 0.0
        %5776 = vadd.xlane.f32.xlu0 %v5775
        %v5777 = vpop.xlane.xlu0 %5776
        %v5778 = vsel %vm2171, %v5758, 0.0
        %5779 = vadd.xlane.f32.xlu0 %v5778
        %v5780 = vpop.xlane.xlu0 %5779
        %v5781 = vsel %vm2171, %v5759, 0.0
        %5782 = vadd.xlane.f32.xlu0 %v5781
        %v5783 = vpop.xlane.xlu0 %5782
        %v5784 = vmul.f32 %v5762, %v3704
        %v5785 = vmul.f32 %v5765, %v3704
        %v5786 = vmul.f32 %v5768, %v3704
        %v5787 = vmul.f32 %v5771, %v3704
        %v5788 = vmul.f32 %v5774, %v3704
        %v5789 = vmul.f32 %v5777, %v3704
        %v5790 = vmul.f32 %v5780, %v3704
        %v5791 = vmul.f32 %v5783, %v3704
        %v5792 = vadd.f32 %v5784, 1e-05
        %v5793 = vadd.f32 %v5785, 1e-05
        %v5794 = vadd.f32 %v5786, 1e-05
        %v5795 = vadd.f32 %v5787, 1e-05
        %v5796 = vadd.f32 %v5788, 1e-05
        %v5797 = vadd.f32 %v5789, 1e-05
        %v5798 = vadd.f32 %v5790, 1e-05
        %v5799 = vadd.f32 %v5791, 1e-05
        %v5800 = vrsqrt.pop %v5792
        %v5801 = vrsqrt.pop %v5793
        %v5802 = vrsqrt.pop %v5794
        %v5803 = vrsqrt.pop %v5795
        %v5804 = vrsqrt.pop %v5796
        %v5805 = vrsqrt.pop %v5797
        %v5806 = vrsqrt.pop %v5798
        %v5807 = vrsqrt.pop %v5799
        %v5808 = vmul.f32 %v5744, %v5800
        %v5809 = vmul.f32 %v5745, %v5801
        %v5810 = vmul.f32 %v5746, %v5802
        %v5811 = vmul.f32 %v5747, %v5803
        %v5812 = vmul.f32 %v5748, %v5804
        %v5813 = vmul.f32 %v5749, %v5805
        %v5814 = vmul.f32 %v5750, %v5806
        %v5815 = vmul.f32 %v5751, %v5807
        %v5817 = vlaneseq
        %v5818 = vshrl.u32 %v5817, 7
        %v5819 = vsub.s32 0, %v5818
        %v5820 = vrot.slane %v5710, %v5819
        %v5822 = vmul.f32 %v5808, %v5820
        %v5823 = vmul.f32 %v5809, %v5820
        %v5824 = vmul.f32 %v5810, %v5820
        %v5825 = vmul.f32 %v5811, %v5820
        %v5826 = vmul.f32 %v5812, %v5820
        %v5827 = vmul.f32 %v5813, %v5820
        %v5828 = vmul.f32 %v5814, %v5820
        %v5829 = vmul.f32 %v5815, %v5820
        %v5831 = vlaneseq
        %v5832 = vshrl.u32 %v5831, 7
        %v5833 = vsub.s32 0, %v5832
        %v5834 = vrot.slane %v5711, %v5833
        %v5836 = vadd.f32 %v5822, %v5834
        %v5837 = vadd.f32 %v5823, %v5834
        %v5838 = vadd.f32 %v5824, %v5834
        %v5839 = vadd.f32 %v5825, %v5834
        %v5840 = vadd.f32 %v5826, %v5834
        %v5841 = vadd.f32 %v5827, %v5834
        %v5842 = vadd.f32 %v5828, %v5834
        %v5843 = vadd.f32 %v5829, %v5834
        %5844 = vst.msk [vmem:[%s2091] sm:$0xff] %vm2171, %v5836
        %5845 = vst.msk [vmem:[%s2091 + $0x8] sm:$0xff] %vm2171, %v5837
        %5846 = vst.msk [vmem:[%s2091 + $0x10] sm:$0xff] %vm2171, %v5838
        %5847 = vst.msk [vmem:[%s2091 + $0x18] sm:$0xff] %vm2171, %v5839
        %5848 = vst.msk [vmem:[%s2091 + $0x20] sm:$0xff] %vm2171, %v5840
        %5849 = vst.msk [vmem:[%s2091 + $0x28] sm:$0xff] %vm2171, %v5841
        %5850 = vst.msk [vmem:[%s2091 + $0x30] sm:$0xff] %vm2171, %v5842
        %5851 = vst.msk [vmem:[%s2091 + $0x38] sm:$0xff] %vm2171, %v5843
        %s5852 = sand.u32 %s1021, 1
        %s5853 = scalar_lea.sflag [#allocation4], %s5852
        %s5854 = sand.u32 %s1021, 1
        %s5855 = smul.addr %s5854, 64
        %s5856 = scalar_lea.vmem [#allocation32], %s5855
        %p5857 = scmp.lt.s32.totalorder %s119, 1
        %s5858 = scalar_select %p5857, %s119, 1
        %p5859 = scmp.lt.s32.totalorder %s117, 1
        %s5860 = scalar_select %p5859, %s117, 1
        %p5861 = scmp.lt.s32.totalorder %s118, 1
        %s5862 = scalar_select %p5861, %s118, 1
        %s5863 = smul.addr %s5862, 8
        %s5864 = smul.addr %s5860, 16
        %s5865 = sadd.s32 %s5863, %s5864
        %s5866 = smul.addr %s5858, 32
        %s5867 = sadd.s32 %s5865, %s5866
        %s5868 = smul.addr %s5867, 8
        %s5869 = scalar_lea.vmem %s67, %s5868
        // Predicated region
        $region229: #{transformer_forward.3} parent=147 // pred_check
          %p5870 = pneg %p1031
        $region230: #{transformer_forward.3} parent=147 // pred_check_branch
          %5872 = sbr.rel (%p5870) target = $region232
        $region231: #{transformer_forward.3} parent=147 // pred_region
          %s5874 = ssub.s32 1024, 1024
          %5875 = vsyncadd %s5853, %s5874
          %s5876 = smul.addr %s118, 8
          %s5877 = smul.addr %s117, 16
          %s5878 = sadd.s32 %s5876, %s5877
          %s5879 = smul.addr %s5878, 128
          %s5880 = scalar_lea.hbm %s65, %s5879
          %s5881 = sshll.u32 %s5856, 4
          %s5882 = int_to_ptr.vmem [resolvable:$true] %s5881
          %5887 = dma.vmem_to_hbm [thread:$0]  %s5882, 1024, %s5880, %s5853, 128, 128, 8
        $region232: #{transformer_forward.3} parent=147 // pred_fallthru
          _
        // Predicated region
        $region233: #{transformer_forward.3} parent=147 // pred_check
          %p5888 = pneg %p1061
        $region234: #{transformer_forward.3} parent=147 // pred_check_branch
          %5890 = sbr.rel (%p5888) target = $region236
        $region235: #{transformer_forward.3} parent=147 // pred_region
          _
        $region236: #{transformer_forward.3} parent=147 // pred_fallthru
          _
      $region148: #{transformer_forward.3} parent=5 // pred_fallthru
        _
      %p5891 = scmp.le.s32.totalorder 2, %s107
      // Predicated region
      $region237: #{transformer_forward.3} parent=5 // pred_check
        %p5892 = pneg %p5891
      $region238: #{transformer_forward.3} parent=5 // pred_check_branch
        %5894 = sbr.rel (%p5892) target = $region240
      $region239: #{transformer_forward.3} parent=5 // pred_region
        %s5895 = ssub.s32 %s107, 2
        // Predicated region
        $region241: #{transformer_forward.3} parent=239 // pred_check
          %p5896 = pneg %p1037
        $region242: #{transformer_forward.3} parent=239 // pred_check_branch
          %5898 = sbr.rel (%p5896) target = $region244
        $region243: #{transformer_forward.3} parent=239 // pred_region
          %s5899 = sand.u32 %s1022, 1
          %s5900 = scalar_lea.sflag [#allocation4], %s5899
          %s5901 = sand.u32 %s1022, 1
          %s5902 = smul.addr %s5901, 64
          %s5903 = scalar_lea.vmem [#allocation32], %s5902
          %5904 = dma.done %s5900, 1024
        $region244: #{transformer_forward.3} parent=239 // pred_fallthru
          _
        // Predicated region
        $region245: #{transformer_forward.3} parent=239 // pred_check
          %p5905 = pneg %p1067
        $region246: #{transformer_forward.3} parent=239 // pred_check_branch
          %5907 = sbr.rel (%p5905) target = $region248
        $region247: #{transformer_forward.3} parent=239 // pred_region
          %p5908 = scmp.lt.s32.totalorder %s122, 1
          %s5909 = scalar_select %p5908, %s122, 1
          %p5910 = scmp.lt.s32.totalorder %s120, 1
          %s5911 = scalar_select %p5910, %s120, 1
          %p5912 = scmp.lt.s32.totalorder %s121, 1
          %s5913 = scalar_select %p5912, %s121, 1
          %s5914 = smul.addr %s5913, 8
          %s5915 = smul.addr %s5911, 16
          %s5916 = sadd.s32 %s5914, %s5915
          %s5917 = smul.addr %s5909, 32
          %s5918 = sadd.s32 %s5916, %s5917
          %s5919 = smul.addr %s5918, 8
          %s5920 = scalar_lea.vmem %s67, %s5919
        $region248: #{transformer_forward.3} parent=239 // pred_fallthru
          _
      $region240: #{transformer_forward.3} parent=5 // pred_fallthru
        _
    $region6: #{transformer_forward.3} parent=1 // loop_footer
      %s111 = sadd.s32 1, %s107
    $region7: #{transformer_forward.3} parent=1 // loop_footer_branch
      %106 = sbr.rel target = $region3
    $region8: #{transformer_forward.3} parent=1 // loop_exit
      _
    %5921 = vsyncpa [#allocation3], 1
    %s5922 = scalar_lea.sflag [#allocation3], 1
    %5923 = vsyncpa %s5922, 1
    %5924 = vsyncpa [#allocation6], 1
    %s5925 = scalar_lea.sflag [#allocation6], 1
    %5926 = vsyncpa %s5925, 1
    %5927 = vsyncpa [#allocation9], 1
    %s5928 = scalar_lea.sflag [#allocation9], 1
    %5929 = vsyncpa %s5928, 1
    %5930 = vsyncpa [#allocation12], 1
    %s5931 = scalar_lea.sflag [#allocation12], 1
    %5932 = vsyncpa %s5931, 1
    %5933 = vsyncpa [#allocation15], 1
    %s5934 = scalar_lea.sflag [#allocation15], 1
    %5935 = vsyncpa %s5934, 1
    %5936 = vsyncpa [#allocation18], 1
    %s5937 = scalar_lea.sflag [#allocation18], 1
    %5938 = vsyncpa %s5937, 1
    %5939 = vsyncpa [#allocation21], 1
    %s5940 = scalar_lea.sflag [#allocation21], 1
    %5941 = vsyncpa %s5940, 1
    %5942 = vsyncpa [#allocation24], 1
    %s5943 = scalar_lea.sflag [#allocation24], 1
    %5944 = vsyncpa %s5943, 1
    %5945 = vsyncpa [#allocation27], 1
    %s5946 = scalar_lea.sflag [#allocation27], 1
    %5947 = vsyncpa %s5946, 1
    %5948 = vsyncpa [#allocation30], 1
    %s5949 = scalar_lea.sflag [#allocation30], 1
    %5950 = vsyncpa %s5949, 1
    %5951 = vsyncpa [#allocation4], 1
    %s5952 = scalar_lea.sflag [#allocation4], 1
    %5953 = vsyncpa %s5952, 1

</llo_original>
